<compile_context>
chip_gen: v6e
topology: v6e:2x2x1
jax: 0.10.0
libtpu: 0.0.40
codegen_flags: <defaults>
</compile_context>

<pallas_src>
import functools

import numpy as np
import jax
import jax.numpy as jnp
from jax import lax
from jax.experimental import pallas as pl
from jax.experimental.pallas import tpu as pltpu


# ----------------------------------------------------------------------------
# Pallas kernels
# ----------------------------------------------------------------------------
def _convT_kernel(w_ref, a_ref, b_ref, o_ref, *, negative_slope):
    """o^T = LeakyReLU(W @ a^T + b); W:(Cout,K) bf16, a^T:(K,tm) bf16, f32 accumulate."""
    acc = jnp.dot(w_ref[...], a_ref[...], preferred_element_type=jnp.float32)
    acc = acc + b_ref[...]
    acc = jnp.where(acc > 0, acc, negative_slope * acc)          # LeakyReLU in f32
    o_ref[...] = acc.astype(o_ref.dtype)


def _softmax_attend(qb, kb, vb):
    """energy[i,j] = sum_c q[c,i] k[c,j]; softmax over j; out^T[c,i] = sum_j v[c,j] attn[i,j]."""
    energy = lax.dot_general(qb, kb, (((0,), (0,)), ((), ())),
                             preferred_element_type=jnp.float32)         # (N, N)
    m = jnp.max(energy, axis=-1, keepdims=True)
    p = jnp.exp(energy - m)
    # NOTE: EUP approx reciprocal -> ~1e-3 relative error vs. the exact divide.
    attn = p * pl.reciprocal(jnp.sum(p, axis=-1, keepdims=True), approx=True)
    return lax.dot_general(vb, attn, (((1,), (1,)), ((), ())),
                           preferred_element_type=jnp.float32)           # (C, N)


def _tail_kernel(gamma1_ref, gamma2_ref, b5_ref,
                 a3_ref, w3_ref, b3_ref,
                 wq1_ref, bq1_ref, wk1_ref, bk1_ref, wv1_ref, bv1_ref,
                 sel_ref, w4_ref, b4_ref,
                 wq2_ref, bq2_ref, wk2_ref, bk2_ref, wv2_ref, bv2_ref,
                 w5_ref, o_ref, *, taps, negative_slope):
    """Fused conv3 -> attn1 -> conv4 (in-kernel im2col) -> attn2 -> conv5, one batch/step."""
    ns = negative_slope
    # conv3: bf16 operands, f32 accumulation + epilogue
    h3 = jnp.dot(w3_ref[...], a3_ref[0], preferred_element_type=jnp.float32)
    h3 = h3 + b3_ref[...]
    h3 = jnp.where(h3 > 0, h3, ns * h3)                          # (C3, n3) f32
    # self-attention 1
    q1 = jnp.dot(wq1_ref[...], h3, preferred_element_type=jnp.float32) + bq1_ref[...]
    k1 = jnp.dot(wk1_ref[...], h3, preferred_element_type=jnp.float32) + bk1_ref[...]
    v1 = jnp.dot(wv1_ref[...], h3, preferred_element_type=jnp.float32) + bv1_ref[...]
    y1 = gamma1_ref[0] * _softmax_attend(q1, k1, v1) + h3        # (C3, n3)
    # conv4: im2col done in-kernel with 0/1 selection matmuls, accumulated per tap
    c4 = w4_ref.shape[1]
    n4 = sel_ref.shape[2]
    h4 = jnp.zeros((c4, n4), jnp.float32)
    for t in range(taps):                                        # static unroll (16 taps)
        shifted = jnp.dot(y1, sel_ref[t], preferred_element_type=jnp.float32)   # (C3, n4)
        h4 = h4 + jnp.dot(w4_ref[t], shifted, preferred_element_type=jnp.float32)
    h4 = h4 + b4_ref[...]
    h4 = jnp.where(h4 > 0, h4, ns * h4)                          # (C4, n4)
    # self-attention 2
    q2 = jnp.dot(wq2_ref[...], h4, preferred_element_type=jnp.float32) + bq2_ref[...]
    k2 = jnp.dot(wk2_ref[...], h4, preferred_element_type=jnp.float32) + bk2_ref[...]
    v2 = jnp.dot(wv2_ref[...], h4, preferred_element_type=jnp.float32) + bv2_ref[...]
    y2 = gamma2_ref[0] * _softmax_attend(q2, k2, v2) + h4        # (C4, n4)
    # conv5: full 4x4 valid conv == dot over all (c, h, w), plus bias
    val = jnp.sum(w5_ref[...] * y2, axis=0, keepdims=True)       # (1, n4)
    val = jnp.sum(val, axis=1, keepdims=True) + b5_ref[0]        # (1, 1)
    o_ref[...] = jnp.broadcast_to(val.reshape(1, 1, 1), o_ref.shape)


# ----------------------------------------------------------------------------
# Pallas wrappers
# ----------------------------------------------------------------------------
def _pick_tm(m):
    """Largest lane-aligned tile (<=1024) dividing m, preferring >= 2 grid steps."""
    if m % 128 != 0:
        return m
    candidates = [t for t in (1024, 512, 384, 256, 128) if m % t == 0]
    for t in candidates:
        if m // t >= 2:
            return t
    return candidates[0]


def pallas_convT_matmul(w_mat, a_t, bias, negative_slope):
    """conv as matmul in transposed layout; bf16 operands, bf16 lane-dense output."""
    cout, k = w_mat.shape
    _, m = a_t.shape
    tm = _pick_tm(m)
    kernel = functools.partial(_convT_kernel, negative_slope=negative_slope)
    return pl.pallas_call(
        kernel,
        out_shape=jax.ShapeDtypeStruct((cout, m), jnp.bfloat16),
        grid=(m // tm,),
        in_specs=[
            pl.BlockSpec((cout, k), lambda i: (0, 0)),
            pl.BlockSpec((k, tm), lambda i: (0, i)),
            pl.BlockSpec((cout, 1), lambda i: (0, 0)),
        ],
        out_specs=pl.BlockSpec((cout, tm), lambda i: (0, i)),
        compiler_params=pltpu.CompilerParams(dimension_semantics=("parallel",)),
    )(w_mat, a_t, bias)


def pallas_fused_tail(a3, pp, negative_slope=0.1):
    """Fused conv3->attn1->conv4->attn2->conv5; batch-parallel grid, one scalar per batch."""
    B, K3, n3 = a3.shape
    C3 = pp["w3"].shape[0]
    taps, sn3, n4 = pp["sel4"].shape
    C4 = pp["w4"].shape[1]
    Cq1 = pp["wq1"].shape[0]
    Cq2 = pp["wq2"].shape[0]
    assert sn3 == n3, (sn3, n3)
    assert pp["w4"].shape == (taps, C4, C3), pp["w4"].shape
    assert pp["w5"].shape == (C4, n4), pp["w5"].shape

    def _full(shp):
        return pl.BlockSpec(shp, lambda b: (0, 0))

    kernel = functools.partial(_tail_kernel, taps=taps, negative_slope=negative_slope)
    out = pl.pallas_call(
        kernel,
        out_shape=jax.ShapeDtypeStruct((B, 1, 128), jnp.float32),
        grid=(B,),
        in_specs=[
            pl.BlockSpec(memory_space=pltpu.MemorySpace.SMEM),     # gamma1
            pl.BlockSpec(memory_space=pltpu.MemorySpace.SMEM),     # gamma2
            pl.BlockSpec(memory_space=pltpu.MemorySpace.SMEM),     # conv5 bias
            pl.BlockSpec((1, K3, n3), lambda b: (b, 0, 0)),        # per-batch conv3 slab
            _full((C3, K3)), _full((C3, 1)),                       # conv3 W (bf16), b
            _full((Cq1, C3)), _full((Cq1, 1)),                     # attn1 query
            _full((Cq1, C3)), _full((Cq1, 1)),                     # attn1 key
            _full((C3, C3)), _full((C3, 1)),                       # attn1 value
            pl.BlockSpec((taps, n3, n4), lambda b: (0, 0, 0)),     # conv4 selection mats
            pl.BlockSpec((taps, C4, C3), lambda b: (0, 0, 0)),     # conv4 W (per tap)
            _full((C4, 1)),                                        # conv4 b
            _full((Cq2, C4)), _full((Cq2, 1)),                     # attn2 query
            _full((Cq2, C4)), _full((Cq2, 1)),                     # attn2 key
            _full((C4, C4)), _full((C4, 1)),                       # attn2 value
            _full((C4, n4)),                                       # conv5 W
        ],
        out_specs=pl.BlockSpec((1, 1, 128), lambda b: (b, 0, 0)),
        compiler_params=pltpu.CompilerParams(dimension_semantics=("parallel",)),
    )(pp["gamma1"], pp["gamma2"], pp["b5"], a3,
      pp["w3"], pp["b3"],
      pp["wq1"], pp["bq1"], pp["wk1"], pp["bk1"], pp["wv1"], pp["bv1"],
      pp["sel4"], pp["w4"], pp["b4"],
      pp["wq2"], pp["bq2"], pp["wk2"], pp["bk2"], pp["wv2"], pp["bv2"],
      pp["w5"])
    return out[:, 0, 0]                                           # (B,)


# ----------------------------------------------------------------------------
# Glue: transposed im2col, selection matrices, params, forward pass
# ----------------------------------------------------------------------------
def _im2col_patches(xt, k, stride, pad):
    C, B, H, W = xt.shape
    if pad > 0:
        xt = jnp.pad(xt, ((0, 0), (0, 0), (pad, pad), (pad, pad)))
    Hp, Wp = H + 2 * pad, W + 2 * pad
    Ho = (Hp - k) // stride + 1
    Wo = (Wp - k) // stride + 1
    cols = []
    for i in range(k):
        for j in range(k):
            cols.append(xt[:, :, i:i + stride * Ho:stride, j:j + stride * Wo:stride])
    return jnp.stack(cols, axis=0), Ho, Wo                        # (k*k, C, B, Ho, Wo)


def im2col_T(xt, k, stride, pad):
    """(C,B,H,W) -> A^T (k*k*C, B*Ho*Wo); K ordered (kh, kw, cin)."""
    patches, Ho, Wo = _im2col_patches(xt, k, stride, pad)
    kk, C, B = patches.shape[:3]
    return patches.reshape(kk * C, B * Ho * Wo), Ho, Wo


def im2col_T_batched(xt, k, stride, pad):
    """(C,B,H,W) -> (B, k*k*C, Ho*Wo); per-batch slabs for the batch-parallel tail grid."""
    patches, Ho, Wo = _im2col_patches(xt, k, stride, pad)
    kk, C, B = patches.shape[:3]
    patches = patches.transpose(2, 0, 1, 3, 4)                    # (B, kk, C, Ho, Wo)
    return patches.reshape(B, kk * C, Ho * Wo), Ho, Wo


def conv_select_matrix(h, w, k, stride, pad):
    """0/1 matrices S[t, n, m] so that per-tap patches = x_flat @ S[t] (in-kernel im2col)."""
    ho = (h + 2 * pad - k) // stride + 1
    wo = (w + 2 * pad - k) // stride + 1
    sel = np.zeros((k * k, h * w, ho * wo), np.float32)
    for di in range(k):
        for dj in range(k):
            for oh in range(ho):
                for ow in range(wo):
                    ih = stride * oh + di - pad
                    iw = stride * ow + dj - pad
                    if 0 <= ih < h and 0 <= iw < w:
                        sel[di * k + dj, ih * w + iw, oh * wo + ow] = 1.0
    return jnp.asarray(sel)


def spectral_normalize(w, key, n_iter=3):
    """Power-iteration spectral norm (same reshape as torch), applied once at init.
    TODO(synk): PyTorch's spectral_norm re-runs one power-iteration step every
    forward; here it is a one-time init-time normalization (inference-style)."""
    cout = w.shape[0]
    w_mat = w.reshape(cout, -1)
    u = jax.random.normal(key, (cout,), jnp.float32)
    u = u / (jnp.linalg.norm(u) + 1e-12)
    v = None
    for _ in range(n_iter):
        v = w_mat.T @ u
        v = v / (jnp.linalg.norm(v) + 1e-12)
        u = w_mat @ v
        u = u / (jnp.linalg.norm(u) + 1e-12)
    sigma = u @ (w_mat @ v)
    return w / sigma


def init_params(key, nc=3, ndf=8, gamma=0.0):
    """PyTorch-layout parameters. gamma defaults to 0.0 like torch's SAGAN attention."""
    keys = iter(jax.random.split(key, 32))

    def conv_w(cout, cin, k):
        return 0.05 * jax.random.normal(next(keys), (cout, cin, k, k), jnp.float32)

    def bias(c):
        return 0.01 * jax.random.normal(next(keys), (c,), jnp.float32)

    params = {}
    chans = [(nc, ndf), (ndf, 2 * ndf), (2 * ndf, 4 * ndf), (4 * ndf, 8 * ndf)]
    for idx, (cin, cout) in enumerate(chans, start=1):
        w = spectral_normalize(conv_w(cout, cin, 4), next(keys))
        params[f"conv{idx}"] = {"w": w, "b": bias(cout)}
    params["conv5"] = {"w": conv_w(1, 8 * ndf, 4), "b": bias(1)}
    for name, c in (("attn1", 4 * ndf), ("attn2", 8 * ndf)):
        cq = c // 8
        params[name] = {
            "wq": conv_w(cq, c, 1), "bq": bias(cq),
            "wk": conv_w(cq, c, 1), "bk": bias(cq),
            "wv": conv_w(c, c, 1), "bv": bias(c),
            "gamma": gamma,
        }
    return params


def prepare_params(params):
    """One-time layout/cast preparation, hoisted out of the forward pass."""
    pp = {}
    for idx in (1, 2, 3):
        p = params[f"conv{idx}"]
        cout = p["w"].shape[0]
        # (Cout, Cin, kh, kw) -> (Cout, kh*kw*Cin), bf16 matmul operand
        pp[f"w{idx}"] = (p["w"].transpose(0, 2, 3, 1).reshape(cout, -1)
                         .astype(jnp.bfloat16))
        pp[f"b{idx}"] = p["b"].reshape(cout, 1).astype(jnp.float32)
    p4 = params["conv4"]
    c4, c3 = p4["w"].shape[0], p4["w"].shape[1]
    kk4 = p4["w"].shape[2] * p4["w"].shape[3]
    # (Cout, Cin, kh, kw) -> (kh*kw, Cout, Cin): per-tap weights for in-kernel conv4
    pp["w4"] = p4["w"].transpose(2, 3, 0, 1).reshape(kk4, c4, c3).astype(jnp.float32)
    pp["b4"] = p4["b"].reshape(c4, 1).astype(jnp.float32)
    p5 = params["conv5"]
    pp["w5"] = p5["w"][0].reshape(c4, -1).astype(jnp.float32)     # (C4, kh*kw)
    pp["b5"] = p5["b"].reshape(1).astype(jnp.float32)
    for tag, name in (("1", "attn1"), ("2", "attn2")):
        pa = params[name]
        cq, c = pa["wq"].shape[0], pa["wq"].shape[1]
        pp[f"wq{tag}"] = pa["wq"].reshape(cq, c).astype(jnp.float32)
        pp[f"bq{tag}"] = pa["bq"].reshape(cq, 1).astype(jnp.float32)
        pp[f"wk{tag}"] = pa["wk"].reshape(cq, c).astype(jnp.float32)
        pp[f"bk{tag}"] = pa["bk"].reshape(cq, 1).astype(jnp.float32)
        pp[f"wv{tag}"] = pa["wv"].reshape(c, c).astype(jnp.float32)
        pp[f"bv{tag}"] = pa["bv"].reshape(c, 1).astype(jnp.float32)
        pp[f"gamma{tag}"] = jnp.asarray(pa["gamma"], jnp.float32).reshape(1)
    # conv4's stride-2 / pad-1 / 4x4 im2col on the 8x8 attn1 map, as selection matmuls
    pp["sel4"] = conv_select_matrix(8, 8, 4, 2, 1)                # (16, 64, 16)
    return pp


def discriminator_forward(x, pp):
    """x: (B, nc, 64, 64) NCHW -> (B, 1, 1, 1)."""
    B = x.shape[0]
    xt = jnp.transpose(x, (1, 0, 2, 3)).astype(jnp.bfloat16)     # (C,B,H,W), bf16 ingress
    a1, H1, W1 = im2col_T(xt, 4, 2, 1)                           # (48, B*1024) bf16
    o1 = pallas_convT_matmul(pp["w1"], a1, pp["b1"], 0.1)
    o1 = o1.reshape(pp["w1"].shape[0], B, H1, W1)                # (ndf,  B, 32, 32)
    a2, H2, W2 = im2col_T(o1, 4, 2, 1)
    o2 = pallas_convT_matmul(pp["w2"], a2, pp["b2"], 0.1)
    o2 = o2.reshape(pp["w2"].shape[0], B, H2, W2)                # (2ndf, B, 16, 16)
    a3, H3, W3 = im2col_T_batched(o2, 4, 2, 1)                   # (B, K3, 64) bf16
    out = pallas_fused_tail(a3, pp)                              # (B,)  fused tail
    return out.reshape(B, 1, 1, 1)


if __name__ == "__main__":
    key = jax.random.PRNGKey(0)
    pkey, xkey = jax.random.split(key)
    # PyTorch initializes gamma to 0 (identity attention); 0.1 is used here so the
    # attention path is actually exercised by this smoke test.
    params = init_params(pkey, nc=3, ndf=8, gamma=0.1)
    pp = prepare_params(params)
    # 4 stride-2 convs + final 4x4 valid conv require a 64x64 spatial input.
    x = jax.random.normal(xkey, (2, 3, 64, 64), jnp.float32)     # NCHW like PyTorch
    fwd = jax.jit(discriminator_forward)
    out = jax.block_until_ready(fwd(x, pp))
    assert out.shape == (2, 1, 1, 1), out.shape
    assert bool(jnp.all(jnp.isfinite(out)))
    print("KERNEL_OK")
</pallas_src>

<mosaic_0001>
module attributes {stable_mosaic.version = 11 : i64} {
  func.func @_convT_kernel(%arg0: i32, %arg1: memref<8x48xbf16, #tpu.memory_space<vmem>>, %arg2: memref<48x1024xbf16, #tpu.memory_space<vmem>>, %arg3: memref<8x1xf32, #tpu.memory_space<vmem>>, %arg4: memref<8x1024xbf16, #tpu.memory_space<vmem>>) attributes {dimension_semantics = [#tpu.dimension_semantics<parallel>], iteration_bounds = array<i64: 2>, scalar_prefetch = 0 : i64, scratch_operands = 0 : i64, tpu.core_type = #tpu.core_type<tc>, window_params = [{pipeline_mode = #tpu.pipeline_mode<synchronous>, transform_indices = @transform_0, window_bounds = array<i64: 8, 48>}, {transform_indices = @transform_1, window_bounds = array<i64: 48, 1024>}, {pipeline_mode = #tpu.pipeline_mode<synchronous>, transform_indices = @transform_2, window_bounds = array<i64: 8, 1>}, {transform_indices = @transform_3, window_bounds = array<i64: 8, 1024>}]} {
    %c0 = arith.constant 0 : index
    %c0_0 = arith.constant 0 : index
    %0 = vector.load %arg1[%c0, %c0_0] : memref<8x48xbf16, #tpu.memory_space<vmem>>, vector<8x48xbf16>
    %c0_1 = arith.constant 0 : index
    %c0_2 = arith.constant 0 : index
    %1 = vector.load %arg2[%c0_1, %c0_2] : memref<48x1024xbf16, #tpu.memory_space<vmem>>, vector<48x1024xbf16>
    %cst = arith.constant dense<0.000000e+00> : vector<8x1024xf32>
    %2 = tpu.matmul %0, %1, %cst {dimension_numbers = #tpu.dot_dimension_numbers<[1], [0], [0], [1], [0, 0, 1, 1], [], []>} : vector<8x48xbf16>, vector<48x1024xbf16>, vector<8x1024xf32> -> vector<8x1024xf32>
    %c0_3 = arith.constant 0 : index
    %c0_4 = arith.constant 0 : index
    %3 = vector.load %arg3[%c0_3, %c0_4] : memref<8x1xf32, #tpu.memory_space<vmem>>, vector<8x1xf32>
    %4 = vector.broadcast %3 : vector<8x1xf32> to vector<8x1024xf32>
    %5 = arith.addf %2, %4 : vector<8x1024xf32>
    %cst_5 = arith.constant 0.000000e+00 : f32
    %6 = vector.broadcast %cst_5 : f32 to vector<8x1024xf32>
    %7 = arith.cmpf ogt, %5, %6 : vector<8x1024xf32>
    %cst_6 = arith.constant 1.000000e-01 : f32
    %8 = vector.broadcast %cst_6 : f32 to vector<8x1024xf32>
    %9 = arith.mulf %8, %5 : vector<8x1024xf32>
    %10 = arith.select %7, %5, %9 : vector<8x1024xi1>, vector<8x1024xf32>
    %11 = arith.truncf %10 : vector<8x1024xf32> to vector<8x1024xbf16>
    %c0_7 = arith.constant 0 : index
    %c0_8 = arith.constant 0 : index
    %12 = vector.load %arg4[%c0_7, %c0_8] : memref<8x1024xbf16, #tpu.memory_space<vmem>>, vector<8x1024xbf16>
    tpu.vector_store %arg4[%c0_7, %c0_8], %11 {strides = array<i32>} : memref<8x1024xbf16, #tpu.memory_space<vmem>>, vector<8x1024xbf16>,
    return
  }
  func.func @transform_0(%arg0: i32) -> (i32, i32) {
    %c0_i32 = arith.constant 0 : i32
    %c0_i32_0 = arith.constant 0 : i32
    %c0_i32_1 = arith.constant 0 : i32
    return %c0_i32, %c0_i32_0 : i32, i32
  }
  func.func @transform_1(%arg0: i32) -> (i32, i32) {
    %c0_i32 = arith.constant 0 : i32
    %c0_i32_0 = arith.constant 0 : i32
    return %c0_i32, %arg0 : i32, i32
  }
  func.func @transform_2(%arg0: i32) -> (i32, i32) {
    %c0_i32 = arith.constant 0 : i32
    %c0_i32_0 = arith.constant 0 : i32
    %c0_i32_1 = arith.constant 0 : i32
    return %c0_i32, %c0_i32_0 : i32, i32
  }
  func.func @transform_3(%arg0: i32) -> (i32, i32) {
    %c0_i32 = arith.constant 0 : i32
    %c0_i32_0 = arith.constant 0 : i32
    return %c0_i32, %arg0 : i32, i32
  }
}

module attributes {stable_mosaic.version = 11 : i64} {
  func.func @_convT_kernel(%arg0: i32, %arg1: memref<16x128xbf16, #tpu.memory_space<vmem>>, %arg2: memref<128x256xbf16, #tpu.memory_space<vmem>>, %arg3: memref<16x1xf32, #tpu.memory_space<vmem>>, %arg4: memref<16x256xbf16, #tpu.memory_space<vmem>>) attributes {dimension_semantics = [#tpu.dimension_semantics<parallel>], iteration_bounds = array<i64: 2>, scalar_prefetch = 0 : i64, scratch_operands = 0 : i64, tpu.core_type = #tpu.core_type<tc>, window_params = [{pipeline_mode = #tpu.pipeline_mode<synchronous>, transform_indices = @transform_0, window_bounds = array<i64: 16, 128>}, {transform_indices = @transform_1, window_bounds = array<i64: 128, 256>}, {pipeline_mode = #tpu.pipeline_mode<synchronous>, transform_indices = @transform_2, window_bounds = array<i64: 16, 1>}, {transform_indices = @transform_3, window_bounds = array<i64: 16, 256>}]} {
    %c0 = arith.constant 0 : index
    %c0_0 = arith.constant 0 : index
    %0 = vector.load %arg1[%c0, %c0_0] : memref<16x128xbf16, #tpu.memory_space<vmem>>, vector<16x128xbf16>
    %c0_1 = arith.constant 0 : index
    %c0_2 = arith.constant 0 : index
    %1 = vector.load %arg2[%c0_1, %c0_2] : memref<128x256xbf16, #tpu.memory_space<vmem>>, vector<128x256xbf16>
    %cst = arith.constant dense<0.000000e+00> : vector<16x256xf32>
    %2 = tpu.matmul %0, %1, %cst {dimension_numbers = #tpu.dot_dimension_numbers<[1], [0], [0], [1], [0, 0, 1, 1], [], []>} : vector<16x128xbf16>, vector<128x256xbf16>, vector<16x256xf32> -> vector<16x256xf32>
    %c0_3 = arith.constant 0 : index
    %c0_4 = arith.constant 0 : index
    %3 = vector.load %arg3[%c0_3, %c0_4] : memref<16x1xf32, #tpu.memory_space<vmem>>, vector<16x1xf32>
    %4 = vector.broadcast %3 : vector<16x1xf32> to vector<16x256xf32>
    %5 = arith.addf %2, %4 : vector<16x256xf32>
    %cst_5 = arith.constant 0.000000e+00 : f32
    %6 = vector.broadcast %cst_5 : f32 to vector<16x256xf32>
    %7 = arith.cmpf ogt, %5, %6 : vector<16x256xf32>
    %cst_6 = arith.constant 1.000000e-01 : f32
    %8 = vector.broadcast %cst_6 : f32 to vector<16x256xf32>
    %9 = arith.mulf %8, %5 : vector<16x256xf32>
    %10 = arith.select %7, %5, %9 : vector<16x256xi1>, vector<16x256xf32>
    %11 = arith.truncf %10 : vector<16x256xf32> to vector<16x256xbf16>
    %c0_7 = arith.constant 0 : index
    %c0_8 = arith.constant 0 : index
    %12 = vector.load %arg4[%c0_7, %c0_8] : memref<16x256xbf16, #tpu.memory_space<vmem>>, vector<16x256xbf16>
    tpu.vector_store %arg4[%c0_7, %c0_8], %11 {strides = array<i32>} : memref<16x256xbf16, #tpu.memory_space<vmem>>, vector<16x256xbf16>,
    return
  }
  func.func @transform_0(%arg0: i32) -> (i32, i32) {
    %c0_i32 = arith.constant 0 : i32
    %c0_i32_0 = arith.constant 0 : i32
    %c0_i32_1 = arith.constant 0 : i32
    return %c0_i32, %c0_i32_0 : i32, i32
  }
  func.func @transform_1(%arg0: i32) -> (i32, i32) {
    %c0_i32 = arith.constant 0 : i32
    %c0_i32_0 = arith.constant 0 : i32
    return %c0_i32, %arg0 : i32, i32
  }
  func.func @transform_2(%arg0: i32) -> (i32, i32) {
    %c0_i32 = arith.constant 0 : i32
    %c0_i32_0 = arith.constant 0 : i32
    %c0_i32_1 = arith.constant 0 : i32
    return %c0_i32, %c0_i32_0 : i32, i32
  }
  func.func @transform_3(%arg0: i32) -> (i32, i32) {
    %c0_i32 = arith.constant 0 : i32
    %c0_i32_0 = arith.constant 0 : i32
    return %c0_i32, %arg0 : i32, i32
  }
}

module attributes {stable_mosaic.version = 11 : i64} {
  func.func @_tail_kernel(%arg0: i32, %arg1: memref<1xf32, #tpu.memory_space<smem>>, %arg2: memref<1xf32, #tpu.memory_space<smem>>, %arg3: memref<1xf32, #tpu.memory_space<smem>>, %arg4: memref<1x256x64xbf16, #tpu.memory_space<vmem>>, %arg5: memref<32x256xbf16, #tpu.memory_space<vmem>>, %arg6: memref<32x1xf32, #tpu.memory_space<vmem>>, %arg7: memref<4x32xf32, #tpu.memory_space<vmem>>, %arg8: memref<4x1xf32, #tpu.memory_space<vmem>>, %arg9: memref<4x32xf32, #tpu.memory_space<vmem>>, %arg10: memref<4x1xf32, #tpu.memory_space<vmem>>, %arg11: memref<32x32xf32, #tpu.memory_space<vmem>>, %arg12: memref<32x1xf32, #tpu.memory_space<vmem>>, %arg13: memref<16x64x16xf32, #tpu.memory_space<vmem>>, %arg14: memref<16x64x32xf32, #tpu.memory_space<vmem>>, %arg15: memref<64x1xf32, #tpu.memory_space<vmem>>, %arg16: memref<8x64xf32, #tpu.memory_space<vmem>>, %arg17: memref<8x1xf32, #tpu.memory_space<vmem>>, %arg18: memref<8x64xf32, #tpu.memory_space<vmem>>, %arg19: memref<8x1xf32, #tpu.memory_space<vmem>>, %arg20: memref<64x64xf32, #tpu.memory_space<vmem>>, %arg21: memref<64x1xf32, #tpu.memory_space<vmem>>, %arg22: memref<64x16xf32, #tpu.memory_space<vmem>>, %arg23: memref<1x1x128xf32, #tpu.memory_space<vmem>>) attributes {dimension_semantics = [#tpu.dimension_semantics<parallel>], iteration_bounds = array<i64: 2>, scalar_prefetch = 0 : i64, scratch_operands = 0 : i64, tpu.core_type = #tpu.core_type<tc>, window_params = [{transform_indices = @transform_0, window_bounds = array<i64: 1>}, {transform_indices = @transform_1, window_bounds = array<i64: 1>}, {transform_indices = @transform_2, window_bounds = array<i64: 1>}, {transform_indices = @transform_3, window_bounds = array<i64: 1, 256, 64>}, {pipeline_mode = #tpu.pipeline_mode<synchronous>, transform_indices = @transform_4, window_bounds = array<i64: 32, 256>}, {pipeline_mode = #tpu.pipeline_mode<synchronous>, transform_indices = @transform_5, window_bounds = array<i64: 32, 1>}, {pipeline_mode = #tpu.pipeline_mode<synchronous>, transform_indices = @transform_6, window_bounds = array<i64: 4, 32>}, {pipeline_mode = #tpu.pipeline_mode<synchronous>, transform_indices = @transform_7, window_bounds = array<i64: 4, 1>}, {pipeline_mode = #tpu.pipeline_mode<synchronous>, transform_indices = @transform_8, window_bounds = array<i64: 4, 32>}, {pipeline_mode = #tpu.pipeline_mode<synchronous>, transform_indices = @transform_9, window_bounds = array<i64: 4, 1>}, {pipeline_mode = #tpu.pipeline_mode<synchronous>, transform_indices = @transform_10, window_bounds = array<i64: 32, 32>}, {pipeline_mode = #tpu.pipeline_mode<synchronous>, transform_indices = @transform_11, window_bounds = array<i64: 32, 1>}, {pipeline_mode = #tpu.pipeline_mode<synchronous>, transform_indices = @transform_12, window_bounds = array<i64: 16, 64, 16>}, {pipeline_mode = #tpu.pipeline_mode<synchronous>, transform_indices = @transform_13, window_bounds = array<i64: 16, 64, 32>}, {pipeline_mode = #tpu.pipeline_mode<synchronous>, transform_indices = @transform_14, window_bounds = array<i64: 64, 1>}, {pipeline_mode = #tpu.pipeline_mode<synchronous>, transform_indices = @transform_15, window_bounds = array<i64: 8, 64>}, {pipeline_mode = #tpu.pipeline_mode<synchronous>, transform_indices = @transform_16, window_bounds = array<i64: 8, 1>}, {pipeline_mode = #tpu.pipeline_mode<synchronous>, transform_indices = @transform_17, window_bounds = array<i64: 8, 64>}, {pipeline_mode = #tpu.pipeline_mode<synchronous>, transform_indices = @transform_18, window_bounds = array<i64: 8, 1>}, {pipeline_mode = #tpu.pipeline_mode<synchronous>, transform_indices = @transform_19, window_bounds = array<i64: 64, 64>}, {pipeline_mode = #tpu.pipeline_mode<synchronous>, transform_indices = @transform_20, window_bounds = array<i64: 64, 1>}, {pipeline_mode = #tpu.pipeline_mode<synchronous>, transform_indices = @transform_21, window_bounds = array<i64: 64, 16>}, {transform_indices = @transform_22, window_bounds = array<i64: 1, 1, 128>}]} {
    %c0 = arith.constant 0 : index
    %c0_0 = arith.constant 0 : index
    %0 = vector.load %arg5[%c0, %c0_0] : memref<32x256xbf16, #tpu.memory_space<vmem>>, vector<32x256xbf16>
    %c0_1 = arith.constant 0 : index
    %c0_2 = arith.constant 0 : index
    %c0_3 = arith.constant 0 : index
    %1 = vector.load %arg4[%c0_1, %c0_2, %c0_3] : memref<1x256x64xbf16, #tpu.memory_space<vmem>>, vector<1x256x64xbf16>
    %2 = vector.shape_cast %1 : vector<1x256x64xbf16> to vector<256x64xbf16>
    %cst = arith.constant dense<0.000000e+00> : vector<32x64xf32>
    %3 = tpu.matmul %0, %2, %cst {dimension_numbers = #tpu.dot_dimension_numbers<[1], [0], [0], [1], [0, 0, 1, 1], [], []>} : vector<32x256xbf16>, vector<256x64xbf16>, vector<32x64xf32> -> vector<32x64xf32>
    %c0_4 = arith.constant 0 : index
    %c0_5 = arith.constant 0 : index
    %4 = vector.load %arg6[%c0_4, %c0_5] : memref<32x1xf32, #tpu.memory_space<vmem>>, vector<32x1xf32>
    %5 = vector.broadcast %4 : vector<32x1xf32> to vector<32x64xf32>
    %6 = arith.addf %3, %5 : vector<32x64xf32>
    %cst_6 = arith.constant 0.000000e+00 : f32
    %7 = vector.broadcast %cst_6 : f32 to vector<32x64xf32>
    %8 = arith.cmpf ogt, %6, %7 : vector<32x64xf32>
    %cst_7 = arith.constant 1.000000e-01 : f32
    %9 = vector.broadcast %cst_7 : f32 to vector<32x64xf32>
    %10 = arith.mulf %9, %6 : vector<32x64xf32>
    %11 = arith.select %8, %6, %10 : vector<32x64xi1>, vector<32x64xf32>
    %c0_8 = arith.constant 0 : index
    %c0_9 = arith.constant 0 : index
    %12 = vector.load %arg7[%c0_8, %c0_9] : memref<4x32xf32, #tpu.memory_space<vmem>>, vector<4x32xf32>
    %cst_10 = arith.constant dense<0.000000e+00> : vector<4x64xf32>
    %13 = tpu.matmul %12, %11, %cst_10 {dimension_numbers = #tpu.dot_dimension_numbers<[1], [0], [0], [1], [0, 0, 1, 1], [], []>} : vector<4x32xf32>, vector<32x64xf32>, vector<4x64xf32> -> vector<4x64xf32>
    %c0_11 = arith.constant 0 : index
    %c0_12 = arith.constant 0 : index
    %14 = vector.load %arg8[%c0_11, %c0_12] : memref<4x1xf32, #tpu.memory_space<vmem>>, vector<4x1xf32>
    %15 = vector.broadcast %14 : vector<4x1xf32> to vector<4x64xf32>
    %16 = arith.addf %13, %15 : vector<4x64xf32>
    %c0_13 = arith.constant 0 : index
    %c0_14 = arith.constant 0 : index
    %17 = vector.load %arg9[%c0_13, %c0_14] : memref<4x32xf32, #tpu.memory_space<vmem>>, vector<4x32xf32>
    %cst_15 = arith.constant dense<0.000000e+00> : vector<4x64xf32>
    %18 = tpu.matmul %17, %11, %cst_15 {dimension_numbers = #tpu.dot_dimension_numbers<[1], [0], [0], [1], [0, 0, 1, 1], [], []>} : vector<4x32xf32>, vector<32x64xf32>, vector<4x64xf32> -> vector<4x64xf32>
    %c0_16 = arith.constant 0 : index
    %c0_17 = arith.constant 0 : index
    %19 = vector.load %arg10[%c0_16, %c0_17] : memref<4x1xf32, #tpu.memory_space<vmem>>, vector<4x1xf32>
    %20 = vector.broadcast %19 : vector<4x1xf32> to vector<4x64xf32>
    %21 = arith.addf %18, %20 : vector<4x64xf32>
    %c0_18 = arith.constant 0 : index
    %c0_19 = arith.constant 0 : index
    %22 = vector.load %arg11[%c0_18, %c0_19] : memref<32x32xf32, #tpu.memory_space<vmem>>, vector<32x32xf32>
    %cst_20 = arith.constant dense<0.000000e+00> : vector<32x64xf32>
    %23 = tpu.matmul %22, %11, %cst_20 {dimension_numbers = #tpu.dot_dimension_numbers<[1], [0], [0], [1], [0, 0, 1, 1], [], []>} : vector<32x32xf32>, vector<32x64xf32>, vector<32x64xf32> -> vector<32x64xf32>
    %c0_21 = arith.constant 0 : index
    %c0_22 = arith.constant 0 : index
    %24 = vector.load %arg12[%c0_21, %c0_22] : memref<32x1xf32, #tpu.memory_space<vmem>>, vector<32x1xf32>
    %25 = vector.broadcast %24 : vector<32x1xf32> to vector<32x64xf32>
    %26 = arith.addf %23, %25 : vector<32x64xf32>
    %c0_23 = arith.constant 0 : index
    %27 = memref.load %arg1[%c0_23] : memref<1xf32, #tpu.memory_space<smem>>
    %cst_24 = arith.constant dense<0.000000e+00> : vector<64x64xf32>
    %28 = tpu.matmul %16, %21, %cst_24 {dimension_numbers = #tpu.dot_dimension_numbers<[0], [0], [1], [1], [0, 1, 1, 1], [], []>} : vector<4x64xf32>, vector<4x64xf32>, vector<64x64xf32> -> vector<64x64xf32>
    %cst_25 = arith.constant dense<0xFF800000> : vector<64xf32>
    %29 = vector.multi_reduction <maximumf>, %28, %cst_25 [1] : vector<64x64xf32> to vector<64xf32>
    %30 = vector.shape_cast %29 : vector<64xf32> to vector<64x1xf32>
    %31 = vector.broadcast %30 : vector<64x1xf32> to vector<64x64xf32>
    %32 = arith.subf %28, %31 : vector<64x64xf32>
    %33 = math.exp %32 : vector<64x64xf32>
    %cst_26 = arith.constant dense<0.000000e+00> : vector<64xf32>
    %34 = vector.multi_reduction <add>, %33, %cst_26 [1] : vector<64x64xf32> to vector<64xf32>
    %35 = vector.shape_cast %34 : vector<64xf32> to vector<64x1xf32>
    %36 = tpu.reciprocal %35 {approx = true} : vector<64x1xf32> -> vector<64x1xf32>
    %37 = vector.broadcast %36 : vector<64x1xf32> to vector<64x64xf32>
    %38 = arith.mulf %33, %37 : vector<64x64xf32>
    %cst_27 = arith.constant dense<0.000000e+00> : vector<32x64xf32>
    %39 = tpu.matmul %26, %38, %cst_27 {dimension_numbers = #tpu.dot_dimension_numbers<[1], [1], [0], [0], [0, 0, 1, 0], [], []>} : vector<32x64xf32>, vector<64x64xf32>, vector<32x64xf32> -> vector<32x64xf32>
    %40 = vector.broadcast %27 : f32 to vector<32x64xf32>
    %41 = arith.mulf %40, %39 : vector<32x64xf32>
    %42 = arith.addf %41, %11 : vector<32x64xf32>
    %cst_28 = arith.constant 0.000000e+00 : f32
    %43 = vector.broadcast %cst_28 : f32 to vector<64x16xf32>
    %c0_29 = arith.constant 0 : index
    %c0_30 = arith.constant 0 : index
    %c0_31 = arith.constant 0 : index
    %44 = vector.load %arg13[%c0_29, %c0_30, %c0_31] : memref<16x64x16xf32, #tpu.memory_space<vmem>>, vector<1x64x16xf32>
    %45 = vector.shape_cast %44 : vector<1x64x16xf32> to vector<64x16xf32>
    %cst_32 = arith.constant dense<0.000000e+00> : vector<32x16xf32>
    %46 = tpu.matmul %42, %45, %cst_32 {dimension_numbers = #tpu.dot_dimension_numbers<[1], [0], [0], [1], [0, 0, 1, 1], [], []>} : vector<32x64xf32>, vector<64x16xf32>, vector<32x16xf32> -> vector<32x16xf32>
    %c0_33 = arith.constant 0 : index
    %c0_34 = arith.constant 0 : index
    %c0_35 = arith.constant 0 : index
    %47 = vector.load %arg14[%c0_33, %c0_34, %c0_35] : memref<16x64x32xf32, #tpu.memory_space<vmem>>, vector<1x64x32xf32>
    %48 = vector.shape_cast %47 : vector<1x64x32xf32> to vector<64x32xf32>
    %cst_36 = arith.constant dense<0.000000e+00> : vector<64x16xf32>
    %49 = tpu.matmul %48, %46, %cst_36 {dimension_numbers = #tpu.dot_dimension_numbers<[1], [0], [0], [1], [0, 0, 1, 1], [], []>} : vector<64x32xf32>, vector<32x16xf32>, vector<64x16xf32> -> vector<64x16xf32>
    %50 = arith.addf %43, %49 : vector<64x16xf32>
    %c1 = arith.constant 1 : index
    %c0_37 = arith.constant 0 : index
    %c0_38 = arith.constant 0 : index
    %51 = vector.load %arg13[%c1, %c0_37, %c0_38] : memref<16x64x16xf32, #tpu.memory_space<vmem>>, vector<1x64x16xf32>
    %52 = vector.shape_cast %51 : vector<1x64x16xf32> to vector<64x16xf32>
    %cst_39 = arith.constant dense<0.000000e+00> : vector<32x16xf32>
    %53 = tpu.matmul %42, %52, %cst_39 {dimension_numbers = #tpu.dot_dimension_numbers<[1], [0], [0], [1], [0, 0, 1, 1], [], []>} : vector<32x64xf32>, vector<64x16xf32>, vector<32x16xf32> -> vector<32x16xf32>
    %c1_40 = arith.constant 1 : index
    %c0_41 = arith.constant 0 : index
    %c0_42 = arith.constant 0 : index
    %54 = vector.load %arg14[%c1_40, %c0_41, %c0_42] : memref<16x64x32xf32, #tpu.memory_space<vmem>>, vector<1x64x32xf32>
    %55 = vector.shape_cast %54 : vector<1x64x32xf32> to vector<64x32xf32>
    %cst_43 = arith.constant dense<0.000000e+00> : vector<64x16xf32>
    %56 = tpu.matmul %55, %53, %cst_43 {dimension_numbers = #tpu.dot_dimension_numbers<[1], [0], [0], [1], [0, 0, 1, 1], [], []>} : vector<64x32xf32>, vector<32x16xf32>, vector<64x16xf32> -> vector<64x16xf32>
    %57 = arith.addf %50, %56 : vector<64x16xf32>
    %c2 = arith.constant 2 : index
    %c0_44 = arith.constant 0 : index
    %c0_45 = arith.constant 0 : index
    %58 = vector.load %arg13[%c2, %c0_44, %c0_45] : memref<16x64x16xf32, #tpu.memory_space<vmem>>, vector<1x64x16xf32>
    %59 = vector.shape_cast %58 : vector<1x64x16xf32> to vector<64x16xf32>
    %cst_46 = arith.constant dense<0.000000e+00> : vector<32x16xf32>
    %60 = tpu.matmul %42, %59, %cst_46 {dimension_numbers = #tpu.dot_dimension_numbers<[1], [0], [0], [1], [0, 0, 1, 1], [], []>} : vector<32x64xf32>, vector<64x16xf32>, vector<32x16xf32> -> vector<32x16xf32>
    %c2_47 = arith.constant 2 : index
    %c0_48 = arith.constant 0 : index
    %c0_49 = arith.constant 0 : index
    %61 = vector.load %arg14[%c2_47, %c0_48, %c0_49] : memref<16x64x32xf32, #tpu.memory_space<vmem>>, vector<1x64x32xf32>
    %62 = vector.shape_cast %61 : vector<1x64x32xf32> to vector<64x32xf32>
    %cst_50 = arith.constant dense<0.000000e+00> : vector<64x16xf32>
    %63 = tpu.matmul %62, %60, %cst_50 {dimension_numbers = #tpu.dot_dimension_numbers<[1], [0], [0], [1], [0, 0, 1, 1], [], []>} : vector<64x32xf32>, vector<32x16xf32>, vector<64x16xf32> -> vector<64x16xf32>
    %64 = arith.addf %57, %63 : vector<64x16xf32>
    %c3 = arith.constant 3 : index
    %c0_51 = arith.constant 0 : index
    %c0_52 = arith.constant 0 : index
    %65 = vector.load %arg13[%c3, %c0_51, %c0_52] : memref<16x64x16xf32, #tpu.memory_space<vmem>>, vector<1x64x16xf32>
    %66 = vector.shape_cast %65 : vector<1x64x16xf32> to vector<64x16xf32>
    %cst_53 = arith.constant dense<0.000000e+00> : vector<32x16xf32>
    %67 = tpu.matmul %42, %66, %cst_53 {dimension_numbers = #tpu.dot_dimension_numbers<[1], [0], [0], [1], [0, 0, 1, 1], [], []>} : vector<32x64xf32>, vector<64x16xf32>, vector<32x16xf32> -> vector<32x16xf32>
    %c3_54 = arith.constant 3 : index
    %c0_55 = arith.constant 0 : index
    %c0_56 = arith.constant 0 : index
    %68 = vector.load %arg14[%c3_54, %c0_55, %c0_56] : memref<16x64x32xf32, #tpu.memory_space<vmem>>, vector<1x64x32xf32>
    %69 = vector.shape_cast %68 : vector<1x64x32xf32> to vector<64x32xf32>
    %cst_57 = arith.constant dense<0.000000e+00> : vector<64x16xf32>
    %70 = tpu.matmul %69, %67, %cst_57 {dimension_numbers = #tpu.dot_dimension_numbers<[1], [0], [0], [1], [0, 0, 1, 1], [], []>} : vector<64x32xf32>, vector<32x16xf32>, vector<64x16xf32> -> vector<64x16xf32>
    %71 = arith.addf %64, %70 : vector<64x16xf32>
    %c4 = arith.constant 4 : index
    %c0_58 = arith.constant 0 : index
    %c0_59 = arith.constant 0 : index
    %72 = vector.load %arg13[%c4, %c0_58, %c0_59] : memref<16x64x16xf32, #tpu.memory_space<vmem>>, vector<1x64x16xf32>
    %73 = vector.shape_cast %72 : vector<1x64x16xf32> to vector<64x16xf32>
    %cst_60 = arith.constant dense<0.000000e+00> : vector<32x16xf32>
    %74 = tpu.matmul %42, %73, %cst_60 {dimension_numbers = #tpu.dot_dimension_numbers<[1], [0], [0], [1], [0, 0, 1, 1], [], []>} : vector<32x64xf32>, vector<64x16xf32>, vector<32x16xf32> -> vector<32x16xf32>
    %c4_61 = arith.constant 4 : index
    %c0_62 = arith.constant 0 : index
    %c0_63 = arith.constant 0 : index
    %75 = vector.load %arg14[%c4_61, %c0_62, %c0_63] : memref<16x64x32xf32, #tpu.memory_space<vmem>>, vector<1x64x32xf32>
    %76 = vector.shape_cast %75 : vector<1x64x32xf32> to vector<64x32xf32>
    %cst_64 = arith.constant dense<0.000000e+00> : vector<64x16xf32>
    %77 = tpu.matmul %76, %74, %cst_64 {dimension_numbers = #tpu.dot_dimension_numbers<[1], [0], [0], [1], [0, 0, 1, 1], [], []>} : vector<64x32xf32>, vector<32x16xf32>, vector<64x16xf32> -> vector<64x16xf32>
    %78 = arith.addf %71, %77 : vector<64x16xf32>
    %c5 = arith.constant 5 : index
    %c0_65 = arith.constant 0 : index
    %c0_66 = arith.constant 0 : index
    %79 = vector.load %arg13[%c5, %c0_65, %c0_66] : memref<16x64x16xf32, #tpu.memory_space<vmem>>, vector<1x64x16xf32>
    %80 = vector.shape_cast %79 : vector<1x64x16xf32> to vector<64x16xf32>
    %cst_67 = arith.constant dense<0.000000e+00> : vector<32x16xf32>
    %81 = tpu.matmul %42, %80, %cst_67 {dimension_numbers = #tpu.dot_dimension_numbers<[1], [0], [0], [1], [0, 0, 1, 1], [], []>} : vector<32x64xf32>, vector<64x16xf32>, vector<32x16xf32> -> vector<32x16xf32>
    %c5_68 = arith.constant 5 : index
    %c0_69 = arith.constant 0 : index
    %c0_70 = arith.constant 0 : index
    %82 = vector.load %arg14[%c5_68, %c0_69, %c0_70] : memref<16x64x32xf32, #tpu.memory_space<vmem>>, vector<1x64x32xf32>
    %83 = vector.shape_cast %82 : vector<1x64x32xf32> to vector<64x32xf32>
    %cst_71 = arith.constant dense<0.000000e+00> : vector<64x16xf32>
    %84 = tpu.matmul %83, %81, %cst_71 {dimension_numbers = #tpu.dot_dimension_numbers<[1], [0], [0], [1], [0, 0, 1, 1], [], []>} : vector<64x32xf32>, vector<32x16xf32>, vector<64x16xf32> -> vector<64x16xf32>
    %85 = arith.addf %78, %84 : vector<64x16xf32>
    %c6 = arith.constant 6 : index
    %c0_72 = arith.constant 0 : index
    %c0_73 = arith.constant 0 : index
    %86 = vector.load %arg13[%c6, %c0_72, %c0_73] : memref<16x64x16xf32, #tpu.memory_space<vmem>>, vector<1x64x16xf32>
    %87 = vector.shape_cast %86 : vector<1x64x16xf32> to vector<64x16xf32>
    %cst_74 = arith.constant dense<0.000000e+00> : vector<32x16xf32>
    %88 = tpu.matmul %42, %87, %cst_74 {dimension_numbers = #tpu.dot_dimension_numbers<[1], [0], [0], [1], [0, 0, 1, 1], [], []>} : vector<32x64xf32>, vector<64x16xf32>, vector<32x16xf32> -> vector<32x16xf32>
    %c6_75 = arith.constant 6 : index
    %c0_76 = arith.constant 0 : index
    %c0_77 = arith.constant 0 : index
    %89 = vector.load %arg14[%c6_75, %c0_76, %c0_77] : memref<16x64x32xf32, #tpu.memory_space<vmem>>, vector<1x64x32xf32>
    %90 = vector.shape_cast %89 : vector<1x64x32xf32> to vector<64x32xf32>
    %cst_78 = arith.constant dense<0.000000e+00> : vector<64x16xf32>
    %91 = tpu.matmul %90, %88, %cst_78 {dimension_numbers = #tpu.dot_dimension_numbers<[1], [0], [0], [1], [0, 0, 1, 1], [], []>} : vector<64x32xf32>, vector<32x16xf32>, vector<64x16xf32> -> vector<64x16xf32>
    %92 = arith.addf %85, %91 : vector<64x16xf32>
    %c7 = arith.constant 7 : index
    %c0_79 = arith.constant 0 : index
    %c0_80 = arith.constant 0 : index
    %93 = vector.load %arg13[%c7, %c0_79, %c0_80] : memref<16x64x16xf32, #tpu.memory_space<vmem>>, vector<1x64x16xf32>
    %94 = vector.shape_cast %93 : vector<1x64x16xf32> to vector<64x16xf32>
    %cst_81 = arith.constant dense<0.000000e+00> : vector<32x16xf32>
    %95 = tpu.matmul %42, %94, %cst_81 {dimension_numbers = #tpu.dot_dimension_numbers<[1], [0], [0], [1], [0, 0, 1, 1], [], []>} : vector<32x64xf32>, vector<64x16xf32>, vector<32x16xf32> -> vector<32x16xf32>
    %c7_82 = arith.constant 7 : index
    %c0_83 = arith.constant 0 : index
    %c0_84 = arith.constant 0 : index
    %96 = vector.load %arg14[%c7_82, %c0_83, %c0_84] : memref<16x64x32xf32, #tpu.memory_space<vmem>>, vector<1x64x32xf32>
    %97 = vector.shape_cast %96 : vector<1x64x32xf32> to vector<64x32xf32>
    %cst_85 = arith.constant dense<0.000000e+00> : vector<64x16xf32>
    %98 = tpu.matmul %97, %95, %cst_85 {dimension_numbers = #tpu.dot_dimension_numbers<[1], [0], [0], [1], [0, 0, 1, 1], [], []>} : vector<64x32xf32>, vector<32x16xf32>, vector<64x16xf32> -> vector<64x16xf32>
    %99 = arith.addf %92, %98 : vector<64x16xf32>
    %c8 = arith.constant 8 : index
    %c0_86 = arith.constant 0 : index
    %c0_87 = arith.constant 0 : index
    %100 = vector.load %arg13[%c8, %c0_86, %c0_87] : memref<16x64x16xf32, #tpu.memory_space<vmem>>, vector<1x64x16xf32>
    %101 = vector.shape_cast %100 : vector<1x64x16xf32> to vector<64x16xf32>
    %cst_88 = arith.constant dense<0.000000e+00> : vector<32x16xf32>
    %102 = tpu.matmul %42, %101, %cst_88 {dimension_numbers = #tpu.dot_dimension_numbers<[1], [0], [0], [1], [0, 0, 1, 1], [], []>} : vector<32x64xf32>, vector<64x16xf32>, vector<32x16xf32> -> vector<32x16xf32>
    %c8_89 = arith.constant 8 : index
    %c0_90 = arith.constant 0 : index
    %c0_91 = arith.constant 0 : index
    %103 = vector.load %arg14[%c8_89, %c0_90, %c0_91] : memref<16x64x32xf32, #tpu.memory_space<vmem>>, vector<1x64x32xf32>
    %104 = vector.shape_cast %103 : vector<1x64x32xf32> to vector<64x32xf32>
    %cst_92 = arith.constant dense<0.000000e+00> : vector<64x16xf32>
    %105 = tpu.matmul %104, %102, %cst_92 {dimension_numbers = #tpu.dot_dimension_numbers<[1], [0], [0], [1], [0, 0, 1, 1], [], []>} : vector<64x32xf32>, vector<32x16xf32>, vector<64x16xf32> -> vector<64x16xf32>
    %106 = arith.addf %99, %105 : vector<64x16xf32>
    %c9 = arith.constant 9 : index
    %c0_93 = arith.constant 0 : index
    %c0_94 = arith.constant 0 : index
    %107 = vector.load %arg13[%c9, %c0_93, %c0_94] : memref<16x64x16xf32, #tpu.memory_space<vmem>>, vector<1x64x16xf32>
    %108 = vector.shape_cast %107 : vector<1x64x16xf32> to vector<64x16xf32>
    %cst_95 = arith.constant dense<0.000000e+00> : vector<32x16xf32>
    %109 = tpu.matmul %42, %108, %cst_95 {dimension_numbers = #tpu.dot_dimension_numbers<[1], [0], [0], [1], [0, 0, 1, 1], [], []>} : vector<32x64xf32>, vector<64x16xf32>, vector<32x16xf32> -> vector<32x16xf32>
    %c9_96 = arith.constant 9 : index
    %c0_97 = arith.constant 0 : index
    %c0_98 = arith.constant 0 : index
    %110 = vector.load %arg14[%c9_96, %c0_97, %c0_98] : memref<16x64x32xf32, #tpu.memory_space<vmem>>, vector<1x64x32xf32>
    %111 = vector.shape_cast %110 : vector<1x64x32xf32> to vector<64x32xf32>
    %cst_99 = arith.constant dense<0.000000e+00> : vector<64x16xf32>
    %112 = tpu.matmul %111, %109, %cst_99 {dimension_numbers = #tpu.dot_dimension_numbers<[1], [0], [0], [1], [0, 0, 1, 1], [], []>} : vector<64x32xf32>, vector<32x16xf32>, vector<64x16xf32> -> vector<64x16xf32>
    %113 = arith.addf %106, %112 : vector<64x16xf32>
    %c10 = arith.constant 10 : index
    %c0_100 = arith.constant 0 : index
    %c0_101 = arith.constant 0 : index
    %114 = vector.load %arg13[%c10, %c0_100, %c0_101] : memref<16x64x16xf32, #tpu.memory_space<vmem>>, vector<1x64x16xf32>
    %115 = vector.shape_cast %114 : vector<1x64x16xf32> to vector<64x16xf32>
    %cst_102 = arith.constant dense<0.000000e+00> : vector<32x16xf32>
    %116 = tpu.matmul %42, %115, %cst_102 {dimension_numbers = #tpu.dot_dimension_numbers<[1], [0], [0], [1], [0, 0, 1, 1], [], []>} : vector<32x64xf32>, vector<64x16xf32>, vector<32x16xf32> -> vector<32x16xf32>
    %c10_103 = arith.constant 10 : index
    %c0_104 = arith.constant 0 : index
    %c0_105 = arith.constant 0 : index
    %117 = vector.load %arg14[%c10_103, %c0_104, %c0_105] : memref<16x64x32xf32, #tpu.memory_space<vmem>>, vector<1x64x32xf32>
    %118 = vector.shape_cast %117 : vector<1x64x32xf32> to vector<64x32xf32>
    %cst_106 = arith.constant dense<0.000000e+00> : vector<64x16xf32>
    %119 = tpu.matmul %118, %116, %cst_106 {dimension_numbers = #tpu.dot_dimension_numbers<[1], [0], [0], [1], [0, 0, 1, 1], [], []>} : vector<64x32xf32>, vector<32x16xf32>, vector<64x16xf32> -> vector<64x16xf32>
    %120 = arith.addf %113, %119 : vector<64x16xf32>
    %c11 = arith.constant 11 : index
    %c0_107 = arith.constant 0 : index
    %c0_108 = arith.constant 0 : index
    %121 = vector.load %arg13[%c11, %c0_107, %c0_108] : memref<16x64x16xf32, #tpu.memory_space<vmem>>, vector<1x64x16xf32>
    %122 = vector.shape_cast %121 : vector<1x64x16xf32> to vector<64x16xf32>
    %cst_109 = arith.constant dense<0.000000e+00> : vector<32x16xf32>
    %123 = tpu.matmul %42, %122, %cst_109 {dimension_numbers = #tpu.dot_dimension_numbers<[1], [0], [0], [1], [0, 0, 1, 1], [], []>} : vector<32x64xf32>, vector<64x16xf32>, vector<32x16xf32> -> vector<32x16xf32>
    %c11_110 = arith.constant 11 : index
    %c0_111 = arith.constant 0 : index
    %c0_112 = arith.constant 0 : index
    %124 = vector.load %arg14[%c11_110, %c0_111, %c0_112] : memref<16x64x32xf32, #tpu.memory_space<vmem>>, vector<1x64x32xf32>
    %125 = vector.shape_cast %124 : vector<1x64x32xf32> to vector<64x32xf32>
    %cst_113 = arith.constant dense<0.000000e+00> : vector<64x16xf32>
    %126 = tpu.matmul %125, %123, %cst_113 {dimension_numbers = #tpu.dot_dimension_numbers<[1], [0], [0], [1], [0, 0, 1, 1], [], []>} : vector<64x32xf32>, vector<32x16xf32>, vector<64x16xf32> -> vector<64x16xf32>
    %127 = arith.addf %120, %126 : vector<64x16xf32>
    %c12 = arith.constant 12 : index
    %c0_114 = arith.constant 0 : index
    %c0_115 = arith.constant 0 : index
    %128 = vector.load %arg13[%c12, %c0_114, %c0_115] : memref<16x64x16xf32, #tpu.memory_space<vmem>>, vector<1x64x16xf32>
    %129 = vector.shape_cast %128 : vector<1x64x16xf32> to vector<64x16xf32>
    %cst_116 = arith.constant dense<0.000000e+00> : vector<32x16xf32>
    %130 = tpu.matmul %42, %129, %cst_116 {dimension_numbers = #tpu.dot_dimension_numbers<[1], [0], [0], [1], [0, 0, 1, 1], [], []>} : vector<32x64xf32>, vector<64x16xf32>, vector<32x16xf32> -> vector<32x16xf32>
    %c12_117 = arith.constant 12 : index
    %c0_118 = arith.constant 0 : index
    %c0_119 = arith.constant 0 : index
    %131 = vector.load %arg14[%c12_117, %c0_118, %c0_119] : memref<16x64x32xf32, #tpu.memory_space<vmem>>, vector<1x64x32xf32>
    %132 = vector.shape_cast %131 : vector<1x64x32xf32> to vector<64x32xf32>
    %cst_120 = arith.constant dense<0.000000e+00> : vector<64x16xf32>
    %133 = tpu.matmul %132, %130, %cst_120 {dimension_numbers = #tpu.dot_dimension_numbers<[1], [0], [0], [1], [0, 0, 1, 1], [], []>} : vector<64x32xf32>, vector<32x16xf32>, vector<64x16xf32> -> vector<64x16xf32>
    %134 = arith.addf %127, %133 : vector<64x16xf32>
    %c13 = arith.constant 13 : index
    %c0_121 = arith.constant 0 : index
    %c0_122 = arith.constant 0 : index
    %135 = vector.load %arg13[%c13, %c0_121, %c0_122] : memref<16x64x16xf32, #tpu.memory_space<vmem>>, vector<1x64x16xf32>
    %136 = vector.shape_cast %135 : vector<1x64x16xf32> to vector<64x16xf32>
    %cst_123 = arith.constant dense<0.000000e+00> : vector<32x16xf32>
    %137 = tpu.matmul %42, %136, %cst_123 {dimension_numbers = #tpu.dot_dimension_numbers<[1], [0], [0], [1], [0, 0, 1, 1], [], []>} : vector<32x64xf32>, vector<64x16xf32>, vector<32x16xf32> -> vector<32x16xf32>
    %c13_124 = arith.constant 13 : index
    %c0_125 = arith.constant 0 : index
    %c0_126 = arith.constant 0 : index
    %138 = vector.load %arg14[%c13_124, %c0_125, %c0_126] : memref<16x64x32xf32, #tpu.memory_space<vmem>>, vector<1x64x32xf32>
    %139 = vector.shape_cast %138 : vector<1x64x32xf32> to vector<64x32xf32>
    %cst_127 = arith.constant dense<0.000000e+00> : vector<64x16xf32>
    %140 = tpu.matmul %139, %137, %cst_127 {dimension_numbers = #tpu.dot_dimension_numbers<[1], [0], [0], [1], [0, 0, 1, 1], [], []>} : vector<64x32xf32>, vector<32x16xf32>, vector<64x16xf32> -> vector<64x16xf32>
    %141 = arith.addf %134, %140 : vector<64x16xf32>
    %c14 = arith.constant 14 : index
    %c0_128 = arith.constant 0 : index
    %c0_129 = arith.constant 0 : index
    %142 = vector.load %arg13[%c14, %c0_128, %c0_129] : memref<16x64x16xf32, #tpu.memory_space<vmem>>, vector<1x64x16xf32>
    %143 = vector.shape_cast %142 : vector<1x64x16xf32> to vector<64x16xf32>
    %cst_130 = arith.constant dense<0.000000e+00> : vector<32x16xf32>
    %144 = tpu.matmul %42, %143, %cst_130 {dimension_numbers = #tpu.dot_dimension_numbers<[1], [0], [0], [1], [0, 0, 1, 1], [], []>} : vector<32x64xf32>, vector<64x16xf32>, vector<32x16xf32> -> vector<32x16xf32>
    %c14_131 = arith.constant 14 : index
    %c0_132 = arith.constant 0 : index
    %c0_133 = arith.constant 0 : index
    %145 = vector.load %arg14[%c14_131, %c0_132, %c0_133] : memref<16x64x32xf32, #tpu.memory_space<vmem>>, vector<1x64x32xf32>
    %146 = vector.shape_cast %145 : vector<1x64x32xf32> to vector<64x32xf32>
    %cst_134 = arith.constant dense<0.000000e+00> : vector<64x16xf32>
    %147 = tpu.matmul %146, %144, %cst_134 {dimension_numbers = #tpu.dot_dimension_numbers<[1], [0], [0], [1], [0, 0, 1, 1], [], []>} : vector<64x32xf32>, vector<32x16xf32>, vector<64x16xf32> -> vector<64x16xf32>
    %148 = arith.addf %141, %147 : vector<64x16xf32>
    %c15 = arith.constant 15 : index
    %c0_135 = arith.constant 0 : index
    %c0_136 = arith.constant 0 : index
    %149 = vector.load %arg13[%c15, %c0_135, %c0_136] : memref<16x64x16xf32, #tpu.memory_space<vmem>>, vector<1x64x16xf32>
    %150 = vector.shape_cast %149 : vector<1x64x16xf32> to vector<64x16xf32>
    %cst_137 = arith.constant dense<0.000000e+00> : vector<32x16xf32>
    %151 = tpu.matmul %42, %150, %cst_137 {dimension_numbers = #tpu.dot_dimension_numbers<[1], [0], [0], [1], [0, 0, 1, 1], [], []>} : vector<32x64xf32>, vector<64x16xf32>, vector<32x16xf32> -> vector<32x16xf32>
    %c15_138 = arith.constant 15 : index
    %c0_139 = arith.constant 0 : index
    %c0_140 = arith.constant 0 : index
    %152 = vector.load %arg14[%c15_138, %c0_139, %c0_140] : memref<16x64x32xf32, #tpu.memory_space<vmem>>, vector<1x64x32xf32>
    %153 = vector.shape_cast %152 : vector<1x64x32xf32> to vector<64x32xf32>
    %cst_141 = arith.constant dense<0.000000e+00> : vector<64x16xf32>
    %154 = tpu.matmul %153, %151, %cst_141 {dimension_numbers = #tpu.dot_dimension_numbers<[1], [0], [0], [1], [0, 0, 1, 1], [], []>} : vector<64x32xf32>, vector<32x16xf32>, vector<64x16xf32> -> vector<64x16xf32>
    %155 = arith.addf %148, %154 : vector<64x16xf32>
    %c0_142 = arith.constant 0 : index
    %c0_143 = arith.constant 0 : index
    %156 = vector.load %arg15[%c0_142, %c0_143] : memref<64x1xf32, #tpu.memory_space<vmem>>, vector<64x1xf32>
    %157 = vector.broadcast %156 : vector<64x1xf32> to vector<64x16xf32>
    %158 = arith.addf %155, %157 : vector<64x16xf32>
    %cst_144 = arith.constant 0.000000e+00 : f32
    %159 = vector.broadcast %cst_144 : f32 to vector<64x16xf32>
    %160 = arith.cmpf ogt, %158, %159 : vector<64x16xf32>
    %cst_145 = arith.constant 1.000000e-01 : f32
    %161 = vector.broadcast %cst_145 : f32 to vector<64x16xf32>
    %162 = arith.mulf %161, %158 : vector<64x16xf32>
    %163 = arith.select %160, %158, %162 : vector<64x16xi1>, vector<64x16xf32>
    %c0_146 = arith.constant 0 : index
    %c0_147 = arith.constant 0 : index
    %164 = vector.load %arg16[%c0_146, %c0_147] : memref<8x64xf32, #tpu.memory_space<vmem>>, vector<8x64xf32>
    %cst_148 = arith.constant dense<0.000000e+00> : vector<8x16xf32>
    %165 = tpu.matmul %164, %163, %cst_148 {dimension_numbers = #tpu.dot_dimension_numbers<[1], [0], [0], [1], [0, 0, 1, 1], [], []>} : vector<8x64xf32>, vector<64x16xf32>, vector<8x16xf32> -> vector<8x16xf32>
    %c0_149 = arith.constant 0 : index
    %c0_150 = arith.constant 0 : index
    %166 = vector.load %arg17[%c0_149, %c0_150] : memref<8x1xf32, #tpu.memory_space<vmem>>, vector<8x1xf32>
    %167 = vector.broadcast %166 : vector<8x1xf32> to vector<8x16xf32>
    %168 = arith.addf %165, %167 : vector<8x16xf32>
    %c0_151 = arith.constant 0 : index
    %c0_152 = arith.constant 0 : index
    %169 = vector.load %arg18[%c0_151, %c0_152] : memref<8x64xf32, #tpu.memory_space<vmem>>, vector<8x64xf32>
    %cst_153 = arith.constant dense<0.000000e+00> : vector<8x16xf32>
    %170 = tpu.matmul %169, %163, %cst_153 {dimension_numbers = #tpu.dot_dimension_numbers<[1], [0], [0], [1], [0, 0, 1, 1], [], []>} : vector<8x64xf32>, vector<64x16xf32>, vector<8x16xf32> -> vector<8x16xf32>
    %c0_154 = arith.constant 0 : index
    %c0_155 = arith.constant 0 : index
    %171 = vector.load %arg19[%c0_154, %c0_155] : memref<8x1xf32, #tpu.memory_space<vmem>>, vector<8x1xf32>
    %172 = vector.broadcast %171 : vector<8x1xf32> to vector<8x16xf32>
    %173 = arith.addf %170, %172 : vector<8x16xf32>
    %c0_156 = arith.constant 0 : index
    %c0_157 = arith.constant 0 : index
    %174 = vector.load %arg20[%c0_156, %c0_157] : memref<64x64xf32, #tpu.memory_space<vmem>>, vector<64x64xf32>
    %cst_158 = arith.constant dense<0.000000e+00> : vector<64x16xf32>
    %175 = tpu.matmul %174, %163, %cst_158 {dimension_numbers = #tpu.dot_dimension_numbers<[1], [0], [0], [1], [0, 0, 1, 1], [], []>} : vector<64x64xf32>, vector<64x16xf32>, vector<64x16xf32> -> vector<64x16xf32>
    %c0_159 = arith.constant 0 : index
    %c0_160 = arith.constant 0 : index
    %176 = vector.load %arg21[%c0_159, %c0_160] : memref<64x1xf32, #tpu.memory_space<vmem>>, vector<64x1xf32>
    %177 = vector.broadcast %176 : vector<64x1xf32> to vector<64x16xf32>
    %178 = arith.addf %175, %177 : vector<64x16xf32>
    %c0_161 = arith.constant 0 : index
    %179 = memref.load %arg2[%c0_161] : memref<1xf32, #tpu.memory_space<smem>>
    %cst_162 = arith.constant dense<0.000000e+00> : vector<16x16xf32>
    %180 = tpu.matmul %168, %173, %cst_162 {dimension_numbers = #tpu.dot_dimension_numbers<[0], [0], [1], [1], [0, 1, 1, 1], [], []>} : vector<8x16xf32>, vector<8x16xf32>, vector<16x16xf32> -> vector<16x16xf32>
    %cst_163 = arith.constant dense<0xFF800000> : vector<16xf32>
    %181 = vector.multi_reduction <maximumf>, %180, %cst_163 [1] : vector<16x16xf32> to vector<16xf32>
    %182 = vector.shape_cast %181 : vector<16xf32> to vector<16x1xf32>
    %183 = vector.broadcast %182 : vector<16x1xf32> to vector<16x16xf32>
    %184 = arith.subf %180, %183 : vector<16x16xf32>
    %185 = math.exp %184 : vector<16x16xf32>
    %cst_164 = arith.constant dense<0.000000e+00> : vector<16xf32>
    %186 = vector.multi_reduction <add>, %185, %cst_164 [1] : vector<16x16xf32> to vector<16xf32>
    %187 = vector.shape_cast %186 : vector<16xf32> to vector<16x1xf32>
    %188 = tpu.reciprocal %187 {approx = true} : vector<16x1xf32> -> vector<16x1xf32>
    %189 = vector.broadcast %188 : vector<16x1xf32> to vector<16x16xf32>
    %190 = arith.mulf %185, %189 : vector<16x16xf32>
    %cst_165 = arith.constant dense<0.000000e+00> : vector<64x16xf32>
    %191 = tpu.matmul %178, %190, %cst_165 {dimension_numbers = #tpu.dot_dimension_numbers<[1], [1], [0], [0], [0, 0, 1, 0], [], []>} : vector<64x16xf32>, vector<16x16xf32>, vector<64x16xf32> -> vector<64x16xf32>
    %192 = vector.broadcast %179 : f32 to vector<64x16xf32>
    %193 = arith.mulf %192, %191 : vector<64x16xf32>
    %194 = arith.addf %193, %163 : vector<64x16xf32>
    %c0_166 = arith.constant 0 : index
    %c0_167 = arith.constant 0 : index
    %195 = vector.load %arg22[%c0_166, %c0_167] : memref<64x16xf32, #tpu.memory_space<vmem>>, vector<64x16xf32>
    %196 = arith.mulf %195, %194 : vector<64x16xf32>
    %cst_168 = arith.constant dense<0.000000e+00> : vector<16xf32>
    %197 = vector.multi_reduction <add>, %196, %cst_168 [0] : vector<64x16xf32> to vector<16xf32>
    %198 = vector.shape_cast %197 : vector<16xf32> to vector<1x16xf32>
    %cst_169 = arith.constant dense<0.000000e+00> : vector<1xf32>
    %199 = vector.multi_reduction <add>, %198, %cst_169 [1] : vector<1x16xf32> to vector<1xf32>
    %200 = vector.shape_cast %199 : vector<1xf32> to vector<1x1xf32>
    %c0_170 = arith.constant 0 : index
    %201 = memref.load %arg3[%c0_170] : memref<1xf32, #tpu.memory_space<smem>>
    %202 = vector.broadcast %201 : f32 to vector<1x1xf32>
    %203 = arith.addf %200, %202 : vector<1x1xf32>
    %204 = vector.shape_cast %203 : vector<1x1xf32> to vector<1x1x1xf32>
    %205 = vector.shape_cast %204 : vector<1x1x1xf32> to vector<1x1x1xf32>
    %206 = vector.broadcast %205 : vector<1x1x1xf32> to vector<1x1x128xf32>
    %c0_171 = arith.constant 0 : index
    %c0_172 = arith.constant 0 : index
    %c0_173 = arith.constant 0 : index
    %207 = vector.load %arg23[%c0_171, %c0_172, %c0_173] : memref<1x1x128xf32, #tpu.memory_space<vmem>>, vector<1x1x128xf32>
    tpu.vector_store %arg23[%c0_171, %c0_172, %c0_173], %206 {strides = array<i32>} : memref<1x1x128xf32, #tpu.memory_space<vmem>>, vector<1x1x128xf32>,
    return
  }
  func.func @transform_0(%arg0: i32) -> i32 {
    %c0_i32 = arith.constant 0 : i32
    %c0_i32_0 = arith.constant 0 : i32
    return %c0_i32 : i32
  }
  func.func @transform_1(%arg0: i32) -> i32 {
    %c0_i32 = arith.constant 0 : i32
    %c0_i32_0 = arith.constant 0 : i32
    return %c0_i32 : i32
  }
  func.func @transform_2(%arg0: i32) -> i32 {
    %c0_i32 = arith.constant 0 : i32
    %c0_i32_0 = arith.constant 0 : i32
    return %c0_i32 : i32
  }
  func.func @transform_3(%arg0: i32) -> (i32, i32, i32) {
    %c0_i32 = arith.constant 0 : i32
    %c0_i32_0 = arith.constant 0 : i32
    %c0_i32_1 = arith.constant 0 : i32
    return %arg0, %c0_i32, %c0_i32_0 : i32, i32, i32
  }
  func.func @transform_4(%arg0: i32) -> (i32, i32) {
    %c0_i32 = arith.constant 0 : i32
    %c0_i32_0 = arith.constant 0 : i32
    %c0_i32_1 = arith.constant 0 : i32
    return %c0_i32, %c0_i32_0 : i32, i32
  }
  func.func @transform_5(%arg0: i32) -> (i32, i32) {
    %c0_i32 = arith.constant 0 : i32
    %c0_i32_0 = arith.constant 0 : i32
    %c0_i32_1 = arith.constant 0 : i32
    return %c0_i32, %c0_i32_0 : i32, i32
  }
  func.func @transform_6(%arg0: i32) -> (i32, i32) {
    %c0_i32 = arith.constant 0 : i32
    %c0_i32_0 = arith.constant 0 : i32
    %c0_i32_1 = arith.constant 0 : i32
    return %c0_i32, %c0_i32_0 : i32, i32
  }
  func.func @transform_7(%arg0: i32) -> (i32, i32) {
    %c0_i32 = arith.constant 0 : i32
    %c0_i32_0 = arith.constant 0 : i32
    %c0_i32_1 = arith.constant 0 : i32
    return %c0_i32, %c0_i32_0 : i32, i32
  }
  func.func @transform_8(%arg0: i32) -> (i32, i32) {
    %c0_i32 = arith.constant 0 : i32
    %c0_i32_0 = arith.constant 0 : i32
    %c0_i32_1 = arith.constant 0 : i32
    return %c0_i32, %c0_i32_0 : i32, i32
  }
  func.func @transform_9(%arg0: i32) -> (i32, i32) {
    %c0_i32 = arith.constant 0 : i32
    %c0_i32_0 = arith.constant 0 : i32
    %c0_i32_1 = arith.constant 0 : i32
    return %c0_i32, %c0_i32_0 : i32, i32
  }
  func.func @transform_10(%arg0: i32) -> (i32, i32) {
    %c0_i32 = arith.constant 0 : i32
    %c0_i32_0 = arith.constant 0 : i32
    %c0_i32_1 = arith.constant 0 : i32
    return %c0_i32, %c0_i32_0 : i32, i32
  }
  func.func @transform_11(%arg0: i32) -> (i32, i32) {
    %c0_i32 = arith.constant 0 : i32
    %c0_i32_0 = arith.constant 0 : i32
    %c0_i32_1 = arith.constant 0 : i32
    return %c0_i32, %c0_i32_0 : i32, i32
  }
  func.func @transform_12(%arg0: i32) -> (i32, i32, i32) {
    %c0_i32 = arith.constant 0 : i32
    %c0_i32_0 = arith.constant 0 : i32
    %c0_i32_1 = arith.constant 0 : i32
    %c0_i32_2 = arith.constant 0 : i32
    return %c0_i32, %c0_i32_0, %c0_i32_1 : i32, i32, i32
  }
  func.func @transform_13(%arg0: i32) -> (i32, i32, i32) {
    %c0_i32 = arith.constant 0 : i32
    %c0_i32_0 = arith.constant 0 : i32
    %c0_i32_1 = arith.constant 0 : i32
    %c0_i32_2 = arith.constant 0 : i32
    return %c0_i32, %c0_i32_0, %c0_i32_1 : i32, i32, i32
  }
  func.func @transform_14(%arg0: i32) -> (i32, i32) {
    %c0_i32 = arith.constant 0 : i32
    %c0_i32_0 = arith.constant 0 : i32
    %c0_i32_1 = arith.constant 0 : i32
    return %c0_i32, %c0_i32_0 : i32, i32
  }
  func.func @transform_15(%arg0: i32) -> (i32, i32) {
    %c0_i32 = arith.constant 0 : i32
    %c0_i32_0 = arith.constant 0 : i32
    %c0_i32_1 = arith.constant 0 : i32
    return %c0_i32, %c0_i32_0 : i32, i32
  }
  func.func @transform_16(%arg0: i32) -> (i32, i32) {
    %c0_i32 = arith.constant 0 : i32
    %c0_i32_0 = arith.constant 0 : i32
    %c0_i32_1 = arith.constant 0 : i32
    return %c0_i32, %c0_i32_0 : i32, i32
  }
  func.func @transform_17(%arg0: i32) -> (i32, i32) {
    %c0_i32 = arith.constant 0 : i32
    %c0_i32_0 = arith.constant 0 : i32
    %c0_i32_1 = arith.constant 0 : i32
    return %c0_i32, %c0_i32_0 : i32, i32
  }
  func.func @transform_18(%arg0: i32) -> (i32, i32) {
    %c0_i32 = arith.constant 0 : i32
    %c0_i32_0 = arith.constant 0 : i32
    %c0_i32_1 = arith.constant 0 : i32
    return %c0_i32, %c0_i32_0 : i32, i32
  }
  func.func @transform_19(%arg0: i32) -> (i32, i32) {
    %c0_i32 = arith.constant 0 : i32
    %c0_i32_0 = arith.constant 0 : i32
    %c0_i32_1 = arith.constant 0 : i32
    return %c0_i32, %c0_i32_0 : i32, i32
  }
  func.func @transform_20(%arg0: i32) -> (i32, i32) {
    %c0_i32 = arith.constant 0 : i32
    %c0_i32_0 = arith.constant 0 : i32
    %c0_i32_1 = arith.constant 0 : i32
    return %c0_i32, %c0_i32_0 : i32, i32
  }
  func.func @transform_21(%arg0: i32) -> (i32, i32) {
    %c0_i32 = arith.constant 0 : i32
    %c0_i32_0 = arith.constant 0 : i32
    %c0_i32_1 = arith.constant 0 : i32
    return %c0_i32, %c0_i32_0 : i32, i32
  }
  func.func @transform_22(%arg0: i32) -> (i32, i32, i32) {
    %c0_i32 = arith.constant 0 : i32
    %c0_i32_0 = arith.constant 0 : i32
    %c0_i32_1 = arith.constant 0 : i32
    return %arg0, %c0_i32, %c0_i32_0 : i32, i32, i32
  }
}

</mosaic_0001>

<llo_original>
// kernel: discriminator_forward.3
$region0: #{discriminator_forward.3}
  #allocation0 [shape = 'u32[]', space=smem, size = 0x4, offset = 0x4, fixed_abs, tag = 'smem constant byte address 0x4 - core index']
  #allocation1 [shape = 'u32[144,128]{1,0:T(1,128)}', space=vmem, size = 0x12000, scoped, tag = 'internal scratch']
  %s0 = inlined_call_operand.vmem [shape: bf16[8,48], index: 0, kind: input, shape index: {}]
  %s1 = inlined_call_operand.vmem [shape: bf16[48,2048], index: 1, kind: input, shape index: {}]
  %s2 = inlined_call_operand.vmem [shape: f32[8,1], index: 2, kind: input, shape index: {}]
  %s3 = inlined_call_operand.vmem [shape: bf16[8,2048], index: 3, kind: output, shape index: {}]
  %s4 = sld [smem:[#allocation0]]
  $region68: #{discriminator_forward.3} parent=0
    _
  %s6 = ssub.s32 1, %s4
  %s7 = scalar_select 0, %s6, %s4
  $region1: #{discriminator_forward.3} parent=0
    #allocation2 [shape = 'u8[196608]{0}', space=vmem, size = 0x30000, scoped, tag = 'input window, operand 1']
    loop: start=0, step=1, limit=4
    $region2: #{discriminator_forward.3} parent=1 // loop_pre_header
      _
    $region3: #{discriminator_forward.3} parent=1 // loop_header
      %s9 = sphi 0, %s13
      %p10 = scmp.ge.s32.totalorder %s9, 4
      %s17 = sphi 0, %s17
      %s19 = sphi 0, %s17
      %s20 = sphi 0, %s19
      %s34 = sphi 0, %s20
      %s40 = sphi 0, %s42
      %s43 = sphi 0, %s40
      %s44 = sphi 0, %s43
      %s60 = sphi 0, %s44
      %s64 = sphi 0, %s64
      %s66 = sphi 0, %s64
      %s67 = sphi 0, %s66
      %s81 = sphi 0, %s67
      %s87 = sphi 0, %s89
      %s90 = sphi 0, %s87
      %s91 = sphi 0, %s90
      %s107 = sphi 0, %s91
    $region4: #{discriminator_forward.3} parent=1 // loop_header_branch
      %12 = sbr.rel (%p10) target = $region8
    $region5: #{discriminator_forward.3} parent=1 // loop_body
      %s14 = ssub.s32 %s9, 1
      %s15 = ssub.s32 %s9, 2
      %s16 = sadd.s32 %s9, 1
      %s18 = sadd.s32 %s17, 1
      %p21 = scmp.eq.s32.totalorder %s9, 1
      %p22 = scmp.ne.s32.totalorder %s17, %s19
      %p23 = scmp.eq.s32.totalorder %s9, 0
      %p24 = por %p22, %p23
      %p25 = scmp.ne.s32.totalorder %s17, %s19
      %p26 = scmp.eq.s32.totalorder %s14, 1
      %p27 = por %p25, %p26
      %p28 = scmp.ne.s32.totalorder %s19, %s20
      %p29 = scmp.eq.s32.totalorder %s14, 0
      %p30 = por %p28, %p29
      %p31 = scmp.ne.s32.totalorder %s19, %s20
      %p32 = scmp.eq.s32.totalorder %s15, 1
      %p33 = por %p31, %p32
      %p35 = scmp.ne.s32.totalorder %s20, %s34
      %p36 = scmp.eq.s32.totalorder %s15, 0
      %p37 = por %p35, %p36
      %s38 = ssub.s32 %s9, %s16
      %p39 = scmp.eq.s32.totalorder %s38, 0
      %s41 = sadd.s32 %s40, 1
      %s42 = scalar_select %p39, %s40, %s41
      %p45 = pneg %p39
      %p46 = scmp.eq.s32.totalorder %s9, 1
      %p47 = por %p45, %p46
      %p48 = scmp.ne.s32.totalorder %s40, %s43
      %p49 = scmp.eq.s32.totalorder %s9, 0
      %p50 = por %p48, %p49
      %p51 = scmp.ne.s32.totalorder %s40, %s43
      %p52 = scmp.eq.s32.totalorder %s14, 1
      %p53 = por %p51, %p52
      %p54 = scmp.ne.s32.totalorder %s43, %s44
      %p55 = scmp.eq.s32.totalorder %s14, 0
      %p56 = por %p54, %p55
      %p57 = scmp.ne.s32.totalorder %s43, %s44
      %p58 = scmp.eq.s32.totalorder %s15, 1
      %p59 = por %p57, %p58
      %p61 = scmp.ne.s32.totalorder %s44, %s60
      %p62 = scmp.eq.s32.totalorder %s15, 0
      %p63 = por %p61, %p62
      %s65 = sadd.s32 %s64, 1
      %p68 = scmp.eq.s32.totalorder %s9, 1
      %p69 = scmp.ne.s32.totalorder %s64, %s66
      %p70 = scmp.eq.s32.totalorder %s9, 0
      %p71 = por %p69, %p70
      %p72 = scmp.ne.s32.totalorder %s64, %s66
      %p73 = scmp.eq.s32.totalorder %s14, 1
      %p74 = por %p72, %p73
      %p75 = scmp.ne.s32.totalorder %s66, %s67
      %p76 = scmp.eq.s32.totalorder %s14, 0
      %p77 = por %p75, %p76
      %p78 = scmp.ne.s32.totalorder %s66, %s67
      %p79 = scmp.eq.s32.totalorder %s15, 1
      %p80 = por %p78, %p79
      %p82 = scmp.ne.s32.totalorder %s67, %s81
      %p83 = scmp.eq.s32.totalorder %s15, 0
      %p84 = por %p82, %p83
      %s85 = ssub.s32 %s9, %s16
      %p86 = scmp.eq.s32.totalorder %s85, 0
      %s88 = sadd.s32 %s87, 1
      %s89 = scalar_select %p86, %s87, %s88
      %p92 = pneg %p86
      %p93 = scmp.eq.s32.totalorder %s9, 1
      %p94 = por %p92, %p93
      %p95 = scmp.ne.s32.totalorder %s87, %s90
      %p96 = scmp.eq.s32.totalorder %s9, 0
      %p97 = por %p95, %p96
      %p98 = scmp.ne.s32.totalorder %s87, %s90
      %p99 = scmp.eq.s32.totalorder %s14, 1
      %p100 = por %p98, %p99
      %p101 = scmp.ne.s32.totalorder %s90, %s91
      %p102 = scmp.eq.s32.totalorder %s14, 0
      %p103 = por %p101, %p102
      %p104 = scmp.ne.s32.totalorder %s90, %s91
      %p105 = scmp.eq.s32.totalorder %s15, 1
      %p106 = por %p104, %p105
      %p108 = scmp.ne.s32.totalorder %s91, %s107
      %p109 = scmp.eq.s32.totalorder %s15, 0
      %p110 = por %p108, %p109
      %p111 = scmp.le.s32.totalorder 1, %s9
      %p112 = scmp.lt.s32.totalorder %s9, 3
      %p113 = pnand %p111, %p112
      %p114 = pneg %p113
      // Predicated region
      $region9: #{discriminator_forward.3} parent=5 // pred_check
        _
      $region10: #{discriminator_forward.3} parent=5 // pred_check_branch
        %116 = sbr.rel (%p113) target = $region12
      $region11: #{discriminator_forward.3} parent=5 // pred_region
        %s117 = ssub.s32 %s9, 1
        // Predicated region
        $region13: #{discriminator_forward.3} parent=11 // pred_check
          %p118 = pneg %p30
        $region14: #{discriminator_forward.3} parent=11 // pred_check_branch
          %120 = sbr.rel (%p118) target = $region16
        $region15: #{discriminator_forward.3} parent=11 // pred_region
          _
        $region16: #{discriminator_forward.3} parent=11 // pred_fallthru
          _
        // Predicated region
        $region17: #{discriminator_forward.3} parent=11 // pred_check
          %p121 = pneg %p77
        $region18: #{discriminator_forward.3} parent=11 // pred_check_branch
          %123 = sbr.rel (%p121) target = $region20
        $region19: #{discriminator_forward.3} parent=11 // pred_region
          _
        $region20: #{discriminator_forward.3} parent=11 // pred_fallthru
          _
      $region12: #{discriminator_forward.3} parent=5 // pred_fallthru
        _
      %p124 = scmp.lt.s32.totalorder %s9, 2
      // Predicated region
      $region21: #{discriminator_forward.3} parent=5 // pred_check
        %p125 = pneg %p124
      $region22: #{discriminator_forward.3} parent=5 // pred_check_branch
        %127 = sbr.rel (%p125) target = $region24
      $region23: #{discriminator_forward.3} parent=5 // pred_region
        // Predicated region
        $region25: #{discriminator_forward.3} parent=23 // pred_check
          %p128 = pneg %p50
        $region26: #{discriminator_forward.3} parent=23 // pred_check_branch
          %130 = sbr.rel (%p128) target = $region28
        $region27: #{discriminator_forward.3} parent=23 // pred_region
          %s131 = sand.u32 %s40, 1
          %s132 = sand.u32 %s40, 1
          %s133 = smul.addr %s132, 192
          %s134 = scalar_lea.vmem [#allocation2], %s133
          %s135 = smul.u32 8, %s9
          %s136 = smul.addr %s135, 4
          %s137 = scalar_lea.vmem %s1, %s136
          // Predicated region
          $region29: #{discriminator_forward.3} parent=27 // pred_check
            _
          $region30: #{discriminator_forward.3} parent=27 // pred_check_branch
            %139 = sbr.rel (0) target = $region32
          $region31: #{discriminator_forward.3} parent=27 // pred_region
            // Predicated region
            $region33: #{discriminator_forward.3} parent=31 // pred_check
              _
            $region34: #{discriminator_forward.3} parent=31 // pred_check_branch
              %141 = sbr.rel (0) target = $region36
            $region35: #{discriminator_forward.3} parent=31 // pred_region
              loop: start=0, step=1, limit=1
              $region37: #{discriminator_forward.3} parent=35 // loop_pre_header
                _
              $region38: #{discriminator_forward.3} parent=35 // loop_header
                %s143 = sphi 0, %s147
                %p144 = scmp.ge.s32.totalorder %s143, 1
                %s148 = sphi %s137, %s137
                %s149 = sphi %s134, %s134
              $region39: #{discriminator_forward.3} parent=35 // loop_header_branch
                %146 = sbr.rel (%p144) target = $region43
              $region40: #{discriminator_forward.3} parent=35 // loop_body
                %v150 = vld [vmem:[%s148] sm:$0xff]
                %151 = vst [vmem:[%s149] sm:$0xff] %v150
                %v152 = vld [vmem:[%s148 + $0x8] sm:$0xff]
                %153 = vst [vmem:[%s149 + $0x8] sm:$0xff] %v152
                %v154 = vld [vmem:[%s148 + $0x10] sm:$0xff]
                %155 = vst [vmem:[%s149 + $0x10] sm:$0xff] %v154
                %v156 = vld [vmem:[%s148 + $0x18] sm:$0xff]
                %157 = vst [vmem:[%s149 + $0x18] sm:$0xff] %v156
                %v158 = vld [vmem:[%s148 + $0x40] sm:$0xff]
                %159 = vst [vmem:[%s149 + $0x20] sm:$0xff] %v158
                %v160 = vld [vmem:[%s148 + $0x48] sm:$0xff]
                %161 = vst [vmem:[%s149 + $0x28] sm:$0xff] %v160
                %v162 = vld [vmem:[%s148 + $0x50] sm:$0xff]
                %163 = vst [vmem:[%s149 + $0x30] sm:$0xff] %v162
                %v164 = vld [vmem:[%s148 + $0x58] sm:$0xff]
                %165 = vst [vmem:[%s149 + $0x38] sm:$0xff] %v164
                %v166 = vld [vmem:[%s148 + $0x80] sm:$0xff]
                %167 = vst [vmem:[%s149 + $0x40] sm:$0xff] %v166
                %v168 = vld [vmem:[%s148 + $0x88] sm:$0xff]
                %169 = vst [vmem:[%s149 + $0x48] sm:$0xff] %v168
                %v170 = vld [vmem:[%s148 + $0x90] sm:$0xff]
                %171 = vst [vmem:[%s149 + $0x50] sm:$0xff] %v170
                %v172 = vld [vmem:[%s148 + $0x98] sm:$0xff]
                %173 = vst [vmem:[%s149 + $0x58] sm:$0xff] %v172
                %v174 = vld [vmem:[%s148 + $0xc0] sm:$0xff]
                %175 = vst [vmem:[%s149 + $0x60] sm:$0xff] %v174
                %v176 = vld [vmem:[%s148 + $0xc8] sm:$0xff]
                %177 = vst [vmem:[%s149 + $0x68] sm:$0xff] %v176
                %v178 = vld [vmem:[%s148 + $0xd0] sm:$0xff]
                %179 = vst [vmem:[%s149 + $0x70] sm:$0xff] %v178
                %v180 = vld [vmem:[%s148 + $0xd8] sm:$0xff]
                %181 = vst [vmem:[%s149 + $0x78] sm:$0xff] %v180
                %v182 = vld [vmem:[%s148 + $0x100] sm:$0xff]
                %183 = vst [vmem:[%s149 + $0x80] sm:$0xff] %v182
                %v184 = vld [vmem:[%s148 + $0x108] sm:$0xff]
                %185 = vst [vmem:[%s149 + $0x88] sm:$0xff] %v184
                %v186 = vld [vmem:[%s148 + $0x110] sm:$0xff]
                %187 = vst [vmem:[%s149 + $0x90] sm:$0xff] %v186
                %v188 = vld [vmem:[%s148 + $0x118] sm:$0xff]
                %189 = vst [vmem:[%s149 + $0x98] sm:$0xff] %v188
                %v190 = vld [vmem:[%s148 + $0x140] sm:$0xff]
                %191 = vst [vmem:[%s149 + $0xa0] sm:$0xff] %v190
                %v192 = vld [vmem:[%s148 + $0x148] sm:$0xff]
                %193 = vst [vmem:[%s149 + $0xa8] sm:$0xff] %v192
                %v194 = vld [vmem:[%s148 + $0x150] sm:$0xff]
                %195 = vst [vmem:[%s149 + $0xb0] sm:$0xff] %v194
                %v196 = vld [vmem:[%s148 + $0x158] sm:$0xff]
                %197 = vst [vmem:[%s149 + $0xb8] sm:$0xff] %v196
              $region41: #{discriminator_forward.3} parent=35 // loop_footer
                %s147 = sadd.s32 1, %s143
              $region42: #{discriminator_forward.3} parent=35 // loop_footer_branch
                %142 = sbr.rel target = $region38
              $region43: #{discriminator_forward.3} parent=35 // loop_exit
                _
            $region36: #{discriminator_forward.3} parent=31 // pred_fallthru
              _
            // Predicated region
            $region44: #{discriminator_forward.3} parent=31 // pred_check
              _
            $region45: #{discriminator_forward.3} parent=31 // pred_check_branch
              %199 = sbr.rel target = $region47
            $region46: #{discriminator_forward.3} parent=31 // pred_region
              _
            $region47: #{discriminator_forward.3} parent=31 // pred_fallthru
              _
          $region32: #{discriminator_forward.3} parent=27 // pred_fallthru
            _
          %200 = vnop
        $region28: #{discriminator_forward.3} parent=23 // pred_fallthru
          _
      $region24: #{discriminator_forward.3} parent=5 // pred_fallthru
        _
      %p201 = scmp.le.s32.totalorder 1, %s9
      %p202 = scmp.lt.s32.totalorder %s9, 3
      %p203 = pnand %p201, %p202
      %p204 = pneg %p203
      // Predicated region
      $region48: #{discriminator_forward.3} parent=5 // pred_check
        _
      $region49: #{discriminator_forward.3} parent=5 // pred_check_branch
        %206 = sbr.rel (%p203) target = $region51
      $region50: #{discriminator_forward.3} parent=5 // pred_region
        %s207 = ssub.s32 %s9, 1
        %s208 = sand.u32 %s43, 1
        %s209 = sand.u32 %s43, 1
        %s210 = smul.addr %s209, 192
        %s211 = scalar_lea.vmem [#allocation2], %s210
        // Predicated region
        $region52: #{discriminator_forward.3} parent=50 // pred_check
          %p212 = pneg %p56
        $region53: #{discriminator_forward.3} parent=50 // pred_check_branch
          %214 = sbr.rel (%p212) target = $region55
        $region54: #{discriminator_forward.3} parent=50 // pred_region
          _
        $region55: #{discriminator_forward.3} parent=50 // pred_fallthru
          _
        %p215 = pneg %p30
        %p216 = pneg %p27
        %s217 = sand.u32 %s43, 1
        %s218 = sand.u32 %s43, 1
        %s219 = smul.addr %s218, 192
        %s220 = scalar_lea.vmem [#allocation2], %s219
        %p221 = pneg %p56
        %p222 = pneg %p53
        %p223 = pneg %p77
        %p224 = pneg %p74
        %p225 = pneg %p103
        %p226 = pneg %p100
        %s227 = smul.u32 8, %s14
        %p228 = scmp.lt.s32.totalorder %s227, 15
        %s229 = scalar_select %p228, %s227, 15
        %s230 = smul.addr %s229, 4
        %s231 = scalar_lea.vmem %s3, %s230
        %s232 = smul.u32 8, %s14
        %s233 = smul.u32 8, %s14
        %p234 = scmp.lt.s32.totalorder %s233, 15
        %s235 = scalar_select %p234, %s233, 15
        %s236 = smul.addr %s235, 4
        %s237 = scalar_lea.vmem %s3, %s236
        %s238 = smul.u32 8, %s14
        %v240 = vld [vmem:[%s0] sm:$0xf]
        %v241 = vld [vmem:[%s211] sm:$0xff]
        %v242 = vld [vmem:[%s211 + $0x8] sm:$0xff]
        %v243 = vld [vmem:[%s211 + $0x10] sm:$0xff]
        %v244 = vld [vmem:[%s211 + $0x18] sm:$0xff]
        %v245 = vld [vmem:[%s211 + $0x20] sm:$0xff]
        %v246 = vld [vmem:[%s211 + $0x28] sm:$0xff]
        %v247 = vld [vmem:[%s211 + $0x30] sm:$0xff]
        %v248 = vld [vmem:[%s211 + $0x38] sm:$0xff]
        %v249 = vld [vmem:[%s211 + $0x40] sm:$0xff]
        %v250 = vld [vmem:[%s211 + $0x48] sm:$0xff]
        %v251 = vld [vmem:[%s211 + $0x50] sm:$0xff]
        %v252 = vld [vmem:[%s211 + $0x58] sm:$0xff]
        %v253 = vld [vmem:[%s211 + $0x60] sm:$0xff]
        %v254 = vld [vmem:[%s211 + $0x68] sm:$0xff]
        %v255 = vld [vmem:[%s211 + $0x70] sm:$0xff]
        %v256 = vld [vmem:[%s211 + $0x78] sm:$0xff]
        %v257 = vld [vmem:[%s211 + $0x80] sm:$0xff]
        %v258 = vld [vmem:[%s211 + $0x88] sm:$0xff]
        %v259 = vld [vmem:[%s211 + $0x90] sm:$0xff]
        %v260 = vld [vmem:[%s211 + $0x98] sm:$0xff]
        %v261 = vld [vmem:[%s211 + $0xa0] sm:$0xff]
        %v262 = vld [vmem:[%s211 + $0xa8] sm:$0xff]
        %v263 = vld [vmem:[%s211 + $0xb0] sm:$0xff]
        %v264 = vld [vmem:[%s211 + $0xb8] sm:$0xff]
        %v265 = vld [vmem:[%s2] sm:$0xff]
        %267 = vset.pattern.permute.xlu0 0
        %268 = vperm.xlu0 %267, %v265
        %v269 = vpop.permute.xlu0 %268
        %v295 = vunpack.c.l.b16 %v241
        %v296 = vunpack.c.h.b16 %v241
        %v297 = vunpack.c.l.b16 %v242
        %v298 = vunpack.c.h.b16 %v242
        %v299 = vunpack.c.l.b16 %v243
        %v300 = vunpack.c.h.b16 %v243
        %v301 = vunpack.c.l.b16 %v244
        %v302 = vunpack.c.h.b16 %v244
        %v303 = vunpack.c.l.b16 %v245
        %v304 = vunpack.c.h.b16 %v245
        %v305 = vunpack.c.l.b16 %v246
        %v306 = vunpack.c.h.b16 %v246
        %v307 = vunpack.c.l.b16 %v247
        %v308 = vunpack.c.h.b16 %v247
        %v309 = vunpack.c.l.b16 %v248
        %v310 = vunpack.c.h.b16 %v248
        %v311 = vunpack.c.l.b16 %v249
        %v312 = vunpack.c.h.b16 %v249
        %v313 = vunpack.c.l.b16 %v250
        %v314 = vunpack.c.h.b16 %v250
        %v315 = vunpack.c.l.b16 %v251
        %v316 = vunpack.c.h.b16 %v251
        %v317 = vunpack.c.l.b16 %v252
        %v318 = vunpack.c.h.b16 %v252
        %v319 = vunpack.c.l.b16 %v253
        %v320 = vunpack.c.h.b16 %v253
        %v321 = vunpack.c.l.b16 %v254
        %v322 = vunpack.c.h.b16 %v254
        %v323 = vunpack.c.l.b16 %v255
        %v324 = vunpack.c.h.b16 %v255
        %v325 = vunpack.c.l.b16 %v256
        %v326 = vunpack.c.h.b16 %v256
        %v327 = vunpack.c.l.b16 %v257
        %v328 = vunpack.c.h.b16 %v257
        %v329 = vunpack.c.l.b16 %v258
        %v330 = vunpack.c.h.b16 %v258
        %v331 = vunpack.c.l.b16 %v259
        %v332 = vunpack.c.h.b16 %v259
        %v333 = vunpack.c.l.b16 %v260
        %v334 = vunpack.c.h.b16 %v260
        %v335 = vunpack.c.l.b16 %v261
        %v336 = vunpack.c.h.b16 %v261
        %v337 = vunpack.c.l.b16 %v262
        %v338 = vunpack.c.h.b16 %v262
        %v339 = vunpack.c.l.b16 %v263
        %v340 = vunpack.c.h.b16 %v263
        %v341 = vunpack.c.l.b16 %v264
        %v342 = vunpack.c.h.b16 %v264
        %v343 = vpack.c.b16 %v303, %v295
        %v344 = vpack.c.b16 %v304, %v296
        %v345 = vpack.c.b16 %v305, %v297
        %v346 = vpack.c.b16 %v306, %v298
        %v347 = vpack.c.b16 %v307, %v299
        %v348 = vpack.c.b16 %v308, %v300
        %v349 = vpack.c.b16 %v309, %v301
        %v350 = vpack.c.b16 %v310, %v302
        %v351 = vpack.c.b16 %v319, %v311
        %v352 = vpack.c.b16 %v320, %v312
        %v353 = vpack.c.b16 %v321, %v313
        %v354 = vpack.c.b16 %v322, %v314
        %v355 = vpack.c.b16 %v323, %v315
        %v356 = vpack.c.b16 %v324, %v316
        %v357 = vpack.c.b16 %v325, %v317
        %v358 = vpack.c.b16 %v326, %v318
        %v359 = vpack.c.b16 %v335, %v327
        %v360 = vpack.c.b16 %v336, %v328
        %v361 = vpack.c.b16 %v337, %v329
        %v362 = vpack.c.b16 %v338, %v330
        %v363 = vpack.c.b16 %v339, %v331
        %v364 = vpack.c.b16 %v340, %v332
        %v365 = vpack.c.b16 %v341, %v333
        %v366 = vpack.c.b16 %v342, %v334
        %vm391 = vcmask 392192
        %v393 = vsel %vm391, %v240, 0
        %395 = vmatprep.subr.bf16.mxu0 0
        %396 = vmatpush1.bf16.msra.mxu0 0
        %397 = vmatprep.subr.bf16.mxu0 0
        %398 = vmatpush1.bf16.msra.mxu0 0
        %399 = vmatprep.subr.bf16.mxu0 0
        %400 = vmatpush1.bf16.msra.mxu0 0
        %401 = vmatprep.subr.bf16.mxu0 0
        %402 = vmatpush1.bf16.msra.mxu0 0
        %403 = vmatprep.subr.bf16.mxu0 0
        %404 = vmatpush1.bf16.msra.mxu0 0
        %405 = vmatprep.subr.bf16.mxu0 %v360
        %406 = vmatpush1.bf16.msra.mxu0 %v359
        %407 = vmatprep.subr.bf16.mxu0 %v352
        %408 = vmatpush1.bf16.msra.mxu0 %v351
        %409 = vmatprep.subr.bf16.mxu0 %v344
        %410 = vmatpush1.bf16.msra.mxu0 %v343
        %411 = vmatprep.subr.bf16.mxu0 0
        %412 = vmatpush2.bf16.msra.mxu0 0
        %413 = vmatprep.subr.bf16.mxu0 0
        %414 = vmatpush2.bf16.msra.mxu0 0
        %415 = vmatprep.subr.bf16.mxu0 0
        %416 = vmatpush2.bf16.msra.mxu0 0
        %417 = vmatprep.subr.bf16.mxu0 0
        %418 = vmatpush2.bf16.msra.mxu0 0
        %419 = vmatprep.subr.bf16.mxu0 0
        %420 = vmatpush2.bf16.msra.mxu0 0
        %421 = vmatprep.subr.bf16.mxu0 0
        %422 = vmatpush2.bf16.msra.mxu0 0
        %423 = vmatprep.subr.bf16.mxu0 0
        %424 = vmatpush2.bf16.msra.mxu0 0
        %425 = vmatprep.subr.bf16.mxu0 0
        %426 = vmatpush2.bf16.msra.mxu0 0
        %427 = vmatprep.mubr.bf16.mxu0 0
        %428 = vmatmul.mubr.bf16.gmra.mxu0 %v393
        %v429 = vpop.f32.mrf.mxu0
        %v430 = vadd.f32 %v269, %v429
        %v431 = vpop.f32.mrf.mxu0
        %v432 = vadd.f32 %v269, %v431
        %v433 = vpop.f32.mrf.mxu0
        %v434 = vpop.f32.mrf.mxu0
        %435 = vdwg.mxu0
        %436 = vmatprep.subr.bf16.mxu0 0
        %437 = vmatpush1.bf16.msra.mxu0 0
        %438 = vmatprep.subr.bf16.mxu0 0
        %439 = vmatpush1.bf16.msra.mxu0 0
        %440 = vmatprep.subr.bf16.mxu0 0
        %441 = vmatpush1.bf16.msra.mxu0 0
        %442 = vmatprep.subr.bf16.mxu0 0
        %443 = vmatpush1.bf16.msra.mxu0 0
        %444 = vmatprep.subr.bf16.mxu0 0
        %445 = vmatpush1.bf16.msra.mxu0 0
        %446 = vmatprep.subr.bf16.mxu0 %v362
        %447 = vmatpush1.bf16.msra.mxu0 %v361
        %448 = vmatprep.subr.bf16.mxu0 %v354
        %449 = vmatpush1.bf16.msra.mxu0 %v353
        %450 = vmatprep.subr.bf16.mxu0 %v346
        %451 = vmatpush1.bf16.msra.mxu0 %v345
        %452 = vmatprep.subr.bf16.mxu0 0
        %453 = vmatpush2.bf16.msra.mxu0 0
        %454 = vmatprep.subr.bf16.mxu0 0
        %455 = vmatpush2.bf16.msra.mxu0 0
        %456 = vmatprep.subr.bf16.mxu0 0
        %457 = vmatpush2.bf16.msra.mxu0 0
        %458 = vmatprep.subr.bf16.mxu0 0
        %459 = vmatpush2.bf16.msra.mxu0 0
        %460 = vmatprep.subr.bf16.mxu0 0
        %461 = vmatpush2.bf16.msra.mxu0 0
        %462 = vmatprep.subr.bf16.mxu0 0
        %463 = vmatpush2.bf16.msra.mxu0 0
        %464 = vmatprep.subr.bf16.mxu0 0
        %465 = vmatpush2.bf16.msra.mxu0 0
        %466 = vmatprep.subr.bf16.mxu0 0
        %467 = vmatpush2.bf16.msra.mxu0 0
        %468 = vmatprep.mubr.bf16.mxu0 0
        %469 = vmatmul.mubr.bf16.gmra.mxu0 %v393
        %v470 = vpop.f32.mrf.mxu0
        %v471 = vadd.f32 %v269, %v470
        %v472 = vpop.f32.mrf.mxu0
        %v473 = vadd.f32 %v269, %v472
        %v474 = vpop.f32.mrf.mxu0
        %v475 = vpop.f32.mrf.mxu0
        %476 = vdwg.mxu0
        %477 = vmatprep.subr.bf16.mxu0 0
        %478 = vmatpush1.bf16.msra.mxu0 0
        %479 = vmatprep.subr.bf16.mxu0 0
        %480 = vmatpush1.bf16.msra.mxu0 0
        %481 = vmatprep.subr.bf16.mxu0 0
        %482 = vmatpush1.bf16.msra.mxu0 0
        %483 = vmatprep.subr.bf16.mxu0 0
        %484 = vmatpush1.bf16.msra.mxu0 0
        %485 = vmatprep.subr.bf16.mxu0 0
        %486 = vmatpush1.bf16.msra.mxu0 0
        %487 = vmatprep.subr.bf16.mxu0 %v364
        %488 = vmatpush1.bf16.msra.mxu0 %v363
        %489 = vmatprep.subr.bf16.mxu0 %v356
        %490 = vmatpush1.bf16.msra.mxu0 %v355
        %491 = vmatprep.subr.bf16.mxu0 %v348
        %492 = vmatpush1.bf16.msra.mxu0 %v347
        %493 = vmatprep.subr.bf16.mxu0 0
        %494 = vmatpush2.bf16.msra.mxu0 0
        %495 = vmatprep.subr.bf16.mxu0 0
        %496 = vmatpush2.bf16.msra.mxu0 0
        %497 = vmatprep.subr.bf16.mxu0 0
        %498 = vmatpush2.bf16.msra.mxu0 0
        %499 = vmatprep.subr.bf16.mxu0 0
        %500 = vmatpush2.bf16.msra.mxu0 0
        %501 = vmatprep.subr.bf16.mxu0 0
        %502 = vmatpush2.bf16.msra.mxu0 0
        %503 = vmatprep.subr.bf16.mxu0 0
        %504 = vmatpush2.bf16.msra.mxu0 0
        %505 = vmatprep.subr.bf16.mxu0 0
        %506 = vmatpush2.bf16.msra.mxu0 0
        %507 = vmatprep.subr.bf16.mxu0 0
        %508 = vmatpush2.bf16.msra.mxu0 0
        %509 = vmatprep.mubr.bf16.mxu0 0
        %510 = vmatmul.mubr.bf16.gmra.mxu0 %v393
        %v511 = vpop.f32.mrf.mxu0
        %v512 = vadd.f32 %v269, %v511
        %v513 = vpop.f32.mrf.mxu0
        %v514 = vadd.f32 %v269, %v513
        %v515 = vpop.f32.mrf.mxu0
        %v516 = vpop.f32.mrf.mxu0
        %517 = vdwg.mxu0
        %518 = vmatprep.subr.bf16.mxu0 0
        %519 = vmatpush1.bf16.msra.mxu0 0
        %520 = vmatprep.subr.bf16.mxu0 0
        %521 = vmatpush1.bf16.msra.mxu0 0
        %522 = vmatprep.subr.bf16.mxu0 0
        %523 = vmatpush1.bf16.msra.mxu0 0
        %524 = vmatprep.subr.bf16.mxu0 0
        %525 = vmatpush1.bf16.msra.mxu0 0
        %526 = vmatprep.subr.bf16.mxu0 0
        %527 = vmatpush1.bf16.msra.mxu0 0
        %528 = vmatprep.subr.bf16.mxu0 %v366
        %529 = vmatpush1.bf16.msra.mxu0 %v365
        %530 = vmatprep.subr.bf16.mxu0 %v358
        %531 = vmatpush1.bf16.msra.mxu0 %v357
        %532 = vmatprep.subr.bf16.mxu0 %v350
        %533 = vmatpush1.bf16.msra.mxu0 %v349
        %534 = vmatprep.subr.bf16.mxu0 0
        %535 = vmatpush2.bf16.msra.mxu0 0
        %536 = vmatprep.subr.bf16.mxu0 0
        %537 = vmatpush2.bf16.msra.mxu0 0
        %538 = vmatprep.subr.bf16.mxu0 0
        %539 = vmatpush2.bf16.msra.mxu0 0
        %540 = vmatprep.subr.bf16.mxu0 0
        %541 = vmatpush2.bf16.msra.mxu0 0
        %542 = vmatprep.subr.bf16.mxu0 0
        %543 = vmatpush2.bf16.msra.mxu0 0
        %544 = vmatprep.subr.bf16.mxu0 0
        %545 = vmatpush2.bf16.msra.mxu0 0
        %546 = vmatprep.subr.bf16.mxu0 0
        %547 = vmatpush2.bf16.msra.mxu0 0
        %548 = vmatprep.subr.bf16.mxu0 0
        %549 = vmatpush2.bf16.msra.mxu0 0
        %550 = vmatprep.mubr.bf16.mxu0 0
        %551 = vmatmul.mubr.bf16.gmra.mxu0 %v393
        %v552 = vpop.f32.mrf.mxu0
        %v553 = vadd.f32 %v269, %v552
        %v554 = vpop.f32.mrf.mxu0
        %v555 = vadd.f32 %v269, %v554
        %v556 = vpop.f32.mrf.mxu0
        %v557 = vpop.f32.mrf.mxu0
        %558 = vdwg.mxu0
        %vm559 = vcmp.gt.f32.partialorder %v430, 0.0
        %vm560 = vcmp.gt.f32.partialorder %v432, 0.0
        %vm561 = vcmp.gt.f32.partialorder %v471, 0.0
        %vm562 = vcmp.gt.f32.partialorder %v473, 0.0
        %vm563 = vcmp.gt.f32.partialorder %v512, 0.0
        %vm564 = vcmp.gt.f32.partialorder %v514, 0.0
        %vm565 = vcmp.gt.f32.partialorder %v553, 0.0
        %vm566 = vcmp.gt.f32.partialorder %v555, 0.0
        %v567 = vmul.f32 %v430, 0.1
        %v568 = vmul.f32 %v432, 0.1
        %v569 = vmul.f32 %v471, 0.1
        %v570 = vmul.f32 %v473, 0.1
        %v571 = vmul.f32 %v512, 0.1
        %v572 = vmul.f32 %v514, 0.1
        %v573 = vmul.f32 %v553, 0.1
        %v574 = vmul.f32 %v555, 0.1
        %v575 = vsel %vm559, %v430, %v567
        %v576 = vsel %vm560, %v432, %v568
        %v577 = vsel %vm561, %v471, %v569
        %v578 = vsel %vm562, %v473, %v570
        %v579 = vsel %vm563, %v512, %v571
        %v580 = vsel %vm564, %v514, %v572
        %v581 = vsel %vm565, %v553, %v573
        %v582 = vsel %vm566, %v555, %v574
        %v583 = vpack.c.bf16 %v575, %v575
        %v584 = vpack.c.bf16 %v576, %v576
        %v585 = vpack.c.bf16 %v577, %v577
        %v586 = vpack.c.bf16 %v578, %v578
        %v587 = vpack.c.bf16 %v579, %v579
        %v588 = vpack.c.bf16 %v580, %v580
        %v589 = vpack.c.bf16 %v581, %v581
        %v590 = vpack.c.bf16 %v582, %v582
        %v599 = vunpack.c.l.b16 %v583
        %v600 = vunpack.c.l.b16 %v584
        %v601 = vunpack.c.l.b16 %v585
        %v602 = vunpack.c.l.b16 %v586
        %v603 = vunpack.c.l.b16 %v587
        %v604 = vunpack.c.l.b16 %v588
        %v605 = vunpack.c.l.b16 %v589
        %v606 = vunpack.c.l.b16 %v590
        %v607 = vpack.c.b16 %v600, %v599
        %v608 = vpack.c.b16 %v602, %v601
        %v609 = vpack.c.b16 %v604, %v603
        %v610 = vpack.c.b16 %v606, %v605
        %615 = vst [vmem:[%s237] sm:$0xff] %v607
        %616 = vst [vmem:[%s237 + $0x8] sm:$0xff] %v608
        %617 = vst [vmem:[%s237 + $0x10] sm:$0xff] %v609
        %618 = vst [vmem:[%s237 + $0x18] sm:$0xff] %v610
        %s619 = smul.u32 8, %s14
        %p620 = scmp.lt.s32.totalorder %s619, 15
        %s621 = scalar_select %p620, %s619, 15
        %s622 = smul.addr %s621, 4
        %s623 = scalar_lea.vmem %s3, %s622
        // Predicated region
        $region56: #{discriminator_forward.3} parent=50 // pred_check
          %p624 = pneg %p100
        $region57: #{discriminator_forward.3} parent=50 // pred_check_branch
          %626 = sbr.rel (%p624) target = $region59
        $region58: #{discriminator_forward.3} parent=50 // pred_region
          %s627 = smul.u32 8, %s14
        $region59: #{discriminator_forward.3} parent=50 // pred_fallthru
          _
      $region51: #{discriminator_forward.3} parent=5 // pred_fallthru
        _
      %p628 = scmp.le.s32.totalorder 2, %s9
      // Predicated region
      $region60: #{discriminator_forward.3} parent=5 // pred_check
        %p629 = pneg %p628
      $region61: #{discriminator_forward.3} parent=5 // pred_check_branch
        %631 = sbr.rel (%p629) target = $region63
      $region62: #{discriminator_forward.3} parent=5 // pred_region
        %s632 = ssub.s32 %s9, 2
        // Predicated region
        $region64: #{discriminator_forward.3} parent=62 // pred_check
          %p633 = pneg %p106
        $region65: #{discriminator_forward.3} parent=62 // pred_check_branch
          %635 = sbr.rel (%p633) target = $region67
        $region66: #{discriminator_forward.3} parent=62 // pred_region
          %s636 = smul.u32 8, %s15
          %p637 = scmp.lt.s32.totalorder %s636, 15
          %s638 = scalar_select %p637, %s636, 15
          %s639 = smul.addr %s638, 4
          %s640 = scalar_lea.vmem %s3, %s639
        $region67: #{discriminator_forward.3} parent=62 // pred_fallthru
          _
      $region63: #{discriminator_forward.3} parent=5 // pred_fallthru
        _
    $region6: #{discriminator_forward.3} parent=1 // loop_footer
      %s13 = sadd.s32 1, %s9
    $region7: #{discriminator_forward.3} parent=1 // loop_footer_branch
      %8 = sbr.rel target = $region3
    $region8: #{discriminator_forward.3} parent=1 // loop_exit
      _

// kernel: discriminator_forward.4
$region0: #{discriminator_forward.4}
  #allocation0 [shape = 'u32[]', space=smem, size = 0x4, offset = 0x4, fixed_abs, tag = 'smem constant byte address 0x4 - core index']
  #allocation1 [shape = 'u32[144,128]{1,0:T(1,128)}', space=vmem, size = 0x12000, scoped, tag = 'internal scratch']
  %s0 = inlined_call_operand.vmem [shape: bf16[16,128], index: 0, kind: input, shape index: {}]
  %s1 = inlined_call_operand.vmem [shape: bf16[128,512], index: 1, kind: input, shape index: {}]
  %s2 = inlined_call_operand.vmem [shape: f32[16,1], index: 2, kind: input, shape index: {}]
  %s3 = inlined_call_operand.vmem [shape: bf16[16,512], index: 3, kind: output, shape index: {}]
  %s4 = sld [smem:[#allocation0]]
  $region117: #{discriminator_forward.4} parent=0
    _
  %s6 = ssub.s32 1, %s4
  %s7 = scalar_select 0, %s6, %s4
  $region1: #{discriminator_forward.4} parent=0
    #allocation2 [shape = 'u8[131072]{0}', space=vmem, size = 0x20000, scoped, tag = 'input window, operand 1']
    #allocation3 [shape = 'u8[16384]{0}', space=vmem, size = 0x4000, scoped, tag = 'output window, operand 0']
    loop: start=0, step=1, limit=4
    $region2: #{discriminator_forward.4} parent=1 // loop_pre_header
      _
    $region3: #{discriminator_forward.4} parent=1 // loop_header
      %s9 = sphi 0, %s13
      %p10 = scmp.ge.s32.totalorder %s9, 4
      %s17 = sphi 0, %s17
      %s19 = sphi 0, %s17
      %s20 = sphi 0, %s19
      %s34 = sphi 0, %s20
      %s40 = sphi 0, %s42
      %s43 = sphi 0, %s40
      %s44 = sphi 0, %s43
      %s60 = sphi 0, %s44
      %s64 = sphi 0, %s64
      %s66 = sphi 0, %s64
      %s67 = sphi 0, %s66
      %s81 = sphi 0, %s67
      %s87 = sphi 0, %s89
      %s90 = sphi 0, %s87
      %s91 = sphi 0, %s90
      %s107 = sphi 0, %s91
    $region4: #{discriminator_forward.4} parent=1 // loop_header_branch
      %12 = sbr.rel (%p10) target = $region8
    $region5: #{discriminator_forward.4} parent=1 // loop_body
      %s14 = ssub.s32 %s9, 1
      %s15 = ssub.s32 %s9, 2
      %s16 = sadd.s32 %s9, 1
      %s18 = sadd.s32 %s17, 1
      %p21 = scmp.eq.s32.totalorder %s9, 1
      %p22 = scmp.ne.s32.totalorder %s17, %s19
      %p23 = scmp.eq.s32.totalorder %s9, 0
      %p24 = por %p22, %p23
      %p25 = scmp.ne.s32.totalorder %s17, %s19
      %p26 = scmp.eq.s32.totalorder %s14, 1
      %p27 = por %p25, %p26
      %p28 = scmp.ne.s32.totalorder %s19, %s20
      %p29 = scmp.eq.s32.totalorder %s14, 0
      %p30 = por %p28, %p29
      %p31 = scmp.ne.s32.totalorder %s19, %s20
      %p32 = scmp.eq.s32.totalorder %s15, 1
      %p33 = por %p31, %p32
      %p35 = scmp.ne.s32.totalorder %s20, %s34
      %p36 = scmp.eq.s32.totalorder %s15, 0
      %p37 = por %p35, %p36
      %s38 = ssub.s32 %s9, %s16
      %p39 = scmp.eq.s32.totalorder %s38, 0
      %s41 = sadd.s32 %s40, 1
      %s42 = scalar_select %p39, %s40, %s41
      %p45 = pneg %p39
      %p46 = scmp.eq.s32.totalorder %s9, 1
      %p47 = por %p45, %p46
      %p48 = scmp.ne.s32.totalorder %s40, %s43
      %p49 = scmp.eq.s32.totalorder %s9, 0
      %p50 = por %p48, %p49
      %p51 = scmp.ne.s32.totalorder %s40, %s43
      %p52 = scmp.eq.s32.totalorder %s14, 1
      %p53 = por %p51, %p52
      %p54 = scmp.ne.s32.totalorder %s43, %s44
      %p55 = scmp.eq.s32.totalorder %s14, 0
      %p56 = por %p54, %p55
      %p57 = scmp.ne.s32.totalorder %s43, %s44
      %p58 = scmp.eq.s32.totalorder %s15, 1
      %p59 = por %p57, %p58
      %p61 = scmp.ne.s32.totalorder %s44, %s60
      %p62 = scmp.eq.s32.totalorder %s15, 0
      %p63 = por %p61, %p62
      %s65 = sadd.s32 %s64, 1
      %p68 = scmp.eq.s32.totalorder %s9, 1
      %p69 = scmp.ne.s32.totalorder %s64, %s66
      %p70 = scmp.eq.s32.totalorder %s9, 0
      %p71 = por %p69, %p70
      %p72 = scmp.ne.s32.totalorder %s64, %s66
      %p73 = scmp.eq.s32.totalorder %s14, 1
      %p74 = por %p72, %p73
      %p75 = scmp.ne.s32.totalorder %s66, %s67
      %p76 = scmp.eq.s32.totalorder %s14, 0
      %p77 = por %p75, %p76
      %p78 = scmp.ne.s32.totalorder %s66, %s67
      %p79 = scmp.eq.s32.totalorder %s15, 1
      %p80 = por %p78, %p79
      %p82 = scmp.ne.s32.totalorder %s67, %s81
      %p83 = scmp.eq.s32.totalorder %s15, 0
      %p84 = por %p82, %p83
      %s85 = ssub.s32 %s9, %s16
      %p86 = scmp.eq.s32.totalorder %s85, 0
      %s88 = sadd.s32 %s87, 1
      %s89 = scalar_select %p86, %s87, %s88
      %p92 = pneg %p86
      %p93 = scmp.eq.s32.totalorder %s9, 1
      %p94 = por %p92, %p93
      %p95 = scmp.ne.s32.totalorder %s87, %s90
      %p96 = scmp.eq.s32.totalorder %s9, 0
      %p97 = por %p95, %p96
      %p98 = scmp.ne.s32.totalorder %s87, %s90
      %p99 = scmp.eq.s32.totalorder %s14, 1
      %p100 = por %p98, %p99
      %p101 = scmp.ne.s32.totalorder %s90, %s91
      %p102 = scmp.eq.s32.totalorder %s14, 0
      %p103 = por %p101, %p102
      %p104 = scmp.ne.s32.totalorder %s90, %s91
      %p105 = scmp.eq.s32.totalorder %s15, 1
      %p106 = por %p104, %p105
      %p108 = scmp.ne.s32.totalorder %s91, %s107
      %p109 = scmp.eq.s32.totalorder %s15, 0
      %p110 = por %p108, %p109
      %p111 = scmp.le.s32.totalorder 1, %s9
      %p112 = scmp.lt.s32.totalorder %s9, 3
      %p113 = pnand %p111, %p112
      %p114 = pneg %p113
      // Predicated region
      $region9: #{discriminator_forward.4} parent=5 // pred_check
        _
      $region10: #{discriminator_forward.4} parent=5 // pred_check_branch
        %116 = sbr.rel (%p113) target = $region12
      $region11: #{discriminator_forward.4} parent=5 // pred_region
        %s117 = ssub.s32 %s9, 1
        // Predicated region
        $region13: #{discriminator_forward.4} parent=11 // pred_check
          %p118 = pneg %p30
        $region14: #{discriminator_forward.4} parent=11 // pred_check_branch
          %120 = sbr.rel (%p118) target = $region16
        $region15: #{discriminator_forward.4} parent=11 // pred_region
          _
        $region16: #{discriminator_forward.4} parent=11 // pred_fallthru
          _
        // Predicated region
        $region17: #{discriminator_forward.4} parent=11 // pred_check
          %p121 = pneg %p77
        $region18: #{discriminator_forward.4} parent=11 // pred_check_branch
          %123 = sbr.rel (%p121) target = $region20
        $region19: #{discriminator_forward.4} parent=11 // pred_region
          _
        $region20: #{discriminator_forward.4} parent=11 // pred_fallthru
          _
      $region12: #{discriminator_forward.4} parent=5 // pred_fallthru
        _
      %p124 = scmp.lt.s32.totalorder %s9, 2
      // Predicated region
      $region21: #{discriminator_forward.4} parent=5 // pred_check
        %p125 = pneg %p124
      $region22: #{discriminator_forward.4} parent=5 // pred_check_branch
        %127 = sbr.rel (%p125) target = $region24
      $region23: #{discriminator_forward.4} parent=5 // pred_region
        // Predicated region
        $region25: #{discriminator_forward.4} parent=23 // pred_check
          %p128 = pneg %p50
        $region26: #{discriminator_forward.4} parent=23 // pred_check_branch
          %130 = sbr.rel (%p128) target = $region28
        $region27: #{discriminator_forward.4} parent=23 // pred_region
          %s131 = sand.u32 %s40, 1
          %s132 = sand.u32 %s40, 1
          %s133 = smul.addr %s132, 128
          %s134 = scalar_lea.vmem [#allocation2], %s133
          %s135 = smul.u32 2, %s9
          %s136 = smul.addr %s135, 4
          %s137 = scalar_lea.vmem %s1, %s136
          // Predicated region
          $region29: #{discriminator_forward.4} parent=27 // pred_check
            _
          $region30: #{discriminator_forward.4} parent=27 // pred_check_branch
            %139 = sbr.rel (0) target = $region32
          $region31: #{discriminator_forward.4} parent=27 // pred_region
            // Predicated region
            $region33: #{discriminator_forward.4} parent=31 // pred_check
              _
            $region34: #{discriminator_forward.4} parent=31 // pred_check_branch
              %141 = sbr.rel (0) target = $region36
            $region35: #{discriminator_forward.4} parent=31 // pred_region
              // Predicated region
              $region48: #{discriminator_forward.4} parent=35 // pred_check
                _
              $region49: #{discriminator_forward.4} parent=35 // pred_check_branch
                %187 = sbr.rel (0) target = $region51
              $region50: #{discriminator_forward.4} parent=35 // pred_region
                loop: start=0, step=1, limit=1
                $region52: #{discriminator_forward.4} parent=50 // loop_pre_header
                  _
                $region53: #{discriminator_forward.4} parent=50 // loop_header
                  %s189 = sphi 0, %s193
                  %p190 = scmp.ge.s32.totalorder %s189, 1
                  %s194 = sphi %s137, %s137
                  %s195 = sphi %s134, %s134
                $region54: #{discriminator_forward.4} parent=50 // loop_header_branch
                  %192 = sbr.rel (%p190) target = $region58
                $region55: #{discriminator_forward.4} parent=50 // loop_body
                  %v196 = vld [vmem:[%s194] sm:$0xff]
                  %197 = vst [vmem:[%s195] sm:$0xff] %v196
                  %v198 = vld [vmem:[%s194 + $0x10] sm:$0xff]
                  %199 = vst [vmem:[%s195 + $0x8] sm:$0xff] %v198
                  %v200 = vld [vmem:[%s194 + $0x20] sm:$0xff]
                  %201 = vst [vmem:[%s195 + $0x10] sm:$0xff] %v200
                  %v202 = vld [vmem:[%s194 + $0x30] sm:$0xff]
                  %203 = vst [vmem:[%s195 + $0x18] sm:$0xff] %v202
                  %v204 = vld [vmem:[%s194 + $0x40] sm:$0xff]
                  %205 = vst [vmem:[%s195 + $0x20] sm:$0xff] %v204
                  %v206 = vld [vmem:[%s194 + $0x50] sm:$0xff]
                  %207 = vst [vmem:[%s195 + $0x28] sm:$0xff] %v206
                  %v208 = vld [vmem:[%s194 + $0x60] sm:$0xff]
                  %209 = vst [vmem:[%s195 + $0x30] sm:$0xff] %v208
                  %v210 = vld [vmem:[%s194 + $0x70] sm:$0xff]
                  %211 = vst [vmem:[%s195 + $0x38] sm:$0xff] %v210
                  %v212 = vld [vmem:[%s194 + $0x80] sm:$0xff]
                  %213 = vst [vmem:[%s195 + $0x40] sm:$0xff] %v212
                  %v214 = vld [vmem:[%s194 + $0x90] sm:$0xff]
                  %215 = vst [vmem:[%s195 + $0x48] sm:$0xff] %v214
                  %v216 = vld [vmem:[%s194 + $0xa0] sm:$0xff]
                  %217 = vst [vmem:[%s195 + $0x50] sm:$0xff] %v216
                  %v218 = vld [vmem:[%s194 + $0xb0] sm:$0xff]
                  %219 = vst [vmem:[%s195 + $0x58] sm:$0xff] %v218
                  %v220 = vld [vmem:[%s194 + $0xc0] sm:$0xff]
                  %221 = vst [vmem:[%s195 + $0x60] sm:$0xff] %v220
                  %v222 = vld [vmem:[%s194 + $0xd0] sm:$0xff]
                  %223 = vst [vmem:[%s195 + $0x68] sm:$0xff] %v222
                  %v224 = vld [vmem:[%s194 + $0xe0] sm:$0xff]
                  %225 = vst [vmem:[%s195 + $0x70] sm:$0xff] %v224
                  %v226 = vld [vmem:[%s194 + $0xf0] sm:$0xff]
                  %227 = vst [vmem:[%s195 + $0x78] sm:$0xff] %v226
                $region56: #{discriminator_forward.4} parent=50 // loop_footer
                  %s193 = sadd.s32 1, %s189
                $region57: #{discriminator_forward.4} parent=50 // loop_footer_branch
                  %188 = sbr.rel target = $region53
                $region58: #{discriminator_forward.4} parent=50 // loop_exit
                  _
              $region51: #{discriminator_forward.4} parent=35 // pred_fallthru
                _
              // Predicated region
              $region59: #{discriminator_forward.4} parent=35 // pred_check
                _
              $region60: #{discriminator_forward.4} parent=35 // pred_check_branch
                %229 = sbr.rel target = $region62
              $region61: #{discriminator_forward.4} parent=35 // pred_region
                _
              $region62: #{discriminator_forward.4} parent=35 // pred_fallthru
                _
            $region36: #{discriminator_forward.4} parent=31 // pred_fallthru
              _
            // Predicated region
            $region37: #{discriminator_forward.4} parent=31 // pred_check
              _
            $region38: #{discriminator_forward.4} parent=31 // pred_check_branch
              %143 = sbr.rel target = $region40
            $region39: #{discriminator_forward.4} parent=31 // pred_region
              %s145 = ssub.s32 256, 1
              loop: start=0, step=1, limit=1
              $region41: #{discriminator_forward.4} parent=39 // loop_pre_header
                _
              $region42: #{discriminator_forward.4} parent=39 // loop_header
                %s147 = sphi 0, %s151
                %p148 = scmp.ge.s32.totalorder %s147, 1
                %s152 = sphi %s137, %s137
                %s153 = sphi %s134, %s134
              $region43: #{discriminator_forward.4} parent=39 // loop_header_branch
                %150 = sbr.rel (%p148) target = $region47
              $region44: #{discriminator_forward.4} parent=39 // loop_body
                %v154 = vld [vmem:[%s152] sm:%s145]
                %155 = vst [vmem:[%s153] sm:%s145] %v154
                %v156 = vld [vmem:[%s152 + $0x10] sm:%s145]
                %157 = vst [vmem:[%s153 + $0x8] sm:%s145] %v156
                %v158 = vld [vmem:[%s152 + $0x20] sm:%s145]
                %159 = vst [vmem:[%s153 + $0x10] sm:%s145] %v158
                %v160 = vld [vmem:[%s152 + $0x30] sm:%s145]
                %161 = vst [vmem:[%s153 + $0x18] sm:%s145] %v160
                %v162 = vld [vmem:[%s152 + $0x40] sm:%s145]
                %163 = vst [vmem:[%s153 + $0x20] sm:%s145] %v162
                %v164 = vld [vmem:[%s152 + $0x50] sm:%s145]
                %165 = vst [vmem:[%s153 + $0x28] sm:%s145] %v164
                %v166 = vld [vmem:[%s152 + $0x60] sm:%s145]
                %167 = vst [vmem:[%s153 + $0x30] sm:%s145] %v166
                %v168 = vld [vmem:[%s152 + $0x70] sm:%s145]
                %169 = vst [vmem:[%s153 + $0x38] sm:%s145] %v168
                %v170 = vld [vmem:[%s152 + $0x80] sm:%s145]
                %171 = vst [vmem:[%s153 + $0x40] sm:%s145] %v170
                %v172 = vld [vmem:[%s152 + $0x90] sm:%s145]
                %173 = vst [vmem:[%s153 + $0x48] sm:%s145] %v172
                %v174 = vld [vmem:[%s152 + $0xa0] sm:%s145]
                %175 = vst [vmem:[%s153 + $0x50] sm:%s145] %v174
                %v176 = vld [vmem:[%s152 + $0xb0] sm:%s145]
                %177 = vst [vmem:[%s153 + $0x58] sm:%s145] %v176
                %v178 = vld [vmem:[%s152 + $0xc0] sm:%s145]
                %179 = vst [vmem:[%s153 + $0x60] sm:%s145] %v178
                %v180 = vld [vmem:[%s152 + $0xd0] sm:%s145]
                %181 = vst [vmem:[%s153 + $0x68] sm:%s145] %v180
                %v182 = vld [vmem:[%s152 + $0xe0] sm:%s145]
                %183 = vst [vmem:[%s153 + $0x70] sm:%s145] %v182
                %v184 = vld [vmem:[%s152 + $0xf0] sm:%s145]
                %185 = vst [vmem:[%s153 + $0x78] sm:%s145] %v184
              $region45: #{discriminator_forward.4} parent=39 // loop_footer
                %s151 = sadd.s32 1, %s147
              $region46: #{discriminator_forward.4} parent=39 // loop_footer_branch
                %146 = sbr.rel target = $region42
              $region47: #{discriminator_forward.4} parent=39 // loop_exit
                _
            $region40: #{discriminator_forward.4} parent=31 // pred_fallthru
              _
          $region32: #{discriminator_forward.4} parent=27 // pred_fallthru
            _
          %230 = vnop
        $region28: #{discriminator_forward.4} parent=23 // pred_fallthru
          _
      $region24: #{discriminator_forward.4} parent=5 // pred_fallthru
        _
      %p231 = scmp.le.s32.totalorder 1, %s9
      %p232 = scmp.lt.s32.totalorder %s9, 3
      %p233 = pnand %p231, %p232
      %p234 = pneg %p233
      // Predicated region
      $region63: #{discriminator_forward.4} parent=5 // pred_check
        _
      $region64: #{discriminator_forward.4} parent=5 // pred_check_branch
        %236 = sbr.rel (%p233) target = $region66
      $region65: #{discriminator_forward.4} parent=5 // pred_region
        %s237 = ssub.s32 %s9, 1
        %s238 = sand.u32 %s43, 1
        %s239 = sand.u32 %s43, 1
        %s240 = smul.addr %s239, 128
        %s241 = scalar_lea.vmem [#allocation2], %s240
        // Predicated region
        $region67: #{discriminator_forward.4} parent=65 // pred_check
          %p242 = pneg %p56
        $region68: #{discriminator_forward.4} parent=65 // pred_check_branch
          %244 = sbr.rel (%p242) target = $region70
        $region69: #{discriminator_forward.4} parent=65 // pred_region
          _
        $region70: #{discriminator_forward.4} parent=65 // pred_fallthru
          _
        %p245 = pneg %p30
        %p246 = pneg %p27
        %s247 = sand.u32 %s43, 1
        %s248 = sand.u32 %s43, 1
        %s249 = smul.addr %s248, 128
        %s250 = scalar_lea.vmem [#allocation2], %s249
        %p251 = pneg %p56
        %p252 = pneg %p53
        %p253 = pneg %p77
        %p254 = pneg %p74
        %p255 = pneg %p103
        %p256 = pneg %p100
        %s257 = sand.u32 %s90, 1
        %s258 = sand.u32 %s90, 1
        %s259 = smul.addr %s258, 16
        %s260 = scalar_lea.vmem [#allocation3], %s259
        %s261 = smul.u32 2, %s14
        %s262 = smul.u32 2, %s14
        %v264 = vld [vmem:[%s0] sm:$0xf]
        %v265 = vld [vmem:[%s0 + $0x4] sm:$0xf]
        %v266 = vld [vmem:[%s241] sm:$0xff]
        %v267 = vld [vmem:[%s241 + $0x8] sm:$0xff]
        %v268 = vld [vmem:[%s241 + $0x10] sm:$0xff]
        %v269 = vld [vmem:[%s241 + $0x18] sm:$0xff]
        %v270 = vld [vmem:[%s241 + $0x20] sm:$0xff]
        %v271 = vld [vmem:[%s241 + $0x28] sm:$0xff]
        %v272 = vld [vmem:[%s241 + $0x30] sm:$0xff]
        %v273 = vld [vmem:[%s241 + $0x38] sm:$0xff]
        %v274 = vld [vmem:[%s241 + $0x40] sm:$0xff]
        %v275 = vld [vmem:[%s241 + $0x48] sm:$0xff]
        %v276 = vld [vmem:[%s241 + $0x50] sm:$0xff]
        %v277 = vld [vmem:[%s241 + $0x58] sm:$0xff]
        %v278 = vld [vmem:[%s241 + $0x60] sm:$0xff]
        %v279 = vld [vmem:[%s241 + $0x68] sm:$0xff]
        %v280 = vld [vmem:[%s241 + $0x70] sm:$0xff]
        %v281 = vld [vmem:[%s241 + $0x78] sm:$0xff]
        %v282 = vld [vmem:[%s2] sm:$0xff]
        %v283 = vld [vmem:[%s2 + $0x8] sm:$0xff]
        %285 = vset.pattern.permute.xlu0 0
        %286 = vperm.xlu0 %285, %v282
        %v287 = vpop.permute.xlu0 %286
        %290 = vset.pattern.permute.xlu0 0
        %291 = vperm.xlu0 %290, %v283
        %v292 = vpop.permute.xlu0 %291
        %v296 = vunpack.c.l.b16 %v264
        %v297 = vunpack.c.l.b16 %v265
        %v298 = vpack.c.b16 %v297, %v296
        %v316 = vunpack.c.l.b16 %v266
        %v317 = vunpack.c.h.b16 %v266
        %v318 = vunpack.c.l.b16 %v267
        %v319 = vunpack.c.h.b16 %v267
        %v320 = vunpack.c.l.b16 %v268
        %v321 = vunpack.c.h.b16 %v268
        %v322 = vunpack.c.l.b16 %v269
        %v323 = vunpack.c.h.b16 %v269
        %v324 = vunpack.c.l.b16 %v270
        %v325 = vunpack.c.h.b16 %v270
        %v326 = vunpack.c.l.b16 %v271
        %v327 = vunpack.c.h.b16 %v271
        %v328 = vunpack.c.l.b16 %v272
        %v329 = vunpack.c.h.b16 %v272
        %v330 = vunpack.c.l.b16 %v273
        %v331 = vunpack.c.h.b16 %v273
        %v332 = vunpack.c.l.b16 %v274
        %v333 = vunpack.c.h.b16 %v274
        %v334 = vunpack.c.l.b16 %v275
        %v335 = vunpack.c.h.b16 %v275
        %v336 = vunpack.c.l.b16 %v276
        %v337 = vunpack.c.h.b16 %v276
        %v338 = vunpack.c.l.b16 %v277
        %v339 = vunpack.c.h.b16 %v277
        %v340 = vunpack.c.l.b16 %v278
        %v341 = vunpack.c.h.b16 %v278
        %v342 = vunpack.c.l.b16 %v279
        %v343 = vunpack.c.h.b16 %v279
        %v344 = vunpack.c.l.b16 %v280
        %v345 = vunpack.c.h.b16 %v280
        %v346 = vunpack.c.l.b16 %v281
        %v347 = vunpack.c.h.b16 %v281
        %v348 = vpack.c.b16 %v318, %v316
        %v349 = vpack.c.b16 %v319, %v317
        %v350 = vpack.c.b16 %v322, %v320
        %v351 = vpack.c.b16 %v323, %v321
        %v352 = vpack.c.b16 %v326, %v324
        %v353 = vpack.c.b16 %v327, %v325
        %v354 = vpack.c.b16 %v330, %v328
        %v355 = vpack.c.b16 %v331, %v329
        %v356 = vpack.c.b16 %v334, %v332
        %v357 = vpack.c.b16 %v335, %v333
        %v358 = vpack.c.b16 %v338, %v336
        %v359 = vpack.c.b16 %v339, %v337
        %v360 = vpack.c.b16 %v342, %v340
        %v361 = vpack.c.b16 %v343, %v341
        %v362 = vpack.c.b16 %v346, %v344
        %v363 = vpack.c.b16 %v347, %v345
        %380 = vmatprep.subr.bf16.mxu0 %v363
        %381 = vmatpush1.bf16.msra.mxu0 %v362
        %382 = vmatprep.subr.bf16.mxu0 %v361
        %383 = vmatpush1.bf16.msra.mxu0 %v360
        %384 = vmatprep.subr.bf16.mxu0 %v359
        %385 = vmatpush1.bf16.msra.mxu0 %v358
        %386 = vmatprep.subr.bf16.mxu0 %v357
        %387 = vmatpush1.bf16.msra.mxu0 %v356
        %388 = vmatprep.subr.bf16.mxu0 %v355
        %389 = vmatpush1.bf16.msra.mxu0 %v354
        %390 = vmatprep.subr.bf16.mxu0 %v353
        %391 = vmatpush1.bf16.msra.mxu0 %v352
        %392 = vmatprep.subr.bf16.mxu0 %v351
        %393 = vmatpush1.bf16.msra.mxu0 %v350
        %394 = vmatprep.subr.bf16.mxu0 %v349
        %395 = vmatpush1.bf16.msra.mxu0 %v348
        %396 = vmatprep.subr.bf16.mxu0 0
        %397 = vmatpush2.bf16.msra.mxu0 0
        %398 = vmatprep.subr.bf16.mxu0 0
        %399 = vmatpush2.bf16.msra.mxu0 0
        %400 = vmatprep.subr.bf16.mxu0 0
        %401 = vmatpush2.bf16.msra.mxu0 0
        %402 = vmatprep.subr.bf16.mxu0 0
        %403 = vmatpush2.bf16.msra.mxu0 0
        %404 = vmatprep.subr.bf16.mxu0 0
        %405 = vmatpush2.bf16.msra.mxu0 0
        %406 = vmatprep.subr.bf16.mxu0 0
        %407 = vmatpush2.bf16.msra.mxu0 0
        %408 = vmatprep.subr.bf16.mxu0 0
        %409 = vmatpush2.bf16.msra.mxu0 0
        %410 = vmatprep.subr.bf16.mxu0 0
        %411 = vmatpush2.bf16.msra.mxu0 0
        %412 = vmatprep.mubr.bf16.mxu0 0
        %413 = vmatmul.mubr.bf16.gmra.mxu0 %v298
        %v414 = vpop.f32.mrf.mxu0
        %v415 = vadd.f32 %v287, %v414
        %v416 = vpop.f32.mrf.mxu0
        %v417 = vadd.f32 %v287, %v416
        %v418 = vpop.f32.mrf.mxu0
        %v419 = vadd.f32 %v292, %v418
        %v420 = vpop.f32.mrf.mxu0
        %v421 = vadd.f32 %v292, %v420
        %422 = vdwg.mxu0
        %vm423 = vcmp.gt.f32.partialorder %v415, 0.0
        %vm424 = vcmp.gt.f32.partialorder %v417, 0.0
        %vm425 = vcmp.gt.f32.partialorder %v419, 0.0
        %vm426 = vcmp.gt.f32.partialorder %v421, 0.0
        %v427 = vmul.f32 %v415, 0.1
        %v428 = vmul.f32 %v417, 0.1
        %v429 = vmul.f32 %v419, 0.1
        %v430 = vmul.f32 %v421, 0.1
        %v431 = vsel %vm423, %v415, %v427
        %v432 = vsel %vm424, %v417, %v428
        %v433 = vsel %vm425, %v419, %v429
        %v434 = vsel %vm426, %v421, %v430
        %v435 = vpack.c.bf16 %v433, %v431
        %v436 = vpack.c.bf16 %v434, %v432
        %v439 = vunpack.c.l.b16 %v435
        %v440 = vunpack.c.l.b16 %v436
        %v441 = vunpack.c.h.b16 %v435
        %v442 = vunpack.c.h.b16 %v436
        %v443 = vpack.c.b16 %v440, %v439
        %v444 = vpack.c.b16 %v442, %v441
        %447 = vst [vmem:[%s260] sm:$0xff] %v443
        %448 = vst [vmem:[%s260 + $0x8] sm:$0xff] %v444
        %s449 = sand.u32 %s90, 1
        %s450 = sand.u32 %s90, 1
        %s451 = smul.addr %s450, 16
        %s452 = scalar_lea.vmem [#allocation3], %s451
        // Predicated region
        $region71: #{discriminator_forward.4} parent=65 // pred_check
          %p453 = pneg %p100
        $region72: #{discriminator_forward.4} parent=65 // pred_check_branch
          %455 = sbr.rel (%p453) target = $region74
        $region73: #{discriminator_forward.4} parent=65 // pred_region
          %s456 = smul.u32 2, %s14
          %s457 = smul.addr %s456, 4
          %s458 = scalar_lea.vmem %s3, %s457
          // Predicated region
          $region75: #{discriminator_forward.4} parent=73 // pred_check
            _
          $region76: #{discriminator_forward.4} parent=73 // pred_check_branch
            %460 = sbr.rel (0) target = $region78
          $region77: #{discriminator_forward.4} parent=73 // pred_region
            // Predicated region
            $region79: #{discriminator_forward.4} parent=77 // pred_check
              _
            $region80: #{discriminator_forward.4} parent=77 // pred_check_branch
              %462 = sbr.rel (0) target = $region82
            $region81: #{discriminator_forward.4} parent=77 // pred_region
              // Predicated region
              $region94: #{discriminator_forward.4} parent=81 // pred_check
                _
              $region95: #{discriminator_forward.4} parent=81 // pred_check_branch
                %480 = sbr.rel (0) target = $region97
              $region96: #{discriminator_forward.4} parent=81 // pred_region
                loop: start=0, step=1, limit=1
                $region98: #{discriminator_forward.4} parent=96 // loop_pre_header
                  _
                $region99: #{discriminator_forward.4} parent=96 // loop_header
                  %s482 = sphi 0, %s486
                  %p483 = scmp.ge.s32.totalorder %s482, 1
                  %s487 = sphi %s452, %s452
                  %s488 = sphi %s458, %s458
                $region100: #{discriminator_forward.4} parent=96 // loop_header_branch
                  %485 = sbr.rel (%p483) target = $region104
                $region101: #{discriminator_forward.4} parent=96 // loop_body
                  %v489 = vld [vmem:[%s487] sm:$0xff]
                  %490 = vst [vmem:[%s488] sm:$0xff] %v489
                  %v491 = vld [vmem:[%s487 + $0x8] sm:$0xff]
                  %492 = vst [vmem:[%s488 + $0x10] sm:$0xff] %v491
                $region102: #{discriminator_forward.4} parent=96 // loop_footer
                  %s486 = sadd.s32 1, %s482
                $region103: #{discriminator_forward.4} parent=96 // loop_footer_branch
                  %481 = sbr.rel target = $region99
                $region104: #{discriminator_forward.4} parent=96 // loop_exit
                  _
              $region97: #{discriminator_forward.4} parent=81 // pred_fallthru
                _
              // Predicated region
              $region105: #{discriminator_forward.4} parent=81 // pred_check
                _
              $region106: #{discriminator_forward.4} parent=81 // pred_check_branch
                %494 = sbr.rel target = $region108
              $region107: #{discriminator_forward.4} parent=81 // pred_region
                _
              $region108: #{discriminator_forward.4} parent=81 // pred_fallthru
                _
            $region82: #{discriminator_forward.4} parent=77 // pred_fallthru
              _
            // Predicated region
            $region83: #{discriminator_forward.4} parent=77 // pred_check
              _
            $region84: #{discriminator_forward.4} parent=77 // pred_check_branch
              %464 = sbr.rel target = $region86
            $region85: #{discriminator_forward.4} parent=77 // pred_region
              %s466 = ssub.s32 256, 1
              loop: start=0, step=1, limit=1
              $region87: #{discriminator_forward.4} parent=85 // loop_pre_header
                _
              $region88: #{discriminator_forward.4} parent=85 // loop_header
                %s468 = sphi 0, %s472
                %p469 = scmp.ge.s32.totalorder %s468, 1
                %s473 = sphi %s452, %s452
                %s474 = sphi %s458, %s458
              $region89: #{discriminator_forward.4} parent=85 // loop_header_branch
                %471 = sbr.rel (%p469) target = $region93
              $region90: #{discriminator_forward.4} parent=85 // loop_body
                %v475 = vld [vmem:[%s473] sm:%s466]
                %476 = vst [vmem:[%s474] sm:%s466] %v475
                %v477 = vld [vmem:[%s473 + $0x8] sm:%s466]
                %478 = vst [vmem:[%s474 + $0x10] sm:%s466] %v477
              $region91: #{discriminator_forward.4} parent=85 // loop_footer
                %s472 = sadd.s32 1, %s468
              $region92: #{discriminator_forward.4} parent=85 // loop_footer_branch
                %467 = sbr.rel target = $region88
              $region93: #{discriminator_forward.4} parent=85 // loop_exit
                _
            $region86: #{discriminator_forward.4} parent=77 // pred_fallthru
              _
          $region78: #{discriminator_forward.4} parent=73 // pred_fallthru
            _
          %495 = vnop
        $region74: #{discriminator_forward.4} parent=65 // pred_fallthru
          _
      $region66: #{discriminator_forward.4} parent=5 // pred_fallthru
        _
      %p496 = scmp.le.s32.totalorder 2, %s9
      // Predicated region
      $region109: #{discriminator_forward.4} parent=5 // pred_check
        %p497 = pneg %p496
      $region110: #{discriminator_forward.4} parent=5 // pred_check_branch
        %499 = sbr.rel (%p497) target = $region112
      $region111: #{discriminator_forward.4} parent=5 // pred_region
        %s500 = ssub.s32 %s9, 2
        // Predicated region
        $region113: #{discriminator_forward.4} parent=111 // pred_check
          %p501 = pneg %p106
        $region114: #{discriminator_forward.4} parent=111 // pred_check_branch
          %503 = sbr.rel (%p501) target = $region116
        $region115: #{discriminator_forward.4} parent=111 // pred_region
          %s504 = sand.u32 %s91, 1
          %s505 = sand.u32 %s91, 1
          %s506 = smul.addr %s505, 16
          %s507 = scalar_lea.vmem [#allocation3], %s506
        $region116: #{discriminator_forward.4} parent=111 // pred_fallthru
          _
      $region112: #{discriminator_forward.4} parent=5 // pred_fallthru
        _
    $region6: #{discriminator_forward.4} parent=1 // loop_footer
      %s13 = sadd.s32 1, %s9
    $region7: #{discriminator_forward.4} parent=1 // loop_footer_branch
      %8 = sbr.rel target = $region3
    $region8: #{discriminator_forward.4} parent=1 // loop_exit
      _

// kernel: discriminator_forward.5
$region0: #{discriminator_forward.5}
  #allocation0 [shape = 'u32[]', space=smem, size = 0x4, offset = 0x4, fixed_abs, tag = 'smem constant byte address 0x4 - core index']
  #allocation1 [shape = 'u32[144,128]{1,0:T(1,128)}', space=vmem, size = 0x12000, scoped, tag = 'internal scratch']
  #allocation2 [shape = 'f32[1]{0:T(128)S(6)}', space=smem, size = 0x200, scoped, tag = 'scoped memory for discriminator_forward.5']
  #allocation3 [shape = 'f32[1]{0:T(128)S(6)}', space=smem, size = 0x200, scoped, tag = 'scoped memory for discriminator_forward.5']
  #allocation4 [shape = 'f32[1]{0:T(128)S(6)}', space=smem, size = 0x200, scoped, tag = 'scoped memory for discriminator_forward.5']
  %s0 = inlined_call_operand.<no memory space> [shape: f32[1], index: 0, kind: input, shape index: {}]
  %s1 = inlined_call_operand.<no memory space> [shape: f32[1], index: 1, kind: input, shape index: {}]
  %s2 = inlined_call_operand.<no memory space> [shape: f32[1], index: 2, kind: input, shape index: {}]
  %s3 = inlined_call_operand.vmem [shape: bf16[2,256,64], index: 3, kind: input, shape index: {}]
  %s4 = inlined_call_operand.vmem [shape: bf16[32,256], index: 4, kind: input, shape index: {}]
  %s5 = inlined_call_operand.vmem [shape: f32[32,1], index: 5, kind: input, shape index: {}]
  %s6 = inlined_call_operand.vmem [shape: f32[4,32], index: 6, kind: input, shape index: {}]
  %s7 = inlined_call_operand.vmem [shape: f32[4,1], index: 7, kind: input, shape index: {}]
  %s8 = inlined_call_operand.vmem [shape: f32[4,32], index: 8, kind: input, shape index: {}]
  %s9 = inlined_call_operand.vmem [shape: f32[4,1], index: 9, kind: input, shape index: {}]
  %s10 = inlined_call_operand.vmem [shape: f32[32,32], index: 10, kind: input, shape index: {}]
  %s11 = inlined_call_operand.vmem [shape: f32[32,1], index: 11, kind: input, shape index: {}]
  %s12 = inlined_call_operand.vmem [shape: f32[16,64,16], index: 12, kind: input, shape index: {}]
  %s13 = inlined_call_operand.vmem [shape: f32[16,64,32], index: 13, kind: input, shape index: {}]
  %s14 = inlined_call_operand.vmem [shape: f32[64,1], index: 14, kind: input, shape index: {}]
  %s15 = inlined_call_operand.vmem [shape: f32[8,64], index: 15, kind: input, shape index: {}]
  %s16 = inlined_call_operand.vmem [shape: f32[8,1], index: 16, kind: input, shape index: {}]
  %s17 = inlined_call_operand.vmem [shape: f32[8,64], index: 17, kind: input, shape index: {}]
  %s18 = inlined_call_operand.vmem [shape: f32[8,1], index: 18, kind: input, shape index: {}]
  %s19 = inlined_call_operand.vmem [shape: f32[64,64], index: 19, kind: input, shape index: {}]
  %s20 = inlined_call_operand.vmem [shape: f32[64,1], index: 20, kind: input, shape index: {}]
  %s21 = inlined_call_operand.vmem [shape: f32[64,16], index: 21, kind: input, shape index: {}]
  %s22 = inlined_call_operand.vmem [shape: f32[2,1,128], index: 22, kind: output, shape index: {}]
  %s23 = sld [smem:[#allocation0]]
  $region121: #{discriminator_forward.5} parent=0
    _
  %s25 = ssub.s32 1, %s23
  %s26 = scalar_select 0, %s25, %s23
  %27 = sst [smem:[#allocation2]] %s0
  %28 = sst [smem:[#allocation3]] %s1
  %29 = sst [smem:[#allocation4]] %s2
  loop: start=0, step=1, limit=4
  $region2: #{discriminator_forward.5} parent=0 // loop_pre_header
    _
  $region3: #{discriminator_forward.5} parent=0 // loop_header
    %s31 = sphi 0, %s35
    %p32 = scmp.ge.s32.totalorder %s31, 4
    %s39 = sphi 0, %s39
    %s41 = sphi 0, %s39
    %s42 = sphi 0, %s41
    %s56 = sphi 0, %s42
    %s60 = sphi 0, %s60
    %s62 = sphi 0, %s60
    %s63 = sphi 0, %s62
    %s77 = sphi 0, %s63
    %s81 = sphi 0, %s81
    %s83 = sphi 0, %s81
    %s84 = sphi 0, %s83
    %s98 = sphi 0, %s84
    %s104 = sphi 0, %s106
    %s107 = sphi 0, %s104
    %s108 = sphi 0, %s107
    %s124 = sphi 0, %s108
    %s128 = sphi 0, %s128
    %s130 = sphi 0, %s128
    %s131 = sphi 0, %s130
    %s145 = sphi 0, %s131
    %s149 = sphi 0, %s149
    %s151 = sphi 0, %s149
    %s152 = sphi 0, %s151
    %s166 = sphi 0, %s152
    %s170 = sphi 0, %s170
    %s172 = sphi 0, %s170
    %s173 = sphi 0, %s172
    %s187 = sphi 0, %s173
    %s191 = sphi 0, %s191
    %s193 = sphi 0, %s191
    %s194 = sphi 0, %s193
    %s208 = sphi 0, %s194
    %s212 = sphi 0, %s212
    %s214 = sphi 0, %s212
    %s215 = sphi 0, %s214
    %s229 = sphi 0, %s215
    %s233 = sphi 0, %s233
    %s235 = sphi 0, %s233
    %s236 = sphi 0, %s235
    %s250 = sphi 0, %s236
    %s254 = sphi 0, %s254
    %s256 = sphi 0, %s254
    %s257 = sphi 0, %s256
    %s271 = sphi 0, %s257
    %s275 = sphi 0, %s275
    %s277 = sphi 0, %s275
    %s278 = sphi 0, %s277
    %s292 = sphi 0, %s278
    %s296 = sphi 0, %s296
    %s298 = sphi 0, %s296
    %s299 = sphi 0, %s298
    %s313 = sphi 0, %s299
    %s317 = sphi 0, %s317
    %s319 = sphi 0, %s317
    %s320 = sphi 0, %s319
    %s334 = sphi 0, %s320
    %s338 = sphi 0, %s338
    %s340 = sphi 0, %s338
    %s341 = sphi 0, %s340
    %s355 = sphi 0, %s341
    %s359 = sphi 0, %s359
    %s361 = sphi 0, %s359
    %s362 = sphi 0, %s361
    %s376 = sphi 0, %s362
    %s380 = sphi 0, %s380
    %s382 = sphi 0, %s380
    %s383 = sphi 0, %s382
    %s397 = sphi 0, %s383
    %s401 = sphi 0, %s401
    %s403 = sphi 0, %s401
    %s404 = sphi 0, %s403
    %s418 = sphi 0, %s404
    %s422 = sphi 0, %s422
    %s424 = sphi 0, %s422
    %s425 = sphi 0, %s424
    %s439 = sphi 0, %s425
    %s443 = sphi 0, %s443
    %s445 = sphi 0, %s443
    %s446 = sphi 0, %s445
    %s460 = sphi 0, %s446
    %s464 = sphi 0, %s464
    %s466 = sphi 0, %s464
    %s467 = sphi 0, %s466
    %s481 = sphi 0, %s467
    %s485 = sphi 0, %s485
    %s487 = sphi 0, %s485
    %s488 = sphi 0, %s487
    %s502 = sphi 0, %s488
    %s508 = sphi 0, %s510
    %s511 = sphi 0, %s508
    %s512 = sphi 0, %s511
    %s528 = sphi 0, %s512
  $region4: #{discriminator_forward.5} parent=0 // loop_header_branch
    %34 = sbr.rel (%p32) target = $region8
  $region5: #{discriminator_forward.5} parent=0 // loop_body
    %s36 = ssub.s32 %s31, 1
    %s37 = ssub.s32 %s31, 2
    %s38 = sadd.s32 %s31, 1
    %s40 = sadd.s32 %s39, 1
    %p43 = scmp.eq.s32.totalorder %s31, 1
    %p44 = scmp.ne.s32.totalorder %s39, %s41
    %p45 = scmp.eq.s32.totalorder %s31, 0
    %p46 = por %p44, %p45
    %p47 = scmp.ne.s32.totalorder %s39, %s41
    %p48 = scmp.eq.s32.totalorder %s36, 1
    %p49 = por %p47, %p48
    %p50 = scmp.ne.s32.totalorder %s41, %s42
    %p51 = scmp.eq.s32.totalorder %s36, 0
    %p52 = por %p50, %p51
    %p53 = scmp.ne.s32.totalorder %s41, %s42
    %p54 = scmp.eq.s32.totalorder %s37, 1
    %p55 = por %p53, %p54
    %p57 = scmp.ne.s32.totalorder %s42, %s56
    %p58 = scmp.eq.s32.totalorder %s37, 0
    %p59 = por %p57, %p58
    %s61 = sadd.s32 %s60, 1
    %p64 = scmp.eq.s32.totalorder %s31, 1
    %p65 = scmp.ne.s32.totalorder %s60, %s62
    %p66 = scmp.eq.s32.totalorder %s31, 0
    %p67 = por %p65, %p66
    %p68 = scmp.ne.s32.totalorder %s60, %s62
    %p69 = scmp.eq.s32.totalorder %s36, 1
    %p70 = por %p68, %p69
    %p71 = scmp.ne.s32.totalorder %s62, %s63
    %p72 = scmp.eq.s32.totalorder %s36, 0
    %p73 = por %p71, %p72
    %p74 = scmp.ne.s32.totalorder %s62, %s63
    %p75 = scmp.eq.s32.totalorder %s37, 1
    %p76 = por %p74, %p75
    %p78 = scmp.ne.s32.totalorder %s63, %s77
    %p79 = scmp.eq.s32.totalorder %s37, 0
    %p80 = por %p78, %p79
    %s82 = sadd.s32 %s81, 1
    %p85 = scmp.eq.s32.totalorder %s31, 1
    %p86 = scmp.ne.s32.totalorder %s81, %s83
    %p87 = scmp.eq.s32.totalorder %s31, 0
    %p88 = por %p86, %p87
    %p89 = scmp.ne.s32.totalorder %s81, %s83
    %p90 = scmp.eq.s32.totalorder %s36, 1
    %p91 = por %p89, %p90
    %p92 = scmp.ne.s32.totalorder %s83, %s84
    %p93 = scmp.eq.s32.totalorder %s36, 0
    %p94 = por %p92, %p93
    %p95 = scmp.ne.s32.totalorder %s83, %s84
    %p96 = scmp.eq.s32.totalorder %s37, 1
    %p97 = por %p95, %p96
    %p99 = scmp.ne.s32.totalorder %s84, %s98
    %p100 = scmp.eq.s32.totalorder %s37, 0
    %p101 = por %p99, %p100
    %s102 = ssub.s32 %s31, %s38
    %p103 = scmp.eq.s32.totalorder %s102, 0
    %s105 = sadd.s32 %s104, 1
    %s106 = scalar_select %p103, %s104, %s105
    %p109 = pneg %p103
    %p110 = scmp.eq.s32.totalorder %s31, 1
    %p111 = por %p109, %p110
    %p112 = scmp.ne.s32.totalorder %s104, %s107
    %p113 = scmp.eq.s32.totalorder %s31, 0
    %p114 = por %p112, %p113
    %p115 = scmp.ne.s32.totalorder %s104, %s107
    %p116 = scmp.eq.s32.totalorder %s36, 1
    %p117 = por %p115, %p116
    %p118 = scmp.ne.s32.totalorder %s107, %s108
    %p119 = scmp.eq.s32.totalorder %s36, 0
    %p120 = por %p118, %p119
    %p121 = scmp.ne.s32.totalorder %s107, %s108
    %p122 = scmp.eq.s32.totalorder %s37, 1
    %p123 = por %p121, %p122
    %p125 = scmp.ne.s32.totalorder %s108, %s124
    %p126 = scmp.eq.s32.totalorder %s37, 0
    %p127 = por %p125, %p126
    %s129 = sadd.s32 %s128, 1
    %p132 = scmp.eq.s32.totalorder %s31, 1
    %p133 = scmp.ne.s32.totalorder %s128, %s130
    %p134 = scmp.eq.s32.totalorder %s31, 0
    %p135 = por %p133, %p134
    %p136 = scmp.ne.s32.totalorder %s128, %s130
    %p137 = scmp.eq.s32.totalorder %s36, 1
    %p138 = por %p136, %p137
    %p139 = scmp.ne.s32.totalorder %s130, %s131
    %p140 = scmp.eq.s32.totalorder %s36, 0
    %p141 = por %p139, %p140
    %p142 = scmp.ne.s32.totalorder %s130, %s131
    %p143 = scmp.eq.s32.totalorder %s37, 1
    %p144 = por %p142, %p143
    %p146 = scmp.ne.s32.totalorder %s131, %s145
    %p147 = scmp.eq.s32.totalorder %s37, 0
    %p148 = por %p146, %p147
    %s150 = sadd.s32 %s149, 1
    %p153 = scmp.eq.s32.totalorder %s31, 1
    %p154 = scmp.ne.s32.totalorder %s149, %s151
    %p155 = scmp.eq.s32.totalorder %s31, 0
    %p156 = por %p154, %p155
    %p157 = scmp.ne.s32.totalorder %s149, %s151
    %p158 = scmp.eq.s32.totalorder %s36, 1
    %p159 = por %p157, %p158
    %p160 = scmp.ne.s32.totalorder %s151, %s152
    %p161 = scmp.eq.s32.totalorder %s36, 0
    %p162 = por %p160, %p161
    %p163 = scmp.ne.s32.totalorder %s151, %s152
    %p164 = scmp.eq.s32.totalorder %s37, 1
    %p165 = por %p163, %p164
    %p167 = scmp.ne.s32.totalorder %s152, %s166
    %p168 = scmp.eq.s32.totalorder %s37, 0
    %p169 = por %p167, %p168
    %s171 = sadd.s32 %s170, 1
    %p174 = scmp.eq.s32.totalorder %s31, 1
    %p175 = scmp.ne.s32.totalorder %s170, %s172
    %p176 = scmp.eq.s32.totalorder %s31, 0
    %p177 = por %p175, %p176
    %p178 = scmp.ne.s32.totalorder %s170, %s172
    %p179 = scmp.eq.s32.totalorder %s36, 1
    %p180 = por %p178, %p179
    %p181 = scmp.ne.s32.totalorder %s172, %s173
    %p182 = scmp.eq.s32.totalorder %s36, 0
    %p183 = por %p181, %p182
    %p184 = scmp.ne.s32.totalorder %s172, %s173
    %p185 = scmp.eq.s32.totalorder %s37, 1
    %p186 = por %p184, %p185
    %p188 = scmp.ne.s32.totalorder %s173, %s187
    %p189 = scmp.eq.s32.totalorder %s37, 0
    %p190 = por %p188, %p189
    %s192 = sadd.s32 %s191, 1
    %p195 = scmp.eq.s32.totalorder %s31, 1
    %p196 = scmp.ne.s32.totalorder %s191, %s193
    %p197 = scmp.eq.s32.totalorder %s31, 0
    %p198 = por %p196, %p197
    %p199 = scmp.ne.s32.totalorder %s191, %s193
    %p200 = scmp.eq.s32.totalorder %s36, 1
    %p201 = por %p199, %p200
    %p202 = scmp.ne.s32.totalorder %s193, %s194
    %p203 = scmp.eq.s32.totalorder %s36, 0
    %p204 = por %p202, %p203
    %p205 = scmp.ne.s32.totalorder %s193, %s194
    %p206 = scmp.eq.s32.totalorder %s37, 1
    %p207 = por %p205, %p206
    %p209 = scmp.ne.s32.totalorder %s194, %s208
    %p210 = scmp.eq.s32.totalorder %s37, 0
    %p211 = por %p209, %p210
    %s213 = sadd.s32 %s212, 1
    %p216 = scmp.eq.s32.totalorder %s31, 1
    %p217 = scmp.ne.s32.totalorder %s212, %s214
    %p218 = scmp.eq.s32.totalorder %s31, 0
    %p219 = por %p217, %p218
    %p220 = scmp.ne.s32.totalorder %s212, %s214
    %p221 = scmp.eq.s32.totalorder %s36, 1
    %p222 = por %p220, %p221
    %p223 = scmp.ne.s32.totalorder %s214, %s215
    %p224 = scmp.eq.s32.totalorder %s36, 0
    %p225 = por %p223, %p224
    %p226 = scmp.ne.s32.totalorder %s214, %s215
    %p227 = scmp.eq.s32.totalorder %s37, 1
    %p228 = por %p226, %p227
    %p230 = scmp.ne.s32.totalorder %s215, %s229
    %p231 = scmp.eq.s32.totalorder %s37, 0
    %p232 = por %p230, %p231
    %s234 = sadd.s32 %s233, 1
    %p237 = scmp.eq.s32.totalorder %s31, 1
    %p238 = scmp.ne.s32.totalorder %s233, %s235
    %p239 = scmp.eq.s32.totalorder %s31, 0
    %p240 = por %p238, %p239
    %p241 = scmp.ne.s32.totalorder %s233, %s235
    %p242 = scmp.eq.s32.totalorder %s36, 1
    %p243 = por %p241, %p242
    %p244 = scmp.ne.s32.totalorder %s235, %s236
    %p245 = scmp.eq.s32.totalorder %s36, 0
    %p246 = por %p244, %p245
    %p247 = scmp.ne.s32.totalorder %s235, %s236
    %p248 = scmp.eq.s32.totalorder %s37, 1
    %p249 = por %p247, %p248
    %p251 = scmp.ne.s32.totalorder %s236, %s250
    %p252 = scmp.eq.s32.totalorder %s37, 0
    %p253 = por %p251, %p252
    %s255 = sadd.s32 %s254, 1
    %p258 = scmp.eq.s32.totalorder %s31, 1
    %p259 = scmp.ne.s32.totalorder %s254, %s256
    %p260 = scmp.eq.s32.totalorder %s31, 0
    %p261 = por %p259, %p260
    %p262 = scmp.ne.s32.totalorder %s254, %s256
    %p263 = scmp.eq.s32.totalorder %s36, 1
    %p264 = por %p262, %p263
    %p265 = scmp.ne.s32.totalorder %s256, %s257
    %p266 = scmp.eq.s32.totalorder %s36, 0
    %p267 = por %p265, %p266
    %p268 = scmp.ne.s32.totalorder %s256, %s257
    %p269 = scmp.eq.s32.totalorder %s37, 1
    %p270 = por %p268, %p269
    %p272 = scmp.ne.s32.totalorder %s257, %s271
    %p273 = scmp.eq.s32.totalorder %s37, 0
    %p274 = por %p272, %p273
    %s276 = sadd.s32 %s275, 1
    %p279 = scmp.eq.s32.totalorder %s31, 1
    %p280 = scmp.ne.s32.totalorder %s275, %s277
    %p281 = scmp.eq.s32.totalorder %s31, 0
    %p282 = por %p280, %p281
    %p283 = scmp.ne.s32.totalorder %s275, %s277
    %p284 = scmp.eq.s32.totalorder %s36, 1
    %p285 = por %p283, %p284
    %p286 = scmp.ne.s32.totalorder %s277, %s278
    %p287 = scmp.eq.s32.totalorder %s36, 0
    %p288 = por %p286, %p287
    %p289 = scmp.ne.s32.totalorder %s277, %s278
    %p290 = scmp.eq.s32.totalorder %s37, 1
    %p291 = por %p289, %p290
    %p293 = scmp.ne.s32.totalorder %s278, %s292
    %p294 = scmp.eq.s32.totalorder %s37, 0
    %p295 = por %p293, %p294
    %s297 = sadd.s32 %s296, 1
    %p300 = scmp.eq.s32.totalorder %s31, 1
    %p301 = scmp.ne.s32.totalorder %s296, %s298
    %p302 = scmp.eq.s32.totalorder %s31, 0
    %p303 = por %p301, %p302
    %p304 = scmp.ne.s32.totalorder %s296, %s298
    %p305 = scmp.eq.s32.totalorder %s36, 1
    %p306 = por %p304, %p305
    %p307 = scmp.ne.s32.totalorder %s298, %s299
    %p308 = scmp.eq.s32.totalorder %s36, 0
    %p309 = por %p307, %p308
    %p310 = scmp.ne.s32.totalorder %s298, %s299
    %p311 = scmp.eq.s32.totalorder %s37, 1
    %p312 = por %p310, %p311
    %p314 = scmp.ne.s32.totalorder %s299, %s313
    %p315 = scmp.eq.s32.totalorder %s37, 0
    %p316 = por %p314, %p315
    %s318 = sadd.s32 %s317, 1
    %p321 = scmp.eq.s32.totalorder %s31, 1
    %p322 = scmp.ne.s32.totalorder %s317, %s319
    %p323 = scmp.eq.s32.totalorder %s31, 0
    %p324 = por %p322, %p323
    %p325 = scmp.ne.s32.totalorder %s317, %s319
    %p326 = scmp.eq.s32.totalorder %s36, 1
    %p327 = por %p325, %p326
    %p328 = scmp.ne.s32.totalorder %s319, %s320
    %p329 = scmp.eq.s32.totalorder %s36, 0
    %p330 = por %p328, %p329
    %p331 = scmp.ne.s32.totalorder %s319, %s320
    %p332 = scmp.eq.s32.totalorder %s37, 1
    %p333 = por %p331, %p332
    %p335 = scmp.ne.s32.totalorder %s320, %s334
    %p336 = scmp.eq.s32.totalorder %s37, 0
    %p337 = por %p335, %p336
    %s339 = sadd.s32 %s338, 1
    %p342 = scmp.eq.s32.totalorder %s31, 1
    %p343 = scmp.ne.s32.totalorder %s338, %s340
    %p344 = scmp.eq.s32.totalorder %s31, 0
    %p345 = por %p343, %p344
    %p346 = scmp.ne.s32.totalorder %s338, %s340
    %p347 = scmp.eq.s32.totalorder %s36, 1
    %p348 = por %p346, %p347
    %p349 = scmp.ne.s32.totalorder %s340, %s341
    %p350 = scmp.eq.s32.totalorder %s36, 0
    %p351 = por %p349, %p350
    %p352 = scmp.ne.s32.totalorder %s340, %s341
    %p353 = scmp.eq.s32.totalorder %s37, 1
    %p354 = por %p352, %p353
    %p356 = scmp.ne.s32.totalorder %s341, %s355
    %p357 = scmp.eq.s32.totalorder %s37, 0
    %p358 = por %p356, %p357
    %s360 = sadd.s32 %s359, 1
    %p363 = scmp.eq.s32.totalorder %s31, 1
    %p364 = scmp.ne.s32.totalorder %s359, %s361
    %p365 = scmp.eq.s32.totalorder %s31, 0
    %p366 = por %p364, %p365
    %p367 = scmp.ne.s32.totalorder %s359, %s361
    %p368 = scmp.eq.s32.totalorder %s36, 1
    %p369 = por %p367, %p368
    %p370 = scmp.ne.s32.totalorder %s361, %s362
    %p371 = scmp.eq.s32.totalorder %s36, 0
    %p372 = por %p370, %p371
    %p373 = scmp.ne.s32.totalorder %s361, %s362
    %p374 = scmp.eq.s32.totalorder %s37, 1
    %p375 = por %p373, %p374
    %p377 = scmp.ne.s32.totalorder %s362, %s376
    %p378 = scmp.eq.s32.totalorder %s37, 0
    %p379 = por %p377, %p378
    %s381 = sadd.s32 %s380, 1
    %p384 = scmp.eq.s32.totalorder %s31, 1
    %p385 = scmp.ne.s32.totalorder %s380, %s382
    %p386 = scmp.eq.s32.totalorder %s31, 0
    %p387 = por %p385, %p386
    %p388 = scmp.ne.s32.totalorder %s380, %s382
    %p389 = scmp.eq.s32.totalorder %s36, 1
    %p390 = por %p388, %p389
    %p391 = scmp.ne.s32.totalorder %s382, %s383
    %p392 = scmp.eq.s32.totalorder %s36, 0
    %p393 = por %p391, %p392
    %p394 = scmp.ne.s32.totalorder %s382, %s383
    %p395 = scmp.eq.s32.totalorder %s37, 1
    %p396 = por %p394, %p395
    %p398 = scmp.ne.s32.totalorder %s383, %s397
    %p399 = scmp.eq.s32.totalorder %s37, 0
    %p400 = por %p398, %p399
    %s402 = sadd.s32 %s401, 1
    %p405 = scmp.eq.s32.totalorder %s31, 1
    %p406 = scmp.ne.s32.totalorder %s401, %s403
    %p407 = scmp.eq.s32.totalorder %s31, 0
    %p408 = por %p406, %p407
    %p409 = scmp.ne.s32.totalorder %s401, %s403
    %p410 = scmp.eq.s32.totalorder %s36, 1
    %p411 = por %p409, %p410
    %p412 = scmp.ne.s32.totalorder %s403, %s404
    %p413 = scmp.eq.s32.totalorder %s36, 0
    %p414 = por %p412, %p413
    %p415 = scmp.ne.s32.totalorder %s403, %s404
    %p416 = scmp.eq.s32.totalorder %s37, 1
    %p417 = por %p415, %p416
    %p419 = scmp.ne.s32.totalorder %s404, %s418
    %p420 = scmp.eq.s32.totalorder %s37, 0
    %p421 = por %p419, %p420
    %s423 = sadd.s32 %s422, 1
    %p426 = scmp.eq.s32.totalorder %s31, 1
    %p427 = scmp.ne.s32.totalorder %s422, %s424
    %p428 = scmp.eq.s32.totalorder %s31, 0
    %p429 = por %p427, %p428
    %p430 = scmp.ne.s32.totalorder %s422, %s424
    %p431 = scmp.eq.s32.totalorder %s36, 1
    %p432 = por %p430, %p431
    %p433 = scmp.ne.s32.totalorder %s424, %s425
    %p434 = scmp.eq.s32.totalorder %s36, 0
    %p435 = por %p433, %p434
    %p436 = scmp.ne.s32.totalorder %s424, %s425
    %p437 = scmp.eq.s32.totalorder %s37, 1
    %p438 = por %p436, %p437
    %p440 = scmp.ne.s32.totalorder %s425, %s439
    %p441 = scmp.eq.s32.totalorder %s37, 0
    %p442 = por %p440, %p441
    %s444 = sadd.s32 %s443, 1
    %p447 = scmp.eq.s32.totalorder %s31, 1
    %p448 = scmp.ne.s32.totalorder %s443, %s445
    %p449 = scmp.eq.s32.totalorder %s31, 0
    %p450 = por %p448, %p449
    %p451 = scmp.ne.s32.totalorder %s443, %s445
    %p452 = scmp.eq.s32.totalorder %s36, 1
    %p453 = por %p451, %p452
    %p454 = scmp.ne.s32.totalorder %s445, %s446
    %p455 = scmp.eq.s32.totalorder %s36, 0
    %p456 = por %p454, %p455
    %p457 = scmp.ne.s32.totalorder %s445, %s446
    %p458 = scmp.eq.s32.totalorder %s37, 1
    %p459 = por %p457, %p458
    %p461 = scmp.ne.s32.totalorder %s446, %s460
    %p462 = scmp.eq.s32.totalorder %s37, 0
    %p463 = por %p461, %p462
    %s465 = sadd.s32 %s464, 1
    %p468 = scmp.eq.s32.totalorder %s31, 1
    %p469 = scmp.ne.s32.totalorder %s464, %s466
    %p470 = scmp.eq.s32.totalorder %s31, 0
    %p471 = por %p469, %p470
    %p472 = scmp.ne.s32.totalorder %s464, %s466
    %p473 = scmp.eq.s32.totalorder %s36, 1
    %p474 = por %p472, %p473
    %p475 = scmp.ne.s32.totalorder %s466, %s467
    %p476 = scmp.eq.s32.totalorder %s36, 0
    %p477 = por %p475, %p476
    %p478 = scmp.ne.s32.totalorder %s466, %s467
    %p479 = scmp.eq.s32.totalorder %s37, 1
    %p480 = por %p478, %p479
    %p482 = scmp.ne.s32.totalorder %s467, %s481
    %p483 = scmp.eq.s32.totalorder %s37, 0
    %p484 = por %p482, %p483
    %s486 = sadd.s32 %s485, 1
    %p489 = scmp.eq.s32.totalorder %s31, 1
    %p490 = scmp.ne.s32.totalorder %s485, %s487
    %p491 = scmp.eq.s32.totalorder %s31, 0
    %p492 = por %p490, %p491
    %p493 = scmp.ne.s32.totalorder %s485, %s487
    %p494 = scmp.eq.s32.totalorder %s36, 1
    %p495 = por %p493, %p494
    %p496 = scmp.ne.s32.totalorder %s487, %s488
    %p497 = scmp.eq.s32.totalorder %s36, 0
    %p498 = por %p496, %p497
    %p499 = scmp.ne.s32.totalorder %s487, %s488
    %p500 = scmp.eq.s32.totalorder %s37, 1
    %p501 = por %p499, %p500
    %p503 = scmp.ne.s32.totalorder %s488, %s502
    %p504 = scmp.eq.s32.totalorder %s37, 0
    %p505 = por %p503, %p504
    %s506 = ssub.s32 %s31, %s38
    %p507 = scmp.eq.s32.totalorder %s506, 0
    %s509 = sadd.s32 %s508, 1
    %s510 = scalar_select %p507, %s508, %s509
    %p513 = pneg %p507
    %p514 = scmp.eq.s32.totalorder %s31, 1
    %p515 = por %p513, %p514
    %p516 = scmp.ne.s32.totalorder %s508, %s511
    %p517 = scmp.eq.s32.totalorder %s31, 0
    %p518 = por %p516, %p517
    %p519 = scmp.ne.s32.totalorder %s508, %s511
    %p520 = scmp.eq.s32.totalorder %s36, 1
    %p521 = por %p519, %p520
    %p522 = scmp.ne.s32.totalorder %s511, %s512
    %p523 = scmp.eq.s32.totalorder %s36, 0
    %p524 = por %p522, %p523
    %p525 = scmp.ne.s32.totalorder %s511, %s512
    %p526 = scmp.eq.s32.totalorder %s37, 1
    %p527 = por %p525, %p526
    %p529 = scmp.ne.s32.totalorder %s512, %s528
    %p530 = scmp.eq.s32.totalorder %s37, 0
    %p531 = por %p529, %p530
    %p532 = scmp.le.s32.totalorder 1, %s31
    %p533 = scmp.lt.s32.totalorder %s31, 3
    %p534 = pnand %p532, %p533
    %p535 = pneg %p534
    // Predicated region
    $region9: #{discriminator_forward.5} parent=5 // pred_check
      _
    $region10: #{discriminator_forward.5} parent=5 // pred_check_branch
      %537 = sbr.rel (%p534) target = $region12
    $region11: #{discriminator_forward.5} parent=5 // pred_region
      %s538 = ssub.s32 %s31, 1
      // Predicated region
      $region13: #{discriminator_forward.5} parent=11 // pred_check
        %p539 = pneg %p52
      $region14: #{discriminator_forward.5} parent=11 // pred_check_branch
        %541 = sbr.rel (%p539) target = $region16
      $region15: #{discriminator_forward.5} parent=11 // pred_region
        _
      $region16: #{discriminator_forward.5} parent=11 // pred_fallthru
        _
      // Predicated region
      $region17: #{discriminator_forward.5} parent=11 // pred_check
        %p542 = pneg %p73
      $region18: #{discriminator_forward.5} parent=11 // pred_check_branch
        %544 = sbr.rel (%p542) target = $region20
      $region19: #{discriminator_forward.5} parent=11 // pred_region
        _
      $region20: #{discriminator_forward.5} parent=11 // pred_fallthru
        _
      // Predicated region
      $region21: #{discriminator_forward.5} parent=11 // pred_check
        %p545 = pneg %p94
      $region22: #{discriminator_forward.5} parent=11 // pred_check_branch
        %547 = sbr.rel (%p545) target = $region24
      $region23: #{discriminator_forward.5} parent=11 // pred_region
        _
      $region24: #{discriminator_forward.5} parent=11 // pred_fallthru
        _
      // Predicated region
      $region25: #{discriminator_forward.5} parent=11 // pred_check
        %p548 = pneg %p141
      $region26: #{discriminator_forward.5} parent=11 // pred_check_branch
        %550 = sbr.rel (%p548) target = $region28
      $region27: #{discriminator_forward.5} parent=11 // pred_region
        _
      $region28: #{discriminator_forward.5} parent=11 // pred_fallthru
        _
      // Predicated region
      $region29: #{discriminator_forward.5} parent=11 // pred_check
        %p551 = pneg %p162
      $region30: #{discriminator_forward.5} parent=11 // pred_check_branch
        %553 = sbr.rel (%p551) target = $region32
      $region31: #{discriminator_forward.5} parent=11 // pred_region
        _
      $region32: #{discriminator_forward.5} parent=11 // pred_fallthru
        _
      // Predicated region
      $region33: #{discriminator_forward.5} parent=11 // pred_check
        %p554 = pneg %p183
      $region34: #{discriminator_forward.5} parent=11 // pred_check_branch
        %556 = sbr.rel (%p554) target = $region36
      $region35: #{discriminator_forward.5} parent=11 // pred_region
        _
      $region36: #{discriminator_forward.5} parent=11 // pred_fallthru
        _
      // Predicated region
      $region37: #{discriminator_forward.5} parent=11 // pred_check
        %p557 = pneg %p204
      $region38: #{discriminator_forward.5} parent=11 // pred_check_branch
        %559 = sbr.rel (%p557) target = $region40
      $region39: #{discriminator_forward.5} parent=11 // pred_region
        _
      $region40: #{discriminator_forward.5} parent=11 // pred_fallthru
        _
      // Predicated region
      $region41: #{discriminator_forward.5} parent=11 // pred_check
        %p560 = pneg %p225
      $region42: #{discriminator_forward.5} parent=11 // pred_check_branch
        %562 = sbr.rel (%p560) target = $region44
      $region43: #{discriminator_forward.5} parent=11 // pred_region
        _
      $region44: #{discriminator_forward.5} parent=11 // pred_fallthru
        _
      // Predicated region
      $region45: #{discriminator_forward.5} parent=11 // pred_check
        %p563 = pneg %p246
      $region46: #{discriminator_forward.5} parent=11 // pred_check_branch
        %565 = sbr.rel (%p563) target = $region48
      $region47: #{discriminator_forward.5} parent=11 // pred_region
        _
      $region48: #{discriminator_forward.5} parent=11 // pred_fallthru
        _
      // Predicated region
      $region49: #{discriminator_forward.5} parent=11 // pred_check
        %p566 = pneg %p267
      $region50: #{discriminator_forward.5} parent=11 // pred_check_branch
        %568 = sbr.rel (%p566) target = $region52
      $region51: #{discriminator_forward.5} parent=11 // pred_region
        _
      $region52: #{discriminator_forward.5} parent=11 // pred_fallthru
        _
      // Predicated region
      $region53: #{discriminator_forward.5} parent=11 // pred_check
        %p569 = pneg %p288
      $region54: #{discriminator_forward.5} parent=11 // pred_check_branch
        %571 = sbr.rel (%p569) target = $region56
      $region55: #{discriminator_forward.5} parent=11 // pred_region
        _
      $region56: #{discriminator_forward.5} parent=11 // pred_fallthru
        _
      // Predicated region
      $region57: #{discriminator_forward.5} parent=11 // pred_check
        %p572 = pneg %p309
      $region58: #{discriminator_forward.5} parent=11 // pred_check_branch
        %574 = sbr.rel (%p572) target = $region60
      $region59: #{discriminator_forward.5} parent=11 // pred_region
        _
      $region60: #{discriminator_forward.5} parent=11 // pred_fallthru
        _
      // Predicated region
      $region61: #{discriminator_forward.5} parent=11 // pred_check
        %p575 = pneg %p330
      $region62: #{discriminator_forward.5} parent=11 // pred_check_branch
        %577 = sbr.rel (%p575) target = $region64
      $region63: #{discriminator_forward.5} parent=11 // pred_region
        _
      $region64: #{discriminator_forward.5} parent=11 // pred_fallthru
        _
      // Predicated region
      $region65: #{discriminator_forward.5} parent=11 // pred_check
        %p578 = pneg %p351
      $region66: #{discriminator_forward.5} parent=11 // pred_check_branch
        %580 = sbr.rel (%p578) target = $region68
      $region67: #{discriminator_forward.5} parent=11 // pred_region
        _
      $region68: #{discriminator_forward.5} parent=11 // pred_fallthru
        _
      // Predicated region
      $region69: #{discriminator_forward.5} parent=11 // pred_check
        %p581 = pneg %p372
      $region70: #{discriminator_forward.5} parent=11 // pred_check_branch
        %583 = sbr.rel (%p581) target = $region72
      $region71: #{discriminator_forward.5} parent=11 // pred_region
        _
      $region72: #{discriminator_forward.5} parent=11 // pred_fallthru
        _
      // Predicated region
      $region73: #{discriminator_forward.5} parent=11 // pred_check
        %p584 = pneg %p393
      $region74: #{discriminator_forward.5} parent=11 // pred_check_branch
        %586 = sbr.rel (%p584) target = $region76
      $region75: #{discriminator_forward.5} parent=11 // pred_region
        _
      $region76: #{discriminator_forward.5} parent=11 // pred_fallthru
        _
      // Predicated region
      $region77: #{discriminator_forward.5} parent=11 // pred_check
        %p587 = pneg %p414
      $region78: #{discriminator_forward.5} parent=11 // pred_check_branch
        %589 = sbr.rel (%p587) target = $region80
      $region79: #{discriminator_forward.5} parent=11 // pred_region
        _
      $region80: #{discriminator_forward.5} parent=11 // pred_fallthru
        _
      // Predicated region
      $region81: #{discriminator_forward.5} parent=11 // pred_check
        %p590 = pneg %p435
      $region82: #{discriminator_forward.5} parent=11 // pred_check_branch
        %592 = sbr.rel (%p590) target = $region84
      $region83: #{discriminator_forward.5} parent=11 // pred_region
        _
      $region84: #{discriminator_forward.5} parent=11 // pred_fallthru
        _
      // Predicated region
      $region85: #{discriminator_forward.5} parent=11 // pred_check
        %p593 = pneg %p456
      $region86: #{discriminator_forward.5} parent=11 // pred_check_branch
        %595 = sbr.rel (%p593) target = $region88
      $region87: #{discriminator_forward.5} parent=11 // pred_region
        _
      $region88: #{discriminator_forward.5} parent=11 // pred_fallthru
        _
      // Predicated region
      $region89: #{discriminator_forward.5} parent=11 // pred_check
        %p596 = pneg %p477
      $region90: #{discriminator_forward.5} parent=11 // pred_check_branch
        %598 = sbr.rel (%p596) target = $region92
      $region91: #{discriminator_forward.5} parent=11 // pred_region
        _
      $region92: #{discriminator_forward.5} parent=11 // pred_fallthru
        _
      // Predicated region
      $region93: #{discriminator_forward.5} parent=11 // pred_check
        %p599 = pneg %p498
      $region94: #{discriminator_forward.5} parent=11 // pred_check_branch
        %601 = sbr.rel (%p599) target = $region96
      $region95: #{discriminator_forward.5} parent=11 // pred_region
        _
      $region96: #{discriminator_forward.5} parent=11 // pred_fallthru
        _
    $region12: #{discriminator_forward.5} parent=5 // pred_fallthru
      _
    %p602 = scmp.lt.s32.totalorder %s31, 2
    // Predicated region
    $region97: #{discriminator_forward.5} parent=5 // pred_check
      %p603 = pneg %p602
    $region98: #{discriminator_forward.5} parent=5 // pred_check_branch
      %605 = sbr.rel (%p603) target = $region100
    $region99: #{discriminator_forward.5} parent=5 // pred_region
      // Predicated region
      $region101: #{discriminator_forward.5} parent=99 // pred_check
        %p606 = pneg %p114
      $region102: #{discriminator_forward.5} parent=99 // pred_check_branch
        %608 = sbr.rel (%p606) target = $region104
      $region103: #{discriminator_forward.5} parent=99 // pred_region
        %p609 = scmp.lt.s32.totalorder %s31, 1
        %s610 = scalar_select %p609, %s31, 1
        %s611 = smul.addr %s610, 32
        %s612 = smul.addr %s611, 4
        %s613 = scalar_lea.vmem %s3, %s612
      $region104: #{discriminator_forward.5} parent=99 // pred_fallthru
        _
    $region100: #{discriminator_forward.5} parent=5 // pred_fallthru
      _
    %p614 = scmp.le.s32.totalorder 1, %s31
    %p615 = scmp.lt.s32.totalorder %s31, 3
    %p616 = pnand %p614, %p615
    %p617 = pneg %p616
    // Predicated region
    $region105: #{discriminator_forward.5} parent=5 // pred_check
      _
    $region106: #{discriminator_forward.5} parent=5 // pred_check_branch
      %619 = sbr.rel (%p616) target = $region108
    $region107: #{discriminator_forward.5} parent=5 // pred_region
      %s620 = ssub.s32 %s31, 1
      %p621 = pneg %p52
      %p622 = pneg %p49
      %p623 = pneg %p73
      %p624 = pneg %p70
      %p625 = pneg %p94
      %p626 = pneg %p91
      %p627 = scmp.lt.s32.totalorder %s36, 1
      %s628 = scalar_select %p627, %s36, 1
      %s629 = smul.addr %s628, 32
      %s630 = smul.addr %s629, 4
      %s631 = scalar_lea.vmem %s3, %s630
      %p632 = pneg %p120
      %p633 = pneg %p117
      %p634 = pneg %p141
      %p635 = pneg %p138
      %p636 = pneg %p162
      %p637 = pneg %p159
      %p638 = pneg %p183
      %p639 = pneg %p180
      %p640 = pneg %p204
      %p641 = pneg %p201
      %p642 = pneg %p225
      %p643 = pneg %p222
      %p644 = pneg %p246
      %p645 = pneg %p243
      %p646 = pneg %p267
      %p647 = pneg %p264
      %p648 = pneg %p288
      %p649 = pneg %p285
      %p650 = pneg %p309
      %p651 = pneg %p306
      %p652 = pneg %p330
      %p653 = pneg %p327
      %p654 = pneg %p351
      %p655 = pneg %p348
      %p656 = pneg %p372
      %p657 = pneg %p369
      %p658 = pneg %p393
      %p659 = pneg %p390
      %p660 = pneg %p414
      %p661 = pneg %p411
      %p662 = pneg %p435
      %p663 = pneg %p432
      %p664 = pneg %p456
      %p665 = pneg %p453
      %p666 = pneg %p477
      %p667 = pneg %p474
      %p668 = pneg %p498
      %p669 = pneg %p495
      %p670 = pneg %p524
      %p671 = pneg %p521
      %p672 = scmp.lt.s32.totalorder %s36, 1
      %s673 = scalar_select %p672, %s36, 1
      %s674 = scalar_lea.vmem %s22, %s673
      %p675 = scmp.lt.s32.totalorder %s36, 1
      %s676 = scalar_select %p675, %s36, 1
      %s677 = smul.addr %s676, 32
      %s678 = smul.addr %s677, 4
      %s679 = scalar_lea.vmem %s3, %s678
      %p680 = scmp.lt.s32.totalorder %s36, 1
      %s681 = scalar_select %p680, %s36, 1
      %s682 = scalar_lea.vmem %s22, %s681
      %v684 = vld [vmem:[%s4] sm:$0xff]
      %v685 = vld [vmem:[%s4 + $0x8] sm:$0xff]
      %v686 = vld [vmem:[%s4 + $0x10] sm:$0xff]
      %v687 = vld [vmem:[%s4 + $0x18] sm:$0xff]
      %v688 = vld [vmem:[%s679] sm:$0xf]
      %v689 = vld [vmem:[%s679 + $0x4] sm:$0xf]
      %v690 = vld [vmem:[%s679 + $0x8] sm:$0xf]
      %v691 = vld [vmem:[%s679 + $0xc] sm:$0xf]
      %v692 = vld [vmem:[%s679 + $0x10] sm:$0xf]
      %v693 = vld [vmem:[%s679 + $0x14] sm:$0xf]
      %v694 = vld [vmem:[%s679 + $0x18] sm:$0xf]
      %v695 = vld [vmem:[%s679 + $0x1c] sm:$0xf]
      %v696 = vld [vmem:[%s679 + $0x20] sm:$0xf]
      %v697 = vld [vmem:[%s679 + $0x24] sm:$0xf]
      %v698 = vld [vmem:[%s679 + $0x28] sm:$0xf]
      %v699 = vld [vmem:[%s679 + $0x2c] sm:$0xf]
      %v700 = vld [vmem:[%s679 + $0x30] sm:$0xf]
      %v701 = vld [vmem:[%s679 + $0x34] sm:$0xf]
      %v702 = vld [vmem:[%s679 + $0x38] sm:$0xf]
      %v703 = vld [vmem:[%s679 + $0x3c] sm:$0xf]
      %v704 = vld [vmem:[%s679 + $0x40] sm:$0xf]
      %v705 = vld [vmem:[%s679 + $0x44] sm:$0xf]
      %v706 = vld [vmem:[%s679 + $0x48] sm:$0xf]
      %v707 = vld [vmem:[%s679 + $0x4c] sm:$0xf]
      %v708 = vld [vmem:[%s679 + $0x50] sm:$0xf]
      %v709 = vld [vmem:[%s679 + $0x54] sm:$0xf]
      %v710 = vld [vmem:[%s679 + $0x58] sm:$0xf]
      %v711 = vld [vmem:[%s679 + $0x5c] sm:$0xf]
      %v712 = vld [vmem:[%s679 + $0x60] sm:$0xf]
      %v713 = vld [vmem:[%s679 + $0x64] sm:$0xf]
      %v714 = vld [vmem:[%s679 + $0x68] sm:$0xf]
      %v715 = vld [vmem:[%s679 + $0x6c] sm:$0xf]
      %v716 = vld [vmem:[%s679 + $0x70] sm:$0xf]
      %v717 = vld [vmem:[%s679 + $0x74] sm:$0xf]
      %v718 = vld [vmem:[%s679 + $0x78] sm:$0xf]
      %v719 = vld [vmem:[%s679 + $0x7c] sm:$0xf]
      %v720 = vld [vmem:[%s5] sm:$0xff]
      %v721 = vld [vmem:[%s5 + $0x8] sm:$0xff]
      %v722 = vld [vmem:[%s5 + $0x10] sm:$0xff]
      %v723 = vld [vmem:[%s5 + $0x18] sm:$0xff]
      %725 = vset.pattern.permute.xlu0 0
      %726 = vperm.xlu0 %725, %v720
      %v727 = vpop.permute.xlu0 %726
      %730 = vset.pattern.permute.xlu0 0
      %731 = vperm.xlu0 %730, %v721
      %v732 = vpop.permute.xlu0 %731
      %735 = vset.pattern.permute.xlu0 0
      %736 = vperm.xlu0 %735, %v722
      %v737 = vpop.permute.xlu0 %736
      %740 = vset.pattern.permute.xlu0 0
      %741 = vperm.xlu0 %740, %v723
      %v742 = vpop.permute.xlu0 %741
      %v748 = vunpack.c.l.b16 %v684
      %v749 = vunpack.c.h.b16 %v684
      %v750 = vunpack.c.l.b16 %v685
      %v751 = vunpack.c.h.b16 %v685
      %v752 = vunpack.c.l.b16 %v686
      %v753 = vunpack.c.h.b16 %v686
      %v754 = vunpack.c.l.b16 %v687
      %v755 = vunpack.c.h.b16 %v687
      %v756 = vpack.c.b16 %v750, %v748
      %v757 = vpack.c.b16 %v751, %v749
      %v758 = vpack.c.b16 %v754, %v752
      %v759 = vpack.c.b16 %v755, %v753
      %v796 = vunpack.c.l.b16 %v688
      %v797 = vunpack.c.l.b16 %v689
      %v798 = vunpack.c.l.b16 %v690
      %v799 = vunpack.c.l.b16 %v691
      %v800 = vunpack.c.l.b16 %v692
      %v801 = vunpack.c.l.b16 %v693
      %v802 = vunpack.c.l.b16 %v694
      %v803 = vunpack.c.l.b16 %v695
      %v804 = vunpack.c.l.b16 %v696
      %v805 = vunpack.c.l.b16 %v697
      %v806 = vunpack.c.l.b16 %v698
      %v807 = vunpack.c.l.b16 %v699
      %v808 = vunpack.c.l.b16 %v700
      %v809 = vunpack.c.l.b16 %v701
      %v810 = vunpack.c.l.b16 %v702
      %v811 = vunpack.c.l.b16 %v703
      %v812 = vunpack.c.l.b16 %v704
      %v813 = vunpack.c.l.b16 %v705
      %v814 = vunpack.c.l.b16 %v706
      %v815 = vunpack.c.l.b16 %v707
      %v816 = vunpack.c.l.b16 %v708
      %v817 = vunpack.c.l.b16 %v709
      %v818 = vunpack.c.l.b16 %v710
      %v819 = vunpack.c.l.b16 %v711
      %v820 = vunpack.c.l.b16 %v712
      %v821 = vunpack.c.l.b16 %v713
      %v822 = vunpack.c.l.b16 %v714
      %v823 = vunpack.c.l.b16 %v715
      %v824 = vunpack.c.l.b16 %v716
      %v825 = vunpack.c.l.b16 %v717
      %v826 = vunpack.c.l.b16 %v718
      %v827 = vunpack.c.l.b16 %v719
      %v828 = vpack.c.b16 %v797, %v796
      %v829 = vpack.c.b16 %v799, %v798
      %v830 = vpack.c.b16 %v801, %v800
      %v831 = vpack.c.b16 %v803, %v802
      %v832 = vpack.c.b16 %v805, %v804
      %v833 = vpack.c.b16 %v807, %v806
      %v834 = vpack.c.b16 %v809, %v808
      %v835 = vpack.c.b16 %v811, %v810
      %v836 = vpack.c.b16 %v813, %v812
      %v837 = vpack.c.b16 %v815, %v814
      %v838 = vpack.c.b16 %v817, %v816
      %v839 = vpack.c.b16 %v819, %v818
      %v840 = vpack.c.b16 %v821, %v820
      %v841 = vpack.c.b16 %v823, %v822
      %v842 = vpack.c.b16 %v825, %v824
      %v843 = vpack.c.b16 %v827, %v826
      %860 = vmatprep.subr.bf16.mxu0 0
      %861 = vmatpush1.bf16.msra.mxu0 %v835
      %862 = vmatprep.subr.bf16.mxu0 0
      %863 = vmatpush1.bf16.msra.mxu0 %v834
      %864 = vmatprep.subr.bf16.mxu0 0
      %865 = vmatpush1.bf16.msra.mxu0 %v833
      %866 = vmatprep.subr.bf16.mxu0 0
      %867 = vmatpush1.bf16.msra.mxu0 %v832
      %868 = vmatprep.subr.bf16.mxu0 0
      %869 = vmatpush1.bf16.msra.mxu0 %v831
      %870 = vmatprep.subr.bf16.mxu0 0
      %871 = vmatpush1.bf16.msra.mxu0 %v830
      %872 = vmatprep.subr.bf16.mxu0 0
      %873 = vmatpush1.bf16.msra.mxu0 %v829
      %874 = vmatprep.subr.bf16.mxu0 0
      %875 = vmatpush1.bf16.msra.mxu0 %v828
      %876 = vmatprep.subr.bf16.mxu0 0
      %877 = vmatpush2.bf16.msra.mxu0 %v843
      %878 = vmatprep.subr.bf16.mxu0 0
      %879 = vmatpush2.bf16.msra.mxu0 %v842
      %880 = vmatprep.subr.bf16.mxu0 0
      %881 = vmatpush2.bf16.msra.mxu0 %v841
      %882 = vmatprep.subr.bf16.mxu0 0
      %883 = vmatpush2.bf16.msra.mxu0 %v840
      %884 = vmatprep.subr.bf16.mxu0 0
      %885 = vmatpush2.bf16.msra.mxu0 %v839
      %886 = vmatprep.subr.bf16.mxu0 0
      %887 = vmatpush2.bf16.msra.mxu0 %v838
      %888 = vmatprep.subr.bf16.mxu0 0
      %889 = vmatpush2.bf16.msra.mxu0 %v837
      %890 = vmatprep.subr.bf16.mxu0 0
      %891 = vmatpush2.bf16.msra.mxu0 %v836
      %892 = vmatprep.mubr.bf16.mxu0 %v757
      %893 = vmatmul.mubr.bf16.gmra.mxu0 %v756
      %v894 = vpop.f32.mrf.mxu0
      %v895 = vadd.f32 %v727, %v894
      %v896 = vpop.f32.mrf.mxu0
      %v897 = vpop.f32.mrf.mxu0
      %v898 = vadd.f32 %v732, %v897
      %v899 = vpop.f32.mrf.mxu0
      %900 = vmatprep.mubr.bf16.mxu0 %v759
      %901 = vmatmul.mubr.bf16.gmra.mxu0 %v758
      %v902 = vpop.f32.mrf.mxu0
      %v903 = vadd.f32 %v737, %v902
      %v904 = vpop.f32.mrf.mxu0
      %v905 = vpop.f32.mrf.mxu0
      %v906 = vadd.f32 %v742, %v905
      %v907 = vpop.f32.mrf.mxu0
      %908 = vdwg.mxu0
      %vm909 = vcmp.gt.f32.partialorder %v895, 0.0
      %vm910 = vcmp.gt.f32.partialorder %v898, 0.0
      %vm911 = vcmp.gt.f32.partialorder %v903, 0.0
      %vm912 = vcmp.gt.f32.partialorder %v906, 0.0
      %v913 = vmul.f32 %v895, 0.1
      %v914 = vmul.f32 %v898, 0.1
      %v915 = vmul.f32 %v903, 0.1
      %v916 = vmul.f32 %v906, 0.1
      %v917 = vsel %vm909, %v895, %v913
      %v918 = vsel %vm910, %v898, %v914
      %v919 = vsel %vm911, %v903, %v915
      %v920 = vsel %vm912, %v906, %v916
      %v921 = vld [vmem:[%s6] sm:$0xf]
      %v922 = vld [vmem:[%s7] sm:$0xf]
      %924 = vset.pattern.permute.xlu0 0
      %925 = vperm.xlu0 %924, %v922
      %v926 = vpop.permute.xlu0 %925
      %vm928 = vcmask 261120
      %v930 = vsel %vm928, %v921, 0
      %932 = vmatprep.subr.mxu0 0.0
      %933 = vmatpush1.msra.mxu0 0.0
      %934 = vmatprep.subr.mxu0 0.0
      %935 = vmatpush1.msra.mxu0 0.0
      %936 = vmatprep.subr.mxu0 0.0
      %937 = vmatpush1.msra.mxu0 0.0
      %938 = vmatprep.subr.mxu0 0.0
      %939 = vmatpush1.msra.mxu0 0.0
      %940 = vmatprep.subr.mxu0 0.0
      %941 = vmatpush1.msra.mxu0 0.0
      %942 = vmatprep.subr.mxu0 0.0
      %943 = vmatpush1.msra.mxu0 0.0
      %944 = vmatprep.subr.mxu0 0.0
      %945 = vmatpush1.msra.mxu0 0.0
      %946 = vmatprep.subr.mxu0 0.0
      %947 = vmatpush1.msra.mxu0 0.0
      %948 = vmatprep.subr.mxu0 0.0
      %949 = vmatpush1.msra.mxu0 0.0
      %950 = vmatprep.subr.mxu0 0.0
      %951 = vmatpush1.msra.mxu0 0.0
      %952 = vmatprep.subr.mxu0 0.0
      %953 = vmatpush1.msra.mxu0 0.0
      %954 = vmatprep.subr.mxu0 0.0
      %955 = vmatpush1.msra.mxu0 0.0
      %956 = vmatprep.subr.mxu0 0.0
      %957 = vmatpush1.msra.mxu0 %v920
      %958 = vmatprep.subr.mxu0 0.0
      %959 = vmatpush1.msra.mxu0 %v919
      %960 = vmatprep.subr.mxu0 0.0
      %961 = vmatpush1.msra.mxu0 %v918
      %962 = vmatprep.subr.mxu0 0.0
      %963 = vmatpush1.msra.mxu0 %v917
      %964 = vmatprep.subr.mxu0 0.0
      %965 = vmatpush2.msra.mxu0 0.0
      %966 = vmatprep.subr.mxu0 0.0
      %967 = vmatpush2.msra.mxu0 0.0
      %968 = vmatprep.subr.mxu0 0.0
      %969 = vmatpush2.msra.mxu0 0.0
      %970 = vmatprep.subr.mxu0 0.0
      %971 = vmatpush2.msra.mxu0 0.0
      %972 = vmatprep.subr.mxu0 0.0
      %973 = vmatpush2.msra.mxu0 0.0
      %974 = vmatprep.subr.mxu0 0.0
      %975 = vmatpush2.msra.mxu0 0.0
      %976 = vmatprep.subr.mxu0 0.0
      %977 = vmatpush2.msra.mxu0 0.0
      %978 = vmatprep.subr.mxu0 0.0
      %979 = vmatpush2.msra.mxu0 0.0
      %980 = vmatprep.subr.mxu0 0.0
      %981 = vmatpush2.msra.mxu0 0.0
      %982 = vmatprep.subr.mxu0 0.0
      %983 = vmatpush2.msra.mxu0 0.0
      %984 = vmatprep.subr.mxu0 0.0
      %985 = vmatpush2.msra.mxu0 0.0
      %986 = vmatprep.subr.mxu0 0.0
      %987 = vmatpush2.msra.mxu0 0.0
      %988 = vmatprep.subr.mxu0 0.0
      %989 = vmatpush2.msra.mxu0 0.0
      %990 = vmatprep.subr.mxu0 0.0
      %991 = vmatpush2.msra.mxu0 0.0
      %992 = vmatprep.subr.mxu0 0.0
      %993 = vmatpush2.msra.mxu0 0.0
      %994 = vmatprep.subr.mxu0 0.0
      %995 = vmatpush2.msra.mxu0 0.0
      %996 = vmatprep.mubr.f32.mxu0 0.0
      %997 = vmatmul.mubr.f32.gmra.mxu0 %v930
      %v998 = vpop.f32.mrf.mxu0
      %v999 = vadd.f32 %v926, %v998
      %v1000 = vpop.f32.mrf.mxu0
      %1001 = vdwg.mxu0
      %v1002 = vld [vmem:[%s8] sm:$0xf]
      %v1003 = vld [vmem:[%s9] sm:$0xf]
      %1005 = vset.pattern.permute.xlu0 0
      %1006 = vperm.xlu0 %1005, %v1003
      %v1007 = vpop.permute.xlu0 %1006
      %v1010 = vsel %vm928, %v1002, 0
      %1012 = vmatprep.subr.mxu0 0.0
      %1013 = vmatpush1.msra.mxu0 0.0
      %1014 = vmatprep.subr.mxu0 0.0
      %1015 = vmatpush1.msra.mxu0 0.0
      %1016 = vmatprep.subr.mxu0 0.0
      %1017 = vmatpush1.msra.mxu0 0.0
      %1018 = vmatprep.subr.mxu0 0.0
      %1019 = vmatpush1.msra.mxu0 0.0
      %1020 = vmatprep.subr.mxu0 0.0
      %1021 = vmatpush1.msra.mxu0 0.0
      %1022 = vmatprep.subr.mxu0 0.0
      %1023 = vmatpush1.msra.mxu0 0.0
      %1024 = vmatprep.subr.mxu0 0.0
      %1025 = vmatpush1.msra.mxu0 0.0
      %1026 = vmatprep.subr.mxu0 0.0
      %1027 = vmatpush1.msra.mxu0 0.0
      %1028 = vmatprep.subr.mxu0 0.0
      %1029 = vmatpush1.msra.mxu0 0.0
      %1030 = vmatprep.subr.mxu0 0.0
      %1031 = vmatpush1.msra.mxu0 0.0
      %1032 = vmatprep.subr.mxu0 0.0
      %1033 = vmatpush1.msra.mxu0 0.0
      %1034 = vmatprep.subr.mxu0 0.0
      %1035 = vmatpush1.msra.mxu0 0.0
      %1036 = vmatprep.subr.mxu0 0.0
      %1037 = vmatpush1.msra.mxu0 %v920
      %1038 = vmatprep.subr.mxu0 0.0
      %1039 = vmatpush1.msra.mxu0 %v919
      %1040 = vmatprep.subr.mxu0 0.0
      %1041 = vmatpush1.msra.mxu0 %v918
      %1042 = vmatprep.subr.mxu0 0.0
      %1043 = vmatpush1.msra.mxu0 %v917
      %1044 = vmatprep.subr.mxu0 0.0
      %1045 = vmatpush2.msra.mxu0 0.0
      %1046 = vmatprep.subr.mxu0 0.0
      %1047 = vmatpush2.msra.mxu0 0.0
      %1048 = vmatprep.subr.mxu0 0.0
      %1049 = vmatpush2.msra.mxu0 0.0
      %1050 = vmatprep.subr.mxu0 0.0
      %1051 = vmatpush2.msra.mxu0 0.0
      %1052 = vmatprep.subr.mxu0 0.0
      %1053 = vmatpush2.msra.mxu0 0.0
      %1054 = vmatprep.subr.mxu0 0.0
      %1055 = vmatpush2.msra.mxu0 0.0
      %1056 = vmatprep.subr.mxu0 0.0
      %1057 = vmatpush2.msra.mxu0 0.0
      %1058 = vmatprep.subr.mxu0 0.0
      %1059 = vmatpush2.msra.mxu0 0.0
      %1060 = vmatprep.subr.mxu0 0.0
      %1061 = vmatpush2.msra.mxu0 0.0
      %1062 = vmatprep.subr.mxu0 0.0
      %1063 = vmatpush2.msra.mxu0 0.0
      %1064 = vmatprep.subr.mxu0 0.0
      %1065 = vmatpush2.msra.mxu0 0.0
      %1066 = vmatprep.subr.mxu0 0.0
      %1067 = vmatpush2.msra.mxu0 0.0
      %1068 = vmatprep.subr.mxu0 0.0
      %1069 = vmatpush2.msra.mxu0 0.0
      %1070 = vmatprep.subr.mxu0 0.0
      %1071 = vmatpush2.msra.mxu0 0.0
      %1072 = vmatprep.subr.mxu0 0.0
      %1073 = vmatpush2.msra.mxu0 0.0
      %1074 = vmatprep.subr.mxu0 0.0
      %1075 = vmatpush2.msra.mxu0 0.0
      %1076 = vmatprep.mubr.f32.mxu0 0.0
      %1077 = vmatmul.mubr.f32.gmra.mxu0 %v1010
      %v1078 = vpop.f32.mrf.mxu0
      %v1079 = vadd.f32 %v1007, %v1078
      %v1080 = vpop.f32.mrf.mxu0
      %1081 = vdwg.mxu0
      %v1082 = vld [vmem:[%s10] sm:$0xff]
      %v1083 = vld [vmem:[%s10 + $0x8] sm:$0xff]
      %v1084 = vld [vmem:[%s10 + $0x10] sm:$0xff]
      %v1085 = vld [vmem:[%s10 + $0x18] sm:$0xff]
      %v1086 = vld [vmem:[%s11] sm:$0xff]
      %v1087 = vld [vmem:[%s11 + $0x8] sm:$0xff]
      %v1088 = vld [vmem:[%s11 + $0x10] sm:$0xff]
      %v1089 = vld [vmem:[%s11 + $0x18] sm:$0xff]
      %1091 = vset.pattern.permute.xlu0 0
      %1092 = vperm.xlu0 %1091, %v1086
      %v1093 = vpop.permute.xlu0 %1092
      %1096 = vset.pattern.permute.xlu0 0
      %1097 = vperm.xlu0 %1096, %v1087
      %v1098 = vpop.permute.xlu0 %1097
      %1101 = vset.pattern.permute.xlu0 0
      %1102 = vperm.xlu0 %1101, %v1088
      %v1103 = vpop.permute.xlu0 %1102
      %1106 = vset.pattern.permute.xlu0 0
      %1107 = vperm.xlu0 %1106, %v1089
      %v1108 = vpop.permute.xlu0 %1107
      %v1111 = vsel %vm928, %v1082, 0
      %v1114 = vsel %vm928, %v1083, 0
      %v1117 = vsel %vm928, %v1084, 0
      %v1120 = vsel %vm928, %v1085, 0
      %1122 = vmatprep.subr.mxu0 0.0
      %1123 = vmatpush1.msra.mxu0 0.0
      %1124 = vmatprep.subr.mxu0 0.0
      %1125 = vmatpush1.msra.mxu0 0.0
      %1126 = vmatprep.subr.mxu0 0.0
      %1127 = vmatpush1.msra.mxu0 0.0
      %1128 = vmatprep.subr.mxu0 0.0
      %1129 = vmatpush1.msra.mxu0 0.0
      %1130 = vmatprep.subr.mxu0 0.0
      %1131 = vmatpush1.msra.mxu0 0.0
      %1132 = vmatprep.subr.mxu0 0.0
      %1133 = vmatpush1.msra.mxu0 0.0
      %1134 = vmatprep.subr.mxu0 0.0
      %1135 = vmatpush1.msra.mxu0 0.0
      %1136 = vmatprep.subr.mxu0 0.0
      %1137 = vmatpush1.msra.mxu0 0.0
      %1138 = vmatprep.subr.mxu0 0.0
      %1139 = vmatpush1.msra.mxu0 0.0
      %1140 = vmatprep.subr.mxu0 0.0
      %1141 = vmatpush1.msra.mxu0 0.0
      %1142 = vmatprep.subr.mxu0 0.0
      %1143 = vmatpush1.msra.mxu0 0.0
      %1144 = vmatprep.subr.mxu0 0.0
      %1145 = vmatpush1.msra.mxu0 0.0
      %1146 = vmatprep.subr.mxu0 0.0
      %1147 = vmatpush1.msra.mxu0 %v920
      %1148 = vmatprep.subr.mxu0 0.0
      %1149 = vmatpush1.msra.mxu0 %v919
      %1150 = vmatprep.subr.mxu0 0.0
      %1151 = vmatpush1.msra.mxu0 %v918
      %1152 = vmatprep.subr.mxu0 0.0
      %1153 = vmatpush1.msra.mxu0 %v917
      %1154 = vmatprep.subr.mxu0 0.0
      %1155 = vmatpush2.msra.mxu0 0.0
      %1156 = vmatprep.subr.mxu0 0.0
      %1157 = vmatpush2.msra.mxu0 0.0
      %1158 = vmatprep.subr.mxu0 0.0
      %1159 = vmatpush2.msra.mxu0 0.0
      %1160 = vmatprep.subr.mxu0 0.0
      %1161 = vmatpush2.msra.mxu0 0.0
      %1162 = vmatprep.subr.mxu0 0.0
      %1163 = vmatpush2.msra.mxu0 0.0
      %1164 = vmatprep.subr.mxu0 0.0
      %1165 = vmatpush2.msra.mxu0 0.0
      %1166 = vmatprep.subr.mxu0 0.0
      %1167 = vmatpush2.msra.mxu0 0.0
      %1168 = vmatprep.subr.mxu0 0.0
      %1169 = vmatpush2.msra.mxu0 0.0
      %1170 = vmatprep.subr.mxu0 0.0
      %1171 = vmatpush2.msra.mxu0 0.0
      %1172 = vmatprep.subr.mxu0 0.0
      %1173 = vmatpush2.msra.mxu0 0.0
      %1174 = vmatprep.subr.mxu0 0.0
      %1175 = vmatpush2.msra.mxu0 0.0
      %1176 = vmatprep.subr.mxu0 0.0
      %1177 = vmatpush2.msra.mxu0 0.0
      %1178 = vmatprep.subr.mxu0 0.0
      %1179 = vmatpush2.msra.mxu0 0.0
      %1180 = vmatprep.subr.mxu0 0.0
      %1181 = vmatpush2.msra.mxu0 0.0
      %1182 = vmatprep.subr.mxu0 0.0
      %1183 = vmatpush2.msra.mxu0 0.0
      %1184 = vmatprep.subr.mxu0 0.0
      %1185 = vmatpush2.msra.mxu0 0.0
      %1186 = vmatprep.mubr.f32.mxu0 0.0
      %1187 = vmatmul.mubr.f32.gmra.mxu0 %v1111
      %v1188 = vpop.f32.mrf.mxu0
      %v1189 = vadd.f32 %v1093, %v1188
      %v1190 = vpop.f32.mrf.mxu0
      %1191 = vmatprep.mubr.f32.mxu0 0.0
      %1192 = vmatmul.mubr.f32.gmra.mxu0 %v1114
      %v1193 = vpop.f32.mrf.mxu0
      %v1194 = vadd.f32 %v1098, %v1193
      %v1195 = vpop.f32.mrf.mxu0
      %1196 = vmatprep.mubr.f32.mxu0 0.0
      %1197 = vmatmul.mubr.f32.gmra.mxu0 %v1117
      %v1198 = vpop.f32.mrf.mxu0
      %v1199 = vadd.f32 %v1103, %v1198
      %v1200 = vpop.f32.mrf.mxu0
      %1201 = vmatprep.mubr.f32.mxu0 0.0
      %1202 = vmatmul.mubr.f32.gmra.mxu0 %v1120
      %v1203 = vpop.f32.mrf.mxu0
      %v1204 = vadd.f32 %v1108, %v1203
      %v1205 = vpop.f32.mrf.mxu0
      %1206 = vdwg.mxu0
      %s1207 = sld [smem:[#allocation2]]
      %1208 = vxpose.xlu0.b32.start [1/16] %v999, 128
      %1209 = vxpose.xlu0.b32.cont [2/16] 0.0, 128
      %1210 = vxpose.xlu0.b32.cont [3/16] 0.0, 128
      %1211 = vxpose.xlu0.b32.cont [4/16] 0.0, 128
      %1212 = vxpose.xlu0.b32.cont [5/16] 0.0, 128
      %1213 = vxpose.xlu0.b32.cont [6/16] 0.0, 128
      %1214 = vxpose.xlu0.b32.cont [7/16] 0.0, 128
      %1215 = vxpose.xlu0.b32.cont [8/16] 0.0, 128
      %1216 = vxpose.xlu0.b32.cont [9/16] 0.0, 128
      %1217 = vxpose.xlu0.b32.cont [10/16] 0.0, 128
      %1218 = vxpose.xlu0.b32.cont [11/16] 0.0, 128
      %1219 = vxpose.xlu0.b32.cont [12/16] 0.0, 128
      %1220 = vxpose.xlu0.b32.cont [13/16] 0.0, 128
      %1221 = vxpose.xlu0.b32.cont [14/16] 0.0, 128
      %1222 = vxpose.xlu0.b32.cont [15/16] 0.0, 128
      %1223 = vxpose.xlu0.b32.end [16/16] 0.0, 128
      %v1224 = vpop.trf.xlu0
      %v1225 = vpop.trf.xlu0
      %v1226 = vpop.trf.xlu0
      %v1227 = vpop.trf.xlu0
      %v1228 = vpop.trf.xlu0
      %v1229 = vpop.trf.xlu0
      %v1230 = vpop.trf.xlu0
      %v1231 = vpop.trf.xlu0
      %v1232 = vpop.trf.xlu0
      %v1233 = vpop.trf.xlu0
      %v1234 = vpop.trf.xlu0
      %v1235 = vpop.trf.xlu0
      %v1236 = vpop.trf.xlu0
      %v1237 = vpop.trf.xlu0
      %v1238 = vpop.trf.xlu0
      %v1239 = vpop.trf.xlu0
      %vm1240 = vcmask 31744
      %v1242 = vsel %vm1240, %v1224, 0
      %v1245 = vsel %vm1240, %v1225, 0
      %v1248 = vsel %vm1240, %v1226, 0
      %v1251 = vsel %vm1240, %v1227, 0
      %v1254 = vsel %vm1240, %v1228, 0
      %v1257 = vsel %vm1240, %v1229, 0
      %v1260 = vsel %vm1240, %v1230, 0
      %v1263 = vsel %vm1240, %v1231, 0
      %vm1265 = vcmask 1043456
      %v1267 = vsel %vm1265, %v1079, 0
      %1269 = vmatprep.subr.mxu0 0.0
      %1270 = vmatpush1.msra.mxu0 0.0
      %1271 = vmatprep.subr.mxu0 0.0
      %1272 = vmatpush1.msra.mxu0 0.0
      %1273 = vmatprep.subr.mxu0 0.0
      %1274 = vmatpush1.msra.mxu0 0.0
      %1275 = vmatprep.subr.mxu0 0.0
      %1276 = vmatpush1.msra.mxu0 0.0
      %1277 = vmatprep.subr.mxu0 0.0
      %1278 = vmatpush1.msra.mxu0 0.0
      %1279 = vmatprep.subr.mxu0 0.0
      %1280 = vmatpush1.msra.mxu0 0.0
      %1281 = vmatprep.subr.mxu0 0.0
      %1282 = vmatpush1.msra.mxu0 0.0
      %1283 = vmatprep.subr.mxu0 0.0
      %1284 = vmatpush1.msra.mxu0 0.0
      %1285 = vmatprep.subr.mxu0 0.0
      %1286 = vmatpush1.msra.mxu0 0.0
      %1287 = vmatprep.subr.mxu0 0.0
      %1288 = vmatpush1.msra.mxu0 0.0
      %1289 = vmatprep.subr.mxu0 0.0
      %1290 = vmatpush1.msra.mxu0 0.0
      %1291 = vmatprep.subr.mxu0 0.0
      %1292 = vmatpush1.msra.mxu0 0.0
      %1293 = vmatprep.subr.mxu0 0.0
      %1294 = vmatpush1.msra.mxu0 0.0
      %1295 = vmatprep.subr.mxu0 0.0
      %1296 = vmatpush1.msra.mxu0 0.0
      %1297 = vmatprep.subr.mxu0 0.0
      %1298 = vmatpush1.msra.mxu0 0.0
      %1299 = vmatprep.subr.mxu0 0.0
      %1300 = vmatpush1.msra.mxu0 %v1267
      %1301 = vmatprep.subr.mxu0 0.0
      %1302 = vmatpush2.msra.mxu0 0.0
      %1303 = vmatprep.subr.mxu0 0.0
      %1304 = vmatpush2.msra.mxu0 0.0
      %1305 = vmatprep.subr.mxu0 0.0
      %1306 = vmatpush2.msra.mxu0 0.0
      %1307 = vmatprep.subr.mxu0 0.0
      %1308 = vmatpush2.msra.mxu0 0.0
      %1309 = vmatprep.subr.mxu0 0.0
      %1310 = vmatpush2.msra.mxu0 0.0
      %1311 = vmatprep.subr.mxu0 0.0
      %1312 = vmatpush2.msra.mxu0 0.0
      %1313 = vmatprep.subr.mxu0 0.0
      %1314 = vmatpush2.msra.mxu0 0.0
      %1315 = vmatprep.subr.mxu0 0.0
      %1316 = vmatpush2.msra.mxu0 0.0
      %1317 = vmatprep.subr.mxu0 0.0
      %1318 = vmatpush2.msra.mxu0 0.0
      %1319 = vmatprep.subr.mxu0 0.0
      %1320 = vmatpush2.msra.mxu0 0.0
      %1321 = vmatprep.subr.mxu0 0.0
      %1322 = vmatpush2.msra.mxu0 0.0
      %1323 = vmatprep.subr.mxu0 0.0
      %1324 = vmatpush2.msra.mxu0 0.0
      %1325 = vmatprep.subr.mxu0 0.0
      %1326 = vmatpush2.msra.mxu0 0.0
      %1327 = vmatprep.subr.mxu0 0.0
      %1328 = vmatpush2.msra.mxu0 0.0
      %1329 = vmatprep.subr.mxu0 0.0
      %1330 = vmatpush2.msra.mxu0 0.0
      %1331 = vmatprep.subr.mxu0 0.0
      %1332 = vmatpush2.msra.mxu0 0.0
      %1333 = vmatprep.mubr.f32.mxu0 0.0
      %1334 = vmatmul.mubr.f32.gmra.mxu0 %v1242
      %v1335 = vpop.f32.mrf.mxu0
      %v1336 = vadd.f32 0.0, %v1335
      %v1337 = vpop.f32.mrf.mxu0
      %1338 = vmatprep.mubr.f32.mxu0 0.0
      %1339 = vmatmul.mubr.f32.gmra.mxu0 %v1245
      %v1340 = vpop.f32.mrf.mxu0
      %v1341 = vadd.f32 0.0, %v1340
      %v1342 = vpop.f32.mrf.mxu0
      %1343 = vmatprep.mubr.f32.mxu0 0.0
      %1344 = vmatmul.mubr.f32.gmra.mxu0 %v1248
      %v1345 = vpop.f32.mrf.mxu0
      %v1346 = vadd.f32 0.0, %v1345
      %v1347 = vpop.f32.mrf.mxu0
      %1348 = vmatprep.mubr.f32.mxu0 0.0
      %1349 = vmatmul.mubr.f32.gmra.mxu0 %v1251
      %v1350 = vpop.f32.mrf.mxu0
      %v1351 = vadd.f32 0.0, %v1350
      %v1352 = vpop.f32.mrf.mxu0
      %1353 = vmatprep.mubr.f32.mxu0 0.0
      %1354 = vmatmul.mubr.f32.gmra.mxu0 %v1254
      %v1355 = vpop.f32.mrf.mxu0
      %v1356 = vadd.f32 0.0, %v1355
      %v1357 = vpop.f32.mrf.mxu0
      %1358 = vmatprep.mubr.f32.mxu0 0.0
      %1359 = vmatmul.mubr.f32.gmra.mxu0 %v1257
      %v1360 = vpop.f32.mrf.mxu0
      %v1361 = vadd.f32 0.0, %v1360
      %v1362 = vpop.f32.mrf.mxu0
      %1363 = vmatprep.mubr.f32.mxu0 0.0
      %1364 = vmatmul.mubr.f32.gmra.mxu0 %v1260
      %v1365 = vpop.f32.mrf.mxu0
      %v1366 = vadd.f32 0.0, %v1365
      %v1367 = vpop.f32.mrf.mxu0
      %1368 = vmatprep.mubr.f32.mxu0 0.0
      %1369 = vmatmul.mubr.f32.gmra.mxu0 %v1263
      %v1370 = vpop.f32.mrf.mxu0
      %v1371 = vadd.f32 0.0, %v1370
      %v1372 = vpop.f32.mrf.mxu0
      %1373 = vdwg.mxu0
      %vm1374 = vcmask 523264
      %v1375 = vsel %vm1374, %v1336, -inf
      %1376 = vmax.xlane.f32.xlu0 %v1375
      %v1377 = vpop.xlane.xlu0 %1376
      %v1378 = vsel %vm1374, %v1341, -inf
      %1379 = vmax.xlane.f32.xlu0 %v1378
      %v1380 = vpop.xlane.xlu0 %1379
      %v1381 = vsel %vm1374, %v1346, -inf
      %1382 = vmax.xlane.f32.xlu0 %v1381
      %v1383 = vpop.xlane.xlu0 %1382
      %v1384 = vsel %vm1374, %v1351, -inf
      %1385 = vmax.xlane.f32.xlu0 %v1384
      %v1386 = vpop.xlane.xlu0 %1385
      %v1387 = vsel %vm1374, %v1356, -inf
      %1388 = vmax.xlane.f32.xlu0 %v1387
      %v1389 = vpop.xlane.xlu0 %1388
      %v1390 = vsel %vm1374, %v1361, -inf
      %1391 = vmax.xlane.f32.xlu0 %v1390
      %v1392 = vpop.xlane.xlu0 %1391
      %v1393 = vsel %vm1374, %v1366, -inf
      %1394 = vmax.xlane.f32.xlu0 %v1393
      %v1395 = vpop.xlane.xlu0 %1394
      %v1396 = vsel %vm1374, %v1371, -inf
      %1397 = vmax.xlane.f32.xlu0 %v1396
      %v1398 = vpop.xlane.xlu0 %1397
      %v1399 = vsub.f32 %v1336, %v1377
      %v1400 = vsub.f32 %v1341, %v1380
      %v1401 = vsub.f32 %v1346, %v1383
      %v1402 = vsub.f32 %v1351, %v1386
      %v1403 = vsub.f32 %v1356, %v1389
      %v1404 = vsub.f32 %v1361, %v1392
      %v1405 = vsub.f32 %v1366, %v1395
      %v1406 = vsub.f32 %v1371, %v1398
      %v1407 = vmul.f32 %v1399, 1.442695
      %v1408 = vpow.pop %v1407
      %v1409 = vmul.f32 %v1400, 1.442695
      %v1410 = vpow.pop %v1409
      %v1411 = vmul.f32 %v1401, 1.442695
      %v1412 = vpow.pop %v1411
      %v1413 = vmul.f32 %v1402, 1.442695
      %v1414 = vpow.pop %v1413
      %v1415 = vmul.f32 %v1403, 1.442695
      %v1416 = vpow.pop %v1415
      %v1417 = vmul.f32 %v1404, 1.442695
      %v1418 = vpow.pop %v1417
      %v1419 = vmul.f32 %v1405, 1.442695
      %v1420 = vpow.pop %v1419
      %v1421 = vmul.f32 %v1406, 1.442695
      %v1422 = vpow.pop %v1421
      %v1423 = vsel %vm1374, %v1408, 0.0
      %1424 = vadd.xlane.f32.xlu0 %v1423
      %v1425 = vpop.xlane.xlu0 %1424
      %v1426 = vsel %vm1374, %v1410, 0.0
      %1427 = vadd.xlane.f32.xlu0 %v1426
      %v1428 = vpop.xlane.xlu0 %1427
      %v1429 = vsel %vm1374, %v1412, 0.0
      %1430 = vadd.xlane.f32.xlu0 %v1429
      %v1431 = vpop.xlane.xlu0 %1430
      %v1432 = vsel %vm1374, %v1414, 0.0
      %1433 = vadd.xlane.f32.xlu0 %v1432
      %v1434 = vpop.xlane.xlu0 %1433
      %v1435 = vsel %vm1374, %v1416, 0.0
      %1436 = vadd.xlane.f32.xlu0 %v1435
      %v1437 = vpop.xlane.xlu0 %1436
      %v1438 = vsel %vm1374, %v1418, 0.0
      %1439 = vadd.xlane.f32.xlu0 %v1438
      %v1440 = vpop.xlane.xlu0 %1439
      %v1441 = vsel %vm1374, %v1420, 0.0
      %1442 = vadd.xlane.f32.xlu0 %v1441
      %v1443 = vpop.xlane.xlu0 %1442
      %v1444 = vsel %vm1374, %v1422, 0.0
      %1445 = vadd.xlane.f32.xlu0 %v1444
      %v1446 = vpop.xlane.xlu0 %1445
      %v1447 = vrcp.pop %v1425
      %v1448 = vrcp.pop %v1428
      %v1449 = vrcp.pop %v1431
      %v1450 = vrcp.pop %v1434
      %v1451 = vrcp.pop %v1437
      %v1452 = vrcp.pop %v1440
      %v1453 = vrcp.pop %v1443
      %v1454 = vrcp.pop %v1446
      %v1455 = vmul.f32 %v1408, %v1447
      %v1456 = vmul.f32 %v1410, %v1448
      %v1457 = vmul.f32 %v1412, %v1449
      %v1458 = vmul.f32 %v1414, %v1450
      %v1459 = vmul.f32 %v1416, %v1451
      %v1460 = vmul.f32 %v1418, %v1452
      %v1461 = vmul.f32 %v1420, %v1453
      %v1462 = vmul.f32 %v1422, %v1454
      %v1464 = vsel %vm1374, %v1189, 0
      %v1467 = vsel %vm1374, %v1194, 0
      %v1470 = vsel %vm1374, %v1199, 0
      %v1473 = vsel %vm1374, %v1204, 0
      %v1476 = vsel %vm1374, %v1455, 0
      %v1479 = vsel %vm1374, %v1456, 0
      %v1482 = vsel %vm1374, %v1457, 0
      %v1485 = vsel %vm1374, %v1458, 0
      %v1488 = vsel %vm1374, %v1459, 0
      %v1491 = vsel %vm1374, %v1460, 0
      %v1494 = vsel %vm1374, %v1461, 0
      %v1497 = vsel %vm1374, %v1462, 0
      %1499 = vmatprep.subr.mxu0 0.0
      %1500 = vmatpush1.xpose.msra.mxu0 0.0
      %1501 = vmatprep.subr.mxu0 0.0
      %1502 = vmatpush1.xpose.msra.mxu0 0.0
      %1503 = vmatprep.subr.mxu0 0.0
      %1504 = vmatpush1.xpose.msra.mxu0 0.0
      %1505 = vmatprep.subr.mxu0 0.0
      %1506 = vmatpush1.xpose.msra.mxu0 0.0
      %1507 = vmatprep.subr.mxu0 0.0
      %1508 = vmatpush1.xpose.msra.mxu0 0.0
      %1509 = vmatprep.subr.mxu0 0.0
      %1510 = vmatpush1.xpose.msra.mxu0 0.0
      %1511 = vmatprep.subr.mxu0 0.0
      %1512 = vmatpush1.xpose.msra.mxu0 0.0
      %1513 = vmatprep.subr.mxu0 0.0
      %1514 = vmatpush1.xpose.msra.mxu0 0.0
      %1515 = vmatprep.subr.mxu0 0.0
      %1516 = vmatpush1.xpose.msra.mxu0 %v1497
      %1517 = vmatprep.subr.mxu0 0.0
      %1518 = vmatpush1.xpose.msra.mxu0 %v1494
      %1519 = vmatprep.subr.mxu0 0.0
      %1520 = vmatpush1.xpose.msra.mxu0 %v1491
      %1521 = vmatprep.subr.mxu0 0.0
      %1522 = vmatpush1.xpose.msra.mxu0 %v1488
      %1523 = vmatprep.subr.mxu0 0.0
      %1524 = vmatpush1.xpose.msra.mxu0 %v1485
      %1525 = vmatprep.subr.mxu0 0.0
      %1526 = vmatpush1.xpose.msra.mxu0 %v1482
      %1527 = vmatprep.subr.mxu0 0.0
      %1528 = vmatpush1.xpose.msra.mxu0 %v1479
      %1529 = vmatprep.subr.mxu0 0.0
      %1530 = vmatpush1.xpose.msra.mxu0 %v1476
      %1531 = vmatprep.subr.mxu0 0.0
      %1532 = vmatpush2.xpose.msra.mxu0 0.0
      %1533 = vmatprep.subr.mxu0 0.0
      %1534 = vmatpush2.xpose.msra.mxu0 0.0
      %1535 = vmatprep.subr.mxu0 0.0
      %1536 = vmatpush2.xpose.msra.mxu0 0.0
      %1537 = vmatprep.subr.mxu0 0.0
      %1538 = vmatpush2.xpose.msra.mxu0 0.0
      %1539 = vmatprep.subr.mxu0 0.0
      %1540 = vmatpush2.xpose.msra.mxu0 0.0
      %1541 = vmatprep.subr.mxu0 0.0
      %1542 = vmatpush2.xpose.msra.mxu0 0.0
      %1543 = vmatprep.subr.mxu0 0.0
      %1544 = vmatpush2.xpose.msra.mxu0 0.0
      %1545 = vmatprep.subr.mxu0 0.0
      %1546 = vmatpush2.xpose.msra.mxu0 0.0
      %1547 = vmatprep.subr.mxu0 0.0
      %1548 = vmatpush2.xpose.msra.mxu0 0.0
      %1549 = vmatprep.subr.mxu0 0.0
      %1550 = vmatpush2.xpose.msra.mxu0 0.0
      %1551 = vmatprep.subr.mxu0 0.0
      %1552 = vmatpush2.xpose.msra.mxu0 0.0
      %1553 = vmatprep.subr.mxu0 0.0
      %1554 = vmatpush2.xpose.msra.mxu0 0.0
      %1555 = vmatprep.subr.mxu0 0.0
      %1556 = vmatpush2.xpose.msra.mxu0 0.0
      %1557 = vmatprep.subr.mxu0 0.0
      %1558 = vmatpush2.xpose.msra.mxu0 0.0
      %1559 = vmatprep.subr.mxu0 0.0
      %1560 = vmatpush2.xpose.msra.mxu0 0.0
      %1561 = vmatprep.subr.mxu0 0.0
      %1562 = vmatpush2.xpose.msra.mxu0 0.0
      %1563 = vmatprep.mubr.f32.mxu0 0.0
      %1564 = vmatmul.mubr.f32.gmra.mxu0 %v1464
      %v1565 = vpop.f32.mrf.mxu0
      %v1566 = vadd.f32 0.0, %v1565
      %v1567 = vpop.f32.mrf.mxu0
      %1568 = vmatprep.mubr.f32.mxu0 0.0
      %1569 = vmatmul.mubr.f32.gmra.mxu0 %v1467
      %v1570 = vpop.f32.mrf.mxu0
      %v1571 = vadd.f32 0.0, %v1570
      %v1572 = vpop.f32.mrf.mxu0
      %1573 = vmatprep.mubr.f32.mxu0 0.0
      %1574 = vmatmul.mubr.f32.gmra.mxu0 %v1470
      %v1575 = vpop.f32.mrf.mxu0
      %v1576 = vadd.f32 0.0, %v1575
      %v1577 = vpop.f32.mrf.mxu0
      %1578 = vmatprep.mubr.f32.mxu0 0.0
      %1579 = vmatmul.mubr.f32.gmra.mxu0 %v1473
      %v1580 = vpop.f32.mrf.mxu0
      %v1581 = vadd.f32 0.0, %v1580
      %v1582 = vpop.f32.mrf.mxu0
      %1583 = vdwg.mxu0
      %v1584 = vstv %s1207
      %v1585 = vmul.f32 %v1584, %v1566
      %v1586 = vmul.f32 %v1584, %v1571
      %v1587 = vmul.f32 %v1584, %v1576
      %v1588 = vmul.f32 %v1584, %v1581
      %v1589 = vadd.f32 %v1585, %v917
      %v1590 = vadd.f32 %v1586, %v918
      %v1591 = vadd.f32 %v1587, %v919
      %v1592 = vadd.f32 %v1588, %v920
      %v1593 = vld [vmem:[%s12] sm:$0xff]
      %v1594 = vld [vmem:[%s12 + $0x8] sm:$0xff]
      %v1595 = vld [vmem:[%s12 + $0x10] sm:$0xff]
      %v1596 = vld [vmem:[%s12 + $0x18] sm:$0xff]
      %v1597 = vld [vmem:[%s12 + $0x20] sm:$0xff]
      %v1598 = vld [vmem:[%s12 + $0x28] sm:$0xff]
      %v1599 = vld [vmem:[%s12 + $0x30] sm:$0xff]
      %v1600 = vld [vmem:[%s12 + $0x38] sm:$0xff]
      %v1602 = vsel %vm1374, %v1589, 0
      %v1605 = vsel %vm1374, %v1590, 0
      %v1608 = vsel %vm1374, %v1591, 0
      %v1611 = vsel %vm1374, %v1592, 0
      %1613 = vmatprep.subr.mxu0 0.0
      %1614 = vmatpush1.msra.mxu0 0.0
      %1615 = vmatprep.subr.mxu0 0.0
      %1616 = vmatpush1.msra.mxu0 0.0
      %1617 = vmatprep.subr.mxu0 0.0
      %1618 = vmatpush1.msra.mxu0 0.0
      %1619 = vmatprep.subr.mxu0 0.0
      %1620 = vmatpush1.msra.mxu0 0.0
      %1621 = vmatprep.subr.mxu0 0.0
      %1622 = vmatpush1.msra.mxu0 0.0
      %1623 = vmatprep.subr.mxu0 0.0
      %1624 = vmatpush1.msra.mxu0 0.0
      %1625 = vmatprep.subr.mxu0 0.0
      %1626 = vmatpush1.msra.mxu0 0.0
      %1627 = vmatprep.subr.mxu0 0.0
      %1628 = vmatpush1.msra.mxu0 0.0
      %1629 = vmatprep.subr.mxu0 0.0
      %1630 = vmatpush1.msra.mxu0 %v1600
      %1631 = vmatprep.subr.mxu0 0.0
      %1632 = vmatpush1.msra.mxu0 %v1599
      %1633 = vmatprep.subr.mxu0 0.0
      %1634 = vmatpush1.msra.mxu0 %v1598
      %1635 = vmatprep.subr.mxu0 0.0
      %1636 = vmatpush1.msra.mxu0 %v1597
      %1637 = vmatprep.subr.mxu0 0.0
      %1638 = vmatpush1.msra.mxu0 %v1596
      %1639 = vmatprep.subr.mxu0 0.0
      %1640 = vmatpush1.msra.mxu0 %v1595
      %1641 = vmatprep.subr.mxu0 0.0
      %1642 = vmatpush1.msra.mxu0 %v1594
      %1643 = vmatprep.subr.mxu0 0.0
      %1644 = vmatpush1.msra.mxu0 %v1593
      %1645 = vmatprep.subr.mxu0 0.0
      %1646 = vmatpush2.msra.mxu0 0.0
      %1647 = vmatprep.subr.mxu0 0.0
      %1648 = vmatpush2.msra.mxu0 0.0
      %1649 = vmatprep.subr.mxu0 0.0
      %1650 = vmatpush2.msra.mxu0 0.0
      %1651 = vmatprep.subr.mxu0 0.0
      %1652 = vmatpush2.msra.mxu0 0.0
      %1653 = vmatprep.subr.mxu0 0.0
      %1654 = vmatpush2.msra.mxu0 0.0
      %1655 = vmatprep.subr.mxu0 0.0
      %1656 = vmatpush2.msra.mxu0 0.0
      %1657 = vmatprep.subr.mxu0 0.0
      %1658 = vmatpush2.msra.mxu0 0.0
      %1659 = vmatprep.subr.mxu0 0.0
      %1660 = vmatpush2.msra.mxu0 0.0
      %1661 = vmatprep.subr.mxu0 0.0
      %1662 = vmatpush2.msra.mxu0 0.0
      %1663 = vmatprep.subr.mxu0 0.0
      %1664 = vmatpush2.msra.mxu0 0.0
      %1665 = vmatprep.subr.mxu0 0.0
      %1666 = vmatpush2.msra.mxu0 0.0
      %1667 = vmatprep.subr.mxu0 0.0
      %1668 = vmatpush2.msra.mxu0 0.0
      %1669 = vmatprep.subr.mxu0 0.0
      %1670 = vmatpush2.msra.mxu0 0.0
      %1671 = vmatprep.subr.mxu0 0.0
      %1672 = vmatpush2.msra.mxu0 0.0
      %1673 = vmatprep.subr.mxu0 0.0
      %1674 = vmatpush2.msra.mxu0 0.0
      %1675 = vmatprep.subr.mxu0 0.0
      %1676 = vmatpush2.msra.mxu0 0.0
      %1677 = vmatprep.mubr.f32.mxu0 0.0
      %1678 = vmatmul.mubr.f32.gmra.mxu0 %v1602
      %v1679 = vpop.f32.mrf.mxu0
      %v1680 = vadd.f32 0.0, %v1679
      %v1681 = vpop.f32.mrf.mxu0
      %1682 = vmatprep.mubr.f32.mxu0 0.0
      %1683 = vmatmul.mubr.f32.gmra.mxu0 %v1605
      %v1684 = vpop.f32.mrf.mxu0
      %v1685 = vadd.f32 0.0, %v1684
      %v1686 = vpop.f32.mrf.mxu0
      %1687 = vmatprep.mubr.f32.mxu0 0.0
      %1688 = vmatmul.mubr.f32.gmra.mxu0 %v1608
      %v1689 = vpop.f32.mrf.mxu0
      %v1690 = vadd.f32 0.0, %v1689
      %v1691 = vpop.f32.mrf.mxu0
      %1692 = vmatprep.mubr.f32.mxu0 0.0
      %1693 = vmatmul.mubr.f32.gmra.mxu0 %v1611
      %v1694 = vpop.f32.mrf.mxu0
      %v1695 = vadd.f32 0.0, %v1694
      %v1696 = vpop.f32.mrf.mxu0
      %1697 = vdwg.mxu0
      %v1698 = vld [vmem:[%s13] sm:$0xff]
      %v1699 = vld [vmem:[%s13 + $0x8] sm:$0xff]
      %v1700 = vld [vmem:[%s13 + $0x10] sm:$0xff]
      %v1701 = vld [vmem:[%s13 + $0x18] sm:$0xff]
      %v1702 = vld [vmem:[%s13 + $0x20] sm:$0xff]
      %v1703 = vld [vmem:[%s13 + $0x28] sm:$0xff]
      %v1704 = vld [vmem:[%s13 + $0x30] sm:$0xff]
      %v1705 = vld [vmem:[%s13 + $0x38] sm:$0xff]
      %s1706 = scalar_lea.vmem %s12, 64
      %v1707 = vld [vmem:[%s1706] sm:$0xff]
      %v1708 = vld [vmem:[%s1706 + $0x8] sm:$0xff]
      %v1709 = vld [vmem:[%s1706 + $0x10] sm:$0xff]
      %v1710 = vld [vmem:[%s1706 + $0x18] sm:$0xff]
      %v1711 = vld [vmem:[%s1706 + $0x20] sm:$0xff]
      %v1712 = vld [vmem:[%s1706 + $0x28] sm:$0xff]
      %v1713 = vld [vmem:[%s1706 + $0x30] sm:$0xff]
      %v1714 = vld [vmem:[%s1706 + $0x38] sm:$0xff]
      %1715 = vmatprep.subr.mxu0 0.0
      %1716 = vmatpush1.msra.mxu0 0.0
      %1717 = vmatprep.subr.mxu0 0.0
      %1718 = vmatpush1.msra.mxu0 0.0
      %1719 = vmatprep.subr.mxu0 0.0
      %1720 = vmatpush1.msra.mxu0 0.0
      %1721 = vmatprep.subr.mxu0 0.0
      %1722 = vmatpush1.msra.mxu0 0.0
      %1723 = vmatprep.subr.mxu0 0.0
      %1724 = vmatpush1.msra.mxu0 0.0
      %1725 = vmatprep.subr.mxu0 0.0
      %1726 = vmatpush1.msra.mxu0 0.0
      %1727 = vmatprep.subr.mxu0 0.0
      %1728 = vmatpush1.msra.mxu0 0.0
      %1729 = vmatprep.subr.mxu0 0.0
      %1730 = vmatpush1.msra.mxu0 0.0
      %1731 = vmatprep.subr.mxu0 0.0
      %1732 = vmatpush1.msra.mxu0 %v1714
      %1733 = vmatprep.subr.mxu0 0.0
      %1734 = vmatpush1.msra.mxu0 %v1713
      %1735 = vmatprep.subr.mxu0 0.0
      %1736 = vmatpush1.msra.mxu0 %v1712
      %1737 = vmatprep.subr.mxu0 0.0
      %1738 = vmatpush1.msra.mxu0 %v1711
      %1739 = vmatprep.subr.mxu0 0.0
      %1740 = vmatpush1.msra.mxu0 %v1710
      %1741 = vmatprep.subr.mxu0 0.0
      %1742 = vmatpush1.msra.mxu0 %v1709
      %1743 = vmatprep.subr.mxu0 0.0
      %1744 = vmatpush1.msra.mxu0 %v1708
      %1745 = vmatprep.subr.mxu0 0.0
      %1746 = vmatpush1.msra.mxu0 %v1707
      %1747 = vmatprep.subr.mxu0 0.0
      %1748 = vmatpush2.msra.mxu0 0.0
      %1749 = vmatprep.subr.mxu0 0.0
      %1750 = vmatpush2.msra.mxu0 0.0
      %1751 = vmatprep.subr.mxu0 0.0
      %1752 = vmatpush2.msra.mxu0 0.0
      %1753 = vmatprep.subr.mxu0 0.0
      %1754 = vmatpush2.msra.mxu0 0.0
      %1755 = vmatprep.subr.mxu0 0.0
      %1756 = vmatpush2.msra.mxu0 0.0
      %1757 = vmatprep.subr.mxu0 0.0
      %1758 = vmatpush2.msra.mxu0 0.0
      %1759 = vmatprep.subr.mxu0 0.0
      %1760 = vmatpush2.msra.mxu0 0.0
      %1761 = vmatprep.subr.mxu0 0.0
      %1762 = vmatpush2.msra.mxu0 0.0
      %1763 = vmatprep.subr.mxu0 0.0
      %1764 = vmatpush2.msra.mxu0 0.0
      %1765 = vmatprep.subr.mxu0 0.0
      %1766 = vmatpush2.msra.mxu0 0.0
      %1767 = vmatprep.subr.mxu0 0.0
      %1768 = vmatpush2.msra.mxu0 0.0
      %1769 = vmatprep.subr.mxu0 0.0
      %1770 = vmatpush2.msra.mxu0 0.0
      %1771 = vmatprep.subr.mxu0 0.0
      %1772 = vmatpush2.msra.mxu0 0.0
      %1773 = vmatprep.subr.mxu0 0.0
      %1774 = vmatpush2.msra.mxu0 0.0
      %1775 = vmatprep.subr.mxu0 0.0
      %1776 = vmatpush2.msra.mxu0 0.0
      %1777 = vmatprep.subr.mxu0 0.0
      %1778 = vmatpush2.msra.mxu0 0.0
      %1779 = vmatprep.mubr.f32.mxu0 0.0
      %1780 = vmatmul.mubr.f32.gmra.mxu0 %v1602
      %v1781 = vpop.f32.mrf.mxu0
      %v1782 = vadd.f32 0.0, %v1781
      %v1783 = vpop.f32.mrf.mxu0
      %1784 = vmatprep.mubr.f32.mxu0 0.0
      %1785 = vmatmul.mubr.f32.gmra.mxu0 %v1605
      %v1786 = vpop.f32.mrf.mxu0
      %v1787 = vadd.f32 0.0, %v1786
      %v1788 = vpop.f32.mrf.mxu0
      %1789 = vmatprep.mubr.f32.mxu0 0.0
      %1790 = vmatmul.mubr.f32.gmra.mxu0 %v1608
      %v1791 = vpop.f32.mrf.mxu0
      %v1792 = vadd.f32 0.0, %v1791
      %v1793 = vpop.f32.mrf.mxu0
      %1794 = vmatprep.mubr.f32.mxu0 0.0
      %1795 = vmatmul.mubr.f32.gmra.mxu0 %v1611
      %v1796 = vpop.f32.mrf.mxu0
      %v1797 = vadd.f32 0.0, %v1796
      %v1798 = vpop.f32.mrf.mxu0
      %1799 = vdwg.mxu0
      %s1800 = scalar_lea.vmem %s13, 64
      %v1801 = vld [vmem:[%s1800] sm:$0xff]
      %v1802 = vld [vmem:[%s1800 + $0x8] sm:$0xff]
      %v1803 = vld [vmem:[%s1800 + $0x10] sm:$0xff]
      %v1804 = vld [vmem:[%s1800 + $0x18] sm:$0xff]
      %v1805 = vld [vmem:[%s1800 + $0x20] sm:$0xff]
      %v1806 = vld [vmem:[%s1800 + $0x28] sm:$0xff]
      %v1807 = vld [vmem:[%s1800 + $0x30] sm:$0xff]
      %v1808 = vld [vmem:[%s1800 + $0x38] sm:$0xff]
      %v1810 = vsel %vm928, %v1801, 0
      %v1813 = vsel %vm928, %v1802, 0
      %v1816 = vsel %vm928, %v1803, 0
      %v1819 = vsel %vm928, %v1804, 0
      %v1822 = vsel %vm928, %v1805, 0
      %v1825 = vsel %vm928, %v1806, 0
      %v1828 = vsel %vm928, %v1807, 0
      %v1831 = vsel %vm928, %v1808, 0
      %1833 = vmatprep.subr.mxu0 0.0
      %1834 = vmatpush1.msra.mxu0 0.0
      %1835 = vmatprep.subr.mxu0 0.0
      %1836 = vmatpush1.msra.mxu0 0.0
      %1837 = vmatprep.subr.mxu0 0.0
      %1838 = vmatpush1.msra.mxu0 0.0
      %1839 = vmatprep.subr.mxu0 0.0
      %1840 = vmatpush1.msra.mxu0 0.0
      %1841 = vmatprep.subr.mxu0 0.0
      %1842 = vmatpush1.msra.mxu0 0.0
      %1843 = vmatprep.subr.mxu0 0.0
      %1844 = vmatpush1.msra.mxu0 0.0
      %1845 = vmatprep.subr.mxu0 0.0
      %1846 = vmatpush1.msra.mxu0 0.0
      %1847 = vmatprep.subr.mxu0 0.0
      %1848 = vmatpush1.msra.mxu0 0.0
      %1849 = vmatprep.subr.mxu0 0.0
      %1850 = vmatpush1.msra.mxu0 0.0
      %1851 = vmatprep.subr.mxu0 0.0
      %1852 = vmatpush1.msra.mxu0 0.0
      %1853 = vmatprep.subr.mxu0 0.0
      %1854 = vmatpush1.msra.mxu0 0.0
      %1855 = vmatprep.subr.mxu0 0.0
      %1856 = vmatpush1.msra.mxu0 0.0
      %1857 = vmatprep.subr.mxu0 0.0
      %1858 = vmatpush1.msra.mxu0 %v1797
      %1859 = vmatprep.subr.mxu0 0.0
      %1860 = vmatpush1.msra.mxu0 %v1792
      %1861 = vmatprep.subr.mxu0 0.0
      %1862 = vmatpush1.msra.mxu0 %v1787
      %1863 = vmatprep.subr.mxu0 0.0
      %1864 = vmatpush1.msra.mxu0 %v1782
      %1865 = vmatprep.subr.mxu0 0.0
      %1866 = vmatpush2.msra.mxu0 0.0
      %1867 = vmatprep.subr.mxu0 0.0
      %1868 = vmatpush2.msra.mxu0 0.0
      %1869 = vmatprep.subr.mxu0 0.0
      %1870 = vmatpush2.msra.mxu0 0.0
      %1871 = vmatprep.subr.mxu0 0.0
      %1872 = vmatpush2.msra.mxu0 0.0
      %1873 = vmatprep.subr.mxu0 0.0
      %1874 = vmatpush2.msra.mxu0 0.0
      %1875 = vmatprep.subr.mxu0 0.0
      %1876 = vmatpush2.msra.mxu0 0.0
      %1877 = vmatprep.subr.mxu0 0.0
      %1878 = vmatpush2.msra.mxu0 0.0
      %1879 = vmatprep.subr.mxu0 0.0
      %1880 = vmatpush2.msra.mxu0 0.0
      %1881 = vmatprep.subr.mxu0 0.0
      %1882 = vmatpush2.msra.mxu0 0.0
      %1883 = vmatprep.subr.mxu0 0.0
      %1884 = vmatpush2.msra.mxu0 0.0
      %1885 = vmatprep.subr.mxu0 0.0
      %1886 = vmatpush2.msra.mxu0 0.0
      %1887 = vmatprep.subr.mxu0 0.0
      %1888 = vmatpush2.msra.mxu0 0.0
      %1889 = vmatprep.subr.mxu0 0.0
      %1890 = vmatpush2.msra.mxu0 0.0
      %1891 = vmatprep.subr.mxu0 0.0
      %1892 = vmatpush2.msra.mxu0 0.0
      %1893 = vmatprep.subr.mxu0 0.0
      %1894 = vmatpush2.msra.mxu0 0.0
      %1895 = vmatprep.subr.mxu0 0.0
      %1896 = vmatpush2.msra.mxu0 0.0
      %1897 = vmatprep.mubr.f32.mxu0 0.0
      %1898 = vmatmul.mubr.f32.gmra.mxu0 %v1810
      %v1899 = vpop.f32.mrf.mxu0
      %v1900 = vadd.f32 0.0, %v1899
      %v1901 = vpop.f32.mrf.mxu0
      %1902 = vmatprep.mubr.f32.mxu0 0.0
      %1903 = vmatmul.mubr.f32.gmra.mxu0 %v1813
      %v1904 = vpop.f32.mrf.mxu0
      %v1905 = vadd.f32 0.0, %v1904
      %v1906 = vpop.f32.mrf.mxu0
      %1907 = vmatprep.mubr.f32.mxu0 0.0
      %1908 = vmatmul.mubr.f32.gmra.mxu0 %v1816
      %v1909 = vpop.f32.mrf.mxu0
      %v1910 = vadd.f32 0.0, %v1909
      %v1911 = vpop.f32.mrf.mxu0
      %1912 = vmatprep.mubr.f32.mxu0 0.0
      %1913 = vmatmul.mubr.f32.gmra.mxu0 %v1819
      %v1914 = vpop.f32.mrf.mxu0
      %v1915 = vadd.f32 0.0, %v1914
      %v1916 = vpop.f32.mrf.mxu0
      %1917 = vmatprep.mubr.f32.mxu0 0.0
      %1918 = vmatmul.mubr.f32.gmra.mxu0 %v1822
      %v1919 = vpop.f32.mrf.mxu0
      %v1920 = vadd.f32 0.0, %v1919
      %v1921 = vpop.f32.mrf.mxu0
      %1922 = vmatprep.mubr.f32.mxu0 0.0
      %1923 = vmatmul.mubr.f32.gmra.mxu0 %v1825
      %v1924 = vpop.f32.mrf.mxu0
      %v1925 = vadd.f32 0.0, %v1924
      %v1926 = vpop.f32.mrf.mxu0
      %1927 = vmatprep.mubr.f32.mxu0 0.0
      %1928 = vmatmul.mubr.f32.gmra.mxu0 %v1828
      %v1929 = vpop.f32.mrf.mxu0
      %v1930 = vadd.f32 0.0, %v1929
      %v1931 = vpop.f32.mrf.mxu0
      %1932 = vmatprep.mubr.f32.mxu0 0.0
      %1933 = vmatmul.mubr.f32.gmra.mxu0 %v1831
      %v1934 = vpop.f32.mrf.mxu0
      %v1935 = vadd.f32 0.0, %v1934
      %v1936 = vpop.f32.mrf.mxu0
      %1937 = vdwg.mxu0
      %v1939 = vsel %vm928, %v1698, 0
      %v1942 = vsel %vm928, %v1699, 0
      %v1945 = vsel %vm928, %v1700, 0
      %v1948 = vsel %vm928, %v1701, 0
      %v1951 = vsel %vm928, %v1702, 0
      %v1954 = vsel %vm928, %v1703, 0
      %v1957 = vsel %vm928, %v1704, 0
      %v1960 = vsel %vm928, %v1705, 0
      %1962 = vmatprep.subr.mxu0 0.0
      %1963 = vmatpush1.msra.mxu0 0.0
      %1964 = vmatprep.subr.mxu0 0.0
      %1965 = vmatpush1.msra.mxu0 0.0
      %1966 = vmatprep.subr.mxu0 0.0
      %1967 = vmatpush1.msra.mxu0 0.0
      %1968 = vmatprep.subr.mxu0 0.0
      %1969 = vmatpush1.msra.mxu0 0.0
      %1970 = vmatprep.subr.mxu0 0.0
      %1971 = vmatpush1.msra.mxu0 0.0
      %1972 = vmatprep.subr.mxu0 0.0
      %1973 = vmatpush1.msra.mxu0 0.0
      %1974 = vmatprep.subr.mxu0 0.0
      %1975 = vmatpush1.msra.mxu0 0.0
      %1976 = vmatprep.subr.mxu0 0.0
      %1977 = vmatpush1.msra.mxu0 0.0
      %1978 = vmatprep.subr.mxu0 0.0
      %1979 = vmatpush1.msra.mxu0 0.0
      %1980 = vmatprep.subr.mxu0 0.0
      %1981 = vmatpush1.msra.mxu0 0.0
      %1982 = vmatprep.subr.mxu0 0.0
      %1983 = vmatpush1.msra.mxu0 0.0
      %1984 = vmatprep.subr.mxu0 0.0
      %1985 = vmatpush1.msra.mxu0 0.0
      %1986 = vmatprep.subr.mxu0 0.0
      %1987 = vmatpush1.msra.mxu0 %v1695
      %1988 = vmatprep.subr.mxu0 0.0
      %1989 = vmatpush1.msra.mxu0 %v1690
      %1990 = vmatprep.subr.mxu0 0.0
      %1991 = vmatpush1.msra.mxu0 %v1685
      %1992 = vmatprep.subr.mxu0 0.0
      %1993 = vmatpush1.msra.mxu0 %v1680
      %1994 = vmatprep.subr.mxu0 0.0
      %1995 = vmatpush2.msra.mxu0 0.0
      %1996 = vmatprep.subr.mxu0 0.0
      %1997 = vmatpush2.msra.mxu0 0.0
      %1998 = vmatprep.subr.mxu0 0.0
      %1999 = vmatpush2.msra.mxu0 0.0
      %2000 = vmatprep.subr.mxu0 0.0
      %2001 = vmatpush2.msra.mxu0 0.0
      %2002 = vmatprep.subr.mxu0 0.0
      %2003 = vmatpush2.msra.mxu0 0.0
      %2004 = vmatprep.subr.mxu0 0.0
      %2005 = vmatpush2.msra.mxu0 0.0
      %2006 = vmatprep.subr.mxu0 0.0
      %2007 = vmatpush2.msra.mxu0 0.0
      %2008 = vmatprep.subr.mxu0 0.0
      %2009 = vmatpush2.msra.mxu0 0.0
      %2010 = vmatprep.subr.mxu0 0.0
      %2011 = vmatpush2.msra.mxu0 0.0
      %2012 = vmatprep.subr.mxu0 0.0
      %2013 = vmatpush2.msra.mxu0 0.0
      %2014 = vmatprep.subr.mxu0 0.0
      %2015 = vmatpush2.msra.mxu0 0.0
      %2016 = vmatprep.subr.mxu0 0.0
      %2017 = vmatpush2.msra.mxu0 0.0
      %2018 = vmatprep.subr.mxu0 0.0
      %2019 = vmatpush2.msra.mxu0 0.0
      %2020 = vmatprep.subr.mxu0 0.0
      %2021 = vmatpush2.msra.mxu0 0.0
      %2022 = vmatprep.subr.mxu0 0.0
      %2023 = vmatpush2.msra.mxu0 0.0
      %2024 = vmatprep.subr.mxu0 0.0
      %2025 = vmatpush2.msra.mxu0 0.0
      %2026 = vmatprep.mubr.f32.mxu0 0.0
      %2027 = vmatmul.mubr.f32.gmra.mxu0 %v1939
      %v2028 = vpop.f32.mrf.mxu0
      %v2029 = vadd.f32 %v1900, %v2028
      %v2030 = vpop.f32.mrf.mxu0
      %2031 = vmatprep.mubr.f32.mxu0 0.0
      %2032 = vmatmul.mubr.f32.gmra.mxu0 %v1942
      %v2033 = vpop.f32.mrf.mxu0
      %v2034 = vadd.f32 %v1905, %v2033
      %v2035 = vpop.f32.mrf.mxu0
      %2036 = vmatprep.mubr.f32.mxu0 0.0
      %2037 = vmatmul.mubr.f32.gmra.mxu0 %v1945
      %v2038 = vpop.f32.mrf.mxu0
      %v2039 = vadd.f32 %v1910, %v2038
      %v2040 = vpop.f32.mrf.mxu0
      %2041 = vmatprep.mubr.f32.mxu0 0.0
      %2042 = vmatmul.mubr.f32.gmra.mxu0 %v1948
      %v2043 = vpop.f32.mrf.mxu0
      %v2044 = vadd.f32 %v1915, %v2043
      %v2045 = vpop.f32.mrf.mxu0
      %2046 = vmatprep.mubr.f32.mxu0 0.0
      %2047 = vmatmul.mubr.f32.gmra.mxu0 %v1951
      %v2048 = vpop.f32.mrf.mxu0
      %v2049 = vadd.f32 %v1920, %v2048
      %v2050 = vpop.f32.mrf.mxu0
      %2051 = vmatprep.mubr.f32.mxu0 0.0
      %2052 = vmatmul.mubr.f32.gmra.mxu0 %v1954
      %v2053 = vpop.f32.mrf.mxu0
      %v2054 = vadd.f32 %v1925, %v2053
      %v2055 = vpop.f32.mrf.mxu0
      %2056 = vmatprep.mubr.f32.mxu0 0.0
      %2057 = vmatmul.mubr.f32.gmra.mxu0 %v1957
      %v2058 = vpop.f32.mrf.mxu0
      %v2059 = vadd.f32 %v1930, %v2058
      %v2060 = vpop.f32.mrf.mxu0
      %2061 = vmatprep.mubr.f32.mxu0 0.0
      %2062 = vmatmul.mubr.f32.gmra.mxu0 %v1960
      %v2063 = vpop.f32.mrf.mxu0
      %v2064 = vadd.f32 %v1935, %v2063
      %v2065 = vpop.f32.mrf.mxu0
      %2066 = vdwg.mxu0
      %s2067 = scalar_lea.vmem %s12, 128
      %v2068 = vld [vmem:[%s2067] sm:$0xff]
      %v2069 = vld [vmem:[%s2067 + $0x8] sm:$0xff]
      %v2070 = vld [vmem:[%s2067 + $0x10] sm:$0xff]
      %v2071 = vld [vmem:[%s2067 + $0x18] sm:$0xff]
      %v2072 = vld [vmem:[%s2067 + $0x20] sm:$0xff]
      %v2073 = vld [vmem:[%s2067 + $0x28] sm:$0xff]
      %v2074 = vld [vmem:[%s2067 + $0x30] sm:$0xff]
      %v2075 = vld [vmem:[%s2067 + $0x38] sm:$0xff]
      %2076 = vmatprep.subr.mxu0 0.0
      %2077 = vmatpush1.msra.mxu0 0.0
      %2078 = vmatprep.subr.mxu0 0.0
      %2079 = vmatpush1.msra.mxu0 0.0
      %2080 = vmatprep.subr.mxu0 0.0
      %2081 = vmatpush1.msra.mxu0 0.0
      %2082 = vmatprep.subr.mxu0 0.0
      %2083 = vmatpush1.msra.mxu0 0.0
      %2084 = vmatprep.subr.mxu0 0.0
      %2085 = vmatpush1.msra.mxu0 0.0
      %2086 = vmatprep.subr.mxu0 0.0
      %2087 = vmatpush1.msra.mxu0 0.0
      %2088 = vmatprep.subr.mxu0 0.0
      %2089 = vmatpush1.msra.mxu0 0.0
      %2090 = vmatprep.subr.mxu0 0.0
      %2091 = vmatpush1.msra.mxu0 0.0
      %2092 = vmatprep.subr.mxu0 0.0
      %2093 = vmatpush1.msra.mxu0 %v2075
      %2094 = vmatprep.subr.mxu0 0.0
      %2095 = vmatpush1.msra.mxu0 %v2074
      %2096 = vmatprep.subr.mxu0 0.0
      %2097 = vmatpush1.msra.mxu0 %v2073
      %2098 = vmatprep.subr.mxu0 0.0
      %2099 = vmatpush1.msra.mxu0 %v2072
      %2100 = vmatprep.subr.mxu0 0.0
      %2101 = vmatpush1.msra.mxu0 %v2071
      %2102 = vmatprep.subr.mxu0 0.0
      %2103 = vmatpush1.msra.mxu0 %v2070
      %2104 = vmatprep.subr.mxu0 0.0
      %2105 = vmatpush1.msra.mxu0 %v2069
      %2106 = vmatprep.subr.mxu0 0.0
      %2107 = vmatpush1.msra.mxu0 %v2068
      %2108 = vmatprep.subr.mxu0 0.0
      %2109 = vmatpush2.msra.mxu0 0.0
      %2110 = vmatprep.subr.mxu0 0.0
      %2111 = vmatpush2.msra.mxu0 0.0
      %2112 = vmatprep.subr.mxu0 0.0
      %2113 = vmatpush2.msra.mxu0 0.0
      %2114 = vmatprep.subr.mxu0 0.0
      %2115 = vmatpush2.msra.mxu0 0.0
      %2116 = vmatprep.subr.mxu0 0.0
      %2117 = vmatpush2.msra.mxu0 0.0
      %2118 = vmatprep.subr.mxu0 0.0
      %2119 = vmatpush2.msra.mxu0 0.0
      %2120 = vmatprep.subr.mxu0 0.0
      %2121 = vmatpush2.msra.mxu0 0.0
      %2122 = vmatprep.subr.mxu0 0.0
      %2123 = vmatpush2.msra.mxu0 0.0
      %2124 = vmatprep.subr.mxu0 0.0
      %2125 = vmatpush2.msra.mxu0 0.0
      %2126 = vmatprep.subr.mxu0 0.0
      %2127 = vmatpush2.msra.mxu0 0.0
      %2128 = vmatprep.subr.mxu0 0.0
      %2129 = vmatpush2.msra.mxu0 0.0
      %2130 = vmatprep.subr.mxu0 0.0
      %2131 = vmatpush2.msra.mxu0 0.0
      %2132 = vmatprep.subr.mxu0 0.0
      %2133 = vmatpush2.msra.mxu0 0.0
      %2134 = vmatprep.subr.mxu0 0.0
      %2135 = vmatpush2.msra.mxu0 0.0
      %2136 = vmatprep.subr.mxu0 0.0
      %2137 = vmatpush2.msra.mxu0 0.0
      %2138 = vmatprep.subr.mxu0 0.0
      %2139 = vmatpush2.msra.mxu0 0.0
      %2140 = vmatprep.mubr.f32.mxu0 0.0
      %2141 = vmatmul.mubr.f32.gmra.mxu0 %v1602
      %v2142 = vpop.f32.mrf.mxu0
      %v2143 = vadd.f32 0.0, %v2142
      %v2144 = vpop.f32.mrf.mxu0
      %2145 = vmatprep.mubr.f32.mxu0 0.0
      %2146 = vmatmul.mubr.f32.gmra.mxu0 %v1605
      %v2147 = vpop.f32.mrf.mxu0
      %v2148 = vadd.f32 0.0, %v2147
      %v2149 = vpop.f32.mrf.mxu0
      %2150 = vmatprep.mubr.f32.mxu0 0.0
      %2151 = vmatmul.mubr.f32.gmra.mxu0 %v1608
      %v2152 = vpop.f32.mrf.mxu0
      %v2153 = vadd.f32 0.0, %v2152
      %v2154 = vpop.f32.mrf.mxu0
      %2155 = vmatprep.mubr.f32.mxu0 0.0
      %2156 = vmatmul.mubr.f32.gmra.mxu0 %v1611
      %v2157 = vpop.f32.mrf.mxu0
      %v2158 = vadd.f32 0.0, %v2157
      %v2159 = vpop.f32.mrf.mxu0
      %2160 = vdwg.mxu0
      %s2161 = scalar_lea.vmem %s13, 128
      %v2162 = vld [vmem:[%s2161] sm:$0xff]
      %v2163 = vld [vmem:[%s2161 + $0x8] sm:$0xff]
      %v2164 = vld [vmem:[%s2161 + $0x10] sm:$0xff]
      %v2165 = vld [vmem:[%s2161 + $0x18] sm:$0xff]
      %v2166 = vld [vmem:[%s2161 + $0x20] sm:$0xff]
      %v2167 = vld [vmem:[%s2161 + $0x28] sm:$0xff]
      %v2168 = vld [vmem:[%s2161 + $0x30] sm:$0xff]
      %v2169 = vld [vmem:[%s2161 + $0x38] sm:$0xff]
      %v2171 = vsel %vm928, %v2162, 0
      %v2174 = vsel %vm928, %v2163, 0
      %v2177 = vsel %vm928, %v2164, 0
      %v2180 = vsel %vm928, %v2165, 0
      %v2183 = vsel %vm928, %v2166, 0
      %v2186 = vsel %vm928, %v2167, 0
      %v2189 = vsel %vm928, %v2168, 0
      %v2192 = vsel %vm928, %v2169, 0
      %2194 = vmatprep.subr.mxu0 0.0
      %2195 = vmatpush1.msra.mxu0 0.0
      %2196 = vmatprep.subr.mxu0 0.0
      %2197 = vmatpush1.msra.mxu0 0.0
      %2198 = vmatprep.subr.mxu0 0.0
      %2199 = vmatpush1.msra.mxu0 0.0
      %2200 = vmatprep.subr.mxu0 0.0
      %2201 = vmatpush1.msra.mxu0 0.0
      %2202 = vmatprep.subr.mxu0 0.0
      %2203 = vmatpush1.msra.mxu0 0.0
      %2204 = vmatprep.subr.mxu0 0.0
      %2205 = vmatpush1.msra.mxu0 0.0
      %2206 = vmatprep.subr.mxu0 0.0
      %2207 = vmatpush1.msra.mxu0 0.0
      %2208 = vmatprep.subr.mxu0 0.0
      %2209 = vmatpush1.msra.mxu0 0.0
      %2210 = vmatprep.subr.mxu0 0.0
      %2211 = vmatpush1.msra.mxu0 0.0
      %2212 = vmatprep.subr.mxu0 0.0
      %2213 = vmatpush1.msra.mxu0 0.0
      %2214 = vmatprep.subr.mxu0 0.0
      %2215 = vmatpush1.msra.mxu0 0.0
      %2216 = vmatprep.subr.mxu0 0.0
      %2217 = vmatpush1.msra.mxu0 0.0
      %2218 = vmatprep.subr.mxu0 0.0
      %2219 = vmatpush1.msra.mxu0 %v2158
      %2220 = vmatprep.subr.mxu0 0.0
      %2221 = vmatpush1.msra.mxu0 %v2153
      %2222 = vmatprep.subr.mxu0 0.0
      %2223 = vmatpush1.msra.mxu0 %v2148
      %2224 = vmatprep.subr.mxu0 0.0
      %2225 = vmatpush1.msra.mxu0 %v2143
      %2226 = vmatprep.subr.mxu0 0.0
      %2227 = vmatpush2.msra.mxu0 0.0
      %2228 = vmatprep.subr.mxu0 0.0
      %2229 = vmatpush2.msra.mxu0 0.0
      %2230 = vmatprep.subr.mxu0 0.0
      %2231 = vmatpush2.msra.mxu0 0.0
      %2232 = vmatprep.subr.mxu0 0.0
      %2233 = vmatpush2.msra.mxu0 0.0
      %2234 = vmatprep.subr.mxu0 0.0
      %2235 = vmatpush2.msra.mxu0 0.0
      %2236 = vmatprep.subr.mxu0 0.0
      %2237 = vmatpush2.msra.mxu0 0.0
      %2238 = vmatprep.subr.mxu0 0.0
      %2239 = vmatpush2.msra.mxu0 0.0
      %2240 = vmatprep.subr.mxu0 0.0
      %2241 = vmatpush2.msra.mxu0 0.0
      %2242 = vmatprep.subr.mxu0 0.0
      %2243 = vmatpush2.msra.mxu0 0.0
      %2244 = vmatprep.subr.mxu0 0.0
      %2245 = vmatpush2.msra.mxu0 0.0
      %2246 = vmatprep.subr.mxu0 0.0
      %2247 = vmatpush2.msra.mxu0 0.0
      %2248 = vmatprep.subr.mxu0 0.0
      %2249 = vmatpush2.msra.mxu0 0.0
      %2250 = vmatprep.subr.mxu0 0.0
      %2251 = vmatpush2.msra.mxu0 0.0
      %2252 = vmatprep.subr.mxu0 0.0
      %2253 = vmatpush2.msra.mxu0 0.0
      %2254 = vmatprep.subr.mxu0 0.0
      %2255 = vmatpush2.msra.mxu0 0.0
      %2256 = vmatprep.subr.mxu0 0.0
      %2257 = vmatpush2.msra.mxu0 0.0
      %2258 = vmatprep.mubr.f32.mxu0 0.0
      %2259 = vmatmul.mubr.f32.gmra.mxu0 %v2171
      %v2260 = vpop.f32.mrf.mxu0
      %v2261 = vadd.f32 0.0, %v2260
      %v2262 = vpop.f32.mrf.mxu0
      %2263 = vmatprep.mubr.f32.mxu0 0.0
      %2264 = vmatmul.mubr.f32.gmra.mxu0 %v2174
      %v2265 = vpop.f32.mrf.mxu0
      %v2266 = vadd.f32 0.0, %v2265
      %v2267 = vpop.f32.mrf.mxu0
      %2268 = vmatprep.mubr.f32.mxu0 0.0
      %2269 = vmatmul.mubr.f32.gmra.mxu0 %v2177
      %v2270 = vpop.f32.mrf.mxu0
      %v2271 = vadd.f32 0.0, %v2270
      %v2272 = vpop.f32.mrf.mxu0
      %2273 = vmatprep.mubr.f32.mxu0 0.0
      %2274 = vmatmul.mubr.f32.gmra.mxu0 %v2180
      %v2275 = vpop.f32.mrf.mxu0
      %v2276 = vadd.f32 0.0, %v2275
      %v2277 = vpop.f32.mrf.mxu0
      %2278 = vmatprep.mubr.f32.mxu0 0.0
      %2279 = vmatmul.mubr.f32.gmra.mxu0 %v2183
      %v2280 = vpop.f32.mrf.mxu0
      %v2281 = vadd.f32 0.0, %v2280
      %v2282 = vpop.f32.mrf.mxu0
      %2283 = vmatprep.mubr.f32.mxu0 0.0
      %2284 = vmatmul.mubr.f32.gmra.mxu0 %v2186
      %v2285 = vpop.f32.mrf.mxu0
      %v2286 = vadd.f32 0.0, %v2285
      %v2287 = vpop.f32.mrf.mxu0
      %2288 = vmatprep.mubr.f32.mxu0 0.0
      %2289 = vmatmul.mubr.f32.gmra.mxu0 %v2189
      %v2290 = vpop.f32.mrf.mxu0
      %v2291 = vadd.f32 0.0, %v2290
      %v2292 = vpop.f32.mrf.mxu0
      %2293 = vmatprep.mubr.f32.mxu0 0.0
      %2294 = vmatmul.mubr.f32.gmra.mxu0 %v2192
      %v2295 = vpop.f32.mrf.mxu0
      %v2296 = vadd.f32 0.0, %v2295
      %v2297 = vpop.f32.mrf.mxu0
      %2298 = vdwg.mxu0
      %v2299 = vadd.f32 %v2029, %v2261
      %v2300 = vadd.f32 %v2034, %v2266
      %v2301 = vadd.f32 %v2039, %v2271
      %v2302 = vadd.f32 %v2044, %v2276
      %v2303 = vadd.f32 %v2049, %v2281
      %v2304 = vadd.f32 %v2054, %v2286
      %v2305 = vadd.f32 %v2059, %v2291
      %v2306 = vadd.f32 %v2064, %v2296
      %s2307 = scalar_lea.vmem %s12, 192
      %v2308 = vld [vmem:[%s2307] sm:$0xff]
      %v2309 = vld [vmem:[%s2307 + $0x8] sm:$0xff]
      %v2310 = vld [vmem:[%s2307 + $0x10] sm:$0xff]
      %v2311 = vld [vmem:[%s2307 + $0x18] sm:$0xff]
      %v2312 = vld [vmem:[%s2307 + $0x20] sm:$0xff]
      %v2313 = vld [vmem:[%s2307 + $0x28] sm:$0xff]
      %v2314 = vld [vmem:[%s2307 + $0x30] sm:$0xff]
      %v2315 = vld [vmem:[%s2307 + $0x38] sm:$0xff]
      %2316 = vmatprep.subr.mxu0 0.0
      %2317 = vmatpush1.msra.mxu0 0.0
      %2318 = vmatprep.subr.mxu0 0.0
      %2319 = vmatpush1.msra.mxu0 0.0
      %2320 = vmatprep.subr.mxu0 0.0
      %2321 = vmatpush1.msra.mxu0 0.0
      %2322 = vmatprep.subr.mxu0 0.0
      %2323 = vmatpush1.msra.mxu0 0.0
      %2324 = vmatprep.subr.mxu0 0.0
      %2325 = vmatpush1.msra.mxu0 0.0
      %2326 = vmatprep.subr.mxu0 0.0
      %2327 = vmatpush1.msra.mxu0 0.0
      %2328 = vmatprep.subr.mxu0 0.0
      %2329 = vmatpush1.msra.mxu0 0.0
      %2330 = vmatprep.subr.mxu0 0.0
      %2331 = vmatpush1.msra.mxu0 0.0
      %2332 = vmatprep.subr.mxu0 0.0
      %2333 = vmatpush1.msra.mxu0 %v2315
      %2334 = vmatprep.subr.mxu0 0.0
      %2335 = vmatpush1.msra.mxu0 %v2314
      %2336 = vmatprep.subr.mxu0 0.0
      %2337 = vmatpush1.msra.mxu0 %v2313
      %2338 = vmatprep.subr.mxu0 0.0
      %2339 = vmatpush1.msra.mxu0 %v2312
      %2340 = vmatprep.subr.mxu0 0.0
      %2341 = vmatpush1.msra.mxu0 %v2311
      %2342 = vmatprep.subr.mxu0 0.0
      %2343 = vmatpush1.msra.mxu0 %v2310
      %2344 = vmatprep.subr.mxu0 0.0
      %2345 = vmatpush1.msra.mxu0 %v2309
      %2346 = vmatprep.subr.mxu0 0.0
      %2347 = vmatpush1.msra.mxu0 %v2308
      %2348 = vmatprep.subr.mxu0 0.0
      %2349 = vmatpush2.msra.mxu0 0.0
      %2350 = vmatprep.subr.mxu0 0.0
      %2351 = vmatpush2.msra.mxu0 0.0
      %2352 = vmatprep.subr.mxu0 0.0
      %2353 = vmatpush2.msra.mxu0 0.0
      %2354 = vmatprep.subr.mxu0 0.0
      %2355 = vmatpush2.msra.mxu0 0.0
      %2356 = vmatprep.subr.mxu0 0.0
      %2357 = vmatpush2.msra.mxu0 0.0
      %2358 = vmatprep.subr.mxu0 0.0
      %2359 = vmatpush2.msra.mxu0 0.0
      %2360 = vmatprep.subr.mxu0 0.0
      %2361 = vmatpush2.msra.mxu0 0.0
      %2362 = vmatprep.subr.mxu0 0.0
      %2363 = vmatpush2.msra.mxu0 0.0
      %2364 = vmatprep.subr.mxu0 0.0
      %2365 = vmatpush2.msra.mxu0 0.0
      %2366 = vmatprep.subr.mxu0 0.0
      %2367 = vmatpush2.msra.mxu0 0.0
      %2368 = vmatprep.subr.mxu0 0.0
      %2369 = vmatpush2.msra.mxu0 0.0
      %2370 = vmatprep.subr.mxu0 0.0
      %2371 = vmatpush2.msra.mxu0 0.0
      %2372 = vmatprep.subr.mxu0 0.0
      %2373 = vmatpush2.msra.mxu0 0.0
      %2374 = vmatprep.subr.mxu0 0.0
      %2375 = vmatpush2.msra.mxu0 0.0
      %2376 = vmatprep.subr.mxu0 0.0
      %2377 = vmatpush2.msra.mxu0 0.0
      %2378 = vmatprep.subr.mxu0 0.0
      %2379 = vmatpush2.msra.mxu0 0.0
      %2380 = vmatprep.mubr.f32.mxu0 0.0
      %2381 = vmatmul.mubr.f32.gmra.mxu0 %v1602
      %v2382 = vpop.f32.mrf.mxu0
      %v2383 = vadd.f32 0.0, %v2382
      %v2384 = vpop.f32.mrf.mxu0
      %2385 = vmatprep.mubr.f32.mxu0 0.0
      %2386 = vmatmul.mubr.f32.gmra.mxu0 %v1605
      %v2387 = vpop.f32.mrf.mxu0
      %v2388 = vadd.f32 0.0, %v2387
      %v2389 = vpop.f32.mrf.mxu0
      %2390 = vmatprep.mubr.f32.mxu0 0.0
      %2391 = vmatmul.mubr.f32.gmra.mxu0 %v1608
      %v2392 = vpop.f32.mrf.mxu0
      %v2393 = vadd.f32 0.0, %v2392
      %v2394 = vpop.f32.mrf.mxu0
      %2395 = vmatprep.mubr.f32.mxu0 0.0
      %2396 = vmatmul.mubr.f32.gmra.mxu0 %v1611
      %v2397 = vpop.f32.mrf.mxu0
      %v2398 = vadd.f32 0.0, %v2397
      %v2399 = vpop.f32.mrf.mxu0
      %2400 = vdwg.mxu0
      %s2401 = scalar_lea.vmem %s13, 192
      %v2402 = vld [vmem:[%s2401] sm:$0xff]
      %v2403 = vld [vmem:[%s2401 + $0x8] sm:$0xff]
      %v2404 = vld [vmem:[%s2401 + $0x10] sm:$0xff]
      %v2405 = vld [vmem:[%s2401 + $0x18] sm:$0xff]
      %v2406 = vld [vmem:[%s2401 + $0x20] sm:$0xff]
      %v2407 = vld [vmem:[%s2401 + $0x28] sm:$0xff]
      %v2408 = vld [vmem:[%s2401 + $0x30] sm:$0xff]
      %v2409 = vld [vmem:[%s2401 + $0x38] sm:$0xff]
      %v2411 = vsel %vm928, %v2402, 0
      %v2414 = vsel %vm928, %v2403, 0
      %v2417 = vsel %vm928, %v2404, 0
      %v2420 = vsel %vm928, %v2405, 0
      %v2423 = vsel %vm928, %v2406, 0
      %v2426 = vsel %vm928, %v2407, 0
      %v2429 = vsel %vm928, %v2408, 0
      %v2432 = vsel %vm928, %v2409, 0
      %2434 = vmatprep.subr.mxu0 0.0
      %2435 = vmatpush1.msra.mxu0 0.0
      %2436 = vmatprep.subr.mxu0 0.0
      %2437 = vmatpush1.msra.mxu0 0.0
      %2438 = vmatprep.subr.mxu0 0.0
      %2439 = vmatpush1.msra.mxu0 0.0
      %2440 = vmatprep.subr.mxu0 0.0
      %2441 = vmatpush1.msra.mxu0 0.0
      %2442 = vmatprep.subr.mxu0 0.0
      %2443 = vmatpush1.msra.mxu0 0.0
      %2444 = vmatprep.subr.mxu0 0.0
      %2445 = vmatpush1.msra.mxu0 0.0
      %2446 = vmatprep.subr.mxu0 0.0
      %2447 = vmatpush1.msra.mxu0 0.0
      %2448 = vmatprep.subr.mxu0 0.0
      %2449 = vmatpush1.msra.mxu0 0.0
      %2450 = vmatprep.subr.mxu0 0.0
      %2451 = vmatpush1.msra.mxu0 0.0
      %2452 = vmatprep.subr.mxu0 0.0
      %2453 = vmatpush1.msra.mxu0 0.0
      %2454 = vmatprep.subr.mxu0 0.0
      %2455 = vmatpush1.msra.mxu0 0.0
      %2456 = vmatprep.subr.mxu0 0.0
      %2457 = vmatpush1.msra.mxu0 0.0
      %2458 = vmatprep.subr.mxu0 0.0
      %2459 = vmatpush1.msra.mxu0 %v2398
      %2460 = vmatprep.subr.mxu0 0.0
      %2461 = vmatpush1.msra.mxu0 %v2393
      %2462 = vmatprep.subr.mxu0 0.0
      %2463 = vmatpush1.msra.mxu0 %v2388
      %2464 = vmatprep.subr.mxu0 0.0
      %2465 = vmatpush1.msra.mxu0 %v2383
      %2466 = vmatprep.subr.mxu0 0.0
      %2467 = vmatpush2.msra.mxu0 0.0
      %2468 = vmatprep.subr.mxu0 0.0
      %2469 = vmatpush2.msra.mxu0 0.0
      %2470 = vmatprep.subr.mxu0 0.0
      %2471 = vmatpush2.msra.mxu0 0.0
      %2472 = vmatprep.subr.mxu0 0.0
      %2473 = vmatpush2.msra.mxu0 0.0
      %2474 = vmatprep.subr.mxu0 0.0
      %2475 = vmatpush2.msra.mxu0 0.0
      %2476 = vmatprep.subr.mxu0 0.0
      %2477 = vmatpush2.msra.mxu0 0.0
      %2478 = vmatprep.subr.mxu0 0.0
      %2479 = vmatpush2.msra.mxu0 0.0
      %2480 = vmatprep.subr.mxu0 0.0
      %2481 = vmatpush2.msra.mxu0 0.0
      %2482 = vmatprep.subr.mxu0 0.0
      %2483 = vmatpush2.msra.mxu0 0.0
      %2484 = vmatprep.subr.mxu0 0.0
      %2485 = vmatpush2.msra.mxu0 0.0
      %2486 = vmatprep.subr.mxu0 0.0
      %2487 = vmatpush2.msra.mxu0 0.0
      %2488 = vmatprep.subr.mxu0 0.0
      %2489 = vmatpush2.msra.mxu0 0.0
      %2490 = vmatprep.subr.mxu0 0.0
      %2491 = vmatpush2.msra.mxu0 0.0
      %2492 = vmatprep.subr.mxu0 0.0
      %2493 = vmatpush2.msra.mxu0 0.0
      %2494 = vmatprep.subr.mxu0 0.0
      %2495 = vmatpush2.msra.mxu0 0.0
      %2496 = vmatprep.subr.mxu0 0.0
      %2497 = vmatpush2.msra.mxu0 0.0
      %2498 = vmatprep.mubr.f32.mxu0 0.0
      %2499 = vmatmul.mubr.f32.gmra.mxu0 %v2411
      %v2500 = vpop.f32.mrf.mxu0
      %v2501 = vadd.f32 0.0, %v2500
      %v2502 = vpop.f32.mrf.mxu0
      %2503 = vmatprep.mubr.f32.mxu0 0.0
      %2504 = vmatmul.mubr.f32.gmra.mxu0 %v2414
      %v2505 = vpop.f32.mrf.mxu0
      %v2506 = vadd.f32 0.0, %v2505
      %v2507 = vpop.f32.mrf.mxu0
      %2508 = vmatprep.mubr.f32.mxu0 0.0
      %2509 = vmatmul.mubr.f32.gmra.mxu0 %v2417
      %v2510 = vpop.f32.mrf.mxu0
      %v2511 = vadd.f32 0.0, %v2510
      %v2512 = vpop.f32.mrf.mxu0
      %2513 = vmatprep.mubr.f32.mxu0 0.0
      %2514 = vmatmul.mubr.f32.gmra.mxu0 %v2420
      %v2515 = vpop.f32.mrf.mxu0
      %v2516 = vadd.f32 0.0, %v2515
      %v2517 = vpop.f32.mrf.mxu0
      %2518 = vmatprep.mubr.f32.mxu0 0.0
      %2519 = vmatmul.mubr.f32.gmra.mxu0 %v2423
      %v2520 = vpop.f32.mrf.mxu0
      %v2521 = vadd.f32 0.0, %v2520
      %v2522 = vpop.f32.mrf.mxu0
      %2523 = vmatprep.mubr.f32.mxu0 0.0
      %2524 = vmatmul.mubr.f32.gmra.mxu0 %v2426
      %v2525 = vpop.f32.mrf.mxu0
      %v2526 = vadd.f32 0.0, %v2525
      %v2527 = vpop.f32.mrf.mxu0
      %2528 = vmatprep.mubr.f32.mxu0 0.0
      %2529 = vmatmul.mubr.f32.gmra.mxu0 %v2429
      %v2530 = vpop.f32.mrf.mxu0
      %v2531 = vadd.f32 0.0, %v2530
      %v2532 = vpop.f32.mrf.mxu0
      %2533 = vmatprep.mubr.f32.mxu0 0.0
      %2534 = vmatmul.mubr.f32.gmra.mxu0 %v2432
      %v2535 = vpop.f32.mrf.mxu0
      %v2536 = vadd.f32 0.0, %v2535
      %v2537 = vpop.f32.mrf.mxu0
      %2538 = vdwg.mxu0
      %v2539 = vadd.f32 %v2299, %v2501
      %v2540 = vadd.f32 %v2300, %v2506
      %v2541 = vadd.f32 %v2301, %v2511
      %v2542 = vadd.f32 %v2302, %v2516
      %v2543 = vadd.f32 %v2303, %v2521
      %v2544 = vadd.f32 %v2304, %v2526
      %v2545 = vadd.f32 %v2305, %v2531
      %v2546 = vadd.f32 %v2306, %v2536
      %s2547 = scalar_lea.vmem %s12, 256
      %v2548 = vld [vmem:[%s2547] sm:$0xff]
      %v2549 = vld [vmem:[%s2547 + $0x8] sm:$0xff]
      %v2550 = vld [vmem:[%s2547 + $0x10] sm:$0xff]
      %v2551 = vld [vmem:[%s2547 + $0x18] sm:$0xff]
      %v2552 = vld [vmem:[%s2547 + $0x20] sm:$0xff]
      %v2553 = vld [vmem:[%s2547 + $0x28] sm:$0xff]
      %v2554 = vld [vmem:[%s2547 + $0x30] sm:$0xff]
      %v2555 = vld [vmem:[%s2547 + $0x38] sm:$0xff]
      %2556 = vmatprep.subr.mxu0 0.0
      %2557 = vmatpush1.msra.mxu0 0.0
      %2558 = vmatprep.subr.mxu0 0.0
      %2559 = vmatpush1.msra.mxu0 0.0
      %2560 = vmatprep.subr.mxu0 0.0
      %2561 = vmatpush1.msra.mxu0 0.0
      %2562 = vmatprep.subr.mxu0 0.0
      %2563 = vmatpush1.msra.mxu0 0.0
      %2564 = vmatprep.subr.mxu0 0.0
      %2565 = vmatpush1.msra.mxu0 0.0
      %2566 = vmatprep.subr.mxu0 0.0
      %2567 = vmatpush1.msra.mxu0 0.0
      %2568 = vmatprep.subr.mxu0 0.0
      %2569 = vmatpush1.msra.mxu0 0.0
      %2570 = vmatprep.subr.mxu0 0.0
      %2571 = vmatpush1.msra.mxu0 0.0
      %2572 = vmatprep.subr.mxu0 0.0
      %2573 = vmatpush1.msra.mxu0 %v2555
      %2574 = vmatprep.subr.mxu0 0.0
      %2575 = vmatpush1.msra.mxu0 %v2554
      %2576 = vmatprep.subr.mxu0 0.0
      %2577 = vmatpush1.msra.mxu0 %v2553
      %2578 = vmatprep.subr.mxu0 0.0
      %2579 = vmatpush1.msra.mxu0 %v2552
      %2580 = vmatprep.subr.mxu0 0.0
      %2581 = vmatpush1.msra.mxu0 %v2551
      %2582 = vmatprep.subr.mxu0 0.0
      %2583 = vmatpush1.msra.mxu0 %v2550
      %2584 = vmatprep.subr.mxu0 0.0
      %2585 = vmatpush1.msra.mxu0 %v2549
      %2586 = vmatprep.subr.mxu0 0.0
      %2587 = vmatpush1.msra.mxu0 %v2548
      %2588 = vmatprep.subr.mxu0 0.0
      %2589 = vmatpush2.msra.mxu0 0.0
      %2590 = vmatprep.subr.mxu0 0.0
      %2591 = vmatpush2.msra.mxu0 0.0
      %2592 = vmatprep.subr.mxu0 0.0
      %2593 = vmatpush2.msra.mxu0 0.0
      %2594 = vmatprep.subr.mxu0 0.0
      %2595 = vmatpush2.msra.mxu0 0.0
      %2596 = vmatprep.subr.mxu0 0.0
      %2597 = vmatpush2.msra.mxu0 0.0
      %2598 = vmatprep.subr.mxu0 0.0
      %2599 = vmatpush2.msra.mxu0 0.0
      %2600 = vmatprep.subr.mxu0 0.0
      %2601 = vmatpush2.msra.mxu0 0.0
      %2602 = vmatprep.subr.mxu0 0.0
      %2603 = vmatpush2.msra.mxu0 0.0
      %2604 = vmatprep.subr.mxu0 0.0
      %2605 = vmatpush2.msra.mxu0 0.0
      %2606 = vmatprep.subr.mxu0 0.0
      %2607 = vmatpush2.msra.mxu0 0.0
      %2608 = vmatprep.subr.mxu0 0.0
      %2609 = vmatpush2.msra.mxu0 0.0
      %2610 = vmatprep.subr.mxu0 0.0
      %2611 = vmatpush2.msra.mxu0 0.0
      %2612 = vmatprep.subr.mxu0 0.0
      %2613 = vmatpush2.msra.mxu0 0.0
      %2614 = vmatprep.subr.mxu0 0.0
      %2615 = vmatpush2.msra.mxu0 0.0
      %2616 = vmatprep.subr.mxu0 0.0
      %2617 = vmatpush2.msra.mxu0 0.0
      %2618 = vmatprep.subr.mxu0 0.0
      %2619 = vmatpush2.msra.mxu0 0.0
      %2620 = vmatprep.mubr.f32.mxu0 0.0
      %2621 = vmatmul.mubr.f32.gmra.mxu0 %v1602
      %v2622 = vpop.f32.mrf.mxu0
      %v2623 = vadd.f32 0.0, %v2622
      %v2624 = vpop.f32.mrf.mxu0
      %2625 = vmatprep.mubr.f32.mxu0 0.0
      %2626 = vmatmul.mubr.f32.gmra.mxu0 %v1605
      %v2627 = vpop.f32.mrf.mxu0
      %v2628 = vadd.f32 0.0, %v2627
      %v2629 = vpop.f32.mrf.mxu0
      %2630 = vmatprep.mubr.f32.mxu0 0.0
      %2631 = vmatmul.mubr.f32.gmra.mxu0 %v1608
      %v2632 = vpop.f32.mrf.mxu0
      %v2633 = vadd.f32 0.0, %v2632
      %v2634 = vpop.f32.mrf.mxu0
      %2635 = vmatprep.mubr.f32.mxu0 0.0
      %2636 = vmatmul.mubr.f32.gmra.mxu0 %v1611
      %v2637 = vpop.f32.mrf.mxu0
      %v2638 = vadd.f32 0.0, %v2637
      %v2639 = vpop.f32.mrf.mxu0
      %2640 = vdwg.mxu0
      %s2641 = scalar_lea.vmem %s13, 256
      %v2642 = vld [vmem:[%s2641] sm:$0xff]
      %v2643 = vld [vmem:[%s2641 + $0x8] sm:$0xff]
      %v2644 = vld [vmem:[%s2641 + $0x10] sm:$0xff]
      %v2645 = vld [vmem:[%s2641 + $0x18] sm:$0xff]
      %v2646 = vld [vmem:[%s2641 + $0x20] sm:$0xff]
      %v2647 = vld [vmem:[%s2641 + $0x28] sm:$0xff]
      %v2648 = vld [vmem:[%s2641 + $0x30] sm:$0xff]
      %v2649 = vld [vmem:[%s2641 + $0x38] sm:$0xff]
      %v2651 = vsel %vm928, %v2642, 0
      %v2654 = vsel %vm928, %v2643, 0
      %v2657 = vsel %vm928, %v2644, 0
      %v2660 = vsel %vm928, %v2645, 0
      %v2663 = vsel %vm928, %v2646, 0
      %v2666 = vsel %vm928, %v2647, 0
      %v2669 = vsel %vm928, %v2648, 0
      %v2672 = vsel %vm928, %v2649, 0
      %2674 = vmatprep.subr.mxu0 0.0
      %2675 = vmatpush1.msra.mxu0 0.0
      %2676 = vmatprep.subr.mxu0 0.0
      %2677 = vmatpush1.msra.mxu0 0.0
      %2678 = vmatprep.subr.mxu0 0.0
      %2679 = vmatpush1.msra.mxu0 0.0
      %2680 = vmatprep.subr.mxu0 0.0
      %2681 = vmatpush1.msra.mxu0 0.0
      %2682 = vmatprep.subr.mxu0 0.0
      %2683 = vmatpush1.msra.mxu0 0.0
      %2684 = vmatprep.subr.mxu0 0.0
      %2685 = vmatpush1.msra.mxu0 0.0
      %2686 = vmatprep.subr.mxu0 0.0
      %2687 = vmatpush1.msra.mxu0 0.0
      %2688 = vmatprep.subr.mxu0 0.0
      %2689 = vmatpush1.msra.mxu0 0.0
      %2690 = vmatprep.subr.mxu0 0.0
      %2691 = vmatpush1.msra.mxu0 0.0
      %2692 = vmatprep.subr.mxu0 0.0
      %2693 = vmatpush1.msra.mxu0 0.0
      %2694 = vmatprep.subr.mxu0 0.0
      %2695 = vmatpush1.msra.mxu0 0.0
      %2696 = vmatprep.subr.mxu0 0.0
      %2697 = vmatpush1.msra.mxu0 0.0
      %2698 = vmatprep.subr.mxu0 0.0
      %2699 = vmatpush1.msra.mxu0 %v2638
      %2700 = vmatprep.subr.mxu0 0.0
      %2701 = vmatpush1.msra.mxu0 %v2633
      %2702 = vmatprep.subr.mxu0 0.0
      %2703 = vmatpush1.msra.mxu0 %v2628
      %2704 = vmatprep.subr.mxu0 0.0
      %2705 = vmatpush1.msra.mxu0 %v2623
      %2706 = vmatprep.subr.mxu0 0.0
      %2707 = vmatpush2.msra.mxu0 0.0
      %2708 = vmatprep.subr.mxu0 0.0
      %2709 = vmatpush2.msra.mxu0 0.0
      %2710 = vmatprep.subr.mxu0 0.0
      %2711 = vmatpush2.msra.mxu0 0.0
      %2712 = vmatprep.subr.mxu0 0.0
      %2713 = vmatpush2.msra.mxu0 0.0
      %2714 = vmatprep.subr.mxu0 0.0
      %2715 = vmatpush2.msra.mxu0 0.0
      %2716 = vmatprep.subr.mxu0 0.0
      %2717 = vmatpush2.msra.mxu0 0.0
      %2718 = vmatprep.subr.mxu0 0.0
      %2719 = vmatpush2.msra.mxu0 0.0
      %2720 = vmatprep.subr.mxu0 0.0
      %2721 = vmatpush2.msra.mxu0 0.0
      %2722 = vmatprep.subr.mxu0 0.0
      %2723 = vmatpush2.msra.mxu0 0.0
      %2724 = vmatprep.subr.mxu0 0.0
      %2725 = vmatpush2.msra.mxu0 0.0
      %2726 = vmatprep.subr.mxu0 0.0
      %2727 = vmatpush2.msra.mxu0 0.0
      %2728 = vmatprep.subr.mxu0 0.0
      %2729 = vmatpush2.msra.mxu0 0.0
      %2730 = vmatprep.subr.mxu0 0.0
      %2731 = vmatpush2.msra.mxu0 0.0
      %2732 = vmatprep.subr.mxu0 0.0
      %2733 = vmatpush2.msra.mxu0 0.0
      %2734 = vmatprep.subr.mxu0 0.0
      %2735 = vmatpush2.msra.mxu0 0.0
      %2736 = vmatprep.subr.mxu0 0.0
      %2737 = vmatpush2.msra.mxu0 0.0
      %2738 = vmatprep.mubr.f32.mxu0 0.0
      %2739 = vmatmul.mubr.f32.gmra.mxu0 %v2651
      %v2740 = vpop.f32.mrf.mxu0
      %v2741 = vadd.f32 0.0, %v2740
      %v2742 = vpop.f32.mrf.mxu0
      %2743 = vmatprep.mubr.f32.mxu0 0.0
      %2744 = vmatmul.mubr.f32.gmra.mxu0 %v2654
      %v2745 = vpop.f32.mrf.mxu0
      %v2746 = vadd.f32 0.0, %v2745
      %v2747 = vpop.f32.mrf.mxu0
      %2748 = vmatprep.mubr.f32.mxu0 0.0
      %2749 = vmatmul.mubr.f32.gmra.mxu0 %v2657
      %v2750 = vpop.f32.mrf.mxu0
      %v2751 = vadd.f32 0.0, %v2750
      %v2752 = vpop.f32.mrf.mxu0
      %2753 = vmatprep.mubr.f32.mxu0 0.0
      %2754 = vmatmul.mubr.f32.gmra.mxu0 %v2660
      %v2755 = vpop.f32.mrf.mxu0
      %v2756 = vadd.f32 0.0, %v2755
      %v2757 = vpop.f32.mrf.mxu0
      %2758 = vmatprep.mubr.f32.mxu0 0.0
      %2759 = vmatmul.mubr.f32.gmra.mxu0 %v2663
      %v2760 = vpop.f32.mrf.mxu0
      %v2761 = vadd.f32 0.0, %v2760
      %v2762 = vpop.f32.mrf.mxu0
      %2763 = vmatprep.mubr.f32.mxu0 0.0
      %2764 = vmatmul.mubr.f32.gmra.mxu0 %v2666
      %v2765 = vpop.f32.mrf.mxu0
      %v2766 = vadd.f32 0.0, %v2765
      %v2767 = vpop.f32.mrf.mxu0
      %2768 = vmatprep.mubr.f32.mxu0 0.0
      %2769 = vmatmul.mubr.f32.gmra.mxu0 %v2669
      %v2770 = vpop.f32.mrf.mxu0
      %v2771 = vadd.f32 0.0, %v2770
      %v2772 = vpop.f32.mrf.mxu0
      %2773 = vmatprep.mubr.f32.mxu0 0.0
      %2774 = vmatmul.mubr.f32.gmra.mxu0 %v2672
      %v2775 = vpop.f32.mrf.mxu0
      %v2776 = vadd.f32 0.0, %v2775
      %v2777 = vpop.f32.mrf.mxu0
      %2778 = vdwg.mxu0
      %v2779 = vadd.f32 %v2539, %v2741
      %v2780 = vadd.f32 %v2540, %v2746
      %v2781 = vadd.f32 %v2541, %v2751
      %v2782 = vadd.f32 %v2542, %v2756
      %v2783 = vadd.f32 %v2543, %v2761
      %v2784 = vadd.f32 %v2544, %v2766
      %v2785 = vadd.f32 %v2545, %v2771
      %v2786 = vadd.f32 %v2546, %v2776
      %s2787 = scalar_lea.vmem %s12, 320
      %v2788 = vld [vmem:[%s2787] sm:$0xff]
      %v2789 = vld [vmem:[%s2787 + $0x8] sm:$0xff]
      %v2790 = vld [vmem:[%s2787 + $0x10] sm:$0xff]
      %v2791 = vld [vmem:[%s2787 + $0x18] sm:$0xff]
      %v2792 = vld [vmem:[%s2787 + $0x20] sm:$0xff]
      %v2793 = vld [vmem:[%s2787 + $0x28] sm:$0xff]
      %v2794 = vld [vmem:[%s2787 + $0x30] sm:$0xff]
      %v2795 = vld [vmem:[%s2787 + $0x38] sm:$0xff]
      %2796 = vmatprep.subr.mxu0 0.0
      %2797 = vmatpush1.msra.mxu0 0.0
      %2798 = vmatprep.subr.mxu0 0.0
      %2799 = vmatpush1.msra.mxu0 0.0
      %2800 = vmatprep.subr.mxu0 0.0
      %2801 = vmatpush1.msra.mxu0 0.0
      %2802 = vmatprep.subr.mxu0 0.0
      %2803 = vmatpush1.msra.mxu0 0.0
      %2804 = vmatprep.subr.mxu0 0.0
      %2805 = vmatpush1.msra.mxu0 0.0
      %2806 = vmatprep.subr.mxu0 0.0
      %2807 = vmatpush1.msra.mxu0 0.0
      %2808 = vmatprep.subr.mxu0 0.0
      %2809 = vmatpush1.msra.mxu0 0.0
      %2810 = vmatprep.subr.mxu0 0.0
      %2811 = vmatpush1.msra.mxu0 0.0
      %2812 = vmatprep.subr.mxu0 0.0
      %2813 = vmatpush1.msra.mxu0 %v2795
      %2814 = vmatprep.subr.mxu0 0.0
      %2815 = vmatpush1.msra.mxu0 %v2794
      %2816 = vmatprep.subr.mxu0 0.0
      %2817 = vmatpush1.msra.mxu0 %v2793
      %2818 = vmatprep.subr.mxu0 0.0
      %2819 = vmatpush1.msra.mxu0 %v2792
      %2820 = vmatprep.subr.mxu0 0.0
      %2821 = vmatpush1.msra.mxu0 %v2791
      %2822 = vmatprep.subr.mxu0 0.0
      %2823 = vmatpush1.msra.mxu0 %v2790
      %2824 = vmatprep.subr.mxu0 0.0
      %2825 = vmatpush1.msra.mxu0 %v2789
      %2826 = vmatprep.subr.mxu0 0.0
      %2827 = vmatpush1.msra.mxu0 %v2788
      %2828 = vmatprep.subr.mxu0 0.0
      %2829 = vmatpush2.msra.mxu0 0.0
      %2830 = vmatprep.subr.mxu0 0.0
      %2831 = vmatpush2.msra.mxu0 0.0
      %2832 = vmatprep.subr.mxu0 0.0
      %2833 = vmatpush2.msra.mxu0 0.0
      %2834 = vmatprep.subr.mxu0 0.0
      %2835 = vmatpush2.msra.mxu0 0.0
      %2836 = vmatprep.subr.mxu0 0.0
      %2837 = vmatpush2.msra.mxu0 0.0
      %2838 = vmatprep.subr.mxu0 0.0
      %2839 = vmatpush2.msra.mxu0 0.0
      %2840 = vmatprep.subr.mxu0 0.0
      %2841 = vmatpush2.msra.mxu0 0.0
      %2842 = vmatprep.subr.mxu0 0.0
      %2843 = vmatpush2.msra.mxu0 0.0
      %2844 = vmatprep.subr.mxu0 0.0
      %2845 = vmatpush2.msra.mxu0 0.0
      %2846 = vmatprep.subr.mxu0 0.0
      %2847 = vmatpush2.msra.mxu0 0.0
      %2848 = vmatprep.subr.mxu0 0.0
      %2849 = vmatpush2.msra.mxu0 0.0
      %2850 = vmatprep.subr.mxu0 0.0
      %2851 = vmatpush2.msra.mxu0 0.0
      %2852 = vmatprep.subr.mxu0 0.0
      %2853 = vmatpush2.msra.mxu0 0.0
      %2854 = vmatprep.subr.mxu0 0.0
      %2855 = vmatpush2.msra.mxu0 0.0
      %2856 = vmatprep.subr.mxu0 0.0
      %2857 = vmatpush2.msra.mxu0 0.0
      %2858 = vmatprep.subr.mxu0 0.0
      %2859 = vmatpush2.msra.mxu0 0.0
      %2860 = vmatprep.mubr.f32.mxu0 0.0
      %2861 = vmatmul.mubr.f32.gmra.mxu0 %v1602
      %v2862 = vpop.f32.mrf.mxu0
      %v2863 = vadd.f32 0.0, %v2862
      %v2864 = vpop.f32.mrf.mxu0
      %2865 = vmatprep.mubr.f32.mxu0 0.0
      %2866 = vmatmul.mubr.f32.gmra.mxu0 %v1605
      %v2867 = vpop.f32.mrf.mxu0
      %v2868 = vadd.f32 0.0, %v2867
      %v2869 = vpop.f32.mrf.mxu0
      %2870 = vmatprep.mubr.f32.mxu0 0.0
      %2871 = vmatmul.mubr.f32.gmra.mxu0 %v1608
      %v2872 = vpop.f32.mrf.mxu0
      %v2873 = vadd.f32 0.0, %v2872
      %v2874 = vpop.f32.mrf.mxu0
      %2875 = vmatprep.mubr.f32.mxu0 0.0
      %2876 = vmatmul.mubr.f32.gmra.mxu0 %v1611
      %v2877 = vpop.f32.mrf.mxu0
      %v2878 = vadd.f32 0.0, %v2877
      %v2879 = vpop.f32.mrf.mxu0
      %2880 = vdwg.mxu0
      %s2881 = scalar_lea.vmem %s13, 320
      %v2882 = vld [vmem:[%s2881] sm:$0xff]
      %v2883 = vld [vmem:[%s2881 + $0x8] sm:$0xff]
      %v2884 = vld [vmem:[%s2881 + $0x10] sm:$0xff]
      %v2885 = vld [vmem:[%s2881 + $0x18] sm:$0xff]
      %v2886 = vld [vmem:[%s2881 + $0x20] sm:$0xff]
      %v2887 = vld [vmem:[%s2881 + $0x28] sm:$0xff]
      %v2888 = vld [vmem:[%s2881 + $0x30] sm:$0xff]
      %v2889 = vld [vmem:[%s2881 + $0x38] sm:$0xff]
      %v2891 = vsel %vm928, %v2882, 0
      %v2894 = vsel %vm928, %v2883, 0
      %v2897 = vsel %vm928, %v2884, 0
      %v2900 = vsel %vm928, %v2885, 0
      %v2903 = vsel %vm928, %v2886, 0
      %v2906 = vsel %vm928, %v2887, 0
      %v2909 = vsel %vm928, %v2888, 0
      %v2912 = vsel %vm928, %v2889, 0
      %2914 = vmatprep.subr.mxu0 0.0
      %2915 = vmatpush1.msra.mxu0 0.0
      %2916 = vmatprep.subr.mxu0 0.0
      %2917 = vmatpush1.msra.mxu0 0.0
      %2918 = vmatprep.subr.mxu0 0.0
      %2919 = vmatpush1.msra.mxu0 0.0
      %2920 = vmatprep.subr.mxu0 0.0
      %2921 = vmatpush1.msra.mxu0 0.0
      %2922 = vmatprep.subr.mxu0 0.0
      %2923 = vmatpush1.msra.mxu0 0.0
      %2924 = vmatprep.subr.mxu0 0.0
      %2925 = vmatpush1.msra.mxu0 0.0
      %2926 = vmatprep.subr.mxu0 0.0
      %2927 = vmatpush1.msra.mxu0 0.0
      %2928 = vmatprep.subr.mxu0 0.0
      %2929 = vmatpush1.msra.mxu0 0.0
      %2930 = vmatprep.subr.mxu0 0.0
      %2931 = vmatpush1.msra.mxu0 0.0
      %2932 = vmatprep.subr.mxu0 0.0
      %2933 = vmatpush1.msra.mxu0 0.0
      %2934 = vmatprep.subr.mxu0 0.0
      %2935 = vmatpush1.msra.mxu0 0.0
      %2936 = vmatprep.subr.mxu0 0.0
      %2937 = vmatpush1.msra.mxu0 0.0
      %2938 = vmatprep.subr.mxu0 0.0
      %2939 = vmatpush1.msra.mxu0 %v2878
      %2940 = vmatprep.subr.mxu0 0.0
      %2941 = vmatpush1.msra.mxu0 %v2873
      %2942 = vmatprep.subr.mxu0 0.0
      %2943 = vmatpush1.msra.mxu0 %v2868
      %2944 = vmatprep.subr.mxu0 0.0
      %2945 = vmatpush1.msra.mxu0 %v2863
      %2946 = vmatprep.subr.mxu0 0.0
      %2947 = vmatpush2.msra.mxu0 0.0
      %2948 = vmatprep.subr.mxu0 0.0
      %2949 = vmatpush2.msra.mxu0 0.0
      %2950 = vmatprep.subr.mxu0 0.0
      %2951 = vmatpush2.msra.mxu0 0.0
      %2952 = vmatprep.subr.mxu0 0.0
      %2953 = vmatpush2.msra.mxu0 0.0
      %2954 = vmatprep.subr.mxu0 0.0
      %2955 = vmatpush2.msra.mxu0 0.0
      %2956 = vmatprep.subr.mxu0 0.0
      %2957 = vmatpush2.msra.mxu0 0.0
      %2958 = vmatprep.subr.mxu0 0.0
      %2959 = vmatpush2.msra.mxu0 0.0
      %2960 = vmatprep.subr.mxu0 0.0
      %2961 = vmatpush2.msra.mxu0 0.0
      %2962 = vmatprep.subr.mxu0 0.0
      %2963 = vmatpush2.msra.mxu0 0.0
      %2964 = vmatprep.subr.mxu0 0.0
      %2965 = vmatpush2.msra.mxu0 0.0
      %2966 = vmatprep.subr.mxu0 0.0
      %2967 = vmatpush2.msra.mxu0 0.0
      %2968 = vmatprep.subr.mxu0 0.0
      %2969 = vmatpush2.msra.mxu0 0.0
      %2970 = vmatprep.subr.mxu0 0.0
      %2971 = vmatpush2.msra.mxu0 0.0
      %2972 = vmatprep.subr.mxu0 0.0
      %2973 = vmatpush2.msra.mxu0 0.0
      %2974 = vmatprep.subr.mxu0 0.0
      %2975 = vmatpush2.msra.mxu0 0.0
      %2976 = vmatprep.subr.mxu0 0.0
      %2977 = vmatpush2.msra.mxu0 0.0
      %2978 = vmatprep.mubr.f32.mxu0 0.0
      %2979 = vmatmul.mubr.f32.gmra.mxu0 %v2891
      %v2980 = vpop.f32.mrf.mxu0
      %v2981 = vadd.f32 0.0, %v2980
      %v2982 = vpop.f32.mrf.mxu0
      %2983 = vmatprep.mubr.f32.mxu0 0.0
      %2984 = vmatmul.mubr.f32.gmra.mxu0 %v2894
      %v2985 = vpop.f32.mrf.mxu0
      %v2986 = vadd.f32 0.0, %v2985
      %v2987 = vpop.f32.mrf.mxu0
      %2988 = vmatprep.mubr.f32.mxu0 0.0
      %2989 = vmatmul.mubr.f32.gmra.mxu0 %v2897
      %v2990 = vpop.f32.mrf.mxu0
      %v2991 = vadd.f32 0.0, %v2990
      %v2992 = vpop.f32.mrf.mxu0
      %2993 = vmatprep.mubr.f32.mxu0 0.0
      %2994 = vmatmul.mubr.f32.gmra.mxu0 %v2900
      %v2995 = vpop.f32.mrf.mxu0
      %v2996 = vadd.f32 0.0, %v2995
      %v2997 = vpop.f32.mrf.mxu0
      %2998 = vmatprep.mubr.f32.mxu0 0.0
      %2999 = vmatmul.mubr.f32.gmra.mxu0 %v2903
      %v3000 = vpop.f32.mrf.mxu0
      %v3001 = vadd.f32 0.0, %v3000
      %v3002 = vpop.f32.mrf.mxu0
      %3003 = vmatprep.mubr.f32.mxu0 0.0
      %3004 = vmatmul.mubr.f32.gmra.mxu0 %v2906
      %v3005 = vpop.f32.mrf.mxu0
      %v3006 = vadd.f32 0.0, %v3005
      %v3007 = vpop.f32.mrf.mxu0
      %3008 = vmatprep.mubr.f32.mxu0 0.0
      %3009 = vmatmul.mubr.f32.gmra.mxu0 %v2909
      %v3010 = vpop.f32.mrf.mxu0
      %v3011 = vadd.f32 0.0, %v3010
      %v3012 = vpop.f32.mrf.mxu0
      %3013 = vmatprep.mubr.f32.mxu0 0.0
      %3014 = vmatmul.mubr.f32.gmra.mxu0 %v2912
      %v3015 = vpop.f32.mrf.mxu0
      %v3016 = vadd.f32 0.0, %v3015
      %v3017 = vpop.f32.mrf.mxu0
      %3018 = vdwg.mxu0
      %v3019 = vadd.f32 %v2779, %v2981
      %v3020 = vadd.f32 %v2780, %v2986
      %v3021 = vadd.f32 %v2781, %v2991
      %v3022 = vadd.f32 %v2782, %v2996
      %v3023 = vadd.f32 %v2783, %v3001
      %v3024 = vadd.f32 %v2784, %v3006
      %v3025 = vadd.f32 %v2785, %v3011
      %v3026 = vadd.f32 %v2786, %v3016
      %s3027 = scalar_lea.vmem %s12, 384
      %v3028 = vld [vmem:[%s3027] sm:$0xff]
      %v3029 = vld [vmem:[%s3027 + $0x8] sm:$0xff]
      %v3030 = vld [vmem:[%s3027 + $0x10] sm:$0xff]
      %v3031 = vld [vmem:[%s3027 + $0x18] sm:$0xff]
      %v3032 = vld [vmem:[%s3027 + $0x20] sm:$0xff]
      %v3033 = vld [vmem:[%s3027 + $0x28] sm:$0xff]
      %v3034 = vld [vmem:[%s3027 + $0x30] sm:$0xff]
      %v3035 = vld [vmem:[%s3027 + $0x38] sm:$0xff]
      %3036 = vmatprep.subr.mxu0 0.0
      %3037 = vmatpush1.msra.mxu0 0.0
      %3038 = vmatprep.subr.mxu0 0.0
      %3039 = vmatpush1.msra.mxu0 0.0
      %3040 = vmatprep.subr.mxu0 0.0
      %3041 = vmatpush1.msra.mxu0 0.0
      %3042 = vmatprep.subr.mxu0 0.0
      %3043 = vmatpush1.msra.mxu0 0.0
      %3044 = vmatprep.subr.mxu0 0.0
      %3045 = vmatpush1.msra.mxu0 0.0
      %3046 = vmatprep.subr.mxu0 0.0
      %3047 = vmatpush1.msra.mxu0 0.0
      %3048 = vmatprep.subr.mxu0 0.0
      %3049 = vmatpush1.msra.mxu0 0.0
      %3050 = vmatprep.subr.mxu0 0.0
      %3051 = vmatpush1.msra.mxu0 0.0
      %3052 = vmatprep.subr.mxu0 0.0
      %3053 = vmatpush1.msra.mxu0 %v3035
      %3054 = vmatprep.subr.mxu0 0.0
      %3055 = vmatpush1.msra.mxu0 %v3034
      %3056 = vmatprep.subr.mxu0 0.0
      %3057 = vmatpush1.msra.mxu0 %v3033
      %3058 = vmatprep.subr.mxu0 0.0
      %3059 = vmatpush1.msra.mxu0 %v3032
      %3060 = vmatprep.subr.mxu0 0.0
      %3061 = vmatpush1.msra.mxu0 %v3031
      %3062 = vmatprep.subr.mxu0 0.0
      %3063 = vmatpush1.msra.mxu0 %v3030
      %3064 = vmatprep.subr.mxu0 0.0
      %3065 = vmatpush1.msra.mxu0 %v3029
      %3066 = vmatprep.subr.mxu0 0.0
      %3067 = vmatpush1.msra.mxu0 %v3028
      %3068 = vmatprep.subr.mxu0 0.0
      %3069 = vmatpush2.msra.mxu0 0.0
      %3070 = vmatprep.subr.mxu0 0.0
      %3071 = vmatpush2.msra.mxu0 0.0
      %3072 = vmatprep.subr.mxu0 0.0
      %3073 = vmatpush2.msra.mxu0 0.0
      %3074 = vmatprep.subr.mxu0 0.0
      %3075 = vmatpush2.msra.mxu0 0.0
      %3076 = vmatprep.subr.mxu0 0.0
      %3077 = vmatpush2.msra.mxu0 0.0
      %3078 = vmatprep.subr.mxu0 0.0
      %3079 = vmatpush2.msra.mxu0 0.0
      %3080 = vmatprep.subr.mxu0 0.0
      %3081 = vmatpush2.msra.mxu0 0.0
      %3082 = vmatprep.subr.mxu0 0.0
      %3083 = vmatpush2.msra.mxu0 0.0
      %3084 = vmatprep.subr.mxu0 0.0
      %3085 = vmatpush2.msra.mxu0 0.0
      %3086 = vmatprep.subr.mxu0 0.0
      %3087 = vmatpush2.msra.mxu0 0.0
      %3088 = vmatprep.subr.mxu0 0.0
      %3089 = vmatpush2.msra.mxu0 0.0
      %3090 = vmatprep.subr.mxu0 0.0
      %3091 = vmatpush2.msra.mxu0 0.0
      %3092 = vmatprep.subr.mxu0 0.0
      %3093 = vmatpush2.msra.mxu0 0.0
      %3094 = vmatprep.subr.mxu0 0.0
      %3095 = vmatpush2.msra.mxu0 0.0
      %3096 = vmatprep.subr.mxu0 0.0
      %3097 = vmatpush2.msra.mxu0 0.0
      %3098 = vmatprep.subr.mxu0 0.0
      %3099 = vmatpush2.msra.mxu0 0.0
      %3100 = vmatprep.mubr.f32.mxu0 0.0
      %3101 = vmatmul.mubr.f32.gmra.mxu0 %v1602
      %v3102 = vpop.f32.mrf.mxu0
      %v3103 = vadd.f32 0.0, %v3102
      %v3104 = vpop.f32.mrf.mxu0
      %3105 = vmatprep.mubr.f32.mxu0 0.0
      %3106 = vmatmul.mubr.f32.gmra.mxu0 %v1605
      %v3107 = vpop.f32.mrf.mxu0
      %v3108 = vadd.f32 0.0, %v3107
      %v3109 = vpop.f32.mrf.mxu0
      %3110 = vmatprep.mubr.f32.mxu0 0.0
      %3111 = vmatmul.mubr.f32.gmra.mxu0 %v1608
      %v3112 = vpop.f32.mrf.mxu0
      %v3113 = vadd.f32 0.0, %v3112
      %v3114 = vpop.f32.mrf.mxu0
      %3115 = vmatprep.mubr.f32.mxu0 0.0
      %3116 = vmatmul.mubr.f32.gmra.mxu0 %v1611
      %v3117 = vpop.f32.mrf.mxu0
      %v3118 = vadd.f32 0.0, %v3117
      %v3119 = vpop.f32.mrf.mxu0
      %3120 = vdwg.mxu0
      %s3121 = scalar_lea.vmem %s13, 384
      %v3122 = vld [vmem:[%s3121] sm:$0xff]
      %v3123 = vld [vmem:[%s3121 + $0x8] sm:$0xff]
      %v3124 = vld [vmem:[%s3121 + $0x10] sm:$0xff]
      %v3125 = vld [vmem:[%s3121 + $0x18] sm:$0xff]
      %v3126 = vld [vmem:[%s3121 + $0x20] sm:$0xff]
      %v3127 = vld [vmem:[%s3121 + $0x28] sm:$0xff]
      %v3128 = vld [vmem:[%s3121 + $0x30] sm:$0xff]
      %v3129 = vld [vmem:[%s3121 + $0x38] sm:$0xff]
      %v3131 = vsel %vm928, %v3122, 0
      %v3134 = vsel %vm928, %v3123, 0
      %v3137 = vsel %vm928, %v3124, 0
      %v3140 = vsel %vm928, %v3125, 0
      %v3143 = vsel %vm928, %v3126, 0
      %v3146 = vsel %vm928, %v3127, 0
      %v3149 = vsel %vm928, %v3128, 0
      %v3152 = vsel %vm928, %v3129, 0
      %3154 = vmatprep.subr.mxu0 0.0
      %3155 = vmatpush1.msra.mxu0 0.0
      %3156 = vmatprep.subr.mxu0 0.0
      %3157 = vmatpush1.msra.mxu0 0.0
      %3158 = vmatprep.subr.mxu0 0.0
      %3159 = vmatpush1.msra.mxu0 0.0
      %3160 = vmatprep.subr.mxu0 0.0
      %3161 = vmatpush1.msra.mxu0 0.0
      %3162 = vmatprep.subr.mxu0 0.0
      %3163 = vmatpush1.msra.mxu0 0.0
      %3164 = vmatprep.subr.mxu0 0.0
      %3165 = vmatpush1.msra.mxu0 0.0
      %3166 = vmatprep.subr.mxu0 0.0
      %3167 = vmatpush1.msra.mxu0 0.0
      %3168 = vmatprep.subr.mxu0 0.0
      %3169 = vmatpush1.msra.mxu0 0.0
      %3170 = vmatprep.subr.mxu0 0.0
      %3171 = vmatpush1.msra.mxu0 0.0
      %3172 = vmatprep.subr.mxu0 0.0
      %3173 = vmatpush1.msra.mxu0 0.0
      %3174 = vmatprep.subr.mxu0 0.0
      %3175 = vmatpush1.msra.mxu0 0.0
      %3176 = vmatprep.subr.mxu0 0.0
      %3177 = vmatpush1.msra.mxu0 0.0
      %3178 = vmatprep.subr.mxu0 0.0
      %3179 = vmatpush1.msra.mxu0 %v3118
      %3180 = vmatprep.subr.mxu0 0.0
      %3181 = vmatpush1.msra.mxu0 %v3113
      %3182 = vmatprep.subr.mxu0 0.0
      %3183 = vmatpush1.msra.mxu0 %v3108
      %3184 = vmatprep.subr.mxu0 0.0
      %3185 = vmatpush1.msra.mxu0 %v3103
      %3186 = vmatprep.subr.mxu0 0.0
      %3187 = vmatpush2.msra.mxu0 0.0
      %3188 = vmatprep.subr.mxu0 0.0
      %3189 = vmatpush2.msra.mxu0 0.0
      %3190 = vmatprep.subr.mxu0 0.0
      %3191 = vmatpush2.msra.mxu0 0.0
      %3192 = vmatprep.subr.mxu0 0.0
      %3193 = vmatpush2.msra.mxu0 0.0
      %3194 = vmatprep.subr.mxu0 0.0
      %3195 = vmatpush2.msra.mxu0 0.0
      %3196 = vmatprep.subr.mxu0 0.0
      %3197 = vmatpush2.msra.mxu0 0.0
      %3198 = vmatprep.subr.mxu0 0.0
      %3199 = vmatpush2.msra.mxu0 0.0
      %3200 = vmatprep.subr.mxu0 0.0
      %3201 = vmatpush2.msra.mxu0 0.0
      %3202 = vmatprep.subr.mxu0 0.0
      %3203 = vmatpush2.msra.mxu0 0.0
      %3204 = vmatprep.subr.mxu0 0.0
      %3205 = vmatpush2.msra.mxu0 0.0
      %3206 = vmatprep.subr.mxu0 0.0
      %3207 = vmatpush2.msra.mxu0 0.0
      %3208 = vmatprep.subr.mxu0 0.0
      %3209 = vmatpush2.msra.mxu0 0.0
      %3210 = vmatprep.subr.mxu0 0.0
      %3211 = vmatpush2.msra.mxu0 0.0
      %3212 = vmatprep.subr.mxu0 0.0
      %3213 = vmatpush2.msra.mxu0 0.0
      %3214 = vmatprep.subr.mxu0 0.0
      %3215 = vmatpush2.msra.mxu0 0.0
      %3216 = vmatprep.subr.mxu0 0.0
      %3217 = vmatpush2.msra.mxu0 0.0
      %3218 = vmatprep.mubr.f32.mxu0 0.0
      %3219 = vmatmul.mubr.f32.gmra.mxu0 %v3131
      %v3220 = vpop.f32.mrf.mxu0
      %v3221 = vadd.f32 0.0, %v3220
      %v3222 = vpop.f32.mrf.mxu0
      %3223 = vmatprep.mubr.f32.mxu0 0.0
      %3224 = vmatmul.mubr.f32.gmra.mxu0 %v3134
      %v3225 = vpop.f32.mrf.mxu0
      %v3226 = vadd.f32 0.0, %v3225
      %v3227 = vpop.f32.mrf.mxu0
      %3228 = vmatprep.mubr.f32.mxu0 0.0
      %3229 = vmatmul.mubr.f32.gmra.mxu0 %v3137
      %v3230 = vpop.f32.mrf.mxu0
      %v3231 = vadd.f32 0.0, %v3230
      %v3232 = vpop.f32.mrf.mxu0
      %3233 = vmatprep.mubr.f32.mxu0 0.0
      %3234 = vmatmul.mubr.f32.gmra.mxu0 %v3140
      %v3235 = vpop.f32.mrf.mxu0
      %v3236 = vadd.f32 0.0, %v3235
      %v3237 = vpop.f32.mrf.mxu0
      %3238 = vmatprep.mubr.f32.mxu0 0.0
      %3239 = vmatmul.mubr.f32.gmra.mxu0 %v3143
      %v3240 = vpop.f32.mrf.mxu0
      %v3241 = vadd.f32 0.0, %v3240
      %v3242 = vpop.f32.mrf.mxu0
      %3243 = vmatprep.mubr.f32.mxu0 0.0
      %3244 = vmatmul.mubr.f32.gmra.mxu0 %v3146
      %v3245 = vpop.f32.mrf.mxu0
      %v3246 = vadd.f32 0.0, %v3245
      %v3247 = vpop.f32.mrf.mxu0
      %3248 = vmatprep.mubr.f32.mxu0 0.0
      %3249 = vmatmul.mubr.f32.gmra.mxu0 %v3149
      %v3250 = vpop.f32.mrf.mxu0
      %v3251 = vadd.f32 0.0, %v3250
      %v3252 = vpop.f32.mrf.mxu0
      %3253 = vmatprep.mubr.f32.mxu0 0.0
      %3254 = vmatmul.mubr.f32.gmra.mxu0 %v3152
      %v3255 = vpop.f32.mrf.mxu0
      %v3256 = vadd.f32 0.0, %v3255
      %v3257 = vpop.f32.mrf.mxu0
      %3258 = vdwg.mxu0
      %v3259 = vadd.f32 %v3019, %v3221
      %v3260 = vadd.f32 %v3020, %v3226
      %v3261 = vadd.f32 %v3021, %v3231
      %v3262 = vadd.f32 %v3022, %v3236
      %v3263 = vadd.f32 %v3023, %v3241
      %v3264 = vadd.f32 %v3024, %v3246
      %v3265 = vadd.f32 %v3025, %v3251
      %v3266 = vadd.f32 %v3026, %v3256
      %s3267 = scalar_lea.vmem %s12, 448
      %v3268 = vld [vmem:[%s3267] sm:$0xff]
      %v3269 = vld [vmem:[%s3267 + $0x8] sm:$0xff]
      %v3270 = vld [vmem:[%s3267 + $0x10] sm:$0xff]
      %v3271 = vld [vmem:[%s3267 + $0x18] sm:$0xff]
      %v3272 = vld [vmem:[%s3267 + $0x20] sm:$0xff]
      %v3273 = vld [vmem:[%s3267 + $0x28] sm:$0xff]
      %v3274 = vld [vmem:[%s3267 + $0x30] sm:$0xff]
      %v3275 = vld [vmem:[%s3267 + $0x38] sm:$0xff]
      %3276 = vmatprep.subr.mxu0 0.0
      %3277 = vmatpush1.msra.mxu0 0.0
      %3278 = vmatprep.subr.mxu0 0.0
      %3279 = vmatpush1.msra.mxu0 0.0
      %3280 = vmatprep.subr.mxu0 0.0
      %3281 = vmatpush1.msra.mxu0 0.0
      %3282 = vmatprep.subr.mxu0 0.0
      %3283 = vmatpush1.msra.mxu0 0.0
      %3284 = vmatprep.subr.mxu0 0.0
      %3285 = vmatpush1.msra.mxu0 0.0
      %3286 = vmatprep.subr.mxu0 0.0
      %3287 = vmatpush1.msra.mxu0 0.0
      %3288 = vmatprep.subr.mxu0 0.0
      %3289 = vmatpush1.msra.mxu0 0.0
      %3290 = vmatprep.subr.mxu0 0.0
      %3291 = vmatpush1.msra.mxu0 0.0
      %3292 = vmatprep.subr.mxu0 0.0
      %3293 = vmatpush1.msra.mxu0 %v3275
      %3294 = vmatprep.subr.mxu0 0.0
      %3295 = vmatpush1.msra.mxu0 %v3274
      %3296 = vmatprep.subr.mxu0 0.0
      %3297 = vmatpush1.msra.mxu0 %v3273
      %3298 = vmatprep.subr.mxu0 0.0
      %3299 = vmatpush1.msra.mxu0 %v3272
      %3300 = vmatprep.subr.mxu0 0.0
      %3301 = vmatpush1.msra.mxu0 %v3271
      %3302 = vmatprep.subr.mxu0 0.0
      %3303 = vmatpush1.msra.mxu0 %v3270
      %3304 = vmatprep.subr.mxu0 0.0
      %3305 = vmatpush1.msra.mxu0 %v3269
      %3306 = vmatprep.subr.mxu0 0.0
      %3307 = vmatpush1.msra.mxu0 %v3268
      %3308 = vmatprep.subr.mxu0 0.0
      %3309 = vmatpush2.msra.mxu0 0.0
      %3310 = vmatprep.subr.mxu0 0.0
      %3311 = vmatpush2.msra.mxu0 0.0
      %3312 = vmatprep.subr.mxu0 0.0
      %3313 = vmatpush2.msra.mxu0 0.0
      %3314 = vmatprep.subr.mxu0 0.0
      %3315 = vmatpush2.msra.mxu0 0.0
      %3316 = vmatprep.subr.mxu0 0.0
      %3317 = vmatpush2.msra.mxu0 0.0
      %3318 = vmatprep.subr.mxu0 0.0
      %3319 = vmatpush2.msra.mxu0 0.0
      %3320 = vmatprep.subr.mxu0 0.0
      %3321 = vmatpush2.msra.mxu0 0.0
      %3322 = vmatprep.subr.mxu0 0.0
      %3323 = vmatpush2.msra.mxu0 0.0
      %3324 = vmatprep.subr.mxu0 0.0
      %3325 = vmatpush2.msra.mxu0 0.0
      %3326 = vmatprep.subr.mxu0 0.0
      %3327 = vmatpush2.msra.mxu0 0.0
      %3328 = vmatprep.subr.mxu0 0.0
      %3329 = vmatpush2.msra.mxu0 0.0
      %3330 = vmatprep.subr.mxu0 0.0
      %3331 = vmatpush2.msra.mxu0 0.0
      %3332 = vmatprep.subr.mxu0 0.0
      %3333 = vmatpush2.msra.mxu0 0.0
      %3334 = vmatprep.subr.mxu0 0.0
      %3335 = vmatpush2.msra.mxu0 0.0
      %3336 = vmatprep.subr.mxu0 0.0
      %3337 = vmatpush2.msra.mxu0 0.0
      %3338 = vmatprep.subr.mxu0 0.0
      %3339 = vmatpush2.msra.mxu0 0.0
      %3340 = vmatprep.mubr.f32.mxu0 0.0
      %3341 = vmatmul.mubr.f32.gmra.mxu0 %v1602
      %v3342 = vpop.f32.mrf.mxu0
      %v3343 = vadd.f32 0.0, %v3342
      %v3344 = vpop.f32.mrf.mxu0
      %3345 = vmatprep.mubr.f32.mxu0 0.0
      %3346 = vmatmul.mubr.f32.gmra.mxu0 %v1605
      %v3347 = vpop.f32.mrf.mxu0
      %v3348 = vadd.f32 0.0, %v3347
      %v3349 = vpop.f32.mrf.mxu0
      %3350 = vmatprep.mubr.f32.mxu0 0.0
      %3351 = vmatmul.mubr.f32.gmra.mxu0 %v1608
      %v3352 = vpop.f32.mrf.mxu0
      %v3353 = vadd.f32 0.0, %v3352
      %v3354 = vpop.f32.mrf.mxu0
      %3355 = vmatprep.mubr.f32.mxu0 0.0
      %3356 = vmatmul.mubr.f32.gmra.mxu0 %v1611
      %v3357 = vpop.f32.mrf.mxu0
      %v3358 = vadd.f32 0.0, %v3357
      %v3359 = vpop.f32.mrf.mxu0
      %3360 = vdwg.mxu0
      %s3361 = scalar_lea.vmem %s13, 448
      %v3362 = vld [vmem:[%s3361] sm:$0xff]
      %v3363 = vld [vmem:[%s3361 + $0x8] sm:$0xff]
      %v3364 = vld [vmem:[%s3361 + $0x10] sm:$0xff]
      %v3365 = vld [vmem:[%s3361 + $0x18] sm:$0xff]
      %v3366 = vld [vmem:[%s3361 + $0x20] sm:$0xff]
      %v3367 = vld [vmem:[%s3361 + $0x28] sm:$0xff]
      %v3368 = vld [vmem:[%s3361 + $0x30] sm:$0xff]
      %v3369 = vld [vmem:[%s3361 + $0x38] sm:$0xff]
      %v3371 = vsel %vm928, %v3362, 0
      %v3374 = vsel %vm928, %v3363, 0
      %v3377 = vsel %vm928, %v3364, 0
      %v3380 = vsel %vm928, %v3365, 0
      %v3383 = vsel %vm928, %v3366, 0
      %v3386 = vsel %vm928, %v3367, 0
      %v3389 = vsel %vm928, %v3368, 0
      %v3392 = vsel %vm928, %v3369, 0
      %3394 = vmatprep.subr.mxu0 0.0
      %3395 = vmatpush1.msra.mxu0 0.0
      %3396 = vmatprep.subr.mxu0 0.0
      %3397 = vmatpush1.msra.mxu0 0.0
      %3398 = vmatprep.subr.mxu0 0.0
      %3399 = vmatpush1.msra.mxu0 0.0
      %3400 = vmatprep.subr.mxu0 0.0
      %3401 = vmatpush1.msra.mxu0 0.0
      %3402 = vmatprep.subr.mxu0 0.0
      %3403 = vmatpush1.msra.mxu0 0.0
      %3404 = vmatprep.subr.mxu0 0.0
      %3405 = vmatpush1.msra.mxu0 0.0
      %3406 = vmatprep.subr.mxu0 0.0
      %3407 = vmatpush1.msra.mxu0 0.0
      %3408 = vmatprep.subr.mxu0 0.0
      %3409 = vmatpush1.msra.mxu0 0.0
      %3410 = vmatprep.subr.mxu0 0.0
      %3411 = vmatpush1.msra.mxu0 0.0
      %3412 = vmatprep.subr.mxu0 0.0
      %3413 = vmatpush1.msra.mxu0 0.0
      %3414 = vmatprep.subr.mxu0 0.0
      %3415 = vmatpush1.msra.mxu0 0.0
      %3416 = vmatprep.subr.mxu0 0.0
      %3417 = vmatpush1.msra.mxu0 0.0
      %3418 = vmatprep.subr.mxu0 0.0
      %3419 = vmatpush1.msra.mxu0 %v3358
      %3420 = vmatprep.subr.mxu0 0.0
      %3421 = vmatpush1.msra.mxu0 %v3353
      %3422 = vmatprep.subr.mxu0 0.0
      %3423 = vmatpush1.msra.mxu0 %v3348
      %3424 = vmatprep.subr.mxu0 0.0
      %3425 = vmatpush1.msra.mxu0 %v3343
      %3426 = vmatprep.subr.mxu0 0.0
      %3427 = vmatpush2.msra.mxu0 0.0
      %3428 = vmatprep.subr.mxu0 0.0
      %3429 = vmatpush2.msra.mxu0 0.0
      %3430 = vmatprep.subr.mxu0 0.0
      %3431 = vmatpush2.msra.mxu0 0.0
      %3432 = vmatprep.subr.mxu0 0.0
      %3433 = vmatpush2.msra.mxu0 0.0
      %3434 = vmatprep.subr.mxu0 0.0
      %3435 = vmatpush2.msra.mxu0 0.0
      %3436 = vmatprep.subr.mxu0 0.0
      %3437 = vmatpush2.msra.mxu0 0.0
      %3438 = vmatprep.subr.mxu0 0.0
      %3439 = vmatpush2.msra.mxu0 0.0
      %3440 = vmatprep.subr.mxu0 0.0
      %3441 = vmatpush2.msra.mxu0 0.0
      %3442 = vmatprep.subr.mxu0 0.0
      %3443 = vmatpush2.msra.mxu0 0.0
      %3444 = vmatprep.subr.mxu0 0.0
      %3445 = vmatpush2.msra.mxu0 0.0
      %3446 = vmatprep.subr.mxu0 0.0
      %3447 = vmatpush2.msra.mxu0 0.0
      %3448 = vmatprep.subr.mxu0 0.0
      %3449 = vmatpush2.msra.mxu0 0.0
      %3450 = vmatprep.subr.mxu0 0.0
      %3451 = vmatpush2.msra.mxu0 0.0
      %3452 = vmatprep.subr.mxu0 0.0
      %3453 = vmatpush2.msra.mxu0 0.0
      %3454 = vmatprep.subr.mxu0 0.0
      %3455 = vmatpush2.msra.mxu0 0.0
      %3456 = vmatprep.subr.mxu0 0.0
      %3457 = vmatpush2.msra.mxu0 0.0
      %3458 = vmatprep.mubr.f32.mxu0 0.0
      %3459 = vmatmul.mubr.f32.gmra.mxu0 %v3371
      %v3460 = vpop.f32.mrf.mxu0
      %v3461 = vadd.f32 0.0, %v3460
      %v3462 = vpop.f32.mrf.mxu0
      %3463 = vmatprep.mubr.f32.mxu0 0.0
      %3464 = vmatmul.mubr.f32.gmra.mxu0 %v3374
      %v3465 = vpop.f32.mrf.mxu0
      %v3466 = vadd.f32 0.0, %v3465
      %v3467 = vpop.f32.mrf.mxu0
      %3468 = vmatprep.mubr.f32.mxu0 0.0
      %3469 = vmatmul.mubr.f32.gmra.mxu0 %v3377
      %v3470 = vpop.f32.mrf.mxu0
      %v3471 = vadd.f32 0.0, %v3470
      %v3472 = vpop.f32.mrf.mxu0
      %3473 = vmatprep.mubr.f32.mxu0 0.0
      %3474 = vmatmul.mubr.f32.gmra.mxu0 %v3380
      %v3475 = vpop.f32.mrf.mxu0
      %v3476 = vadd.f32 0.0, %v3475
      %v3477 = vpop.f32.mrf.mxu0
      %3478 = vmatprep.mubr.f32.mxu0 0.0
      %3479 = vmatmul.mubr.f32.gmra.mxu0 %v3383
      %v3480 = vpop.f32.mrf.mxu0
      %v3481 = vadd.f32 0.0, %v3480
      %v3482 = vpop.f32.mrf.mxu0
      %3483 = vmatprep.mubr.f32.mxu0 0.0
      %3484 = vmatmul.mubr.f32.gmra.mxu0 %v3386
      %v3485 = vpop.f32.mrf.mxu0
      %v3486 = vadd.f32 0.0, %v3485
      %v3487 = vpop.f32.mrf.mxu0
      %3488 = vmatprep.mubr.f32.mxu0 0.0
      %3489 = vmatmul.mubr.f32.gmra.mxu0 %v3389
      %v3490 = vpop.f32.mrf.mxu0
      %v3491 = vadd.f32 0.0, %v3490
      %v3492 = vpop.f32.mrf.mxu0
      %3493 = vmatprep.mubr.f32.mxu0 0.0
      %3494 = vmatmul.mubr.f32.gmra.mxu0 %v3392
      %v3495 = vpop.f32.mrf.mxu0
      %v3496 = vadd.f32 0.0, %v3495
      %v3497 = vpop.f32.mrf.mxu0
      %3498 = vdwg.mxu0
      %v3499 = vadd.f32 %v3259, %v3461
      %v3500 = vadd.f32 %v3260, %v3466
      %v3501 = vadd.f32 %v3261, %v3471
      %v3502 = vadd.f32 %v3262, %v3476
      %v3503 = vadd.f32 %v3263, %v3481
      %v3504 = vadd.f32 %v3264, %v3486
      %v3505 = vadd.f32 %v3265, %v3491
      %v3506 = vadd.f32 %v3266, %v3496
      %s3507 = scalar_lea.vmem %s12, 512
      %v3508 = vld [vmem:[%s3507] sm:$0xff]
      %v3509 = vld [vmem:[%s3507 + $0x8] sm:$0xff]
      %v3510 = vld [vmem:[%s3507 + $0x10] sm:$0xff]
      %v3511 = vld [vmem:[%s3507 + $0x18] sm:$0xff]
      %v3512 = vld [vmem:[%s3507 + $0x20] sm:$0xff]
      %v3513 = vld [vmem:[%s3507 + $0x28] sm:$0xff]
      %v3514 = vld [vmem:[%s3507 + $0x30] sm:$0xff]
      %v3515 = vld [vmem:[%s3507 + $0x38] sm:$0xff]
      %3516 = vmatprep.subr.mxu0 0.0
      %3517 = vmatpush1.msra.mxu0 0.0
      %3518 = vmatprep.subr.mxu0 0.0
      %3519 = vmatpush1.msra.mxu0 0.0
      %3520 = vmatprep.subr.mxu0 0.0
      %3521 = vmatpush1.msra.mxu0 0.0
      %3522 = vmatprep.subr.mxu0 0.0
      %3523 = vmatpush1.msra.mxu0 0.0
      %3524 = vmatprep.subr.mxu0 0.0
      %3525 = vmatpush1.msra.mxu0 0.0
      %3526 = vmatprep.subr.mxu0 0.0
      %3527 = vmatpush1.msra.mxu0 0.0
      %3528 = vmatprep.subr.mxu0 0.0
      %3529 = vmatpush1.msra.mxu0 0.0
      %3530 = vmatprep.subr.mxu0 0.0
      %3531 = vmatpush1.msra.mxu0 0.0
      %3532 = vmatprep.subr.mxu0 0.0
      %3533 = vmatpush1.msra.mxu0 %v3515
      %3534 = vmatprep.subr.mxu0 0.0
      %3535 = vmatpush1.msra.mxu0 %v3514
      %3536 = vmatprep.subr.mxu0 0.0
      %3537 = vmatpush1.msra.mxu0 %v3513
      %3538 = vmatprep.subr.mxu0 0.0
      %3539 = vmatpush1.msra.mxu0 %v3512
      %3540 = vmatprep.subr.mxu0 0.0
      %3541 = vmatpush1.msra.mxu0 %v3511
      %3542 = vmatprep.subr.mxu0 0.0
      %3543 = vmatpush1.msra.mxu0 %v3510
      %3544 = vmatprep.subr.mxu0 0.0
      %3545 = vmatpush1.msra.mxu0 %v3509
      %3546 = vmatprep.subr.mxu0 0.0
      %3547 = vmatpush1.msra.mxu0 %v3508
      %3548 = vmatprep.subr.mxu0 0.0
      %3549 = vmatpush2.msra.mxu0 0.0
      %3550 = vmatprep.subr.mxu0 0.0
      %3551 = vmatpush2.msra.mxu0 0.0
      %3552 = vmatprep.subr.mxu0 0.0
      %3553 = vmatpush2.msra.mxu0 0.0
      %3554 = vmatprep.subr.mxu0 0.0
      %3555 = vmatpush2.msra.mxu0 0.0
      %3556 = vmatprep.subr.mxu0 0.0
      %3557 = vmatpush2.msra.mxu0 0.0
      %3558 = vmatprep.subr.mxu0 0.0
      %3559 = vmatpush2.msra.mxu0 0.0
      %3560 = vmatprep.subr.mxu0 0.0
      %3561 = vmatpush2.msra.mxu0 0.0
      %3562 = vmatprep.subr.mxu0 0.0
      %3563 = vmatpush2.msra.mxu0 0.0
      %3564 = vmatprep.subr.mxu0 0.0
      %3565 = vmatpush2.msra.mxu0 0.0
      %3566 = vmatprep.subr.mxu0 0.0
      %3567 = vmatpush2.msra.mxu0 0.0
      %3568 = vmatprep.subr.mxu0 0.0
      %3569 = vmatpush2.msra.mxu0 0.0
      %3570 = vmatprep.subr.mxu0 0.0
      %3571 = vmatpush2.msra.mxu0 0.0
      %3572 = vmatprep.subr.mxu0 0.0
      %3573 = vmatpush2.msra.mxu0 0.0
      %3574 = vmatprep.subr.mxu0 0.0
      %3575 = vmatpush2.msra.mxu0 0.0
      %3576 = vmatprep.subr.mxu0 0.0
      %3577 = vmatpush2.msra.mxu0 0.0
      %3578 = vmatprep.subr.mxu0 0.0
      %3579 = vmatpush2.msra.mxu0 0.0
      %3580 = vmatprep.mubr.f32.mxu0 0.0
      %3581 = vmatmul.mubr.f32.gmra.mxu0 %v1602
      %v3582 = vpop.f32.mrf.mxu0
      %v3583 = vadd.f32 0.0, %v3582
      %v3584 = vpop.f32.mrf.mxu0
      %3585 = vmatprep.mubr.f32.mxu0 0.0
      %3586 = vmatmul.mubr.f32.gmra.mxu0 %v1605
      %v3587 = vpop.f32.mrf.mxu0
      %v3588 = vadd.f32 0.0, %v3587
      %v3589 = vpop.f32.mrf.mxu0
      %3590 = vmatprep.mubr.f32.mxu0 0.0
      %3591 = vmatmul.mubr.f32.gmra.mxu0 %v1608
      %v3592 = vpop.f32.mrf.mxu0
      %v3593 = vadd.f32 0.0, %v3592
      %v3594 = vpop.f32.mrf.mxu0
      %3595 = vmatprep.mubr.f32.mxu0 0.0
      %3596 = vmatmul.mubr.f32.gmra.mxu0 %v1611
      %v3597 = vpop.f32.mrf.mxu0
      %v3598 = vadd.f32 0.0, %v3597
      %v3599 = vpop.f32.mrf.mxu0
      %3600 = vdwg.mxu0
      %s3601 = scalar_lea.vmem %s13, 512
      %v3602 = vld [vmem:[%s3601] sm:$0xff]
      %v3603 = vld [vmem:[%s3601 + $0x8] sm:$0xff]
      %v3604 = vld [vmem:[%s3601 + $0x10] sm:$0xff]
      %v3605 = vld [vmem:[%s3601 + $0x18] sm:$0xff]
      %v3606 = vld [vmem:[%s3601 + $0x20] sm:$0xff]
      %v3607 = vld [vmem:[%s3601 + $0x28] sm:$0xff]
      %v3608 = vld [vmem:[%s3601 + $0x30] sm:$0xff]
      %v3609 = vld [vmem:[%s3601 + $0x38] sm:$0xff]
      %v3611 = vsel %vm928, %v3602, 0
      %v3614 = vsel %vm928, %v3603, 0
      %v3617 = vsel %vm928, %v3604, 0
      %v3620 = vsel %vm928, %v3605, 0
      %v3623 = vsel %vm928, %v3606, 0
      %v3626 = vsel %vm928, %v3607, 0
      %v3629 = vsel %vm928, %v3608, 0
      %v3632 = vsel %vm928, %v3609, 0
      %3634 = vmatprep.subr.mxu0 0.0
      %3635 = vmatpush1.msra.mxu0 0.0
      %3636 = vmatprep.subr.mxu0 0.0
      %3637 = vmatpush1.msra.mxu0 0.0
      %3638 = vmatprep.subr.mxu0 0.0
      %3639 = vmatpush1.msra.mxu0 0.0
      %3640 = vmatprep.subr.mxu0 0.0
      %3641 = vmatpush1.msra.mxu0 0.0
      %3642 = vmatprep.subr.mxu0 0.0
      %3643 = vmatpush1.msra.mxu0 0.0
      %3644 = vmatprep.subr.mxu0 0.0
      %3645 = vmatpush1.msra.mxu0 0.0
      %3646 = vmatprep.subr.mxu0 0.0
      %3647 = vmatpush1.msra.mxu0 0.0
      %3648 = vmatprep.subr.mxu0 0.0
      %3649 = vmatpush1.msra.mxu0 0.0
      %3650 = vmatprep.subr.mxu0 0.0
      %3651 = vmatpush1.msra.mxu0 0.0
      %3652 = vmatprep.subr.mxu0 0.0
      %3653 = vmatpush1.msra.mxu0 0.0
      %3654 = vmatprep.subr.mxu0 0.0
      %3655 = vmatpush1.msra.mxu0 0.0
      %3656 = vmatprep.subr.mxu0 0.0
      %3657 = vmatpush1.msra.mxu0 0.0
      %3658 = vmatprep.subr.mxu0 0.0
      %3659 = vmatpush1.msra.mxu0 %v3598
      %3660 = vmatprep.subr.mxu0 0.0
      %3661 = vmatpush1.msra.mxu0 %v3593
      %3662 = vmatprep.subr.mxu0 0.0
      %3663 = vmatpush1.msra.mxu0 %v3588
      %3664 = vmatprep.subr.mxu0 0.0
      %3665 = vmatpush1.msra.mxu0 %v3583
      %3666 = vmatprep.subr.mxu0 0.0
      %3667 = vmatpush2.msra.mxu0 0.0
      %3668 = vmatprep.subr.mxu0 0.0
      %3669 = vmatpush2.msra.mxu0 0.0
      %3670 = vmatprep.subr.mxu0 0.0
      %3671 = vmatpush2.msra.mxu0 0.0
      %3672 = vmatprep.subr.mxu0 0.0
      %3673 = vmatpush2.msra.mxu0 0.0
      %3674 = vmatprep.subr.mxu0 0.0
      %3675 = vmatpush2.msra.mxu0 0.0
      %3676 = vmatprep.subr.mxu0 0.0
      %3677 = vmatpush2.msra.mxu0 0.0
      %3678 = vmatprep.subr.mxu0 0.0
      %3679 = vmatpush2.msra.mxu0 0.0
      %3680 = vmatprep.subr.mxu0 0.0
      %3681 = vmatpush2.msra.mxu0 0.0
      %3682 = vmatprep.subr.mxu0 0.0
      %3683 = vmatpush2.msra.mxu0 0.0
      %3684 = vmatprep.subr.mxu0 0.0
      %3685 = vmatpush2.msra.mxu0 0.0
      %3686 = vmatprep.subr.mxu0 0.0
      %3687 = vmatpush2.msra.mxu0 0.0
      %3688 = vmatprep.subr.mxu0 0.0
      %3689 = vmatpush2.msra.mxu0 0.0
      %3690 = vmatprep.subr.mxu0 0.0
      %3691 = vmatpush2.msra.mxu0 0.0
      %3692 = vmatprep.subr.mxu0 0.0
      %3693 = vmatpush2.msra.mxu0 0.0
      %3694 = vmatprep.subr.mxu0 0.0
      %3695 = vmatpush2.msra.mxu0 0.0
      %3696 = vmatprep.subr.mxu0 0.0
      %3697 = vmatpush2.msra.mxu0 0.0
      %3698 = vmatprep.mubr.f32.mxu0 0.0
      %3699 = vmatmul.mubr.f32.gmra.mxu0 %v3611
      %v3700 = vpop.f32.mrf.mxu0
      %v3701 = vadd.f32 0.0, %v3700
      %v3702 = vpop.f32.mrf.mxu0
      %3703 = vmatprep.mubr.f32.mxu0 0.0
      %3704 = vmatmul.mubr.f32.gmra.mxu0 %v3614
      %v3705 = vpop.f32.mrf.mxu0
      %v3706 = vadd.f32 0.0, %v3705
      %v3707 = vpop.f32.mrf.mxu0
      %3708 = vmatprep.mubr.f32.mxu0 0.0
      %3709 = vmatmul.mubr.f32.gmra.mxu0 %v3617
      %v3710 = vpop.f32.mrf.mxu0
      %v3711 = vadd.f32 0.0, %v3710
      %v3712 = vpop.f32.mrf.mxu0
      %3713 = vmatprep.mubr.f32.mxu0 0.0
      %3714 = vmatmul.mubr.f32.gmra.mxu0 %v3620
      %v3715 = vpop.f32.mrf.mxu0
      %v3716 = vadd.f32 0.0, %v3715
      %v3717 = vpop.f32.mrf.mxu0
      %3718 = vmatprep.mubr.f32.mxu0 0.0
      %3719 = vmatmul.mubr.f32.gmra.mxu0 %v3623
      %v3720 = vpop.f32.mrf.mxu0
      %v3721 = vadd.f32 0.0, %v3720
      %v3722 = vpop.f32.mrf.mxu0
      %3723 = vmatprep.mubr.f32.mxu0 0.0
      %3724 = vmatmul.mubr.f32.gmra.mxu0 %v3626
      %v3725 = vpop.f32.mrf.mxu0
      %v3726 = vadd.f32 0.0, %v3725
      %v3727 = vpop.f32.mrf.mxu0
      %3728 = vmatprep.mubr.f32.mxu0 0.0
      %3729 = vmatmul.mubr.f32.gmra.mxu0 %v3629
      %v3730 = vpop.f32.mrf.mxu0
      %v3731 = vadd.f32 0.0, %v3730
      %v3732 = vpop.f32.mrf.mxu0
      %3733 = vmatprep.mubr.f32.mxu0 0.0
      %3734 = vmatmul.mubr.f32.gmra.mxu0 %v3632
      %v3735 = vpop.f32.mrf.mxu0
      %v3736 = vadd.f32 0.0, %v3735
      %v3737 = vpop.f32.mrf.mxu0
      %3738 = vdwg.mxu0
      %v3739 = vadd.f32 %v3499, %v3701
      %v3740 = vadd.f32 %v3500, %v3706
      %v3741 = vadd.f32 %v3501, %v3711
      %v3742 = vadd.f32 %v3502, %v3716
      %v3743 = vadd.f32 %v3503, %v3721
      %v3744 = vadd.f32 %v3504, %v3726
      %v3745 = vadd.f32 %v3505, %v3731
      %v3746 = vadd.f32 %v3506, %v3736
      %s3747 = scalar_lea.vmem %s12, 576
      %v3748 = vld [vmem:[%s3747] sm:$0xff]
      %v3749 = vld [vmem:[%s3747 + $0x8] sm:$0xff]
      %v3750 = vld [vmem:[%s3747 + $0x10] sm:$0xff]
      %v3751 = vld [vmem:[%s3747 + $0x18] sm:$0xff]
      %v3752 = vld [vmem:[%s3747 + $0x20] sm:$0xff]
      %v3753 = vld [vmem:[%s3747 + $0x28] sm:$0xff]
      %v3754 = vld [vmem:[%s3747 + $0x30] sm:$0xff]
      %v3755 = vld [vmem:[%s3747 + $0x38] sm:$0xff]
      %3756 = vmatprep.subr.mxu0 0.0
      %3757 = vmatpush1.msra.mxu0 0.0
      %3758 = vmatprep.subr.mxu0 0.0
      %3759 = vmatpush1.msra.mxu0 0.0
      %3760 = vmatprep.subr.mxu0 0.0
      %3761 = vmatpush1.msra.mxu0 0.0
      %3762 = vmatprep.subr.mxu0 0.0
      %3763 = vmatpush1.msra.mxu0 0.0
      %3764 = vmatprep.subr.mxu0 0.0
      %3765 = vmatpush1.msra.mxu0 0.0
      %3766 = vmatprep.subr.mxu0 0.0
      %3767 = vmatpush1.msra.mxu0 0.0
      %3768 = vmatprep.subr.mxu0 0.0
      %3769 = vmatpush1.msra.mxu0 0.0
      %3770 = vmatprep.subr.mxu0 0.0
      %3771 = vmatpush1.msra.mxu0 0.0
      %3772 = vmatprep.subr.mxu0 0.0
      %3773 = vmatpush1.msra.mxu0 %v3755
      %3774 = vmatprep.subr.mxu0 0.0
      %3775 = vmatpush1.msra.mxu0 %v3754
      %3776 = vmatprep.subr.mxu0 0.0
      %3777 = vmatpush1.msra.mxu0 %v3753
      %3778 = vmatprep.subr.mxu0 0.0
      %3779 = vmatpush1.msra.mxu0 %v3752
      %3780 = vmatprep.subr.mxu0 0.0
      %3781 = vmatpush1.msra.mxu0 %v3751
      %3782 = vmatprep.subr.mxu0 0.0
      %3783 = vmatpush1.msra.mxu0 %v3750
      %3784 = vmatprep.subr.mxu0 0.0
      %3785 = vmatpush1.msra.mxu0 %v3749
      %3786 = vmatprep.subr.mxu0 0.0
      %3787 = vmatpush1.msra.mxu0 %v3748
      %3788 = vmatprep.subr.mxu0 0.0
      %3789 = vmatpush2.msra.mxu0 0.0
      %3790 = vmatprep.subr.mxu0 0.0
      %3791 = vmatpush2.msra.mxu0 0.0
      %3792 = vmatprep.subr.mxu0 0.0
      %3793 = vmatpush2.msra.mxu0 0.0
      %3794 = vmatprep.subr.mxu0 0.0
      %3795 = vmatpush2.msra.mxu0 0.0
      %3796 = vmatprep.subr.mxu0 0.0
      %3797 = vmatpush2.msra.mxu0 0.0
      %3798 = vmatprep.subr.mxu0 0.0
      %3799 = vmatpush2.msra.mxu0 0.0
      %3800 = vmatprep.subr.mxu0 0.0
      %3801 = vmatpush2.msra.mxu0 0.0
      %3802 = vmatprep.subr.mxu0 0.0
      %3803 = vmatpush2.msra.mxu0 0.0
      %3804 = vmatprep.subr.mxu0 0.0
      %3805 = vmatpush2.msra.mxu0 0.0
      %3806 = vmatprep.subr.mxu0 0.0
      %3807 = vmatpush2.msra.mxu0 0.0
      %3808 = vmatprep.subr.mxu0 0.0
      %3809 = vmatpush2.msra.mxu0 0.0
      %3810 = vmatprep.subr.mxu0 0.0
      %3811 = vmatpush2.msra.mxu0 0.0
      %3812 = vmatprep.subr.mxu0 0.0
      %3813 = vmatpush2.msra.mxu0 0.0
      %3814 = vmatprep.subr.mxu0 0.0
      %3815 = vmatpush2.msra.mxu0 0.0
      %3816 = vmatprep.subr.mxu0 0.0
      %3817 = vmatpush2.msra.mxu0 0.0
      %3818 = vmatprep.subr.mxu0 0.0
      %3819 = vmatpush2.msra.mxu0 0.0
      %3820 = vmatprep.mubr.f32.mxu0 0.0
      %3821 = vmatmul.mubr.f32.gmra.mxu0 %v1602
      %v3822 = vpop.f32.mrf.mxu0
      %v3823 = vadd.f32 0.0, %v3822
      %v3824 = vpop.f32.mrf.mxu0
      %3825 = vmatprep.mubr.f32.mxu0 0.0
      %3826 = vmatmul.mubr.f32.gmra.mxu0 %v1605
      %v3827 = vpop.f32.mrf.mxu0
      %v3828 = vadd.f32 0.0, %v3827
      %v3829 = vpop.f32.mrf.mxu0
      %3830 = vmatprep.mubr.f32.mxu0 0.0
      %3831 = vmatmul.mubr.f32.gmra.mxu0 %v1608
      %v3832 = vpop.f32.mrf.mxu0
      %v3833 = vadd.f32 0.0, %v3832
      %v3834 = vpop.f32.mrf.mxu0
      %3835 = vmatprep.mubr.f32.mxu0 0.0
      %3836 = vmatmul.mubr.f32.gmra.mxu0 %v1611
      %v3837 = vpop.f32.mrf.mxu0
      %v3838 = vadd.f32 0.0, %v3837
      %v3839 = vpop.f32.mrf.mxu0
      %3840 = vdwg.mxu0
      %s3841 = scalar_lea.vmem %s13, 576
      %v3842 = vld [vmem:[%s3841] sm:$0xff]
      %v3843 = vld [vmem:[%s3841 + $0x8] sm:$0xff]
      %v3844 = vld [vmem:[%s3841 + $0x10] sm:$0xff]
      %v3845 = vld [vmem:[%s3841 + $0x18] sm:$0xff]
      %v3846 = vld [vmem:[%s3841 + $0x20] sm:$0xff]
      %v3847 = vld [vmem:[%s3841 + $0x28] sm:$0xff]
      %v3848 = vld [vmem:[%s3841 + $0x30] sm:$0xff]
      %v3849 = vld [vmem:[%s3841 + $0x38] sm:$0xff]
      %v3851 = vsel %vm928, %v3842, 0
      %v3854 = vsel %vm928, %v3843, 0
      %v3857 = vsel %vm928, %v3844, 0
      %v3860 = vsel %vm928, %v3845, 0
      %v3863 = vsel %vm928, %v3846, 0
      %v3866 = vsel %vm928, %v3847, 0
      %v3869 = vsel %vm928, %v3848, 0
      %v3872 = vsel %vm928, %v3849, 0
      %3874 = vmatprep.subr.mxu0 0.0
      %3875 = vmatpush1.msra.mxu0 0.0
      %3876 = vmatprep.subr.mxu0 0.0
      %3877 = vmatpush1.msra.mxu0 0.0
      %3878 = vmatprep.subr.mxu0 0.0
      %3879 = vmatpush1.msra.mxu0 0.0
      %3880 = vmatprep.subr.mxu0 0.0
      %3881 = vmatpush1.msra.mxu0 0.0
      %3882 = vmatprep.subr.mxu0 0.0
      %3883 = vmatpush1.msra.mxu0 0.0
      %3884 = vmatprep.subr.mxu0 0.0
      %3885 = vmatpush1.msra.mxu0 0.0
      %3886 = vmatprep.subr.mxu0 0.0
      %3887 = vmatpush1.msra.mxu0 0.0
      %3888 = vmatprep.subr.mxu0 0.0
      %3889 = vmatpush1.msra.mxu0 0.0
      %3890 = vmatprep.subr.mxu0 0.0
      %3891 = vmatpush1.msra.mxu0 0.0
      %3892 = vmatprep.subr.mxu0 0.0
      %3893 = vmatpush1.msra.mxu0 0.0
      %3894 = vmatprep.subr.mxu0 0.0
      %3895 = vmatpush1.msra.mxu0 0.0
      %3896 = vmatprep.subr.mxu0 0.0
      %3897 = vmatpush1.msra.mxu0 0.0
      %3898 = vmatprep.subr.mxu0 0.0
      %3899 = vmatpush1.msra.mxu0 %v3838
      %3900 = vmatprep.subr.mxu0 0.0
      %3901 = vmatpush1.msra.mxu0 %v3833
      %3902 = vmatprep.subr.mxu0 0.0
      %3903 = vmatpush1.msra.mxu0 %v3828
      %3904 = vmatprep.subr.mxu0 0.0
      %3905 = vmatpush1.msra.mxu0 %v3823
      %3906 = vmatprep.subr.mxu0 0.0
      %3907 = vmatpush2.msra.mxu0 0.0
      %3908 = vmatprep.subr.mxu0 0.0
      %3909 = vmatpush2.msra.mxu0 0.0
      %3910 = vmatprep.subr.mxu0 0.0
      %3911 = vmatpush2.msra.mxu0 0.0
      %3912 = vmatprep.subr.mxu0 0.0
      %3913 = vmatpush2.msra.mxu0 0.0
      %3914 = vmatprep.subr.mxu0 0.0
      %3915 = vmatpush2.msra.mxu0 0.0
      %3916 = vmatprep.subr.mxu0 0.0
      %3917 = vmatpush2.msra.mxu0 0.0
      %3918 = vmatprep.subr.mxu0 0.0
      %3919 = vmatpush2.msra.mxu0 0.0
      %3920 = vmatprep.subr.mxu0 0.0
      %3921 = vmatpush2.msra.mxu0 0.0
      %3922 = vmatprep.subr.mxu0 0.0
      %3923 = vmatpush2.msra.mxu0 0.0
      %3924 = vmatprep.subr.mxu0 0.0
      %3925 = vmatpush2.msra.mxu0 0.0
      %3926 = vmatprep.subr.mxu0 0.0
      %3927 = vmatpush2.msra.mxu0 0.0
      %3928 = vmatprep.subr.mxu0 0.0
      %3929 = vmatpush2.msra.mxu0 0.0
      %3930 = vmatprep.subr.mxu0 0.0
      %3931 = vmatpush2.msra.mxu0 0.0
      %3932 = vmatprep.subr.mxu0 0.0
      %3933 = vmatpush2.msra.mxu0 0.0
      %3934 = vmatprep.subr.mxu0 0.0
      %3935 = vmatpush2.msra.mxu0 0.0
      %3936 = vmatprep.subr.mxu0 0.0
      %3937 = vmatpush2.msra.mxu0 0.0
      %3938 = vmatprep.mubr.f32.mxu0 0.0
      %3939 = vmatmul.mubr.f32.gmra.mxu0 %v3851
      %v3940 = vpop.f32.mrf.mxu0
      %v3941 = vadd.f32 0.0, %v3940
      %v3942 = vpop.f32.mrf.mxu0
      %3943 = vmatprep.mubr.f32.mxu0 0.0
      %3944 = vmatmul.mubr.f32.gmra.mxu0 %v3854
      %v3945 = vpop.f32.mrf.mxu0
      %v3946 = vadd.f32 0.0, %v3945
      %v3947 = vpop.f32.mrf.mxu0
      %3948 = vmatprep.mubr.f32.mxu0 0.0
      %3949 = vmatmul.mubr.f32.gmra.mxu0 %v3857
      %v3950 = vpop.f32.mrf.mxu0
      %v3951 = vadd.f32 0.0, %v3950
      %v3952 = vpop.f32.mrf.mxu0
      %3953 = vmatprep.mubr.f32.mxu0 0.0
      %3954 = vmatmul.mubr.f32.gmra.mxu0 %v3860
      %v3955 = vpop.f32.mrf.mxu0
      %v3956 = vadd.f32 0.0, %v3955
      %v3957 = vpop.f32.mrf.mxu0
      %3958 = vmatprep.mubr.f32.mxu0 0.0
      %3959 = vmatmul.mubr.f32.gmra.mxu0 %v3863
      %v3960 = vpop.f32.mrf.mxu0
      %v3961 = vadd.f32 0.0, %v3960
      %v3962 = vpop.f32.mrf.mxu0
      %3963 = vmatprep.mubr.f32.mxu0 0.0
      %3964 = vmatmul.mubr.f32.gmra.mxu0 %v3866
      %v3965 = vpop.f32.mrf.mxu0
      %v3966 = vadd.f32 0.0, %v3965
      %v3967 = vpop.f32.mrf.mxu0
      %3968 = vmatprep.mubr.f32.mxu0 0.0
      %3969 = vmatmul.mubr.f32.gmra.mxu0 %v3869
      %v3970 = vpop.f32.mrf.mxu0
      %v3971 = vadd.f32 0.0, %v3970
      %v3972 = vpop.f32.mrf.mxu0
      %3973 = vmatprep.mubr.f32.mxu0 0.0
      %3974 = vmatmul.mubr.f32.gmra.mxu0 %v3872
      %v3975 = vpop.f32.mrf.mxu0
      %v3976 = vadd.f32 0.0, %v3975
      %v3977 = vpop.f32.mrf.mxu0
      %3978 = vdwg.mxu0
      %v3979 = vadd.f32 %v3739, %v3941
      %v3980 = vadd.f32 %v3740, %v3946
      %v3981 = vadd.f32 %v3741, %v3951
      %v3982 = vadd.f32 %v3742, %v3956
      %v3983 = vadd.f32 %v3743, %v3961
      %v3984 = vadd.f32 %v3744, %v3966
      %v3985 = vadd.f32 %v3745, %v3971
      %v3986 = vadd.f32 %v3746, %v3976
      %s3987 = scalar_lea.vmem %s12, 640
      %v3988 = vld [vmem:[%s3987] sm:$0xff]
      %v3989 = vld [vmem:[%s3987 + $0x8] sm:$0xff]
      %v3990 = vld [vmem:[%s3987 + $0x10] sm:$0xff]
      %v3991 = vld [vmem:[%s3987 + $0x18] sm:$0xff]
      %v3992 = vld [vmem:[%s3987 + $0x20] sm:$0xff]
      %v3993 = vld [vmem:[%s3987 + $0x28] sm:$0xff]
      %v3994 = vld [vmem:[%s3987 + $0x30] sm:$0xff]
      %v3995 = vld [vmem:[%s3987 + $0x38] sm:$0xff]
      %3996 = vmatprep.subr.mxu0 0.0
      %3997 = vmatpush1.msra.mxu0 0.0
      %3998 = vmatprep.subr.mxu0 0.0
      %3999 = vmatpush1.msra.mxu0 0.0
      %4000 = vmatprep.subr.mxu0 0.0
      %4001 = vmatpush1.msra.mxu0 0.0
      %4002 = vmatprep.subr.mxu0 0.0
      %4003 = vmatpush1.msra.mxu0 0.0
      %4004 = vmatprep.subr.mxu0 0.0
      %4005 = vmatpush1.msra.mxu0 0.0
      %4006 = vmatprep.subr.mxu0 0.0
      %4007 = vmatpush1.msra.mxu0 0.0
      %4008 = vmatprep.subr.mxu0 0.0
      %4009 = vmatpush1.msra.mxu0 0.0
      %4010 = vmatprep.subr.mxu0 0.0
      %4011 = vmatpush1.msra.mxu0 0.0
      %4012 = vmatprep.subr.mxu0 0.0
      %4013 = vmatpush1.msra.mxu0 %v3995
      %4014 = vmatprep.subr.mxu0 0.0
      %4015 = vmatpush1.msra.mxu0 %v3994
      %4016 = vmatprep.subr.mxu0 0.0
      %4017 = vmatpush1.msra.mxu0 %v3993
      %4018 = vmatprep.subr.mxu0 0.0
      %4019 = vmatpush1.msra.mxu0 %v3992
      %4020 = vmatprep.subr.mxu0 0.0
      %4021 = vmatpush1.msra.mxu0 %v3991
      %4022 = vmatprep.subr.mxu0 0.0
      %4023 = vmatpush1.msra.mxu0 %v3990
      %4024 = vmatprep.subr.mxu0 0.0
      %4025 = vmatpush1.msra.mxu0 %v3989
      %4026 = vmatprep.subr.mxu0 0.0
      %4027 = vmatpush1.msra.mxu0 %v3988
      %4028 = vmatprep.subr.mxu0 0.0
      %4029 = vmatpush2.msra.mxu0 0.0
      %4030 = vmatprep.subr.mxu0 0.0
      %4031 = vmatpush2.msra.mxu0 0.0
      %4032 = vmatprep.subr.mxu0 0.0
      %4033 = vmatpush2.msra.mxu0 0.0
      %4034 = vmatprep.subr.mxu0 0.0
      %4035 = vmatpush2.msra.mxu0 0.0
      %4036 = vmatprep.subr.mxu0 0.0
      %4037 = vmatpush2.msra.mxu0 0.0
      %4038 = vmatprep.subr.mxu0 0.0
      %4039 = vmatpush2.msra.mxu0 0.0
      %4040 = vmatprep.subr.mxu0 0.0
      %4041 = vmatpush2.msra.mxu0 0.0
      %4042 = vmatprep.subr.mxu0 0.0
      %4043 = vmatpush2.msra.mxu0 0.0
      %4044 = vmatprep.subr.mxu0 0.0
      %4045 = vmatpush2.msra.mxu0 0.0
      %4046 = vmatprep.subr.mxu0 0.0
      %4047 = vmatpush2.msra.mxu0 0.0
      %4048 = vmatprep.subr.mxu0 0.0
      %4049 = vmatpush2.msra.mxu0 0.0
      %4050 = vmatprep.subr.mxu0 0.0
      %4051 = vmatpush2.msra.mxu0 0.0
      %4052 = vmatprep.subr.mxu0 0.0
      %4053 = vmatpush2.msra.mxu0 0.0
      %4054 = vmatprep.subr.mxu0 0.0
      %4055 = vmatpush2.msra.mxu0 0.0
      %4056 = vmatprep.subr.mxu0 0.0
      %4057 = vmatpush2.msra.mxu0 0.0
      %4058 = vmatprep.subr.mxu0 0.0
      %4059 = vmatpush2.msra.mxu0 0.0
      %4060 = vmatprep.mubr.f32.mxu0 0.0
      %4061 = vmatmul.mubr.f32.gmra.mxu0 %v1602
      %v4062 = vpop.f32.mrf.mxu0
      %v4063 = vadd.f32 0.0, %v4062
      %v4064 = vpop.f32.mrf.mxu0
      %4065 = vmatprep.mubr.f32.mxu0 0.0
      %4066 = vmatmul.mubr.f32.gmra.mxu0 %v1605
      %v4067 = vpop.f32.mrf.mxu0
      %v4068 = vadd.f32 0.0, %v4067
      %v4069 = vpop.f32.mrf.mxu0
      %4070 = vmatprep.mubr.f32.mxu0 0.0
      %4071 = vmatmul.mubr.f32.gmra.mxu0 %v1608
      %v4072 = vpop.f32.mrf.mxu0
      %v4073 = vadd.f32 0.0, %v4072
      %v4074 = vpop.f32.mrf.mxu0
      %4075 = vmatprep.mubr.f32.mxu0 0.0
      %4076 = vmatmul.mubr.f32.gmra.mxu0 %v1611
      %v4077 = vpop.f32.mrf.mxu0
      %v4078 = vadd.f32 0.0, %v4077
      %v4079 = vpop.f32.mrf.mxu0
      %4080 = vdwg.mxu0
      %s4081 = scalar_lea.vmem %s13, 640
      %v4082 = vld [vmem:[%s4081] sm:$0xff]
      %v4083 = vld [vmem:[%s4081 + $0x8] sm:$0xff]
      %v4084 = vld [vmem:[%s4081 + $0x10] sm:$0xff]
      %v4085 = vld [vmem:[%s4081 + $0x18] sm:$0xff]
      %v4086 = vld [vmem:[%s4081 + $0x20] sm:$0xff]
      %v4087 = vld [vmem:[%s4081 + $0x28] sm:$0xff]
      %v4088 = vld [vmem:[%s4081 + $0x30] sm:$0xff]
      %v4089 = vld [vmem:[%s4081 + $0x38] sm:$0xff]
      %v4091 = vsel %vm928, %v4082, 0
      %v4094 = vsel %vm928, %v4083, 0
      %v4097 = vsel %vm928, %v4084, 0
      %v4100 = vsel %vm928, %v4085, 0
      %v4103 = vsel %vm928, %v4086, 0
      %v4106 = vsel %vm928, %v4087, 0
      %v4109 = vsel %vm928, %v4088, 0
      %v4112 = vsel %vm928, %v4089, 0
      %4114 = vmatprep.subr.mxu0 0.0
      %4115 = vmatpush1.msra.mxu0 0.0
      %4116 = vmatprep.subr.mxu0 0.0
      %4117 = vmatpush1.msra.mxu0 0.0
      %4118 = vmatprep.subr.mxu0 0.0
      %4119 = vmatpush1.msra.mxu0 0.0
      %4120 = vmatprep.subr.mxu0 0.0
      %4121 = vmatpush1.msra.mxu0 0.0
      %4122 = vmatprep.subr.mxu0 0.0
      %4123 = vmatpush1.msra.mxu0 0.0
      %4124 = vmatprep.subr.mxu0 0.0
      %4125 = vmatpush1.msra.mxu0 0.0
      %4126 = vmatprep.subr.mxu0 0.0
      %4127 = vmatpush1.msra.mxu0 0.0
      %4128 = vmatprep.subr.mxu0 0.0
      %4129 = vmatpush1.msra.mxu0 0.0
      %4130 = vmatprep.subr.mxu0 0.0
      %4131 = vmatpush1.msra.mxu0 0.0
      %4132 = vmatprep.subr.mxu0 0.0
      %4133 = vmatpush1.msra.mxu0 0.0
      %4134 = vmatprep.subr.mxu0 0.0
      %4135 = vmatpush1.msra.mxu0 0.0
      %4136 = vmatprep.subr.mxu0 0.0
      %4137 = vmatpush1.msra.mxu0 0.0
      %4138 = vmatprep.subr.mxu0 0.0
      %4139 = vmatpush1.msra.mxu0 %v4078
      %4140 = vmatprep.subr.mxu0 0.0
      %4141 = vmatpush1.msra.mxu0 %v4073
      %4142 = vmatprep.subr.mxu0 0.0
      %4143 = vmatpush1.msra.mxu0 %v4068
      %4144 = vmatprep.subr.mxu0 0.0
      %4145 = vmatpush1.msra.mxu0 %v4063
      %4146 = vmatprep.subr.mxu0 0.0
      %4147 = vmatpush2.msra.mxu0 0.0
      %4148 = vmatprep.subr.mxu0 0.0
      %4149 = vmatpush2.msra.mxu0 0.0
      %4150 = vmatprep.subr.mxu0 0.0
      %4151 = vmatpush2.msra.mxu0 0.0
      %4152 = vmatprep.subr.mxu0 0.0
      %4153 = vmatpush2.msra.mxu0 0.0
      %4154 = vmatprep.subr.mxu0 0.0
      %4155 = vmatpush2.msra.mxu0 0.0
      %4156 = vmatprep.subr.mxu0 0.0
      %4157 = vmatpush2.msra.mxu0 0.0
      %4158 = vmatprep.subr.mxu0 0.0
      %4159 = vmatpush2.msra.mxu0 0.0
      %4160 = vmatprep.subr.mxu0 0.0
      %4161 = vmatpush2.msra.mxu0 0.0
      %4162 = vmatprep.subr.mxu0 0.0
      %4163 = vmatpush2.msra.mxu0 0.0
      %4164 = vmatprep.subr.mxu0 0.0
      %4165 = vmatpush2.msra.mxu0 0.0
      %4166 = vmatprep.subr.mxu0 0.0
      %4167 = vmatpush2.msra.mxu0 0.0
      %4168 = vmatprep.subr.mxu0 0.0
      %4169 = vmatpush2.msra.mxu0 0.0
      %4170 = vmatprep.subr.mxu0 0.0
      %4171 = vmatpush2.msra.mxu0 0.0
      %4172 = vmatprep.subr.mxu0 0.0
      %4173 = vmatpush2.msra.mxu0 0.0
      %4174 = vmatprep.subr.mxu0 0.0
      %4175 = vmatpush2.msra.mxu0 0.0
      %4176 = vmatprep.subr.mxu0 0.0
      %4177 = vmatpush2.msra.mxu0 0.0
      %4178 = vmatprep.mubr.f32.mxu0 0.0
      %4179 = vmatmul.mubr.f32.gmra.mxu0 %v4091
      %v4180 = vpop.f32.mrf.mxu0
      %v4181 = vadd.f32 0.0, %v4180
      %v4182 = vpop.f32.mrf.mxu0
      %4183 = vmatprep.mubr.f32.mxu0 0.0
      %4184 = vmatmul.mubr.f32.gmra.mxu0 %v4094
      %v4185 = vpop.f32.mrf.mxu0
      %v4186 = vadd.f32 0.0, %v4185
      %v4187 = vpop.f32.mrf.mxu0
      %4188 = vmatprep.mubr.f32.mxu0 0.0
      %4189 = vmatmul.mubr.f32.gmra.mxu0 %v4097
      %v4190 = vpop.f32.mrf.mxu0
      %v4191 = vadd.f32 0.0, %v4190
      %v4192 = vpop.f32.mrf.mxu0
      %4193 = vmatprep.mubr.f32.mxu0 0.0
      %4194 = vmatmul.mubr.f32.gmra.mxu0 %v4100
      %v4195 = vpop.f32.mrf.mxu0
      %v4196 = vadd.f32 0.0, %v4195
      %v4197 = vpop.f32.mrf.mxu0
      %4198 = vmatprep.mubr.f32.mxu0 0.0
      %4199 = vmatmul.mubr.f32.gmra.mxu0 %v4103
      %v4200 = vpop.f32.mrf.mxu0
      %v4201 = vadd.f32 0.0, %v4200
      %v4202 = vpop.f32.mrf.mxu0
      %4203 = vmatprep.mubr.f32.mxu0 0.0
      %4204 = vmatmul.mubr.f32.gmra.mxu0 %v4106
      %v4205 = vpop.f32.mrf.mxu0
      %v4206 = vadd.f32 0.0, %v4205
      %v4207 = vpop.f32.mrf.mxu0
      %4208 = vmatprep.mubr.f32.mxu0 0.0
      %4209 = vmatmul.mubr.f32.gmra.mxu0 %v4109
      %v4210 = vpop.f32.mrf.mxu0
      %v4211 = vadd.f32 0.0, %v4210
      %v4212 = vpop.f32.mrf.mxu0
      %4213 = vmatprep.mubr.f32.mxu0 0.0
      %4214 = vmatmul.mubr.f32.gmra.mxu0 %v4112
      %v4215 = vpop.f32.mrf.mxu0
      %v4216 = vadd.f32 0.0, %v4215
      %v4217 = vpop.f32.mrf.mxu0
      %4218 = vdwg.mxu0
      %v4219 = vadd.f32 %v3979, %v4181
      %v4220 = vadd.f32 %v3980, %v4186
      %v4221 = vadd.f32 %v3981, %v4191
      %v4222 = vadd.f32 %v3982, %v4196
      %v4223 = vadd.f32 %v3983, %v4201
      %v4224 = vadd.f32 %v3984, %v4206
      %v4225 = vadd.f32 %v3985, %v4211
      %v4226 = vadd.f32 %v3986, %v4216
      %s4227 = scalar_lea.vmem %s12, 704
      %v4228 = vld [vmem:[%s4227] sm:$0xff]
      %v4229 = vld [vmem:[%s4227 + $0x8] sm:$0xff]
      %v4230 = vld [vmem:[%s4227 + $0x10] sm:$0xff]
      %v4231 = vld [vmem:[%s4227 + $0x18] sm:$0xff]
      %v4232 = vld [vmem:[%s4227 + $0x20] sm:$0xff]
      %v4233 = vld [vmem:[%s4227 + $0x28] sm:$0xff]
      %v4234 = vld [vmem:[%s4227 + $0x30] sm:$0xff]
      %v4235 = vld [vmem:[%s4227 + $0x38] sm:$0xff]
      %4236 = vmatprep.subr.mxu0 0.0
      %4237 = vmatpush1.msra.mxu0 0.0
      %4238 = vmatprep.subr.mxu0 0.0
      %4239 = vmatpush1.msra.mxu0 0.0
      %4240 = vmatprep.subr.mxu0 0.0
      %4241 = vmatpush1.msra.mxu0 0.0
      %4242 = vmatprep.subr.mxu0 0.0
      %4243 = vmatpush1.msra.mxu0 0.0
      %4244 = vmatprep.subr.mxu0 0.0
      %4245 = vmatpush1.msra.mxu0 0.0
      %4246 = vmatprep.subr.mxu0 0.0
      %4247 = vmatpush1.msra.mxu0 0.0
      %4248 = vmatprep.subr.mxu0 0.0
      %4249 = vmatpush1.msra.mxu0 0.0
      %4250 = vmatprep.subr.mxu0 0.0
      %4251 = vmatpush1.msra.mxu0 0.0
      %4252 = vmatprep.subr.mxu0 0.0
      %4253 = vmatpush1.msra.mxu0 %v4235
      %4254 = vmatprep.subr.mxu0 0.0
      %4255 = vmatpush1.msra.mxu0 %v4234
      %4256 = vmatprep.subr.mxu0 0.0
      %4257 = vmatpush1.msra.mxu0 %v4233
      %4258 = vmatprep.subr.mxu0 0.0
      %4259 = vmatpush1.msra.mxu0 %v4232
      %4260 = vmatprep.subr.mxu0 0.0
      %4261 = vmatpush1.msra.mxu0 %v4231
      %4262 = vmatprep.subr.mxu0 0.0
      %4263 = vmatpush1.msra.mxu0 %v4230
      %4264 = vmatprep.subr.mxu0 0.0
      %4265 = vmatpush1.msra.mxu0 %v4229
      %4266 = vmatprep.subr.mxu0 0.0
      %4267 = vmatpush1.msra.mxu0 %v4228
      %4268 = vmatprep.subr.mxu0 0.0
      %4269 = vmatpush2.msra.mxu0 0.0
      %4270 = vmatprep.subr.mxu0 0.0
      %4271 = vmatpush2.msra.mxu0 0.0
      %4272 = vmatprep.subr.mxu0 0.0
      %4273 = vmatpush2.msra.mxu0 0.0
      %4274 = vmatprep.subr.mxu0 0.0
      %4275 = vmatpush2.msra.mxu0 0.0
      %4276 = vmatprep.subr.mxu0 0.0
      %4277 = vmatpush2.msra.mxu0 0.0
      %4278 = vmatprep.subr.mxu0 0.0
      %4279 = vmatpush2.msra.mxu0 0.0
      %4280 = vmatprep.subr.mxu0 0.0
      %4281 = vmatpush2.msra.mxu0 0.0
      %4282 = vmatprep.subr.mxu0 0.0
      %4283 = vmatpush2.msra.mxu0 0.0
      %4284 = vmatprep.subr.mxu0 0.0
      %4285 = vmatpush2.msra.mxu0 0.0
      %4286 = vmatprep.subr.mxu0 0.0
      %4287 = vmatpush2.msra.mxu0 0.0
      %4288 = vmatprep.subr.mxu0 0.0
      %4289 = vmatpush2.msra.mxu0 0.0
      %4290 = vmatprep.subr.mxu0 0.0
      %4291 = vmatpush2.msra.mxu0 0.0
      %4292 = vmatprep.subr.mxu0 0.0
      %4293 = vmatpush2.msra.mxu0 0.0
      %4294 = vmatprep.subr.mxu0 0.0
      %4295 = vmatpush2.msra.mxu0 0.0
      %4296 = vmatprep.subr.mxu0 0.0
      %4297 = vmatpush2.msra.mxu0 0.0
      %4298 = vmatprep.subr.mxu0 0.0
      %4299 = vmatpush2.msra.mxu0 0.0
      %4300 = vmatprep.mubr.f32.mxu0 0.0
      %4301 = vmatmul.mubr.f32.gmra.mxu0 %v1602
      %v4302 = vpop.f32.mrf.mxu0
      %v4303 = vadd.f32 0.0, %v4302
      %v4304 = vpop.f32.mrf.mxu0
      %4305 = vmatprep.mubr.f32.mxu0 0.0
      %4306 = vmatmul.mubr.f32.gmra.mxu0 %v1605
      %v4307 = vpop.f32.mrf.mxu0
      %v4308 = vadd.f32 0.0, %v4307
      %v4309 = vpop.f32.mrf.mxu0
      %4310 = vmatprep.mubr.f32.mxu0 0.0
      %4311 = vmatmul.mubr.f32.gmra.mxu0 %v1608
      %v4312 = vpop.f32.mrf.mxu0
      %v4313 = vadd.f32 0.0, %v4312
      %v4314 = vpop.f32.mrf.mxu0
      %4315 = vmatprep.mubr.f32.mxu0 0.0
      %4316 = vmatmul.mubr.f32.gmra.mxu0 %v1611
      %v4317 = vpop.f32.mrf.mxu0
      %v4318 = vadd.f32 0.0, %v4317
      %v4319 = vpop.f32.mrf.mxu0
      %4320 = vdwg.mxu0
      %s4321 = scalar_lea.vmem %s13, 704
      %v4322 = vld [vmem:[%s4321] sm:$0xff]
      %v4323 = vld [vmem:[%s4321 + $0x8] sm:$0xff]
      %v4324 = vld [vmem:[%s4321 + $0x10] sm:$0xff]
      %v4325 = vld [vmem:[%s4321 + $0x18] sm:$0xff]
      %v4326 = vld [vmem:[%s4321 + $0x20] sm:$0xff]
      %v4327 = vld [vmem:[%s4321 + $0x28] sm:$0xff]
      %v4328 = vld [vmem:[%s4321 + $0x30] sm:$0xff]
      %v4329 = vld [vmem:[%s4321 + $0x38] sm:$0xff]
      %v4331 = vsel %vm928, %v4322, 0
      %v4334 = vsel %vm928, %v4323, 0
      %v4337 = vsel %vm928, %v4324, 0
      %v4340 = vsel %vm928, %v4325, 0
      %v4343 = vsel %vm928, %v4326, 0
      %v4346 = vsel %vm928, %v4327, 0
      %v4349 = vsel %vm928, %v4328, 0
      %v4352 = vsel %vm928, %v4329, 0
      %4354 = vmatprep.subr.mxu0 0.0
      %4355 = vmatpush1.msra.mxu0 0.0
      %4356 = vmatprep.subr.mxu0 0.0
      %4357 = vmatpush1.msra.mxu0 0.0
      %4358 = vmatprep.subr.mxu0 0.0
      %4359 = vmatpush1.msra.mxu0 0.0
      %4360 = vmatprep.subr.mxu0 0.0
      %4361 = vmatpush1.msra.mxu0 0.0
      %4362 = vmatprep.subr.mxu0 0.0
      %4363 = vmatpush1.msra.mxu0 0.0
      %4364 = vmatprep.subr.mxu0 0.0
      %4365 = vmatpush1.msra.mxu0 0.0
      %4366 = vmatprep.subr.mxu0 0.0
      %4367 = vmatpush1.msra.mxu0 0.0
      %4368 = vmatprep.subr.mxu0 0.0
      %4369 = vmatpush1.msra.mxu0 0.0
      %4370 = vmatprep.subr.mxu0 0.0
      %4371 = vmatpush1.msra.mxu0 0.0
      %4372 = vmatprep.subr.mxu0 0.0
      %4373 = vmatpush1.msra.mxu0 0.0
      %4374 = vmatprep.subr.mxu0 0.0
      %4375 = vmatpush1.msra.mxu0 0.0
      %4376 = vmatprep.subr.mxu0 0.0
      %4377 = vmatpush1.msra.mxu0 0.0
      %4378 = vmatprep.subr.mxu0 0.0
      %4379 = vmatpush1.msra.mxu0 %v4318
      %4380 = vmatprep.subr.mxu0 0.0
      %4381 = vmatpush1.msra.mxu0 %v4313
      %4382 = vmatprep.subr.mxu0 0.0
      %4383 = vmatpush1.msra.mxu0 %v4308
      %4384 = vmatprep.subr.mxu0 0.0
      %4385 = vmatpush1.msra.mxu0 %v4303
      %4386 = vmatprep.subr.mxu0 0.0
      %4387 = vmatpush2.msra.mxu0 0.0
      %4388 = vmatprep.subr.mxu0 0.0
      %4389 = vmatpush2.msra.mxu0 0.0
      %4390 = vmatprep.subr.mxu0 0.0
      %4391 = vmatpush2.msra.mxu0 0.0
      %4392 = vmatprep.subr.mxu0 0.0
      %4393 = vmatpush2.msra.mxu0 0.0
      %4394 = vmatprep.subr.mxu0 0.0
      %4395 = vmatpush2.msra.mxu0 0.0
      %4396 = vmatprep.subr.mxu0 0.0
      %4397 = vmatpush2.msra.mxu0 0.0
      %4398 = vmatprep.subr.mxu0 0.0
      %4399 = vmatpush2.msra.mxu0 0.0
      %4400 = vmatprep.subr.mxu0 0.0
      %4401 = vmatpush2.msra.mxu0 0.0
      %4402 = vmatprep.subr.mxu0 0.0
      %4403 = vmatpush2.msra.mxu0 0.0
      %4404 = vmatprep.subr.mxu0 0.0
      %4405 = vmatpush2.msra.mxu0 0.0
      %4406 = vmatprep.subr.mxu0 0.0
      %4407 = vmatpush2.msra.mxu0 0.0
      %4408 = vmatprep.subr.mxu0 0.0
      %4409 = vmatpush2.msra.mxu0 0.0
      %4410 = vmatprep.subr.mxu0 0.0
      %4411 = vmatpush2.msra.mxu0 0.0
      %4412 = vmatprep.subr.mxu0 0.0
      %4413 = vmatpush2.msra.mxu0 0.0
      %4414 = vmatprep.subr.mxu0 0.0
      %4415 = vmatpush2.msra.mxu0 0.0
      %4416 = vmatprep.subr.mxu0 0.0
      %4417 = vmatpush2.msra.mxu0 0.0
      %4418 = vmatprep.mubr.f32.mxu0 0.0
      %4419 = vmatmul.mubr.f32.gmra.mxu0 %v4331
      %v4420 = vpop.f32.mrf.mxu0
      %v4421 = vadd.f32 0.0, %v4420
      %v4422 = vpop.f32.mrf.mxu0
      %4423 = vmatprep.mubr.f32.mxu0 0.0
      %4424 = vmatmul.mubr.f32.gmra.mxu0 %v4334
      %v4425 = vpop.f32.mrf.mxu0
      %v4426 = vadd.f32 0.0, %v4425
      %v4427 = vpop.f32.mrf.mxu0
      %4428 = vmatprep.mubr.f32.mxu0 0.0
      %4429 = vmatmul.mubr.f32.gmra.mxu0 %v4337
      %v4430 = vpop.f32.mrf.mxu0
      %v4431 = vadd.f32 0.0, %v4430
      %v4432 = vpop.f32.mrf.mxu0
      %4433 = vmatprep.mubr.f32.mxu0 0.0
      %4434 = vmatmul.mubr.f32.gmra.mxu0 %v4340
      %v4435 = vpop.f32.mrf.mxu0
      %v4436 = vadd.f32 0.0, %v4435
      %v4437 = vpop.f32.mrf.mxu0
      %4438 = vmatprep.mubr.f32.mxu0 0.0
      %4439 = vmatmul.mubr.f32.gmra.mxu0 %v4343
      %v4440 = vpop.f32.mrf.mxu0
      %v4441 = vadd.f32 0.0, %v4440
      %v4442 = vpop.f32.mrf.mxu0
      %4443 = vmatprep.mubr.f32.mxu0 0.0
      %4444 = vmatmul.mubr.f32.gmra.mxu0 %v4346
      %v4445 = vpop.f32.mrf.mxu0
      %v4446 = vadd.f32 0.0, %v4445
      %v4447 = vpop.f32.mrf.mxu0
      %4448 = vmatprep.mubr.f32.mxu0 0.0
      %4449 = vmatmul.mubr.f32.gmra.mxu0 %v4349
      %v4450 = vpop.f32.mrf.mxu0
      %v4451 = vadd.f32 0.0, %v4450
      %v4452 = vpop.f32.mrf.mxu0
      %4453 = vmatprep.mubr.f32.mxu0 0.0
      %4454 = vmatmul.mubr.f32.gmra.mxu0 %v4352
      %v4455 = vpop.f32.mrf.mxu0
      %v4456 = vadd.f32 0.0, %v4455
      %v4457 = vpop.f32.mrf.mxu0
      %4458 = vdwg.mxu0
      %v4459 = vadd.f32 %v4219, %v4421
      %v4460 = vadd.f32 %v4220, %v4426
      %v4461 = vadd.f32 %v4221, %v4431
      %v4462 = vadd.f32 %v4222, %v4436
      %v4463 = vadd.f32 %v4223, %v4441
      %v4464 = vadd.f32 %v4224, %v4446
      %v4465 = vadd.f32 %v4225, %v4451
      %v4466 = vadd.f32 %v4226, %v4456
      %s4467 = scalar_lea.vmem %s12, 768
      %v4468 = vld [vmem:[%s4467] sm:$0xff]
      %v4469 = vld [vmem:[%s4467 + $0x8] sm:$0xff]
      %v4470 = vld [vmem:[%s4467 + $0x10] sm:$0xff]
      %v4471 = vld [vmem:[%s4467 + $0x18] sm:$0xff]
      %v4472 = vld [vmem:[%s4467 + $0x20] sm:$0xff]
      %v4473 = vld [vmem:[%s4467 + $0x28] sm:$0xff]
      %v4474 = vld [vmem:[%s4467 + $0x30] sm:$0xff]
      %v4475 = vld [vmem:[%s4467 + $0x38] sm:$0xff]
      %4476 = vmatprep.subr.mxu0 0.0
      %4477 = vmatpush1.msra.mxu0 0.0
      %4478 = vmatprep.subr.mxu0 0.0
      %4479 = vmatpush1.msra.mxu0 0.0
      %4480 = vmatprep.subr.mxu0 0.0
      %4481 = vmatpush1.msra.mxu0 0.0
      %4482 = vmatprep.subr.mxu0 0.0
      %4483 = vmatpush1.msra.mxu0 0.0
      %4484 = vmatprep.subr.mxu0 0.0
      %4485 = vmatpush1.msra.mxu0 0.0
      %4486 = vmatprep.subr.mxu0 0.0
      %4487 = vmatpush1.msra.mxu0 0.0
      %4488 = vmatprep.subr.mxu0 0.0
      %4489 = vmatpush1.msra.mxu0 0.0
      %4490 = vmatprep.subr.mxu0 0.0
      %4491 = vmatpush1.msra.mxu0 0.0
      %4492 = vmatprep.subr.mxu0 0.0
      %4493 = vmatpush1.msra.mxu0 %v4475
      %4494 = vmatprep.subr.mxu0 0.0
      %4495 = vmatpush1.msra.mxu0 %v4474
      %4496 = vmatprep.subr.mxu0 0.0
      %4497 = vmatpush1.msra.mxu0 %v4473
      %4498 = vmatprep.subr.mxu0 0.0
      %4499 = vmatpush1.msra.mxu0 %v4472
      %4500 = vmatprep.subr.mxu0 0.0
      %4501 = vmatpush1.msra.mxu0 %v4471
      %4502 = vmatprep.subr.mxu0 0.0
      %4503 = vmatpush1.msra.mxu0 %v4470
      %4504 = vmatprep.subr.mxu0 0.0
      %4505 = vmatpush1.msra.mxu0 %v4469
      %4506 = vmatprep.subr.mxu0 0.0
      %4507 = vmatpush1.msra.mxu0 %v4468
      %4508 = vmatprep.subr.mxu0 0.0
      %4509 = vmatpush2.msra.mxu0 0.0
      %4510 = vmatprep.subr.mxu0 0.0
      %4511 = vmatpush2.msra.mxu0 0.0
      %4512 = vmatprep.subr.mxu0 0.0
      %4513 = vmatpush2.msra.mxu0 0.0
      %4514 = vmatprep.subr.mxu0 0.0
      %4515 = vmatpush2.msra.mxu0 0.0
      %4516 = vmatprep.subr.mxu0 0.0
      %4517 = vmatpush2.msra.mxu0 0.0
      %4518 = vmatprep.subr.mxu0 0.0
      %4519 = vmatpush2.msra.mxu0 0.0
      %4520 = vmatprep.subr.mxu0 0.0
      %4521 = vmatpush2.msra.mxu0 0.0
      %4522 = vmatprep.subr.mxu0 0.0
      %4523 = vmatpush2.msra.mxu0 0.0
      %4524 = vmatprep.subr.mxu0 0.0
      %4525 = vmatpush2.msra.mxu0 0.0
      %4526 = vmatprep.subr.mxu0 0.0
      %4527 = vmatpush2.msra.mxu0 0.0
      %4528 = vmatprep.subr.mxu0 0.0
      %4529 = vmatpush2.msra.mxu0 0.0
      %4530 = vmatprep.subr.mxu0 0.0
      %4531 = vmatpush2.msra.mxu0 0.0
      %4532 = vmatprep.subr.mxu0 0.0
      %4533 = vmatpush2.msra.mxu0 0.0
      %4534 = vmatprep.subr.mxu0 0.0
      %4535 = vmatpush2.msra.mxu0 0.0
      %4536 = vmatprep.subr.mxu0 0.0
      %4537 = vmatpush2.msra.mxu0 0.0
      %4538 = vmatprep.subr.mxu0 0.0
      %4539 = vmatpush2.msra.mxu0 0.0
      %4540 = vmatprep.mubr.f32.mxu0 0.0
      %4541 = vmatmul.mubr.f32.gmra.mxu0 %v1602
      %v4542 = vpop.f32.mrf.mxu0
      %v4543 = vadd.f32 0.0, %v4542
      %v4544 = vpop.f32.mrf.mxu0
      %4545 = vmatprep.mubr.f32.mxu0 0.0
      %4546 = vmatmul.mubr.f32.gmra.mxu0 %v1605
      %v4547 = vpop.f32.mrf.mxu0
      %v4548 = vadd.f32 0.0, %v4547
      %v4549 = vpop.f32.mrf.mxu0
      %4550 = vmatprep.mubr.f32.mxu0 0.0
      %4551 = vmatmul.mubr.f32.gmra.mxu0 %v1608
      %v4552 = vpop.f32.mrf.mxu0
      %v4553 = vadd.f32 0.0, %v4552
      %v4554 = vpop.f32.mrf.mxu0
      %4555 = vmatprep.mubr.f32.mxu0 0.0
      %4556 = vmatmul.mubr.f32.gmra.mxu0 %v1611
      %v4557 = vpop.f32.mrf.mxu0
      %v4558 = vadd.f32 0.0, %v4557
      %v4559 = vpop.f32.mrf.mxu0
      %4560 = vdwg.mxu0
      %s4561 = scalar_lea.vmem %s13, 768
      %v4562 = vld [vmem:[%s4561] sm:$0xff]
      %v4563 = vld [vmem:[%s4561 + $0x8] sm:$0xff]
      %v4564 = vld [vmem:[%s4561 + $0x10] sm:$0xff]
      %v4565 = vld [vmem:[%s4561 + $0x18] sm:$0xff]
      %v4566 = vld [vmem:[%s4561 + $0x20] sm:$0xff]
      %v4567 = vld [vmem:[%s4561 + $0x28] sm:$0xff]
      %v4568 = vld [vmem:[%s4561 + $0x30] sm:$0xff]
      %v4569 = vld [vmem:[%s4561 + $0x38] sm:$0xff]
      %v4571 = vsel %vm928, %v4562, 0
      %v4574 = vsel %vm928, %v4563, 0
      %v4577 = vsel %vm928, %v4564, 0
      %v4580 = vsel %vm928, %v4565, 0
      %v4583 = vsel %vm928, %v4566, 0
      %v4586 = vsel %vm928, %v4567, 0
      %v4589 = vsel %vm928, %v4568, 0
      %v4592 = vsel %vm928, %v4569, 0
      %4594 = vmatprep.subr.mxu0 0.0
      %4595 = vmatpush1.msra.mxu0 0.0
      %4596 = vmatprep.subr.mxu0 0.0
      %4597 = vmatpush1.msra.mxu0 0.0
      %4598 = vmatprep.subr.mxu0 0.0
      %4599 = vmatpush1.msra.mxu0 0.0
      %4600 = vmatprep.subr.mxu0 0.0
      %4601 = vmatpush1.msra.mxu0 0.0
      %4602 = vmatprep.subr.mxu0 0.0
      %4603 = vmatpush1.msra.mxu0 0.0
      %4604 = vmatprep.subr.mxu0 0.0
      %4605 = vmatpush1.msra.mxu0 0.0
      %4606 = vmatprep.subr.mxu0 0.0
      %4607 = vmatpush1.msra.mxu0 0.0
      %4608 = vmatprep.subr.mxu0 0.0
      %4609 = vmatpush1.msra.mxu0 0.0
      %4610 = vmatprep.subr.mxu0 0.0
      %4611 = vmatpush1.msra.mxu0 0.0
      %4612 = vmatprep.subr.mxu0 0.0
      %4613 = vmatpush1.msra.mxu0 0.0
      %4614 = vmatprep.subr.mxu0 0.0
      %4615 = vmatpush1.msra.mxu0 0.0
      %4616 = vmatprep.subr.mxu0 0.0
      %4617 = vmatpush1.msra.mxu0 0.0
      %4618 = vmatprep.subr.mxu0 0.0
      %4619 = vmatpush1.msra.mxu0 %v4558
      %4620 = vmatprep.subr.mxu0 0.0
      %4621 = vmatpush1.msra.mxu0 %v4553
      %4622 = vmatprep.subr.mxu0 0.0
      %4623 = vmatpush1.msra.mxu0 %v4548
      %4624 = vmatprep.subr.mxu0 0.0
      %4625 = vmatpush1.msra.mxu0 %v4543
      %4626 = vmatprep.subr.mxu0 0.0
      %4627 = vmatpush2.msra.mxu0 0.0
      %4628 = vmatprep.subr.mxu0 0.0
      %4629 = vmatpush2.msra.mxu0 0.0
      %4630 = vmatprep.subr.mxu0 0.0
      %4631 = vmatpush2.msra.mxu0 0.0
      %4632 = vmatprep.subr.mxu0 0.0
      %4633 = vmatpush2.msra.mxu0 0.0
      %4634 = vmatprep.subr.mxu0 0.0
      %4635 = vmatpush2.msra.mxu0 0.0
      %4636 = vmatprep.subr.mxu0 0.0
      %4637 = vmatpush2.msra.mxu0 0.0
      %4638 = vmatprep.subr.mxu0 0.0
      %4639 = vmatpush2.msra.mxu0 0.0
      %4640 = vmatprep.subr.mxu0 0.0
      %4641 = vmatpush2.msra.mxu0 0.0
      %4642 = vmatprep.subr.mxu0 0.0
      %4643 = vmatpush2.msra.mxu0 0.0
      %4644 = vmatprep.subr.mxu0 0.0
      %4645 = vmatpush2.msra.mxu0 0.0
      %4646 = vmatprep.subr.mxu0 0.0
      %4647 = vmatpush2.msra.mxu0 0.0
      %4648 = vmatprep.subr.mxu0 0.0
      %4649 = vmatpush2.msra.mxu0 0.0
      %4650 = vmatprep.subr.mxu0 0.0
      %4651 = vmatpush2.msra.mxu0 0.0
      %4652 = vmatprep.subr.mxu0 0.0
      %4653 = vmatpush2.msra.mxu0 0.0
      %4654 = vmatprep.subr.mxu0 0.0
      %4655 = vmatpush2.msra.mxu0 0.0
      %4656 = vmatprep.subr.mxu0 0.0
      %4657 = vmatpush2.msra.mxu0 0.0
      %4658 = vmatprep.mubr.f32.mxu0 0.0
      %4659 = vmatmul.mubr.f32.gmra.mxu0 %v4571
      %v4660 = vpop.f32.mrf.mxu0
      %v4661 = vadd.f32 0.0, %v4660
      %v4662 = vpop.f32.mrf.mxu0
      %4663 = vmatprep.mubr.f32.mxu0 0.0
      %4664 = vmatmul.mubr.f32.gmra.mxu0 %v4574
      %v4665 = vpop.f32.mrf.mxu0
      %v4666 = vadd.f32 0.0, %v4665
      %v4667 = vpop.f32.mrf.mxu0
      %4668 = vmatprep.mubr.f32.mxu0 0.0
      %4669 = vmatmul.mubr.f32.gmra.mxu0 %v4577
      %v4670 = vpop.f32.mrf.mxu0
      %v4671 = vadd.f32 0.0, %v4670
      %v4672 = vpop.f32.mrf.mxu0
      %4673 = vmatprep.mubr.f32.mxu0 0.0
      %4674 = vmatmul.mubr.f32.gmra.mxu0 %v4580
      %v4675 = vpop.f32.mrf.mxu0
      %v4676 = vadd.f32 0.0, %v4675
      %v4677 = vpop.f32.mrf.mxu0
      %4678 = vmatprep.mubr.f32.mxu0 0.0
      %4679 = vmatmul.mubr.f32.gmra.mxu0 %v4583
      %v4680 = vpop.f32.mrf.mxu0
      %v4681 = vadd.f32 0.0, %v4680
      %v4682 = vpop.f32.mrf.mxu0
      %4683 = vmatprep.mubr.f32.mxu0 0.0
      %4684 = vmatmul.mubr.f32.gmra.mxu0 %v4586
      %v4685 = vpop.f32.mrf.mxu0
      %v4686 = vadd.f32 0.0, %v4685
      %v4687 = vpop.f32.mrf.mxu0
      %4688 = vmatprep.mubr.f32.mxu0 0.0
      %4689 = vmatmul.mubr.f32.gmra.mxu0 %v4589
      %v4690 = vpop.f32.mrf.mxu0
      %v4691 = vadd.f32 0.0, %v4690
      %v4692 = vpop.f32.mrf.mxu0
      %4693 = vmatprep.mubr.f32.mxu0 0.0
      %4694 = vmatmul.mubr.f32.gmra.mxu0 %v4592
      %v4695 = vpop.f32.mrf.mxu0
      %v4696 = vadd.f32 0.0, %v4695
      %v4697 = vpop.f32.mrf.mxu0
      %4698 = vdwg.mxu0
      %v4699 = vadd.f32 %v4459, %v4661
      %v4700 = vadd.f32 %v4460, %v4666
      %v4701 = vadd.f32 %v4461, %v4671
      %v4702 = vadd.f32 %v4462, %v4676
      %v4703 = vadd.f32 %v4463, %v4681
      %v4704 = vadd.f32 %v4464, %v4686
      %v4705 = vadd.f32 %v4465, %v4691
      %v4706 = vadd.f32 %v4466, %v4696
      %s4707 = scalar_lea.vmem %s12, 832
      %v4708 = vld [vmem:[%s4707] sm:$0xff]
      %v4709 = vld [vmem:[%s4707 + $0x8] sm:$0xff]
      %v4710 = vld [vmem:[%s4707 + $0x10] sm:$0xff]
      %v4711 = vld [vmem:[%s4707 + $0x18] sm:$0xff]
      %v4712 = vld [vmem:[%s4707 + $0x20] sm:$0xff]
      %v4713 = vld [vmem:[%s4707 + $0x28] sm:$0xff]
      %v4714 = vld [vmem:[%s4707 + $0x30] sm:$0xff]
      %v4715 = vld [vmem:[%s4707 + $0x38] sm:$0xff]
      %4716 = vmatprep.subr.mxu0 0.0
      %4717 = vmatpush1.msra.mxu0 0.0
      %4718 = vmatprep.subr.mxu0 0.0
      %4719 = vmatpush1.msra.mxu0 0.0
      %4720 = vmatprep.subr.mxu0 0.0
      %4721 = vmatpush1.msra.mxu0 0.0
      %4722 = vmatprep.subr.mxu0 0.0
      %4723 = vmatpush1.msra.mxu0 0.0
      %4724 = vmatprep.subr.mxu0 0.0
      %4725 = vmatpush1.msra.mxu0 0.0
      %4726 = vmatprep.subr.mxu0 0.0
      %4727 = vmatpush1.msra.mxu0 0.0
      %4728 = vmatprep.subr.mxu0 0.0
      %4729 = vmatpush1.msra.mxu0 0.0
      %4730 = vmatprep.subr.mxu0 0.0
      %4731 = vmatpush1.msra.mxu0 0.0
      %4732 = vmatprep.subr.mxu0 0.0
      %4733 = vmatpush1.msra.mxu0 %v4715
      %4734 = vmatprep.subr.mxu0 0.0
      %4735 = vmatpush1.msra.mxu0 %v4714
      %4736 = vmatprep.subr.mxu0 0.0
      %4737 = vmatpush1.msra.mxu0 %v4713
      %4738 = vmatprep.subr.mxu0 0.0
      %4739 = vmatpush1.msra.mxu0 %v4712
      %4740 = vmatprep.subr.mxu0 0.0
      %4741 = vmatpush1.msra.mxu0 %v4711
      %4742 = vmatprep.subr.mxu0 0.0
      %4743 = vmatpush1.msra.mxu0 %v4710
      %4744 = vmatprep.subr.mxu0 0.0
      %4745 = vmatpush1.msra.mxu0 %v4709
      %4746 = vmatprep.subr.mxu0 0.0
      %4747 = vmatpush1.msra.mxu0 %v4708
      %4748 = vmatprep.subr.mxu0 0.0
      %4749 = vmatpush2.msra.mxu0 0.0
      %4750 = vmatprep.subr.mxu0 0.0
      %4751 = vmatpush2.msra.mxu0 0.0
      %4752 = vmatprep.subr.mxu0 0.0
      %4753 = vmatpush2.msra.mxu0 0.0
      %4754 = vmatprep.subr.mxu0 0.0
      %4755 = vmatpush2.msra.mxu0 0.0
      %4756 = vmatprep.subr.mxu0 0.0
      %4757 = vmatpush2.msra.mxu0 0.0
      %4758 = vmatprep.subr.mxu0 0.0
      %4759 = vmatpush2.msra.mxu0 0.0
      %4760 = vmatprep.subr.mxu0 0.0
      %4761 = vmatpush2.msra.mxu0 0.0
      %4762 = vmatprep.subr.mxu0 0.0
      %4763 = vmatpush2.msra.mxu0 0.0
      %4764 = vmatprep.subr.mxu0 0.0
      %4765 = vmatpush2.msra.mxu0 0.0
      %4766 = vmatprep.subr.mxu0 0.0
      %4767 = vmatpush2.msra.mxu0 0.0
      %4768 = vmatprep.subr.mxu0 0.0
      %4769 = vmatpush2.msra.mxu0 0.0
      %4770 = vmatprep.subr.mxu0 0.0
      %4771 = vmatpush2.msra.mxu0 0.0
      %4772 = vmatprep.subr.mxu0 0.0
      %4773 = vmatpush2.msra.mxu0 0.0
      %4774 = vmatprep.subr.mxu0 0.0
      %4775 = vmatpush2.msra.mxu0 0.0
      %4776 = vmatprep.subr.mxu0 0.0
      %4777 = vmatpush2.msra.mxu0 0.0
      %4778 = vmatprep.subr.mxu0 0.0
      %4779 = vmatpush2.msra.mxu0 0.0
      %4780 = vmatprep.mubr.f32.mxu0 0.0
      %4781 = vmatmul.mubr.f32.gmra.mxu0 %v1602
      %v4782 = vpop.f32.mrf.mxu0
      %v4783 = vadd.f32 0.0, %v4782
      %v4784 = vpop.f32.mrf.mxu0
      %4785 = vmatprep.mubr.f32.mxu0 0.0
      %4786 = vmatmul.mubr.f32.gmra.mxu0 %v1605
      %v4787 = vpop.f32.mrf.mxu0
      %v4788 = vadd.f32 0.0, %v4787
      %v4789 = vpop.f32.mrf.mxu0
      %4790 = vmatprep.mubr.f32.mxu0 0.0
      %4791 = vmatmul.mubr.f32.gmra.mxu0 %v1608
      %v4792 = vpop.f32.mrf.mxu0
      %v4793 = vadd.f32 0.0, %v4792
      %v4794 = vpop.f32.mrf.mxu0
      %4795 = vmatprep.mubr.f32.mxu0 0.0
      %4796 = vmatmul.mubr.f32.gmra.mxu0 %v1611
      %v4797 = vpop.f32.mrf.mxu0
      %v4798 = vadd.f32 0.0, %v4797
      %v4799 = vpop.f32.mrf.mxu0
      %4800 = vdwg.mxu0
      %s4801 = scalar_lea.vmem %s13, 832
      %v4802 = vld [vmem:[%s4801] sm:$0xff]
      %v4803 = vld [vmem:[%s4801 + $0x8] sm:$0xff]
      %v4804 = vld [vmem:[%s4801 + $0x10] sm:$0xff]
      %v4805 = vld [vmem:[%s4801 + $0x18] sm:$0xff]
      %v4806 = vld [vmem:[%s4801 + $0x20] sm:$0xff]
      %v4807 = vld [vmem:[%s4801 + $0x28] sm:$0xff]
      %v4808 = vld [vmem:[%s4801 + $0x30] sm:$0xff]
      %v4809 = vld [vmem:[%s4801 + $0x38] sm:$0xff]
      %v4811 = vsel %vm928, %v4802, 0
      %v4814 = vsel %vm928, %v4803, 0
      %v4817 = vsel %vm928, %v4804, 0
      %v4820 = vsel %vm928, %v4805, 0
      %v4823 = vsel %vm928, %v4806, 0
      %v4826 = vsel %vm928, %v4807, 0
      %v4829 = vsel %vm928, %v4808, 0
      %v4832 = vsel %vm928, %v4809, 0
      %4834 = vmatprep.subr.mxu0 0.0
      %4835 = vmatpush1.msra.mxu0 0.0
      %4836 = vmatprep.subr.mxu0 0.0
      %4837 = vmatpush1.msra.mxu0 0.0
      %4838 = vmatprep.subr.mxu0 0.0
      %4839 = vmatpush1.msra.mxu0 0.0
      %4840 = vmatprep.subr.mxu0 0.0
      %4841 = vmatpush1.msra.mxu0 0.0
      %4842 = vmatprep.subr.mxu0 0.0
      %4843 = vmatpush1.msra.mxu0 0.0
      %4844 = vmatprep.subr.mxu0 0.0
      %4845 = vmatpush1.msra.mxu0 0.0
      %4846 = vmatprep.subr.mxu0 0.0
      %4847 = vmatpush1.msra.mxu0 0.0
      %4848 = vmatprep.subr.mxu0 0.0
      %4849 = vmatpush1.msra.mxu0 0.0
      %4850 = vmatprep.subr.mxu0 0.0
      %4851 = vmatpush1.msra.mxu0 0.0
      %4852 = vmatprep.subr.mxu0 0.0
      %4853 = vmatpush1.msra.mxu0 0.0
      %4854 = vmatprep.subr.mxu0 0.0
      %4855 = vmatpush1.msra.mxu0 0.0
      %4856 = vmatprep.subr.mxu0 0.0
      %4857 = vmatpush1.msra.mxu0 0.0
      %4858 = vmatprep.subr.mxu0 0.0
      %4859 = vmatpush1.msra.mxu0 %v4798
      %4860 = vmatprep.subr.mxu0 0.0
      %4861 = vmatpush1.msra.mxu0 %v4793
      %4862 = vmatprep.subr.mxu0 0.0
      %4863 = vmatpush1.msra.mxu0 %v4788
      %4864 = vmatprep.subr.mxu0 0.0
      %4865 = vmatpush1.msra.mxu0 %v4783
      %4866 = vmatprep.subr.mxu0 0.0
      %4867 = vmatpush2.msra.mxu0 0.0
      %4868 = vmatprep.subr.mxu0 0.0
      %4869 = vmatpush2.msra.mxu0 0.0
      %4870 = vmatprep.subr.mxu0 0.0
      %4871 = vmatpush2.msra.mxu0 0.0
      %4872 = vmatprep.subr.mxu0 0.0
      %4873 = vmatpush2.msra.mxu0 0.0
      %4874 = vmatprep.subr.mxu0 0.0
      %4875 = vmatpush2.msra.mxu0 0.0
      %4876 = vmatprep.subr.mxu0 0.0
      %4877 = vmatpush2.msra.mxu0 0.0
      %4878 = vmatprep.subr.mxu0 0.0
      %4879 = vmatpush2.msra.mxu0 0.0
      %4880 = vmatprep.subr.mxu0 0.0
      %4881 = vmatpush2.msra.mxu0 0.0
      %4882 = vmatprep.subr.mxu0 0.0
      %4883 = vmatpush2.msra.mxu0 0.0
      %4884 = vmatprep.subr.mxu0 0.0
      %4885 = vmatpush2.msra.mxu0 0.0
      %4886 = vmatprep.subr.mxu0 0.0
      %4887 = vmatpush2.msra.mxu0 0.0
      %4888 = vmatprep.subr.mxu0 0.0
      %4889 = vmatpush2.msra.mxu0 0.0
      %4890 = vmatprep.subr.mxu0 0.0
      %4891 = vmatpush2.msra.mxu0 0.0
      %4892 = vmatprep.subr.mxu0 0.0
      %4893 = vmatpush2.msra.mxu0 0.0
      %4894 = vmatprep.subr.mxu0 0.0
      %4895 = vmatpush2.msra.mxu0 0.0
      %4896 = vmatprep.subr.mxu0 0.0
      %4897 = vmatpush2.msra.mxu0 0.0
      %4898 = vmatprep.mubr.f32.mxu0 0.0
      %4899 = vmatmul.mubr.f32.gmra.mxu0 %v4811
      %v4900 = vpop.f32.mrf.mxu0
      %v4901 = vadd.f32 0.0, %v4900
      %v4902 = vpop.f32.mrf.mxu0
      %4903 = vmatprep.mubr.f32.mxu0 0.0
      %4904 = vmatmul.mubr.f32.gmra.mxu0 %v4814
      %v4905 = vpop.f32.mrf.mxu0
      %v4906 = vadd.f32 0.0, %v4905
      %v4907 = vpop.f32.mrf.mxu0
      %4908 = vmatprep.mubr.f32.mxu0 0.0
      %4909 = vmatmul.mubr.f32.gmra.mxu0 %v4817
      %v4910 = vpop.f32.mrf.mxu0
      %v4911 = vadd.f32 0.0, %v4910
      %v4912 = vpop.f32.mrf.mxu0
      %4913 = vmatprep.mubr.f32.mxu0 0.0
      %4914 = vmatmul.mubr.f32.gmra.mxu0 %v4820
      %v4915 = vpop.f32.mrf.mxu0
      %v4916 = vadd.f32 0.0, %v4915
      %v4917 = vpop.f32.mrf.mxu0
      %4918 = vmatprep.mubr.f32.mxu0 0.0
      %4919 = vmatmul.mubr.f32.gmra.mxu0 %v4823
      %v4920 = vpop.f32.mrf.mxu0
      %v4921 = vadd.f32 0.0, %v4920
      %v4922 = vpop.f32.mrf.mxu0
      %4923 = vmatprep.mubr.f32.mxu0 0.0
      %4924 = vmatmul.mubr.f32.gmra.mxu0 %v4826
      %v4925 = vpop.f32.mrf.mxu0
      %v4926 = vadd.f32 0.0, %v4925
      %v4927 = vpop.f32.mrf.mxu0
      %4928 = vmatprep.mubr.f32.mxu0 0.0
      %4929 = vmatmul.mubr.f32.gmra.mxu0 %v4829
      %v4930 = vpop.f32.mrf.mxu0
      %v4931 = vadd.f32 0.0, %v4930
      %v4932 = vpop.f32.mrf.mxu0
      %4933 = vmatprep.mubr.f32.mxu0 0.0
      %4934 = vmatmul.mubr.f32.gmra.mxu0 %v4832
      %v4935 = vpop.f32.mrf.mxu0
      %v4936 = vadd.f32 0.0, %v4935
      %v4937 = vpop.f32.mrf.mxu0
      %4938 = vdwg.mxu0
      %v4939 = vadd.f32 %v4699, %v4901
      %v4940 = vadd.f32 %v4700, %v4906
      %v4941 = vadd.f32 %v4701, %v4911
      %v4942 = vadd.f32 %v4702, %v4916
      %v4943 = vadd.f32 %v4703, %v4921
      %v4944 = vadd.f32 %v4704, %v4926
      %v4945 = vadd.f32 %v4705, %v4931
      %v4946 = vadd.f32 %v4706, %v4936
      %s4947 = scalar_lea.vmem %s12, 896
      %v4948 = vld [vmem:[%s4947] sm:$0xff]
      %v4949 = vld [vmem:[%s4947 + $0x8] sm:$0xff]
      %v4950 = vld [vmem:[%s4947 + $0x10] sm:$0xff]
      %v4951 = vld [vmem:[%s4947 + $0x18] sm:$0xff]
      %v4952 = vld [vmem:[%s4947 + $0x20] sm:$0xff]
      %v4953 = vld [vmem:[%s4947 + $0x28] sm:$0xff]
      %v4954 = vld [vmem:[%s4947 + $0x30] sm:$0xff]
      %v4955 = vld [vmem:[%s4947 + $0x38] sm:$0xff]
      %4956 = vmatprep.subr.mxu0 0.0
      %4957 = vmatpush1.msra.mxu0 0.0
      %4958 = vmatprep.subr.mxu0 0.0
      %4959 = vmatpush1.msra.mxu0 0.0
      %4960 = vmatprep.subr.mxu0 0.0
      %4961 = vmatpush1.msra.mxu0 0.0
      %4962 = vmatprep.subr.mxu0 0.0
      %4963 = vmatpush1.msra.mxu0 0.0
      %4964 = vmatprep.subr.mxu0 0.0
      %4965 = vmatpush1.msra.mxu0 0.0
      %4966 = vmatprep.subr.mxu0 0.0
      %4967 = vmatpush1.msra.mxu0 0.0
      %4968 = vmatprep.subr.mxu0 0.0
      %4969 = vmatpush1.msra.mxu0 0.0
      %4970 = vmatprep.subr.mxu0 0.0
      %4971 = vmatpush1.msra.mxu0 0.0
      %4972 = vmatprep.subr.mxu0 0.0
      %4973 = vmatpush1.msra.mxu0 %v4955
      %4974 = vmatprep.subr.mxu0 0.0
      %4975 = vmatpush1.msra.mxu0 %v4954
      %4976 = vmatprep.subr.mxu0 0.0
      %4977 = vmatpush1.msra.mxu0 %v4953
      %4978 = vmatprep.subr.mxu0 0.0
      %4979 = vmatpush1.msra.mxu0 %v4952
      %4980 = vmatprep.subr.mxu0 0.0
      %4981 = vmatpush1.msra.mxu0 %v4951
      %4982 = vmatprep.subr.mxu0 0.0
      %4983 = vmatpush1.msra.mxu0 %v4950
      %4984 = vmatprep.subr.mxu0 0.0
      %4985 = vmatpush1.msra.mxu0 %v4949
      %4986 = vmatprep.subr.mxu0 0.0
      %4987 = vmatpush1.msra.mxu0 %v4948
      %4988 = vmatprep.subr.mxu0 0.0
      %4989 = vmatpush2.msra.mxu0 0.0
      %4990 = vmatprep.subr.mxu0 0.0
      %4991 = vmatpush2.msra.mxu0 0.0
      %4992 = vmatprep.subr.mxu0 0.0
      %4993 = vmatpush2.msra.mxu0 0.0
      %4994 = vmatprep.subr.mxu0 0.0
      %4995 = vmatpush2.msra.mxu0 0.0
      %4996 = vmatprep.subr.mxu0 0.0
      %4997 = vmatpush2.msra.mxu0 0.0
      %4998 = vmatprep.subr.mxu0 0.0
      %4999 = vmatpush2.msra.mxu0 0.0
      %5000 = vmatprep.subr.mxu0 0.0
      %5001 = vmatpush2.msra.mxu0 0.0
      %5002 = vmatprep.subr.mxu0 0.0
      %5003 = vmatpush2.msra.mxu0 0.0
      %5004 = vmatprep.subr.mxu0 0.0
      %5005 = vmatpush2.msra.mxu0 0.0
      %5006 = vmatprep.subr.mxu0 0.0
      %5007 = vmatpush2.msra.mxu0 0.0
      %5008 = vmatprep.subr.mxu0 0.0
      %5009 = vmatpush2.msra.mxu0 0.0
      %5010 = vmatprep.subr.mxu0 0.0
      %5011 = vmatpush2.msra.mxu0 0.0
      %5012 = vmatprep.subr.mxu0 0.0
      %5013 = vmatpush2.msra.mxu0 0.0
      %5014 = vmatprep.subr.mxu0 0.0
      %5015 = vmatpush2.msra.mxu0 0.0
      %5016 = vmatprep.subr.mxu0 0.0
      %5017 = vmatpush2.msra.mxu0 0.0
      %5018 = vmatprep.subr.mxu0 0.0
      %5019 = vmatpush2.msra.mxu0 0.0
      %5020 = vmatprep.mubr.f32.mxu0 0.0
      %5021 = vmatmul.mubr.f32.gmra.mxu0 %v1602
      %v5022 = vpop.f32.mrf.mxu0
      %v5023 = vadd.f32 0.0, %v5022
      %v5024 = vpop.f32.mrf.mxu0
      %5025 = vmatprep.mubr.f32.mxu0 0.0
      %5026 = vmatmul.mubr.f32.gmra.mxu0 %v1605
      %v5027 = vpop.f32.mrf.mxu0
      %v5028 = vadd.f32 0.0, %v5027
      %v5029 = vpop.f32.mrf.mxu0
      %5030 = vmatprep.mubr.f32.mxu0 0.0
      %5031 = vmatmul.mubr.f32.gmra.mxu0 %v1608
      %v5032 = vpop.f32.mrf.mxu0
      %v5033 = vadd.f32 0.0, %v5032
      %v5034 = vpop.f32.mrf.mxu0
      %5035 = vmatprep.mubr.f32.mxu0 0.0
      %5036 = vmatmul.mubr.f32.gmra.mxu0 %v1611
      %v5037 = vpop.f32.mrf.mxu0
      %v5038 = vadd.f32 0.0, %v5037
      %v5039 = vpop.f32.mrf.mxu0
      %5040 = vdwg.mxu0
      %s5041 = scalar_lea.vmem %s13, 896
      %v5042 = vld [vmem:[%s5041] sm:$0xff]
      %v5043 = vld [vmem:[%s5041 + $0x8] sm:$0xff]
      %v5044 = vld [vmem:[%s5041 + $0x10] sm:$0xff]
      %v5045 = vld [vmem:[%s5041 + $0x18] sm:$0xff]
      %v5046 = vld [vmem:[%s5041 + $0x20] sm:$0xff]
      %v5047 = vld [vmem:[%s5041 + $0x28] sm:$0xff]
      %v5048 = vld [vmem:[%s5041 + $0x30] sm:$0xff]
      %v5049 = vld [vmem:[%s5041 + $0x38] sm:$0xff]
      %v5051 = vsel %vm928, %v5042, 0
      %v5054 = vsel %vm928, %v5043, 0
      %v5057 = vsel %vm928, %v5044, 0
      %v5060 = vsel %vm928, %v5045, 0
      %v5063 = vsel %vm928, %v5046, 0
      %v5066 = vsel %vm928, %v5047, 0
      %v5069 = vsel %vm928, %v5048, 0
      %v5072 = vsel %vm928, %v5049, 0
      %5074 = vmatprep.subr.mxu0 0.0
      %5075 = vmatpush1.msra.mxu0 0.0
      %5076 = vmatprep.subr.mxu0 0.0
      %5077 = vmatpush1.msra.mxu0 0.0
      %5078 = vmatprep.subr.mxu0 0.0
      %5079 = vmatpush1.msra.mxu0 0.0
      %5080 = vmatprep.subr.mxu0 0.0
      %5081 = vmatpush1.msra.mxu0 0.0
      %5082 = vmatprep.subr.mxu0 0.0
      %5083 = vmatpush1.msra.mxu0 0.0
      %5084 = vmatprep.subr.mxu0 0.0
      %5085 = vmatpush1.msra.mxu0 0.0
      %5086 = vmatprep.subr.mxu0 0.0
      %5087 = vmatpush1.msra.mxu0 0.0
      %5088 = vmatprep.subr.mxu0 0.0
      %5089 = vmatpush1.msra.mxu0 0.0
      %5090 = vmatprep.subr.mxu0 0.0
      %5091 = vmatpush1.msra.mxu0 0.0
      %5092 = vmatprep.subr.mxu0 0.0
      %5093 = vmatpush1.msra.mxu0 0.0
      %5094 = vmatprep.subr.mxu0 0.0
      %5095 = vmatpush1.msra.mxu0 0.0
      %5096 = vmatprep.subr.mxu0 0.0
      %5097 = vmatpush1.msra.mxu0 0.0
      %5098 = vmatprep.subr.mxu0 0.0
      %5099 = vmatpush1.msra.mxu0 %v5038
      %5100 = vmatprep.subr.mxu0 0.0
      %5101 = vmatpush1.msra.mxu0 %v5033
      %5102 = vmatprep.subr.mxu0 0.0
      %5103 = vmatpush1.msra.mxu0 %v5028
      %5104 = vmatprep.subr.mxu0 0.0
      %5105 = vmatpush1.msra.mxu0 %v5023
      %5106 = vmatprep.subr.mxu0 0.0
      %5107 = vmatpush2.msra.mxu0 0.0
      %5108 = vmatprep.subr.mxu0 0.0
      %5109 = vmatpush2.msra.mxu0 0.0
      %5110 = vmatprep.subr.mxu0 0.0
      %5111 = vmatpush2.msra.mxu0 0.0
      %5112 = vmatprep.subr.mxu0 0.0
      %5113 = vmatpush2.msra.mxu0 0.0
      %5114 = vmatprep.subr.mxu0 0.0
      %5115 = vmatpush2.msra.mxu0 0.0
      %5116 = vmatprep.subr.mxu0 0.0
      %5117 = vmatpush2.msra.mxu0 0.0
      %5118 = vmatprep.subr.mxu0 0.0
      %5119 = vmatpush2.msra.mxu0 0.0
      %5120 = vmatprep.subr.mxu0 0.0
      %5121 = vmatpush2.msra.mxu0 0.0
      %5122 = vmatprep.subr.mxu0 0.0
      %5123 = vmatpush2.msra.mxu0 0.0
      %5124 = vmatprep.subr.mxu0 0.0
      %5125 = vmatpush2.msra.mxu0 0.0
      %5126 = vmatprep.subr.mxu0 0.0
      %5127 = vmatpush2.msra.mxu0 0.0
      %5128 = vmatprep.subr.mxu0 0.0
      %5129 = vmatpush2.msra.mxu0 0.0
      %5130 = vmatprep.subr.mxu0 0.0
      %5131 = vmatpush2.msra.mxu0 0.0
      %5132 = vmatprep.subr.mxu0 0.0
      %5133 = vmatpush2.msra.mxu0 0.0
      %5134 = vmatprep.subr.mxu0 0.0
      %5135 = vmatpush2.msra.mxu0 0.0
      %5136 = vmatprep.subr.mxu0 0.0
      %5137 = vmatpush2.msra.mxu0 0.0
      %5138 = vmatprep.mubr.f32.mxu0 0.0
      %5139 = vmatmul.mubr.f32.gmra.mxu0 %v5051
      %v5140 = vpop.f32.mrf.mxu0
      %v5141 = vadd.f32 0.0, %v5140
      %v5142 = vpop.f32.mrf.mxu0
      %5143 = vmatprep.mubr.f32.mxu0 0.0
      %5144 = vmatmul.mubr.f32.gmra.mxu0 %v5054
      %v5145 = vpop.f32.mrf.mxu0
      %v5146 = vadd.f32 0.0, %v5145
      %v5147 = vpop.f32.mrf.mxu0
      %5148 = vmatprep.mubr.f32.mxu0 0.0
      %5149 = vmatmul.mubr.f32.gmra.mxu0 %v5057
      %v5150 = vpop.f32.mrf.mxu0
      %v5151 = vadd.f32 0.0, %v5150
      %v5152 = vpop.f32.mrf.mxu0
      %5153 = vmatprep.mubr.f32.mxu0 0.0
      %5154 = vmatmul.mubr.f32.gmra.mxu0 %v5060
      %v5155 = vpop.f32.mrf.mxu0
      %v5156 = vadd.f32 0.0, %v5155
      %v5157 = vpop.f32.mrf.mxu0
      %5158 = vmatprep.mubr.f32.mxu0 0.0
      %5159 = vmatmul.mubr.f32.gmra.mxu0 %v5063
      %v5160 = vpop.f32.mrf.mxu0
      %v5161 = vadd.f32 0.0, %v5160
      %v5162 = vpop.f32.mrf.mxu0
      %5163 = vmatprep.mubr.f32.mxu0 0.0
      %5164 = vmatmul.mubr.f32.gmra.mxu0 %v5066
      %v5165 = vpop.f32.mrf.mxu0
      %v5166 = vadd.f32 0.0, %v5165
      %v5167 = vpop.f32.mrf.mxu0
      %5168 = vmatprep.mubr.f32.mxu0 0.0
      %5169 = vmatmul.mubr.f32.gmra.mxu0 %v5069
      %v5170 = vpop.f32.mrf.mxu0
      %v5171 = vadd.f32 0.0, %v5170
      %v5172 = vpop.f32.mrf.mxu0
      %5173 = vmatprep.mubr.f32.mxu0 0.0
      %5174 = vmatmul.mubr.f32.gmra.mxu0 %v5072
      %v5175 = vpop.f32.mrf.mxu0
      %v5176 = vadd.f32 0.0, %v5175
      %v5177 = vpop.f32.mrf.mxu0
      %5178 = vdwg.mxu0
      %v5179 = vadd.f32 %v4939, %v5141
      %v5180 = vadd.f32 %v4940, %v5146
      %v5181 = vadd.f32 %v4941, %v5151
      %v5182 = vadd.f32 %v4942, %v5156
      %v5183 = vadd.f32 %v4943, %v5161
      %v5184 = vadd.f32 %v4944, %v5166
      %v5185 = vadd.f32 %v4945, %v5171
      %v5186 = vadd.f32 %v4946, %v5176
      %s5187 = scalar_lea.vmem %s12, 960
      %v5188 = vld [vmem:[%s5187] sm:$0xff]
      %v5189 = vld [vmem:[%s5187 + $0x8] sm:$0xff]
      %v5190 = vld [vmem:[%s5187 + $0x10] sm:$0xff]
      %v5191 = vld [vmem:[%s5187 + $0x18] sm:$0xff]
      %v5192 = vld [vmem:[%s5187 + $0x20] sm:$0xff]
      %v5193 = vld [vmem:[%s5187 + $0x28] sm:$0xff]
      %v5194 = vld [vmem:[%s5187 + $0x30] sm:$0xff]
      %v5195 = vld [vmem:[%s5187 + $0x38] sm:$0xff]
      %5196 = vmatprep.subr.mxu0 0.0
      %5197 = vmatpush1.msra.mxu0 0.0
      %5198 = vmatprep.subr.mxu0 0.0
      %5199 = vmatpush1.msra.mxu0 0.0
      %5200 = vmatprep.subr.mxu0 0.0
      %5201 = vmatpush1.msra.mxu0 0.0
      %5202 = vmatprep.subr.mxu0 0.0
      %5203 = vmatpush1.msra.mxu0 0.0
      %5204 = vmatprep.subr.mxu0 0.0
      %5205 = vmatpush1.msra.mxu0 0.0
      %5206 = vmatprep.subr.mxu0 0.0
      %5207 = vmatpush1.msra.mxu0 0.0
      %5208 = vmatprep.subr.mxu0 0.0
      %5209 = vmatpush1.msra.mxu0 0.0
      %5210 = vmatprep.subr.mxu0 0.0
      %5211 = vmatpush1.msra.mxu0 0.0
      %5212 = vmatprep.subr.mxu0 0.0
      %5213 = vmatpush1.msra.mxu0 %v5195
      %5214 = vmatprep.subr.mxu0 0.0
      %5215 = vmatpush1.msra.mxu0 %v5194
      %5216 = vmatprep.subr.mxu0 0.0
      %5217 = vmatpush1.msra.mxu0 %v5193
      %5218 = vmatprep.subr.mxu0 0.0
      %5219 = vmatpush1.msra.mxu0 %v5192
      %5220 = vmatprep.subr.mxu0 0.0
      %5221 = vmatpush1.msra.mxu0 %v5191
      %5222 = vmatprep.subr.mxu0 0.0
      %5223 = vmatpush1.msra.mxu0 %v5190
      %5224 = vmatprep.subr.mxu0 0.0
      %5225 = vmatpush1.msra.mxu0 %v5189
      %5226 = vmatprep.subr.mxu0 0.0
      %5227 = vmatpush1.msra.mxu0 %v5188
      %5228 = vmatprep.subr.mxu0 0.0
      %5229 = vmatpush2.msra.mxu0 0.0
      %5230 = vmatprep.subr.mxu0 0.0
      %5231 = vmatpush2.msra.mxu0 0.0
      %5232 = vmatprep.subr.mxu0 0.0
      %5233 = vmatpush2.msra.mxu0 0.0
      %5234 = vmatprep.subr.mxu0 0.0
      %5235 = vmatpush2.msra.mxu0 0.0
      %5236 = vmatprep.subr.mxu0 0.0
      %5237 = vmatpush2.msra.mxu0 0.0
      %5238 = vmatprep.subr.mxu0 0.0
      %5239 = vmatpush2.msra.mxu0 0.0
      %5240 = vmatprep.subr.mxu0 0.0
      %5241 = vmatpush2.msra.mxu0 0.0
      %5242 = vmatprep.subr.mxu0 0.0
      %5243 = vmatpush2.msra.mxu0 0.0
      %5244 = vmatprep.subr.mxu0 0.0
      %5245 = vmatpush2.msra.mxu0 0.0
      %5246 = vmatprep.subr.mxu0 0.0
      %5247 = vmatpush2.msra.mxu0 0.0
      %5248 = vmatprep.subr.mxu0 0.0
      %5249 = vmatpush2.msra.mxu0 0.0
      %5250 = vmatprep.subr.mxu0 0.0
      %5251 = vmatpush2.msra.mxu0 0.0
      %5252 = vmatprep.subr.mxu0 0.0
      %5253 = vmatpush2.msra.mxu0 0.0
      %5254 = vmatprep.subr.mxu0 0.0
      %5255 = vmatpush2.msra.mxu0 0.0
      %5256 = vmatprep.subr.mxu0 0.0
      %5257 = vmatpush2.msra.mxu0 0.0
      %5258 = vmatprep.subr.mxu0 0.0
      %5259 = vmatpush2.msra.mxu0 0.0
      %5260 = vmatprep.mubr.f32.mxu0 0.0
      %5261 = vmatmul.mubr.f32.gmra.mxu0 %v1602
      %v5262 = vpop.f32.mrf.mxu0
      %v5263 = vadd.f32 0.0, %v5262
      %v5264 = vpop.f32.mrf.mxu0
      %5265 = vmatprep.mubr.f32.mxu0 0.0
      %5266 = vmatmul.mubr.f32.gmra.mxu0 %v1605
      %v5267 = vpop.f32.mrf.mxu0
      %v5268 = vadd.f32 0.0, %v5267
      %v5269 = vpop.f32.mrf.mxu0
      %5270 = vmatprep.mubr.f32.mxu0 0.0
      %5271 = vmatmul.mubr.f32.gmra.mxu0 %v1608
      %v5272 = vpop.f32.mrf.mxu0
      %v5273 = vadd.f32 0.0, %v5272
      %v5274 = vpop.f32.mrf.mxu0
      %5275 = vmatprep.mubr.f32.mxu0 0.0
      %5276 = vmatmul.mubr.f32.gmra.mxu0 %v1611
      %v5277 = vpop.f32.mrf.mxu0
      %v5278 = vadd.f32 0.0, %v5277
      %v5279 = vpop.f32.mrf.mxu0
      %5280 = vdwg.mxu0
      %s5281 = scalar_lea.vmem %s13, 960
      %v5282 = vld [vmem:[%s5281] sm:$0xff]
      %v5283 = vld [vmem:[%s5281 + $0x8] sm:$0xff]
      %v5284 = vld [vmem:[%s5281 + $0x10] sm:$0xff]
      %v5285 = vld [vmem:[%s5281 + $0x18] sm:$0xff]
      %v5286 = vld [vmem:[%s5281 + $0x20] sm:$0xff]
      %v5287 = vld [vmem:[%s5281 + $0x28] sm:$0xff]
      %v5288 = vld [vmem:[%s5281 + $0x30] sm:$0xff]
      %v5289 = vld [vmem:[%s5281 + $0x38] sm:$0xff]
      %v5291 = vsel %vm928, %v5282, 0
      %v5294 = vsel %vm928, %v5283, 0
      %v5297 = vsel %vm928, %v5284, 0
      %v5300 = vsel %vm928, %v5285, 0
      %v5303 = vsel %vm928, %v5286, 0
      %v5306 = vsel %vm928, %v5287, 0
      %v5309 = vsel %vm928, %v5288, 0
      %v5312 = vsel %vm928, %v5289, 0
      %5314 = vmatprep.subr.mxu0 0.0
      %5315 = vmatpush1.msra.mxu0 0.0
      %5316 = vmatprep.subr.mxu0 0.0
      %5317 = vmatpush1.msra.mxu0 0.0
      %5318 = vmatprep.subr.mxu0 0.0
      %5319 = vmatpush1.msra.mxu0 0.0
      %5320 = vmatprep.subr.mxu0 0.0
      %5321 = vmatpush1.msra.mxu0 0.0
      %5322 = vmatprep.subr.mxu0 0.0
      %5323 = vmatpush1.msra.mxu0 0.0
      %5324 = vmatprep.subr.mxu0 0.0
      %5325 = vmatpush1.msra.mxu0 0.0
      %5326 = vmatprep.subr.mxu0 0.0
      %5327 = vmatpush1.msra.mxu0 0.0
      %5328 = vmatprep.subr.mxu0 0.0
      %5329 = vmatpush1.msra.mxu0 0.0
      %5330 = vmatprep.subr.mxu0 0.0
      %5331 = vmatpush1.msra.mxu0 0.0
      %5332 = vmatprep.subr.mxu0 0.0
      %5333 = vmatpush1.msra.mxu0 0.0
      %5334 = vmatprep.subr.mxu0 0.0
      %5335 = vmatpush1.msra.mxu0 0.0
      %5336 = vmatprep.subr.mxu0 0.0
      %5337 = vmatpush1.msra.mxu0 0.0
      %5338 = vmatprep.subr.mxu0 0.0
      %5339 = vmatpush1.msra.mxu0 %v5278
      %5340 = vmatprep.subr.mxu0 0.0
      %5341 = vmatpush1.msra.mxu0 %v5273
      %5342 = vmatprep.subr.mxu0 0.0
      %5343 = vmatpush1.msra.mxu0 %v5268
      %5344 = vmatprep.subr.mxu0 0.0
      %5345 = vmatpush1.msra.mxu0 %v5263
      %5346 = vmatprep.subr.mxu0 0.0
      %5347 = vmatpush2.msra.mxu0 0.0
      %5348 = vmatprep.subr.mxu0 0.0
      %5349 = vmatpush2.msra.mxu0 0.0
      %5350 = vmatprep.subr.mxu0 0.0
      %5351 = vmatpush2.msra.mxu0 0.0
      %5352 = vmatprep.subr.mxu0 0.0
      %5353 = vmatpush2.msra.mxu0 0.0
      %5354 = vmatprep.subr.mxu0 0.0
      %5355 = vmatpush2.msra.mxu0 0.0
      %5356 = vmatprep.subr.mxu0 0.0
      %5357 = vmatpush2.msra.mxu0 0.0
      %5358 = vmatprep.subr.mxu0 0.0
      %5359 = vmatpush2.msra.mxu0 0.0
      %5360 = vmatprep.subr.mxu0 0.0
      %5361 = vmatpush2.msra.mxu0 0.0
      %5362 = vmatprep.subr.mxu0 0.0
      %5363 = vmatpush2.msra.mxu0 0.0
      %5364 = vmatprep.subr.mxu0 0.0
      %5365 = vmatpush2.msra.mxu0 0.0
      %5366 = vmatprep.subr.mxu0 0.0
      %5367 = vmatpush2.msra.mxu0 0.0
      %5368 = vmatprep.subr.mxu0 0.0
      %5369 = vmatpush2.msra.mxu0 0.0
      %5370 = vmatprep.subr.mxu0 0.0
      %5371 = vmatpush2.msra.mxu0 0.0
      %5372 = vmatprep.subr.mxu0 0.0
      %5373 = vmatpush2.msra.mxu0 0.0
      %5374 = vmatprep.subr.mxu0 0.0
      %5375 = vmatpush2.msra.mxu0 0.0
      %5376 = vmatprep.subr.mxu0 0.0
      %5377 = vmatpush2.msra.mxu0 0.0
      %5378 = vmatprep.mubr.f32.mxu0 0.0
      %5379 = vmatmul.mubr.f32.gmra.mxu0 %v5291
      %v5380 = vpop.f32.mrf.mxu0
      %v5381 = vadd.f32 0.0, %v5380
      %v5382 = vpop.f32.mrf.mxu0
      %5383 = vmatprep.mubr.f32.mxu0 0.0
      %5384 = vmatmul.mubr.f32.gmra.mxu0 %v5294
      %v5385 = vpop.f32.mrf.mxu0
      %v5386 = vadd.f32 0.0, %v5385
      %v5387 = vpop.f32.mrf.mxu0
      %5388 = vmatprep.mubr.f32.mxu0 0.0
      %5389 = vmatmul.mubr.f32.gmra.mxu0 %v5297
      %v5390 = vpop.f32.mrf.mxu0
      %v5391 = vadd.f32 0.0, %v5390
      %v5392 = vpop.f32.mrf.mxu0
      %5393 = vmatprep.mubr.f32.mxu0 0.0
      %5394 = vmatmul.mubr.f32.gmra.mxu0 %v5300
      %v5395 = vpop.f32.mrf.mxu0
      %v5396 = vadd.f32 0.0, %v5395
      %v5397 = vpop.f32.mrf.mxu0
      %5398 = vmatprep.mubr.f32.mxu0 0.0
      %5399 = vmatmul.mubr.f32.gmra.mxu0 %v5303
      %v5400 = vpop.f32.mrf.mxu0
      %v5401 = vadd.f32 0.0, %v5400
      %v5402 = vpop.f32.mrf.mxu0
      %5403 = vmatprep.mubr.f32.mxu0 0.0
      %5404 = vmatmul.mubr.f32.gmra.mxu0 %v5306
      %v5405 = vpop.f32.mrf.mxu0
      %v5406 = vadd.f32 0.0, %v5405
      %v5407 = vpop.f32.mrf.mxu0
      %5408 = vmatprep.mubr.f32.mxu0 0.0
      %5409 = vmatmul.mubr.f32.gmra.mxu0 %v5309
      %v5410 = vpop.f32.mrf.mxu0
      %v5411 = vadd.f32 0.0, %v5410
      %v5412 = vpop.f32.mrf.mxu0
      %5413 = vmatprep.mubr.f32.mxu0 0.0
      %5414 = vmatmul.mubr.f32.gmra.mxu0 %v5312
      %v5415 = vpop.f32.mrf.mxu0
      %v5416 = vadd.f32 0.0, %v5415
      %v5417 = vpop.f32.mrf.mxu0
      %5418 = vdwg.mxu0
      %v5419 = vadd.f32 %v5179, %v5381
      %v5420 = vadd.f32 %v5180, %v5386
      %v5421 = vadd.f32 %v5181, %v5391
      %v5422 = vadd.f32 %v5182, %v5396
      %v5423 = vadd.f32 %v5183, %v5401
      %v5424 = vadd.f32 %v5184, %v5406
      %v5425 = vadd.f32 %v5185, %v5411
      %v5426 = vadd.f32 %v5186, %v5416
      %v5427 = vld [vmem:[%s14] sm:$0xff]
      %v5428 = vld [vmem:[%s14 + $0x8] sm:$0xff]
      %v5429 = vld [vmem:[%s14 + $0x10] sm:$0xff]
      %v5430 = vld [vmem:[%s14 + $0x18] sm:$0xff]
      %v5431 = vld [vmem:[%s14 + $0x20] sm:$0xff]
      %v5432 = vld [vmem:[%s14 + $0x28] sm:$0xff]
      %v5433 = vld [vmem:[%s14 + $0x30] sm:$0xff]
      %v5434 = vld [vmem:[%s14 + $0x38] sm:$0xff]
      %5436 = vset.pattern.permute.xlu0 0
      %5437 = vperm.xlu0 %5436, %v5427
      %v5438 = vpop.permute.xlu0 %5437
      %5441 = vset.pattern.permute.xlu0 0
      %5442 = vperm.xlu0 %5441, %v5428
      %v5443 = vpop.permute.xlu0 %5442
      %5446 = vset.pattern.permute.xlu0 0
      %5447 = vperm.xlu0 %5446, %v5429
      %v5448 = vpop.permute.xlu0 %5447
      %5451 = vset.pattern.permute.xlu0 0
      %5452 = vperm.xlu0 %5451, %v5430
      %v5453 = vpop.permute.xlu0 %5452
      %5456 = vset.pattern.permute.xlu0 0
      %5457 = vperm.xlu0 %5456, %v5431
      %v5458 = vpop.permute.xlu0 %5457
      %5461 = vset.pattern.permute.xlu0 0
      %5462 = vperm.xlu0 %5461, %v5432
      %v5463 = vpop.permute.xlu0 %5462
      %5466 = vset.pattern.permute.xlu0 0
      %5467 = vperm.xlu0 %5466, %v5433
      %v5468 = vpop.permute.xlu0 %5467
      %5471 = vset.pattern.permute.xlu0 0
      %5472 = vperm.xlu0 %5471, %v5434
      %v5473 = vpop.permute.xlu0 %5472
      %v5475 = vadd.f32 %v5419, %v5438
      %v5476 = vadd.f32 %v5420, %v5443
      %v5477 = vadd.f32 %v5421, %v5448
      %v5478 = vadd.f32 %v5422, %v5453
      %v5479 = vadd.f32 %v5423, %v5458
      %v5480 = vadd.f32 %v5424, %v5463
      %v5481 = vadd.f32 %v5425, %v5468
      %v5482 = vadd.f32 %v5426, %v5473
      %vm5483 = vcmp.gt.f32.partialorder %v5475, 0.0
      %vm5484 = vcmp.gt.f32.partialorder %v5476, 0.0
      %vm5485 = vcmp.gt.f32.partialorder %v5477, 0.0
      %vm5486 = vcmp.gt.f32.partialorder %v5478, 0.0
      %vm5487 = vcmp.gt.f32.partialorder %v5479, 0.0
      %vm5488 = vcmp.gt.f32.partialorder %v5480, 0.0
      %vm5489 = vcmp.gt.f32.partialorder %v5481, 0.0
      %vm5490 = vcmp.gt.f32.partialorder %v5482, 0.0
      %v5491 = vmul.f32 %v5475, 0.1
      %v5492 = vmul.f32 %v5476, 0.1
      %v5493 = vmul.f32 %v5477, 0.1
      %v5494 = vmul.f32 %v5478, 0.1
      %v5495 = vmul.f32 %v5479, 0.1
      %v5496 = vmul.f32 %v5480, 0.1
      %v5497 = vmul.f32 %v5481, 0.1
      %v5498 = vmul.f32 %v5482, 0.1
      %v5499 = vsel %vm5483, %v5475, %v5491
      %v5500 = vsel %vm5484, %v5476, %v5492
      %v5501 = vsel %vm5485, %v5477, %v5493
      %v5502 = vsel %vm5486, %v5478, %v5494
      %v5503 = vsel %vm5487, %v5479, %v5495
      %v5504 = vsel %vm5488, %v5480, %v5496
      %v5505 = vsel %vm5489, %v5481, %v5497
      %v5506 = vsel %vm5490, %v5482, %v5498
      %v5507 = vld [vmem:[%s15] sm:$0xff]
      %v5508 = vld [vmem:[%s16] sm:$0xff]
      %5510 = vset.pattern.permute.xlu0 0
      %5511 = vperm.xlu0 %5510, %v5508
      %v5512 = vpop.permute.xlu0 %5511
      %v5515 = vsel %vm1374, %v5507, 0
      %5517 = vmatprep.subr.mxu0 0.0
      %5518 = vmatpush1.msra.mxu0 0.0
      %5519 = vmatprep.subr.mxu0 0.0
      %5520 = vmatpush1.msra.mxu0 0.0
      %5521 = vmatprep.subr.mxu0 0.0
      %5522 = vmatpush1.msra.mxu0 0.0
      %5523 = vmatprep.subr.mxu0 0.0
      %5524 = vmatpush1.msra.mxu0 0.0
      %5525 = vmatprep.subr.mxu0 0.0
      %5526 = vmatpush1.msra.mxu0 0.0
      %5527 = vmatprep.subr.mxu0 0.0
      %5528 = vmatpush1.msra.mxu0 0.0
      %5529 = vmatprep.subr.mxu0 0.0
      %5530 = vmatpush1.msra.mxu0 0.0
      %5531 = vmatprep.subr.mxu0 0.0
      %5532 = vmatpush1.msra.mxu0 0.0
      %5533 = vmatprep.subr.mxu0 0.0
      %5534 = vmatpush1.msra.mxu0 %v5506
      %5535 = vmatprep.subr.mxu0 0.0
      %5536 = vmatpush1.msra.mxu0 %v5505
      %5537 = vmatprep.subr.mxu0 0.0
      %5538 = vmatpush1.msra.mxu0 %v5504
      %5539 = vmatprep.subr.mxu0 0.0
      %5540 = vmatpush1.msra.mxu0 %v5503
      %5541 = vmatprep.subr.mxu0 0.0
      %5542 = vmatpush1.msra.mxu0 %v5502
      %5543 = vmatprep.subr.mxu0 0.0
      %5544 = vmatpush1.msra.mxu0 %v5501
      %5545 = vmatprep.subr.mxu0 0.0
      %5546 = vmatpush1.msra.mxu0 %v5500
      %5547 = vmatprep.subr.mxu0 0.0
      %5548 = vmatpush1.msra.mxu0 %v5499
      %5549 = vmatprep.subr.mxu0 0.0
      %5550 = vmatpush2.msra.mxu0 0.0
      %5551 = vmatprep.subr.mxu0 0.0
      %5552 = vmatpush2.msra.mxu0 0.0
      %5553 = vmatprep.subr.mxu0 0.0
      %5554 = vmatpush2.msra.mxu0 0.0
      %5555 = vmatprep.subr.mxu0 0.0
      %5556 = vmatpush2.msra.mxu0 0.0
      %5557 = vmatprep.subr.mxu0 0.0
      %5558 = vmatpush2.msra.mxu0 0.0
      %5559 = vmatprep.subr.mxu0 0.0
      %5560 = vmatpush2.msra.mxu0 0.0
      %5561 = vmatprep.subr.mxu0 0.0
      %5562 = vmatpush2.msra.mxu0 0.0
      %5563 = vmatprep.subr.mxu0 0.0
      %5564 = vmatpush2.msra.mxu0 0.0
      %5565 = vmatprep.subr.mxu0 0.0
      %5566 = vmatpush2.msra.mxu0 0.0
      %5567 = vmatprep.subr.mxu0 0.0
      %5568 = vmatpush2.msra.mxu0 0.0
      %5569 = vmatprep.subr.mxu0 0.0
      %5570 = vmatpush2.msra.mxu0 0.0
      %5571 = vmatprep.subr.mxu0 0.0
      %5572 = vmatpush2.msra.mxu0 0.0
      %5573 = vmatprep.subr.mxu0 0.0
      %5574 = vmatpush2.msra.mxu0 0.0
      %5575 = vmatprep.subr.mxu0 0.0
      %5576 = vmatpush2.msra.mxu0 0.0
      %5577 = vmatprep.subr.mxu0 0.0
      %5578 = vmatpush2.msra.mxu0 0.0
      %5579 = vmatprep.subr.mxu0 0.0
      %5580 = vmatpush2.msra.mxu0 0.0
      %5581 = vmatprep.mubr.f32.mxu0 0.0
      %5582 = vmatmul.mubr.f32.gmra.mxu0 %v5515
      %v5583 = vpop.f32.mrf.mxu0
      %v5584 = vadd.f32 %v5512, %v5583
      %v5585 = vpop.f32.mrf.mxu0
      %5586 = vdwg.mxu0
      %v5587 = vld [vmem:[%s17] sm:$0xff]
      %v5588 = vld [vmem:[%s18] sm:$0xff]
      %5590 = vset.pattern.permute.xlu0 0
      %5591 = vperm.xlu0 %5590, %v5588
      %v5592 = vpop.permute.xlu0 %5591
      %v5595 = vsel %vm1374, %v5587, 0
      %5597 = vmatprep.subr.mxu0 0.0
      %5598 = vmatpush1.msra.mxu0 0.0
      %5599 = vmatprep.subr.mxu0 0.0
      %5600 = vmatpush1.msra.mxu0 0.0
      %5601 = vmatprep.subr.mxu0 0.0
      %5602 = vmatpush1.msra.mxu0 0.0
      %5603 = vmatprep.subr.mxu0 0.0
      %5604 = vmatpush1.msra.mxu0 0.0
      %5605 = vmatprep.subr.mxu0 0.0
      %5606 = vmatpush1.msra.mxu0 0.0
      %5607 = vmatprep.subr.mxu0 0.0
      %5608 = vmatpush1.msra.mxu0 0.0
      %5609 = vmatprep.subr.mxu0 0.0
      %5610 = vmatpush1.msra.mxu0 0.0
      %5611 = vmatprep.subr.mxu0 0.0
      %5612 = vmatpush1.msra.mxu0 0.0
      %5613 = vmatprep.subr.mxu0 0.0
      %5614 = vmatpush1.msra.mxu0 %v5506
      %5615 = vmatprep.subr.mxu0 0.0
      %5616 = vmatpush1.msra.mxu0 %v5505
      %5617 = vmatprep.subr.mxu0 0.0
      %5618 = vmatpush1.msra.mxu0 %v5504
      %5619 = vmatprep.subr.mxu0 0.0
      %5620 = vmatpush1.msra.mxu0 %v5503
      %5621 = vmatprep.subr.mxu0 0.0
      %5622 = vmatpush1.msra.mxu0 %v5502
      %5623 = vmatprep.subr.mxu0 0.0
      %5624 = vmatpush1.msra.mxu0 %v5501
      %5625 = vmatprep.subr.mxu0 0.0
      %5626 = vmatpush1.msra.mxu0 %v5500
      %5627 = vmatprep.subr.mxu0 0.0
      %5628 = vmatpush1.msra.mxu0 %v5499
      %5629 = vmatprep.subr.mxu0 0.0
      %5630 = vmatpush2.msra.mxu0 0.0
      %5631 = vmatprep.subr.mxu0 0.0
      %5632 = vmatpush2.msra.mxu0 0.0
      %5633 = vmatprep.subr.mxu0 0.0
      %5634 = vmatpush2.msra.mxu0 0.0
      %5635 = vmatprep.subr.mxu0 0.0
      %5636 = vmatpush2.msra.mxu0 0.0
      %5637 = vmatprep.subr.mxu0 0.0
      %5638 = vmatpush2.msra.mxu0 0.0
      %5639 = vmatprep.subr.mxu0 0.0
      %5640 = vmatpush2.msra.mxu0 0.0
      %5641 = vmatprep.subr.mxu0 0.0
      %5642 = vmatpush2.msra.mxu0 0.0
      %5643 = vmatprep.subr.mxu0 0.0
      %5644 = vmatpush2.msra.mxu0 0.0
      %5645 = vmatprep.subr.mxu0 0.0
      %5646 = vmatpush2.msra.mxu0 0.0
      %5647 = vmatprep.subr.mxu0 0.0
      %5648 = vmatpush2.msra.mxu0 0.0
      %5649 = vmatprep.subr.mxu0 0.0
      %5650 = vmatpush2.msra.mxu0 0.0
      %5651 = vmatprep.subr.mxu0 0.0
      %5652 = vmatpush2.msra.mxu0 0.0
      %5653 = vmatprep.subr.mxu0 0.0
      %5654 = vmatpush2.msra.mxu0 0.0
      %5655 = vmatprep.subr.mxu0 0.0
      %5656 = vmatpush2.msra.mxu0 0.0
      %5657 = vmatprep.subr.mxu0 0.0
      %5658 = vmatpush2.msra.mxu0 0.0
      %5659 = vmatprep.subr.mxu0 0.0
      %5660 = vmatpush2.msra.mxu0 0.0
      %5661 = vmatprep.mubr.f32.mxu0 0.0
      %5662 = vmatmul.mubr.f32.gmra.mxu0 %v5595
      %v5663 = vpop.f32.mrf.mxu0
      %v5664 = vadd.f32 %v5592, %v5663
      %v5665 = vpop.f32.mrf.mxu0
      %5666 = vdwg.mxu0
      %v5667 = vld [vmem:[%s19] sm:$0xff]
      %v5668 = vld [vmem:[%s19 + $0x8] sm:$0xff]
      %v5669 = vld [vmem:[%s19 + $0x10] sm:$0xff]
      %v5670 = vld [vmem:[%s19 + $0x18] sm:$0xff]
      %v5671 = vld [vmem:[%s19 + $0x20] sm:$0xff]
      %v5672 = vld [vmem:[%s19 + $0x28] sm:$0xff]
      %v5673 = vld [vmem:[%s19 + $0x30] sm:$0xff]
      %v5674 = vld [vmem:[%s19 + $0x38] sm:$0xff]
      %v5675 = vld [vmem:[%s20] sm:$0xff]
      %v5676 = vld [vmem:[%s20 + $0x8] sm:$0xff]
      %v5677 = vld [vmem:[%s20 + $0x10] sm:$0xff]
      %v5678 = vld [vmem:[%s20 + $0x18] sm:$0xff]
      %v5679 = vld [vmem:[%s20 + $0x20] sm:$0xff]
      %v5680 = vld [vmem:[%s20 + $0x28] sm:$0xff]
      %v5681 = vld [vmem:[%s20 + $0x30] sm:$0xff]
      %v5682 = vld [vmem:[%s20 + $0x38] sm:$0xff]
      %5684 = vset.pattern.permute.xlu0 0
      %5685 = vperm.xlu0 %5684, %v5675
      %v5686 = vpop.permute.xlu0 %5685
      %5689 = vset.pattern.permute.xlu0 0
      %5690 = vperm.xlu0 %5689, %v5676
      %v5691 = vpop.permute.xlu0 %5690
      %5694 = vset.pattern.permute.xlu0 0
      %5695 = vperm.xlu0 %5694, %v5677
      %v5696 = vpop.permute.xlu0 %5695
      %5699 = vset.pattern.permute.xlu0 0
      %5700 = vperm.xlu0 %5699, %v5678
      %v5701 = vpop.permute.xlu0 %5700
      %5704 = vset.pattern.permute.xlu0 0
      %5705 = vperm.xlu0 %5704, %v5679
      %v5706 = vpop.permute.xlu0 %5705
      %5709 = vset.pattern.permute.xlu0 0
      %5710 = vperm.xlu0 %5709, %v5680
      %v5711 = vpop.permute.xlu0 %5710
      %5714 = vset.pattern.permute.xlu0 0
      %5715 = vperm.xlu0 %5714, %v5681
      %v5716 = vpop.permute.xlu0 %5715
      %5719 = vset.pattern.permute.xlu0 0
      %5720 = vperm.xlu0 %5719, %v5682
      %v5721 = vpop.permute.xlu0 %5720
      %v5724 = vsel %vm1374, %v5667, 0
      %v5727 = vsel %vm1374, %v5668, 0
      %v5730 = vsel %vm1374, %v5669, 0
      %v5733 = vsel %vm1374, %v5670, 0
      %v5736 = vsel %vm1374, %v5671, 0
      %v5739 = vsel %vm1374, %v5672, 0
      %v5742 = vsel %vm1374, %v5673, 0
      %v5745 = vsel %vm1374, %v5674, 0
      %5747 = vmatprep.subr.mxu0 0.0
      %5748 = vmatpush1.msra.mxu0 0.0
      %5749 = vmatprep.subr.mxu0 0.0
      %5750 = vmatpush1.msra.mxu0 0.0
      %5751 = vmatprep.subr.mxu0 0.0
      %5752 = vmatpush1.msra.mxu0 0.0
      %5753 = vmatprep.subr.mxu0 0.0
      %5754 = vmatpush1.msra.mxu0 0.0
      %5755 = vmatprep.subr.mxu0 0.0
      %5756 = vmatpush1.msra.mxu0 0.0
      %5757 = vmatprep.subr.mxu0 0.0
      %5758 = vmatpush1.msra.mxu0 0.0
      %5759 = vmatprep.subr.mxu0 0.0
      %5760 = vmatpush1.msra.mxu0 0.0
      %5761 = vmatprep.subr.mxu0 0.0
      %5762 = vmatpush1.msra.mxu0 0.0
      %5763 = vmatprep.subr.mxu0 0.0
      %5764 = vmatpush1.msra.mxu0 %v5506
      %5765 = vmatprep.subr.mxu0 0.0
      %5766 = vmatpush1.msra.mxu0 %v5505
      %5767 = vmatprep.subr.mxu0 0.0
      %5768 = vmatpush1.msra.mxu0 %v5504
      %5769 = vmatprep.subr.mxu0 0.0
      %5770 = vmatpush1.msra.mxu0 %v5503
      %5771 = vmatprep.subr.mxu0 0.0
      %5772 = vmatpush1.msra.mxu0 %v5502
      %5773 = vmatprep.subr.mxu0 0.0
      %5774 = vmatpush1.msra.mxu0 %v5501
      %5775 = vmatprep.subr.mxu0 0.0
      %5776 = vmatpush1.msra.mxu0 %v5500
      %5777 = vmatprep.subr.mxu0 0.0
      %5778 = vmatpush1.msra.mxu0 %v5499
      %5779 = vmatprep.subr.mxu0 0.0
      %5780 = vmatpush2.msra.mxu0 0.0
      %5781 = vmatprep.subr.mxu0 0.0
      %5782 = vmatpush2.msra.mxu0 0.0
      %5783 = vmatprep.subr.mxu0 0.0
      %5784 = vmatpush2.msra.mxu0 0.0
      %5785 = vmatprep.subr.mxu0 0.0
      %5786 = vmatpush2.msra.mxu0 0.0
      %5787 = vmatprep.subr.mxu0 0.0
      %5788 = vmatpush2.msra.mxu0 0.0
      %5789 = vmatprep.subr.mxu0 0.0
      %5790 = vmatpush2.msra.mxu0 0.0
      %5791 = vmatprep.subr.mxu0 0.0
      %5792 = vmatpush2.msra.mxu0 0.0
      %5793 = vmatprep.subr.mxu0 0.0
      %5794 = vmatpush2.msra.mxu0 0.0
      %5795 = vmatprep.subr.mxu0 0.0
      %5796 = vmatpush2.msra.mxu0 0.0
      %5797 = vmatprep.subr.mxu0 0.0
      %5798 = vmatpush2.msra.mxu0 0.0
      %5799 = vmatprep.subr.mxu0 0.0
      %5800 = vmatpush2.msra.mxu0 0.0
      %5801 = vmatprep.subr.mxu0 0.0
      %5802 = vmatpush2.msra.mxu0 0.0
      %5803 = vmatprep.subr.mxu0 0.0
      %5804 = vmatpush2.msra.mxu0 0.0
      %5805 = vmatprep.subr.mxu0 0.0
      %5806 = vmatpush2.msra.mxu0 0.0
      %5807 = vmatprep.subr.mxu0 0.0
      %5808 = vmatpush2.msra.mxu0 0.0
      %5809 = vmatprep.subr.mxu0 0.0
      %5810 = vmatpush2.msra.mxu0 0.0
      %5811 = vmatprep.mubr.f32.mxu0 0.0
      %5812 = vmatmul.mubr.f32.gmra.mxu0 %v5724
      %v5813 = vpop.f32.mrf.mxu0
      %v5814 = vadd.f32 %v5686, %v5813
      %v5815 = vpop.f32.mrf.mxu0
      %5816 = vmatprep.mubr.f32.mxu0 0.0
      %5817 = vmatmul.mubr.f32.gmra.mxu0 %v5727
      %v5818 = vpop.f32.mrf.mxu0
      %v5819 = vadd.f32 %v5691, %v5818
      %v5820 = vpop.f32.mrf.mxu0
      %5821 = vmatprep.mubr.f32.mxu0 0.0
      %5822 = vmatmul.mubr.f32.gmra.mxu0 %v5730
      %v5823 = vpop.f32.mrf.mxu0
      %v5824 = vadd.f32 %v5696, %v5823
      %v5825 = vpop.f32.mrf.mxu0
      %5826 = vmatprep.mubr.f32.mxu0 0.0
      %5827 = vmatmul.mubr.f32.gmra.mxu0 %v5733
      %v5828 = vpop.f32.mrf.mxu0
      %v5829 = vadd.f32 %v5701, %v5828
      %v5830 = vpop.f32.mrf.mxu0
      %5831 = vmatprep.mubr.f32.mxu0 0.0
      %5832 = vmatmul.mubr.f32.gmra.mxu0 %v5736
      %v5833 = vpop.f32.mrf.mxu0
      %v5834 = vadd.f32 %v5706, %v5833
      %v5835 = vpop.f32.mrf.mxu0
      %5836 = vmatprep.mubr.f32.mxu0 0.0
      %5837 = vmatmul.mubr.f32.gmra.mxu0 %v5739
      %v5838 = vpop.f32.mrf.mxu0
      %v5839 = vadd.f32 %v5711, %v5838
      %v5840 = vpop.f32.mrf.mxu0
      %5841 = vmatprep.mubr.f32.mxu0 0.0
      %5842 = vmatmul.mubr.f32.gmra.mxu0 %v5742
      %v5843 = vpop.f32.mrf.mxu0
      %v5844 = vadd.f32 %v5716, %v5843
      %v5845 = vpop.f32.mrf.mxu0
      %5846 = vmatprep.mubr.f32.mxu0 0.0
      %5847 = vmatmul.mubr.f32.gmra.mxu0 %v5745
      %v5848 = vpop.f32.mrf.mxu0
      %v5849 = vadd.f32 %v5721, %v5848
      %v5850 = vpop.f32.mrf.mxu0
      %5851 = vdwg.mxu0
      %s5852 = sld [smem:[#allocation3]]
      %5853 = vxpose.xlu0.b32.start [1/16] %v5584, 128
      %5854 = vxpose.xlu0.b32.cont [2/16] 0.0, 128
      %5855 = vxpose.xlu0.b32.cont [3/16] 0.0, 128
      %5856 = vxpose.xlu0.b32.cont [4/16] 0.0, 128
      %5857 = vxpose.xlu0.b32.cont [5/16] 0.0, 128
      %5858 = vxpose.xlu0.b32.cont [6/16] 0.0, 128
      %5859 = vxpose.xlu0.b32.cont [7/16] 0.0, 128
      %5860 = vxpose.xlu0.b32.cont [8/16] 0.0, 128
      %5861 = vxpose.xlu0.b32.cont [9/16] 0.0, 128
      %5862 = vxpose.xlu0.b32.cont [10/16] 0.0, 128
      %5863 = vxpose.xlu0.b32.cont [11/16] 0.0, 128
      %5864 = vxpose.xlu0.b32.cont [12/16] 0.0, 128
      %5865 = vxpose.xlu0.b32.cont [13/16] 0.0, 128
      %5866 = vxpose.xlu0.b32.cont [14/16] 0.0, 128
      %5867 = vxpose.xlu0.b32.cont [15/16] 0.0, 128
      %5868 = vxpose.xlu0.b32.end [16/16] 0.0, 128
      %v5869 = vpop.trf.xlu0
      %v5870 = vpop.trf.xlu0
      %v5871 = vpop.trf.xlu0
      %v5872 = vpop.trf.xlu0
      %v5873 = vpop.trf.xlu0
      %v5874 = vpop.trf.xlu0
      %v5875 = vpop.trf.xlu0
      %v5876 = vpop.trf.xlu0
      %v5877 = vpop.trf.xlu0
      %v5878 = vpop.trf.xlu0
      %v5879 = vpop.trf.xlu0
      %v5880 = vpop.trf.xlu0
      %v5881 = vpop.trf.xlu0
      %v5882 = vpop.trf.xlu0
      %v5883 = vpop.trf.xlu0
      %v5884 = vpop.trf.xlu0
      %vm5885 = vcmask 64512
      %v5887 = vsel %vm5885, %v5869, 0
      %v5890 = vsel %vm5885, %v5870, 0
      %5892 = vmatprep.subr.mxu0 0.0
      %5893 = vmatpush1.msra.mxu0 0.0
      %5894 = vmatprep.subr.mxu0 0.0
      %5895 = vmatpush1.msra.mxu0 0.0
      %5896 = vmatprep.subr.mxu0 0.0
      %5897 = vmatpush1.msra.mxu0 0.0
      %5898 = vmatprep.subr.mxu0 0.0
      %5899 = vmatpush1.msra.mxu0 0.0
      %5900 = vmatprep.subr.mxu0 0.0
      %5901 = vmatpush1.msra.mxu0 0.0
      %5902 = vmatprep.subr.mxu0 0.0
      %5903 = vmatpush1.msra.mxu0 0.0
      %5904 = vmatprep.subr.mxu0 0.0
      %5905 = vmatpush1.msra.mxu0 0.0
      %5906 = vmatprep.subr.mxu0 0.0
      %5907 = vmatpush1.msra.mxu0 0.0
      %5908 = vmatprep.subr.mxu0 0.0
      %5909 = vmatpush1.msra.mxu0 0.0
      %5910 = vmatprep.subr.mxu0 0.0
      %5911 = vmatpush1.msra.mxu0 0.0
      %5912 = vmatprep.subr.mxu0 0.0
      %5913 = vmatpush1.msra.mxu0 0.0
      %5914 = vmatprep.subr.mxu0 0.0
      %5915 = vmatpush1.msra.mxu0 0.0
      %5916 = vmatprep.subr.mxu0 0.0
      %5917 = vmatpush1.msra.mxu0 0.0
      %5918 = vmatprep.subr.mxu0 0.0
      %5919 = vmatpush1.msra.mxu0 0.0
      %5920 = vmatprep.subr.mxu0 0.0
      %5921 = vmatpush1.msra.mxu0 0.0
      %5922 = vmatprep.subr.mxu0 0.0
      %5923 = vmatpush1.msra.mxu0 %v5664
      %5924 = vmatprep.subr.mxu0 0.0
      %5925 = vmatpush2.msra.mxu0 0.0
      %5926 = vmatprep.subr.mxu0 0.0
      %5927 = vmatpush2.msra.mxu0 0.0
      %5928 = vmatprep.subr.mxu0 0.0
      %5929 = vmatpush2.msra.mxu0 0.0
      %5930 = vmatprep.subr.mxu0 0.0
      %5931 = vmatpush2.msra.mxu0 0.0
      %5932 = vmatprep.subr.mxu0 0.0
      %5933 = vmatpush2.msra.mxu0 0.0
      %5934 = vmatprep.subr.mxu0 0.0
      %5935 = vmatpush2.msra.mxu0 0.0
      %5936 = vmatprep.subr.mxu0 0.0
      %5937 = vmatpush2.msra.mxu0 0.0
      %5938 = vmatprep.subr.mxu0 0.0
      %5939 = vmatpush2.msra.mxu0 0.0
      %5940 = vmatprep.subr.mxu0 0.0
      %5941 = vmatpush2.msra.mxu0 0.0
      %5942 = vmatprep.subr.mxu0 0.0
      %5943 = vmatpush2.msra.mxu0 0.0
      %5944 = vmatprep.subr.mxu0 0.0
      %5945 = vmatpush2.msra.mxu0 0.0
      %5946 = vmatprep.subr.mxu0 0.0
      %5947 = vmatpush2.msra.mxu0 0.0
      %5948 = vmatprep.subr.mxu0 0.0
      %5949 = vmatpush2.msra.mxu0 0.0
      %5950 = vmatprep.subr.mxu0 0.0
      %5951 = vmatpush2.msra.mxu0 0.0
      %5952 = vmatprep.subr.mxu0 0.0
      %5953 = vmatpush2.msra.mxu0 0.0
      %5954 = vmatprep.subr.mxu0 0.0
      %5955 = vmatpush2.msra.mxu0 0.0
      %5956 = vmatprep.mubr.f32.mxu0 0.0
      %5957 = vmatmul.mubr.f32.gmra.mxu0 %v5887
      %v5958 = vpop.f32.mrf.mxu0
      %v5959 = vadd.f32 0.0, %v5958
      %v5960 = vpop.f32.mrf.mxu0
      %5961 = vmatprep.mubr.f32.mxu0 0.0
      %5962 = vmatmul.mubr.f32.gmra.mxu0 %v5890
      %v5963 = vpop.f32.mrf.mxu0
      %v5964 = vadd.f32 0.0, %v5963
      %v5965 = vpop.f32.mrf.mxu0
      %5966 = vdwg.mxu0
      %vm5967 = vcmask 130048
      %v5968 = vsel %vm5967, %v5959, -inf
      %5969 = vmax.xlane.f32.xlu0 %v5968
      %v5970 = vpop.xlane.xlu0 %5969
      %v5971 = vsel %vm5967, %v5964, -inf
      %5972 = vmax.xlane.f32.xlu0 %v5971
      %v5973 = vpop.xlane.xlu0 %5972
      %v5974 = vsub.f32 %v5959, %v5970
      %v5975 = vsub.f32 %v5964, %v5973
      %v5976 = vmul.f32 %v5974, 1.442695
      %v5977 = vpow.pop %v5976
      %v5978 = vmul.f32 %v5975, 1.442695
      %v5979 = vpow.pop %v5978
      %v5980 = vsel %vm5967, %v5977, 0.0
      %5981 = vadd.xlane.f32.xlu0 %v5980
      %v5982 = vpop.xlane.xlu0 %5981
      %v5983 = vsel %vm5967, %v5979, 0.0
      %5984 = vadd.xlane.f32.xlu0 %v5983
      %v5985 = vpop.xlane.xlu0 %5984
      %v5986 = vrcp.pop %v5982
      %v5987 = vrcp.pop %v5985
      %v5988 = vmul.f32 %v5977, %v5986
      %v5989 = vmul.f32 %v5979, %v5987
      %v5991 = vsel %vm5967, %v5814, 0
      %v5994 = vsel %vm5967, %v5819, 0
      %v5997 = vsel %vm5967, %v5824, 0
      %v6000 = vsel %vm5967, %v5829, 0
      %v6003 = vsel %vm5967, %v5834, 0
      %v6006 = vsel %vm5967, %v5839, 0
      %v6009 = vsel %vm5967, %v5844, 0
      %v6012 = vsel %vm5967, %v5849, 0
      %v6015 = vsel %vm5967, %v5988, 0
      %v6018 = vsel %vm5967, %v5989, 0
      %6020 = vmatprep.subr.mxu0 0.0
      %6021 = vmatpush1.xpose.msra.mxu0 0.0
      %6022 = vmatprep.subr.mxu0 0.0
      %6023 = vmatpush1.xpose.msra.mxu0 0.0
      %6024 = vmatprep.subr.mxu0 0.0
      %6025 = vmatpush1.xpose.msra.mxu0 0.0
      %6026 = vmatprep.subr.mxu0 0.0
      %6027 = vmatpush1.xpose.msra.mxu0 0.0
      %6028 = vmatprep.subr.mxu0 0.0
      %6029 = vmatpush1.xpose.msra.mxu0 0.0
      %6030 = vmatprep.subr.mxu0 0.0
      %6031 = vmatpush1.xpose.msra.mxu0 0.0
      %6032 = vmatprep.subr.mxu0 0.0
      %6033 = vmatpush1.xpose.msra.mxu0 0.0
      %6034 = vmatprep.subr.mxu0 0.0
      %6035 = vmatpush1.xpose.msra.mxu0 0.0
      %6036 = vmatprep.subr.mxu0 0.0
      %6037 = vmatpush1.xpose.msra.mxu0 0.0
      %6038 = vmatprep.subr.mxu0 0.0
      %6039 = vmatpush1.xpose.msra.mxu0 0.0
      %6040 = vmatprep.subr.mxu0 0.0
      %6041 = vmatpush1.xpose.msra.mxu0 0.0
      %6042 = vmatprep.subr.mxu0 0.0
      %6043 = vmatpush1.xpose.msra.mxu0 0.0
      %6044 = vmatprep.subr.mxu0 0.0
      %6045 = vmatpush1.xpose.msra.mxu0 0.0
      %6046 = vmatprep.subr.mxu0 0.0
      %6047 = vmatpush1.xpose.msra.mxu0 0.0
      %6048 = vmatprep.subr.mxu0 0.0
      %6049 = vmatpush1.xpose.msra.mxu0 %v6018
      %6050 = vmatprep.subr.mxu0 0.0
      %6051 = vmatpush1.xpose.msra.mxu0 %v6015
      %6052 = vmatprep.subr.mxu0 0.0
      %6053 = vmatpush2.xpose.msra.mxu0 0.0
      %6054 = vmatprep.subr.mxu0 0.0
      %6055 = vmatpush2.xpose.msra.mxu0 0.0
      %6056 = vmatprep.subr.mxu0 0.0
      %6057 = vmatpush2.xpose.msra.mxu0 0.0
      %6058 = vmatprep.subr.mxu0 0.0
      %6059 = vmatpush2.xpose.msra.mxu0 0.0
      %6060 = vmatprep.subr.mxu0 0.0
      %6061 = vmatpush2.xpose.msra.mxu0 0.0
      %6062 = vmatprep.subr.mxu0 0.0
      %6063 = vmatpush2.xpose.msra.mxu0 0.0
      %6064 = vmatprep.subr.mxu0 0.0
      %6065 = vmatpush2.xpose.msra.mxu0 0.0
      %6066 = vmatprep.subr.mxu0 0.0
      %6067 = vmatpush2.xpose.msra.mxu0 0.0
      %6068 = vmatprep.subr.mxu0 0.0
      %6069 = vmatpush2.xpose.msra.mxu0 0.0
      %6070 = vmatprep.subr.mxu0 0.0
      %6071 = vmatpush2.xpose.msra.mxu0 0.0
      %6072 = vmatprep.subr.mxu0 0.0
      %6073 = vmatpush2.xpose.msra.mxu0 0.0
      %6074 = vmatprep.subr.mxu0 0.0
      %6075 = vmatpush2.xpose.msra.mxu0 0.0
      %6076 = vmatprep.subr.mxu0 0.0
      %6077 = vmatpush2.xpose.msra.mxu0 0.0
      %6078 = vmatprep.subr.mxu0 0.0
      %6079 = vmatpush2.xpose.msra.mxu0 0.0
      %6080 = vmatprep.subr.mxu0 0.0
      %6081 = vmatpush2.xpose.msra.mxu0 0.0
      %6082 = vmatprep.subr.mxu0 0.0
      %6083 = vmatpush2.xpose.msra.mxu0 0.0
      %6084 = vmatprep.mubr.f32.mxu0 0.0
      %6085 = vmatmul.mubr.f32.gmra.mxu0 %v5991
      %v6086 = vpop.f32.mrf.mxu0
      %v6087 = vadd.f32 0.0, %v6086
      %v6088 = vpop.f32.mrf.mxu0
      %6089 = vmatprep.mubr.f32.mxu0 0.0
      %6090 = vmatmul.mubr.f32.gmra.mxu0 %v5994
      %v6091 = vpop.f32.mrf.mxu0
      %v6092 = vadd.f32 0.0, %v6091
      %v6093 = vpop.f32.mrf.mxu0
      %6094 = vmatprep.mubr.f32.mxu0 0.0
      %6095 = vmatmul.mubr.f32.gmra.mxu0 %v5997
      %v6096 = vpop.f32.mrf.mxu0
      %v6097 = vadd.f32 0.0, %v6096
      %v6098 = vpop.f32.mrf.mxu0
      %6099 = vmatprep.mubr.f32.mxu0 0.0
      %6100 = vmatmul.mubr.f32.gmra.mxu0 %v6000
      %v6101 = vpop.f32.mrf.mxu0
      %v6102 = vadd.f32 0.0, %v6101
      %v6103 = vpop.f32.mrf.mxu0
      %6104 = vmatprep.mubr.f32.mxu0 0.0
      %6105 = vmatmul.mubr.f32.gmra.mxu0 %v6003
      %v6106 = vpop.f32.mrf.mxu0
      %v6107 = vadd.f32 0.0, %v6106
      %v6108 = vpop.f32.mrf.mxu0
      %6109 = vmatprep.mubr.f32.mxu0 0.0
      %6110 = vmatmul.mubr.f32.gmra.mxu0 %v6006
      %v6111 = vpop.f32.mrf.mxu0
      %v6112 = vadd.f32 0.0, %v6111
      %v6113 = vpop.f32.mrf.mxu0
      %6114 = vmatprep.mubr.f32.mxu0 0.0
      %6115 = vmatmul.mubr.f32.gmra.mxu0 %v6009
      %v6116 = vpop.f32.mrf.mxu0
      %v6117 = vadd.f32 0.0, %v6116
      %v6118 = vpop.f32.mrf.mxu0
      %6119 = vmatprep.mubr.f32.mxu0 0.0
      %6120 = vmatmul.mubr.f32.gmra.mxu0 %v6012
      %v6121 = vpop.f32.mrf.mxu0
      %v6122 = vadd.f32 0.0, %v6121
      %v6123 = vpop.f32.mrf.mxu0
      %6124 = vdwg.mxu0
      %v6125 = vstv %s5852
      %v6126 = vmul.f32 %v6125, %v6087
      %v6127 = vmul.f32 %v6125, %v6092
      %v6128 = vmul.f32 %v6125, %v6097
      %v6129 = vmul.f32 %v6125, %v6102
      %v6130 = vmul.f32 %v6125, %v6107
      %v6131 = vmul.f32 %v6125, %v6112
      %v6132 = vmul.f32 %v6125, %v6117
      %v6133 = vmul.f32 %v6125, %v6122
      %v6134 = vadd.f32 %v6126, %v5499
      %v6135 = vadd.f32 %v6127, %v5500
      %v6136 = vadd.f32 %v6128, %v5501
      %v6137 = vadd.f32 %v6129, %v5502
      %v6138 = vadd.f32 %v6130, %v5503
      %v6139 = vadd.f32 %v6131, %v5504
      %v6140 = vadd.f32 %v6132, %v5505
      %v6141 = vadd.f32 %v6133, %v5506
      %v6142 = vld [vmem:[%s21] sm:$0xff]
      %v6143 = vld [vmem:[%s21 + $0x8] sm:$0xff]
      %v6144 = vld [vmem:[%s21 + $0x10] sm:$0xff]
      %v6145 = vld [vmem:[%s21 + $0x18] sm:$0xff]
      %v6146 = vld [vmem:[%s21 + $0x20] sm:$0xff]
      %v6147 = vld [vmem:[%s21 + $0x28] sm:$0xff]
      %v6148 = vld [vmem:[%s21 + $0x30] sm:$0xff]
      %v6149 = vld [vmem:[%s21 + $0x38] sm:$0xff]
      %v6150 = vmul.f32 %v6142, %v6134
      %v6151 = vmul.f32 %v6143, %v6135
      %v6152 = vmul.f32 %v6144, %v6136
      %v6153 = vmul.f32 %v6145, %v6137
      %v6154 = vmul.f32 %v6146, %v6138
      %v6155 = vmul.f32 %v6147, %v6139
      %v6156 = vmul.f32 %v6148, %v6140
      %v6157 = vmul.f32 %v6149, %v6141
      %v6158 = vsel %vm5967, %v6150, 0.0
      %v6159 = vsel %vm5967, %v6151, 0.0
      %v6160 = vadd.f32 %v6158, %v6159
      %v6161 = vsel %vm5967, %v6152, 0.0
      %v6162 = vadd.f32 %v6160, %v6161
      %v6163 = vsel %vm5967, %v6153, 0.0
      %v6164 = vadd.f32 %v6162, %v6163
      %v6165 = vsel %vm5967, %v6154, 0.0
      %v6166 = vadd.f32 %v6164, %v6165
      %v6167 = vsel %vm5967, %v6155, 0.0
      %v6168 = vadd.f32 %v6166, %v6167
      %v6169 = vsel %vm5967, %v6156, 0.0
      %v6170 = vadd.f32 %v6168, %v6169
      %v6171 = vsel %vm5967, %v6157, 0.0
      %v6172 = vadd.f32 %v6170, %v6171
      %v6173 = vrot.slane %v6172, 4
      %v6174 = vadd.f32 %v6172, %v6173
      %v6175 = vrot.slane %v6174, 2
      %v6176 = vadd.f32 %v6174, %v6175
      %v6177 = vrot.slane %v6176, 1
      %v6178 = vadd.f32 %v6176, %v6177
      %v6179 = vsel %vm5967, %v6178, 0.0
      %6180 = vadd.xlane.f32.xlu0 %v6179
      %v6181 = vpop.xlane.xlu0 %6180
      %s6182 = sld [smem:[#allocation4]]
      %v6183 = vstv %s6182
      %v6184 = vadd.f32 %v6181, %v6183
      %6185 = vst [vmem:[%s682] sm:$0x1] %v6184
      %p6186 = scmp.lt.s32.totalorder %s36, 1
      %s6187 = scalar_select %p6186, %s36, 1
      %s6188 = scalar_lea.vmem %s22, %s6187
      // Predicated region
      $region109: #{discriminator_forward.5} parent=107 // pred_check
        %p6189 = pneg %p521
      $region110: #{discriminator_forward.5} parent=107 // pred_check_branch
        %6191 = sbr.rel (%p6189) target = $region112
      $region111: #{discriminator_forward.5} parent=107 // pred_region
        _
      $region112: #{discriminator_forward.5} parent=107 // pred_fallthru
        _
    $region108: #{discriminator_forward.5} parent=5 // pred_fallthru
      _
    %p6192 = scmp.le.s32.totalorder 2, %s31
    // Predicated region
    $region113: #{discriminator_forward.5} parent=5 // pred_check
      %p6193 = pneg %p6192
    $region114: #{discriminator_forward.5} parent=5 // pred_check_branch
      %6195 = sbr.rel (%p6193) target = $region116
    $region115: #{discriminator_forward.5} parent=5 // pred_region
      %s6196 = ssub.s32 %s31, 2
      // Predicated region
      $region117: #{discriminator_forward.5} parent=115 // pred_check
        %p6197 = pneg %p527
      $region118: #{discriminator_forward.5} parent=115 // pred_check_branch
        %6199 = sbr.rel (%p6197) target = $region120
      $region119: #{discriminator_forward.5} parent=115 // pred_region
        %p6200 = scmp.lt.s32.totalorder %s37, 1
        %s6201 = scalar_select %p6200, %s37, 1
        %s6202 = scalar_lea.vmem %s22, %s6201
      $region120: #{discriminator_forward.5} parent=115 // pred_fallthru
        _
    $region116: #{discriminator_forward.5} parent=5 // pred_fallthru
      _
  $region6: #{discriminator_forward.5} parent=0 // loop_footer
    %s35 = sadd.s32 1, %s31
  $region7: #{discriminator_forward.5} parent=0 // loop_footer_branch
    %30 = sbr.rel target = $region3
  $region8: #{discriminator_forward.5} parent=0 // loop_exit
    _

</llo_original>
